<compile_context>
chip_gen: v5e
topology: v5e:2x2
jax: 0.10.0
libtpu: 0.0.40
codegen_flags: <defaults>
</compile_context>

<pallas_src>
import numpy as np
import jax
import jax.numpy as jnp
from jax.experimental import pallas as pl
from jax.experimental.pallas import tpu as pltpu

LEAKY_SLOPE = 0.2
BN_EPS = 1e-5
HIDDEN = 1000          # logical hidden width (as in the PyTorch module)
LANE = 128
OUT_PAD = 128          # final output padded from 1 to 128 lanes (lane-dense vst)


def _round_up(x, m):
    return ((x + m - 1) // m) * m


# --------------------------------------------------------------------------- #
# Kernel: fused Linear+BN+LeakyReLU -> Linear+BN+LeakyReLU -> Linear
# --------------------------------------------------------------------------- #
def _discriminator_kernel(x_ref, w1_ref, b1_ref, w2_ref, b2_ref, w3_ref, b3_ref,
                          o_ref):
    x = x_ref[...]                                                   # bf16 [tb, Dp]

    h = jnp.dot(x, w1_ref[...], preferred_element_type=jnp.float32) + b1_ref[...]
    h = jnp.maximum(h, LEAKY_SLOPE * h)                              # LeakyReLU(0.2)

    h = jnp.dot(h.astype(jnp.bfloat16), w2_ref[...],
                preferred_element_type=jnp.float32) + b2_ref[...]
    h = jnp.maximum(h, LEAKY_SLOPE * h)

    # Final layer in f32 (tiny FLOP share, resident weight) for logit accuracy.
    o_ref[...] = jnp.dot(h, w3_ref[...],
                         preferred_element_type=jnp.float32) + b3_ref[...]


# --------------------------------------------------------------------------- #
# Parameter construction (PyTorch-style init)
# --------------------------------------------------------------------------- #
def init_params(key, in_dim, hidden=HIDDEN):
    """Deterministic PyTorch-style (uniform +-1/sqrt(fan_in)) initialization."""
    ks = jax.random.split(key, 3)

    def lin(k, fan_in, fan_out):
        bound = 1.0 / float(np.sqrt(fan_in))
        kw, kb = jax.random.split(k)
        w = jax.random.uniform(kw, (fan_in, fan_out), jnp.float32, -bound, bound)
        b = jax.random.uniform(kb, (1, fan_out), jnp.float32, -bound, bound)
        return w, b

    w1, b1 = lin(ks[0], in_dim, hidden)
    w2, b2 = lin(ks[1], hidden, hidden)
    w3, b3 = lin(ks[2], hidden, 1)
    ones = jnp.ones((1, hidden), jnp.float32)
    zeros = jnp.zeros((1, hidden), jnp.float32)
    return dict(w1=w1, b1=b1, g1=ones, be1=zeros, m1=zeros, v1=ones,
                w2=w2, b2=b2, g2=ones, be2=zeros, m2=zeros, v2=ones,
                w3=w3, b3=b3)


# --------------------------------------------------------------------------- #
# One-time BN folding / padding / casting (hoisted out of the forward path)
# --------------------------------------------------------------------------- #
def prepare_params(params, in_dim):
    """Fold eval-mode BatchNorm into the Linear layers, pad to 128-aligned
    shapes, cast the two big weights to bf16 (biases + final layer stay f32).
    Call ONCE; reuse the result for every forward call."""
    def fold(w, b, g, be, m, v):
        scale = g * jax.lax.rsqrt(v + BN_EPS)          # (1, H)
        return w * scale, (b - m) * scale + be

    w1f, b1f = fold(params["w1"], params["b1"], params["g1"], params["be1"],
                    params["m1"], params["v1"])
    w2f, b2f = fold(params["w2"], params["b2"], params["g2"], params["be2"],
                    params["m2"], params["v2"])
    w3f, b3f = params["w3"], params["b3"]

    Dp = _round_up(in_dim, LANE)
    Hp = _round_up(HIDDEN, LANE)                        # 1024

    def pad2(a, r, c):
        return jnp.pad(a, ((0, r - a.shape[0]), (0, c - a.shape[1])))

    return dict(
        w1=pad2(w1f, Dp, Hp).astype(jnp.bfloat16),
        b1=pad2(b1f, 1, Hp),
        w2=pad2(w2f, Hp, Hp).astype(jnp.bfloat16),
        b2=pad2(b2f, 1, Hp),
        w3=pad2(w3f, Hp, OUT_PAD),                      # f32
        b3=pad2(b3f, 1, OUT_PAD),                       # f32
    )


# --------------------------------------------------------------------------- #
# Wrapper (jit-able; takes the prepared params)
# --------------------------------------------------------------------------- #
def discriminator_forward(x, fp):
    """x: [B, *input_shape] -> validity [B, 1] (float32).
    `fp` is the output of prepare_params (folded/padded weights)."""
    B = x.shape[0]
    in_dim = int(np.prod(x.shape[1:]))
    Dp, Hp = fp["w1"].shape

    # Batch tile: multiple of 16 (bf16 packed sublanes), capped at 512, and
    # ~ceil(B/2) so any batch >= 32 produces grid >= 2 (megacore sharding).
    half = -(-B // 2)
    tile_b = min(512, max(16, _round_up(half, 16)))
    Bp = _round_up(B, tile_b)

    # Cast to bf16 *before* padding (single pass, half the pad traffic).
    x2d = x.reshape(B, -1).astype(jnp.bfloat16)
    x_pad = jnp.pad(x2d, ((0, Bp - B), (0, Dp - in_dim)))

    grid = (Bp // tile_b,)

    in_specs = [
        pl.BlockSpec((tile_b, Dp), lambda i: (i, 0)),     # x tile
        pl.BlockSpec((Dp, Hp), lambda i: (0, 0)),         # w1 (resident, bf16)
        pl.BlockSpec((1, Hp), lambda i: (0, 0)),          # b1 (f32)
        pl.BlockSpec((Hp, Hp), lambda i: (0, 0)),         # w2 (resident, bf16)
        pl.BlockSpec((1, Hp), lambda i: (0, 0)),          # b2 (f32)
        pl.BlockSpec((Hp, OUT_PAD), lambda i: (0, 0)),    # w3 (resident, f32)
        pl.BlockSpec((1, OUT_PAD), lambda i: (0, 0)),     # b3 (f32)
    ]
    out_spec = pl.BlockSpec((tile_b, OUT_PAD), lambda i: (i, 0))

    # VMEM budget: double-buffered weights + I/O blocks, plus the compiler's
    # f32 hidden-activation intermediates and their bf16 casts, plus slack.
    bytes_w = sum(fp[k].size * fp[k].dtype.itemsize
                  for k in ("w1", "b1", "w2", "b2", "w3", "b3"))
    bytes_in = tile_b * Dp * 2
    bytes_out = tile_b * OUT_PAD * 4
    bytes_act = 2 * tile_b * Hp * 4 + 2 * tile_b * Hp * 2
    vmem_limit = int(2 * (bytes_w + bytes_in + bytes_out) + bytes_act + (16 << 20))
    vmem_limit = min(vmem_limit, 56 * 1024 * 1024)       # safe on v7x's 64 MiB

    # Advisory cost estimate so XLA schedules surrounding pad/cast/slice ops.
    flops = 2 * Bp * (Dp * Hp + Hp * Hp + Hp * OUT_PAD)
    bytes_accessed = int(bytes_w + Bp * Dp * 2 + Bp * OUT_PAD * 4)
    cost = pl.CostEstimate(flops=flops, transcendentals=0,
                           bytes_accessed=bytes_accessed)

    out = pl.pallas_call(
        _discriminator_kernel,
        out_shape=jax.ShapeDtypeStruct((Bp, OUT_PAD), jnp.float32),
        grid=grid,
        in_specs=in_specs,
        out_specs=out_spec,
        compiler_params=pltpu.CompilerParams(
            dimension_semantics=("parallel",),
            vmem_limit_bytes=vmem_limit),
        cost_estimate=cost,
    )(x_pad, fp["w1"], fp["b1"], fp["w2"], fp["b2"], fp["w3"], fp["b3"])

    return out[:B, :1]


# --------------------------------------------------------------------------- #
# Pure-JAX reference (eval-mode semantics, f32, unfolded / unpadded params)
# --------------------------------------------------------------------------- #
def _reference_forward(x, params):
    B = x.shape[0]
    h = x.reshape(B, -1).astype(jnp.float32)

    def bn(h, g, be, m, v):
        return (h - m) * jax.lax.rsqrt(v + BN_EPS) * g + be

    h = h @ params["w1"] + params["b1"]
    h = bn(h, params["g1"], params["be1"], params["m1"], params["v1"])
    h = jnp.where(h > 0, h, LEAKY_SLOPE * h)
    h = h @ params["w2"] + params["b2"]
    h = bn(h, params["g2"], params["be2"], params["m2"], params["v2"])
    h = jnp.where(h > 0, h, LEAKY_SLOPE * h)
    return h @ params["w3"] + params["b3"]


if __name__ == "__main__":
    input_shape = (4, 16, 16)           # Discriminator(input_shape)
    batch = 2
    in_dim = int(np.prod(input_shape))  # 1024

    key = jax.random.PRNGKey(0)
    kx, kp = jax.random.split(key)
    x = jax.random.normal(kx, (batch,) + input_shape, dtype=jnp.float32)
    params = init_params(kp, in_dim)

    # One-time weight prep (BN fold + pad + bf16 cast), reused across calls.
    fp = jax.tree_util.tree_map(jax.block_until_ready,
                                prepare_params(params, in_dim))

    fwd = jax.jit(discriminator_forward)
    out = jax.block_until_ready(fwd(x, fp))
    ref = jax.block_until_ready(_reference_forward(x, params))

    assert out.shape == (batch, 1), out.shape
    # bf16 weights/activations on layers 1-2 with f32 accumulation -> relaxed tol.
    np.testing.assert_allclose(np.asarray(out), np.asarray(ref),
                               rtol=2e-2, atol=2e-2)

    print("KERNEL_OK")
</pallas_src>

<mosaic_0001>
module attributes {stable_mosaic.version = 11 : i64} {
  func.func @_discriminator_kernel(%arg0: i32, %arg1: memref<16x1024xbf16, #tpu.memory_space<vmem>>, %arg2: memref<1024x1024xbf16, #tpu.memory_space<vmem>>, %arg3: memref<1x1024xf32, #tpu.memory_space<vmem>>, %arg4: memref<1024x1024xbf16, #tpu.memory_space<vmem>>, %arg5: memref<1x1024xf32, #tpu.memory_space<vmem>>, %arg6: memref<1024x128xf32, #tpu.memory_space<vmem>>, %arg7: memref<1x128xf32, #tpu.memory_space<vmem>>, %arg8: memref<16x128xf32, #tpu.memory_space<vmem>>) attributes {dimension_semantics = [#tpu.dimension_semantics<parallel>], iteration_bounds = array<i64: 1>, scalar_prefetch = 0 : i64, scratch_operands = 0 : i64, tpu.core_type = #tpu.core_type<tc>, window_params = [{transform_indices = @transform_0, window_bounds = array<i64: 16, 1024>}, {pipeline_mode = #tpu.pipeline_mode<synchronous>, transform_indices = @transform_1, window_bounds = array<i64: 1024, 1024>}, {pipeline_mode = #tpu.pipeline_mode<synchronous>, transform_indices = @transform_2, window_bounds = array<i64: 1, 1024>}, {pipeline_mode = #tpu.pipeline_mode<synchronous>, transform_indices = @transform_3, window_bounds = array<i64: 1024, 1024>}, {pipeline_mode = #tpu.pipeline_mode<synchronous>, transform_indices = @transform_4, window_bounds = array<i64: 1, 1024>}, {pipeline_mode = #tpu.pipeline_mode<synchronous>, transform_indices = @transform_5, window_bounds = array<i64: 1024, 128>}, {pipeline_mode = #tpu.pipeline_mode<synchronous>, transform_indices = @transform_6, window_bounds = array<i64: 1, 128>}, {transform_indices = @transform_7, window_bounds = array<i64: 16, 128>}]} {
    %c0 = arith.constant 0 : index
    %c0_0 = arith.constant 0 : index
    %0 = vector.load %arg1[%c0, %c0_0] : memref<16x1024xbf16, #tpu.memory_space<vmem>>, vector<16x1024xbf16>
    %c0_1 = arith.constant 0 : index
    %c0_2 = arith.constant 0 : index
    %1 = vector.load %arg2[%c0_1, %c0_2] : memref<1024x1024xbf16, #tpu.memory_space<vmem>>, vector<1024x1024xbf16>
    %cst = arith.constant dense<0.000000e+00> : vector<16x1024xf32>
    %2 = tpu.matmul %0, %1, %cst {dimension_numbers = #tpu.dot_dimension_numbers<[1], [0], [0], [1], [0, 0, 1, 1], [], []>} : vector<16x1024xbf16>, vector<1024x1024xbf16>, vector<16x1024xf32> -> vector<16x1024xf32>
    %c0_3 = arith.constant 0 : index
    %c0_4 = arith.constant 0 : index
    %3 = vector.load %arg3[%c0_3, %c0_4] : memref<1x1024xf32, #tpu.memory_space<vmem>>, vector<1x1024xf32>
    %4 = vector.broadcast %3 : vector<1x1024xf32> to vector<16x1024xf32>
    %5 = arith.addf %2, %4 : vector<16x1024xf32>
    %cst_5 = arith.constant 2.000000e-01 : f32
    %6 = vector.broadcast %cst_5 : f32 to vector<16x1024xf32>
    %7 = arith.mulf %6, %5 : vector<16x1024xf32>
    %8 = arith.maximumf %5, %7 : vector<16x1024xf32>
    %9 = arith.truncf %8 : vector<16x1024xf32> to vector<16x1024xbf16>
    %c0_6 = arith.constant 0 : index
    %c0_7 = arith.constant 0 : index
    %10 = vector.load %arg4[%c0_6, %c0_7] : memref<1024x1024xbf16, #tpu.memory_space<vmem>>, vector<1024x1024xbf16>
    %cst_8 = arith.constant dense<0.000000e+00> : vector<16x1024xf32>
    %11 = tpu.matmul %9, %10, %cst_8 {dimension_numbers = #tpu.dot_dimension_numbers<[1], [0], [0], [1], [0, 0, 1, 1], [], []>} : vector<16x1024xbf16>, vector<1024x1024xbf16>, vector<16x1024xf32> -> vector<16x1024xf32>
    %c0_9 = arith.constant 0 : index
    %c0_10 = arith.constant 0 : index
    %12 = vector.load %arg5[%c0_9, %c0_10] : memref<1x1024xf32, #tpu.memory_space<vmem>>, vector<1x1024xf32>
    %13 = vector.broadcast %12 : vector<1x1024xf32> to vector<16x1024xf32>
    %14 = arith.addf %11, %13 : vector<16x1024xf32>
    %cst_11 = arith.constant 2.000000e-01 : f32
    %15 = vector.broadcast %cst_11 : f32 to vector<16x1024xf32>
    %16 = arith.mulf %15, %14 : vector<16x1024xf32>
    %17 = arith.maximumf %14, %16 : vector<16x1024xf32>
    %c0_12 = arith.constant 0 : index
    %c0_13 = arith.constant 0 : index
    %18 = vector.load %arg6[%c0_12, %c0_13] : memref<1024x128xf32, #tpu.memory_space<vmem>>, vector<1024x128xf32>
    %cst_14 = arith.constant dense<0.000000e+00> : vector<16x128xf32>
    %19 = tpu.matmul %17, %18, %cst_14 {dimension_numbers = #tpu.dot_dimension_numbers<[1], [0], [0], [1], [0, 0, 1, 1], [], []>} : vector<16x1024xf32>, vector<1024x128xf32>, vector<16x128xf32> -> vector<16x128xf32>
    %c0_15 = arith.constant 0 : index
    %c0_16 = arith.constant 0 : index
    %20 = vector.load %arg7[%c0_15, %c0_16] : memref<1x128xf32, #tpu.memory_space<vmem>>, vector<1x128xf32>
    %21 = vector.broadcast %20 : vector<1x128xf32> to vector<16x128xf32>
    %22 = arith.addf %19, %21 : vector<16x128xf32>
    %c0_17 = arith.constant 0 : index
    %c0_18 = arith.constant 0 : index
    %23 = vector.load %arg8[%c0_17, %c0_18] : memref<16x128xf32, #tpu.memory_space<vmem>>, vector<16x128xf32>
    tpu.vector_store %arg8[%c0_17, %c0_18], %22 {strides = array<i32>} : memref<16x128xf32, #tpu.memory_space<vmem>>, vector<16x128xf32>,
    return
  }
  func.func @transform_0(%arg0: i32) -> (i32, i32) {
    %c0_i32 = arith.constant 0 : i32
    %c0_i32_0 = arith.constant 0 : i32
    return %arg0, %c0_i32 : i32, i32
  }
  func.func @transform_1(%arg0: i32) -> (i32, i32) {
    %c0_i32 = arith.constant 0 : i32
    %c0_i32_0 = arith.constant 0 : i32
    %c0_i32_1 = arith.constant 0 : i32
    return %c0_i32, %c0_i32_0 : i32, i32
  }
  func.func @transform_2(%arg0: i32) -> (i32, i32) {
    %c0_i32 = arith.constant 0 : i32
    %c0_i32_0 = arith.constant 0 : i32
    %c0_i32_1 = arith.constant 0 : i32
    return %c0_i32, %c0_i32_0 : i32, i32
  }
  func.func @transform_3(%arg0: i32) -> (i32, i32) {
    %c0_i32 = arith.constant 0 : i32
    %c0_i32_0 = arith.constant 0 : i32
    %c0_i32_1 = arith.constant 0 : i32
    return %c0_i32, %c0_i32_0 : i32, i32
  }
  func.func @transform_4(%arg0: i32) -> (i32, i32) {
    %c0_i32 = arith.constant 0 : i32
    %c0_i32_0 = arith.constant 0 : i32
    %c0_i32_1 = arith.constant 0 : i32
    return %c0_i32, %c0_i32_0 : i32, i32
  }
  func.func @transform_5(%arg0: i32) -> (i32, i32) {
    %c0_i32 = arith.constant 0 : i32
    %c0_i32_0 = arith.constant 0 : i32
    %c0_i32_1 = arith.constant 0 : i32
    return %c0_i32, %c0_i32_0 : i32, i32
  }
  func.func @transform_6(%arg0: i32) -> (i32, i32) {
    %c0_i32 = arith.constant 0 : i32
    %c0_i32_0 = arith.constant 0 : i32
    %c0_i32_1 = arith.constant 0 : i32
    return %c0_i32, %c0_i32_0 : i32, i32
  }
  func.func @transform_7(%arg0: i32) -> (i32, i32) {
    %c0_i32 = arith.constant 0 : i32
    %c0_i32_0 = arith.constant 0 : i32
    return %arg0, %c0_i32 : i32, i32
  }
}

</mosaic_0001>

<llo_original>
// kernel: discriminator_forward.1
$region0: #{discriminator_forward.1}
  #allocation0 [shape = 'u32[]', space=smem, size = 0x4, offset = 0x4, fixed_abs, tag = 'smem constant byte address 0x4 - core index']
  #allocation1 [shape = 'u32[72,128]{1,0:T(1,128)}', space=vmem, size = 0x9000, scoped, tag = 'internal scratch']
  %s0 = inlined_call_operand.vmem [shape: bf16[16,1024], index: 0, kind: input, shape index: {}]
  %s1 = inlined_call_operand.hbm [shape: bf16[1024,1024], index: 1, kind: input, shape index: {}]
  %s2 = inlined_call_operand.hbm [shape: f32[1,1024], index: 2, kind: input, shape index: {}]
  %s3 = inlined_call_operand.hbm [shape: bf16[1024,1024], index: 3, kind: input, shape index: {}]
  %s4 = inlined_call_operand.hbm [shape: f32[1,1024], index: 4, kind: input, shape index: {}]
  %s5 = inlined_call_operand.hbm [shape: f32[1024,128], index: 5, kind: input, shape index: {}]
  %s6 = inlined_call_operand.hbm [shape: f32[1,128], index: 6, kind: input, shape index: {}]
  %s7 = inlined_call_operand.vmem [shape: f32[16,128], index: 7, kind: output, shape index: {}]
  %s8 = sld [smem:[#allocation0]]
  $region62: #{discriminator_forward.1} parent=0
    _
  %s10 = ssub.s32 1, %s8
  %s11 = scalar_select 0, %s10, %s8
  $region1: #{discriminator_forward.1} parent=0
    #allocation2 [shape = 'u8[2097152]{0}', space=vmem, size = 0x200000, scoped, tag = 'input window, operand 1, single buffered']
    #allocation3 [shape = 's32[1]{0}', space=sflag, size = 0x4, scoped, tag = 'scoped memory for discriminator_forward.1']
    #allocation4 [shape = 'u8[4096]{0}', space=vmem, size = 0x1000, scoped, tag = 'input window, operand 2, single buffered']
    #allocation5 [shape = 's32[1]{0}', space=sflag, size = 0x4, scoped, tag = 'scoped memory for discriminator_forward.1']
    #allocation6 [shape = 'u8[2097152]{0}', space=vmem, size = 0x200000, scoped, tag = 'input window, operand 3, single buffered']
    #allocation7 [shape = 'u8[4096]{0}', space=vmem, size = 0x1000, scoped, tag = 'input window, operand 4, single buffered']
    #allocation8 [shape = 's32[1]{0}', space=sflag, size = 0x4, scoped, tag = 'scoped memory for discriminator_forward.1']
    #allocation9 [shape = 'u8[524288]{0}', space=vmem, size = 0x80000, scoped, tag = 'input window, operand 5, single buffered']
    #allocation10 [shape = 'u8[512]{0}', space=vmem, size = 0x400, scoped, tag = 'input window, operand 6, single buffered']
    #allocation11 [shape = 's32[1]{0}', space=sflag, size = 0x4, scoped, tag = 'scoped memory for discriminator_forward.1']
    %12 = vsyncpa [#allocation3], 0
    %13 = vsyncpa [#allocation5], 0
    %14 = vsyncpa [#allocation8], 0
    %15 = vsyncpa [#allocation11], 0
    // Predicated region
    $region2: #{discriminator_forward.1} parent=1 // pred_check
      _
    $region3: #{discriminator_forward.1} parent=1 // pred_check_branch
      %17 = sbr.rel (0) target = $region5
    $region4: #{discriminator_forward.1} parent=1 // pred_region
      _
    $region5: #{discriminator_forward.1} parent=1 // pred_fallthru
      _
    // Predicated region
    $region6: #{discriminator_forward.1} parent=1 // pred_check
      _
    $region7: #{discriminator_forward.1} parent=1 // pred_check_branch
      %19 = sbr.rel (0) target = $region9
    $region8: #{discriminator_forward.1} parent=1 // pred_region
      %21 = vsyncadd [#allocation3], 0
      %s22 = sshll.u32 %s1, 4
      %s23 = int_to_ptr.hbm [resolvable:$true] %s22
      %s24 = sshll.u32 [#allocation2], 4
      %s25 = int_to_ptr.vmem [resolvable:$true] %s24
      %30 = dma.hbm_to_vmem [thread:$0]  %s23, 65536, %s25, [#allocation3], 512, 512, 32
    $region9: #{discriminator_forward.1} parent=1 // pred_fallthru
      _
    // Predicated region
    $region10: #{discriminator_forward.1} parent=1 // pred_check
      _
    $region11: #{discriminator_forward.1} parent=1 // pred_check_branch
      %32 = sbr.rel (0) target = $region13
    $region12: #{discriminator_forward.1} parent=1 // pred_region
      %34 = vsyncadd [#allocation5], 0
      %s36 = sshll.u32 %s2, 4
      %s37 = int_to_ptr.hbm [resolvable:$true] %s36
      %s38 = sshll.u32 [#allocation4], 4
      %s39 = int_to_ptr.vmem [resolvable:$true] %s38
      %41 = dma.hbm_to_vmem [thread:$0]  %s37, 128, %s39, [#allocation5]
    $region13: #{discriminator_forward.1} parent=1 // pred_fallthru
      _
    // Predicated region
    $region14: #{discriminator_forward.1} parent=1 // pred_check
      _
    $region15: #{discriminator_forward.1} parent=1 // pred_check_branch
      %43 = sbr.rel (0) target = $region17
    $region16: #{discriminator_forward.1} parent=1 // pred_region
      %45 = vsyncadd [#allocation5], 0
      %s46 = sshll.u32 %s3, 4
      %s47 = int_to_ptr.hbm [resolvable:$true] %s46
      %s48 = sshll.u32 [#allocation6], 4
      %s49 = int_to_ptr.vmem [resolvable:$true] %s48
      %54 = dma.hbm_to_vmem [thread:$0]  %s47, 65536, %s49, [#allocation5], 512, 512, 32
    $region17: #{discriminator_forward.1} parent=1 // pred_fallthru
      _
    // Predicated region
    $region18: #{discriminator_forward.1} parent=1 // pred_check
      _
    $region19: #{discriminator_forward.1} parent=1 // pred_check_branch
      %56 = sbr.rel (0) target = $region21
    $region20: #{discriminator_forward.1} parent=1 // pred_region
      %58 = vsyncadd [#allocation8], 0
      %s60 = sshll.u32 %s4, 4
      %s61 = int_to_ptr.hbm [resolvable:$true] %s60
      %s62 = sshll.u32 [#allocation7], 4
      %s63 = int_to_ptr.vmem [resolvable:$true] %s62
      %65 = dma.hbm_to_vmem [thread:$0]  %s61, 128, %s63, [#allocation8]
    $region21: #{discriminator_forward.1} parent=1 // pred_fallthru
      _
    // Predicated region
    $region22: #{discriminator_forward.1} parent=1 // pred_check
      _
    $region23: #{discriminator_forward.1} parent=1 // pred_check_branch
      %67 = sbr.rel (0) target = $region25
    $region24: #{discriminator_forward.1} parent=1 // pred_region
      %69 = vsyncadd [#allocation8], 0
      %s70 = sshll.u32 %s5, 4
      %s71 = int_to_ptr.hbm [resolvable:$true] %s70
      %s72 = sshll.u32 [#allocation9], 4
      %s73 = int_to_ptr.vmem [resolvable:$true] %s72
      %78 = dma.hbm_to_vmem [thread:$0]  %s71, 16384, %s73, [#allocation8], 128, 128, 8
    $region25: #{discriminator_forward.1} parent=1 // pred_fallthru
      _
    // Predicated region
    $region26: #{discriminator_forward.1} parent=1 // pred_check
      _
    $region27: #{discriminator_forward.1} parent=1 // pred_check_branch
      %80 = sbr.rel (0) target = $region29
    $region28: #{discriminator_forward.1} parent=1 // pred_region
      %82 = vsyncadd [#allocation11], 0
      %s84 = sshll.u32 %s6, 4
      %s85 = int_to_ptr.hbm [resolvable:$true] %s84
      %s86 = sshll.u32 [#allocation10], 4
      %s87 = int_to_ptr.vmem [resolvable:$true] %s86
      %89 = dma.hbm_to_vmem [thread:$0]  %s85, 16, %s87, [#allocation11]
    $region29: #{discriminator_forward.1} parent=1 // pred_fallthru
      _
    // Predicated region
    $region30: #{discriminator_forward.1} parent=1 // pred_check
      _
    $region31: #{discriminator_forward.1} parent=1 // pred_check_branch
      %91 = sbr.rel (0) target = $region33
    $region32: #{discriminator_forward.1} parent=1 // pred_region
      %93 = dma.done [#allocation3], 65536
    $region33: #{discriminator_forward.1} parent=1 // pred_fallthru
      _
    // Predicated region
    $region34: #{discriminator_forward.1} parent=1 // pred_check
      _
    $region35: #{discriminator_forward.1} parent=1 // pred_check_branch
      %95 = sbr.rel (0) target = $region37
    $region36: #{discriminator_forward.1} parent=1 // pred_region
      %97 = dma.done [#allocation5], 128
    $region37: #{discriminator_forward.1} parent=1 // pred_fallthru
      _
    // Predicated region
    $region38: #{discriminator_forward.1} parent=1 // pred_check
      _
    $region39: #{discriminator_forward.1} parent=1 // pred_check_branch
      %99 = sbr.rel (0) target = $region41
    $region40: #{discriminator_forward.1} parent=1 // pred_region
      %101 = dma.done [#allocation5], 65536
    $region41: #{discriminator_forward.1} parent=1 // pred_fallthru
      _
    // Predicated region
    $region42: #{discriminator_forward.1} parent=1 // pred_check
      _
    $region43: #{discriminator_forward.1} parent=1 // pred_check_branch
      %103 = sbr.rel (0) target = $region45
    $region44: #{discriminator_forward.1} parent=1 // pred_region
      %105 = dma.done [#allocation8], 128
    $region45: #{discriminator_forward.1} parent=1 // pred_fallthru
      _
    // Predicated region
    $region46: #{discriminator_forward.1} parent=1 // pred_check
      _
    $region47: #{discriminator_forward.1} parent=1 // pred_check_branch
      %107 = sbr.rel (0) target = $region49
    $region48: #{discriminator_forward.1} parent=1 // pred_region
      %109 = dma.done [#allocation8], 16384
    $region49: #{discriminator_forward.1} parent=1 // pred_fallthru
      _
    // Predicated region
    $region50: #{discriminator_forward.1} parent=1 // pred_check
      _
    $region51: #{discriminator_forward.1} parent=1 // pred_check_branch
      %111 = sbr.rel (0) target = $region53
    $region52: #{discriminator_forward.1} parent=1 // pred_region
      %113 = dma.done [#allocation11], 16
    $region53: #{discriminator_forward.1} parent=1 // pred_fallthru
      _
    %v114 = vld [vmem:[%s0] sm:$0xff]
    %v115 = vld [vmem:[%s0 + $0x8] sm:$0xff]
    %v116 = vld [vmem:[%s0 + $0x10] sm:$0xff]
    %v117 = vld [vmem:[%s0 + $0x18] sm:$0xff]
    %v118 = vld [vmem:[%s0 + $0x20] sm:$0xff]
    %v119 = vld [vmem:[%s0 + $0x28] sm:$0xff]
    %v120 = vld [vmem:[%s0 + $0x30] sm:$0xff]
    %v121 = vld [vmem:[%s0 + $0x38] sm:$0xff]
    %v122 = vld [vmem:[#allocation2] sm:$0xff]
    %v123 = vld [vmem:[#allocation2 + $0x8] sm:$0xff]
    %v124 = vld [vmem:[#allocation2 + $0x10] sm:$0xff]
    %v125 = vld [vmem:[#allocation2 + $0x18] sm:$0xff]
    %v126 = vld [vmem:[#allocation2 + $0x20] sm:$0xff]
    %v127 = vld [vmem:[#allocation2 + $0x28] sm:$0xff]
    %v128 = vld [vmem:[#allocation2 + $0x30] sm:$0xff]
    %v129 = vld [vmem:[#allocation2 + $0x38] sm:$0xff]
    %v130 = vld [vmem:[#allocation2 + $0x40] sm:$0xff]
    %v131 = vld [vmem:[#allocation2 + $0x48] sm:$0xff]
    %v132 = vld [vmem:[#allocation2 + $0x50] sm:$0xff]
    %v133 = vld [vmem:[#allocation2 + $0x58] sm:$0xff]
    %v134 = vld [vmem:[#allocation2 + $0x60] sm:$0xff]
    %v135 = vld [vmem:[#allocation2 + $0x68] sm:$0xff]
    %v136 = vld [vmem:[#allocation2 + $0x70] sm:$0xff]
    %v137 = vld [vmem:[#allocation2 + $0x78] sm:$0xff]
    %v138 = vld [vmem:[#allocation2 + $0x80] sm:$0xff]
    %v139 = vld [vmem:[#allocation2 + $0x88] sm:$0xff]
    %v140 = vld [vmem:[#allocation2 + $0x90] sm:$0xff]
    %v141 = vld [vmem:[#allocation2 + $0x98] sm:$0xff]
    %v142 = vld [vmem:[#allocation2 + $0xa0] sm:$0xff]
    %v143 = vld [vmem:[#allocation2 + $0xa8] sm:$0xff]
    %v144 = vld [vmem:[#allocation2 + $0xb0] sm:$0xff]
    %v145 = vld [vmem:[#allocation2 + $0xb8] sm:$0xff]
    %v146 = vld [vmem:[#allocation2 + $0xc0] sm:$0xff]
    %v147 = vld [vmem:[#allocation2 + $0xc8] sm:$0xff]
    %v148 = vld [vmem:[#allocation2 + $0xd0] sm:$0xff]
    %v149 = vld [vmem:[#allocation2 + $0xd8] sm:$0xff]
    %v150 = vld [vmem:[#allocation2 + $0xe0] sm:$0xff]
    %v151 = vld [vmem:[#allocation2 + $0xe8] sm:$0xff]
    %v152 = vld [vmem:[#allocation2 + $0xf0] sm:$0xff]
    %v153 = vld [vmem:[#allocation2 + $0xf8] sm:$0xff]
    %v154 = vld [vmem:[#allocation2 + $0x100] sm:$0xff]
    %v155 = vld [vmem:[#allocation2 + $0x108] sm:$0xff]
    %v156 = vld [vmem:[#allocation2 + $0x110] sm:$0xff]
    %v157 = vld [vmem:[#allocation2 + $0x118] sm:$0xff]
    %v158 = vld [vmem:[#allocation2 + $0x120] sm:$0xff]
    %v159 = vld [vmem:[#allocation2 + $0x128] sm:$0xff]
    %v160 = vld [vmem:[#allocation2 + $0x130] sm:$0xff]
    %v161 = vld [vmem:[#allocation2 + $0x138] sm:$0xff]
    %v162 = vld [vmem:[#allocation2 + $0x140] sm:$0xff]
    %v163 = vld [vmem:[#allocation2 + $0x148] sm:$0xff]
    %v164 = vld [vmem:[#allocation2 + $0x150] sm:$0xff]
    %v165 = vld [vmem:[#allocation2 + $0x158] sm:$0xff]
    %v166 = vld [vmem:[#allocation2 + $0x160] sm:$0xff]
    %v167 = vld [vmem:[#allocation2 + $0x168] sm:$0xff]
    %v168 = vld [vmem:[#allocation2 + $0x170] sm:$0xff]
    %v169 = vld [vmem:[#allocation2 + $0x178] sm:$0xff]
    %v170 = vld [vmem:[#allocation2 + $0x180] sm:$0xff]
    %v171 = vld [vmem:[#allocation2 + $0x188] sm:$0xff]
    %v172 = vld [vmem:[#allocation2 + $0x190] sm:$0xff]
    %v173 = vld [vmem:[#allocation2 + $0x198] sm:$0xff]
    %v174 = vld [vmem:[#allocation2 + $0x1a0] sm:$0xff]
    %v175 = vld [vmem:[#allocation2 + $0x1a8] sm:$0xff]
    %v176 = vld [vmem:[#allocation2 + $0x1b0] sm:$0xff]
    %v177 = vld [vmem:[#allocation2 + $0x1b8] sm:$0xff]
    %v178 = vld [vmem:[#allocation2 + $0x1c0] sm:$0xff]
    %v179 = vld [vmem:[#allocation2 + $0x1c8] sm:$0xff]
    %v180 = vld [vmem:[#allocation2 + $0x1d0] sm:$0xff]
    %v181 = vld [vmem:[#allocation2 + $0x1d8] sm:$0xff]
    %v182 = vld [vmem:[#allocation2 + $0x1e0] sm:$0xff]
    %v183 = vld [vmem:[#allocation2 + $0x1e8] sm:$0xff]
    %v184 = vld [vmem:[#allocation2 + $0x1f0] sm:$0xff]
    %v185 = vld [vmem:[#allocation2 + $0x1f8] sm:$0xff]
    %v186 = vld [vmem:[#allocation2 + $0x200] sm:$0xff]
    %v187 = vld [vmem:[#allocation2 + $0x208] sm:$0xff]
    %v188 = vld [vmem:[#allocation2 + $0x210] sm:$0xff]
    %v189 = vld [vmem:[#allocation2 + $0x218] sm:$0xff]
    %v190 = vld [vmem:[#allocation2 + $0x220] sm:$0xff]
    %v191 = vld [vmem:[#allocation2 + $0x228] sm:$0xff]
    %v192 = vld [vmem:[#allocation2 + $0x230] sm:$0xff]
    %v193 = vld [vmem:[#allocation2 + $0x238] sm:$0xff]
    %v194 = vld [vmem:[#allocation2 + $0x240] sm:$0xff]
    %v195 = vld [vmem:[#allocation2 + $0x248] sm:$0xff]
    %v196 = vld [vmem:[#allocation2 + $0x250] sm:$0xff]
    %v197 = vld [vmem:[#allocation2 + $0x258] sm:$0xff]
    %v198 = vld [vmem:[#allocation2 + $0x260] sm:$0xff]
    %v199 = vld [vmem:[#allocation2 + $0x268] sm:$0xff]
    %v200 = vld [vmem:[#allocation2 + $0x270] sm:$0xff]
    %v201 = vld [vmem:[#allocation2 + $0x278] sm:$0xff]
    %v202 = vld [vmem:[#allocation2 + $0x280] sm:$0xff]
    %v203 = vld [vmem:[#allocation2 + $0x288] sm:$0xff]
    %v204 = vld [vmem:[#allocation2 + $0x290] sm:$0xff]
    %v205 = vld [vmem:[#allocation2 + $0x298] sm:$0xff]
    %v206 = vld [vmem:[#allocation2 + $0x2a0] sm:$0xff]
    %v207 = vld [vmem:[#allocation2 + $0x2a8] sm:$0xff]
    %v208 = vld [vmem:[#allocation2 + $0x2b0] sm:$0xff]
    %v209 = vld [vmem:[#allocation2 + $0x2b8] sm:$0xff]
    %v210 = vld [vmem:[#allocation2 + $0x2c0] sm:$0xff]
    %v211 = vld [vmem:[#allocation2 + $0x2c8] sm:$0xff]
    %v212 = vld [vmem:[#allocation2 + $0x2d0] sm:$0xff]
    %v213 = vld [vmem:[#allocation2 + $0x2d8] sm:$0xff]
    %v214 = vld [vmem:[#allocation2 + $0x2e0] sm:$0xff]
    %v215 = vld [vmem:[#allocation2 + $0x2e8] sm:$0xff]
    %v216 = vld [vmem:[#allocation2 + $0x2f0] sm:$0xff]
    %v217 = vld [vmem:[#allocation2 + $0x2f8] sm:$0xff]
    %v218 = vld [vmem:[#allocation2 + $0x300] sm:$0xff]
    %v219 = vld [vmem:[#allocation2 + $0x308] sm:$0xff]
    %v220 = vld [vmem:[#allocation2 + $0x310] sm:$0xff]
    %v221 = vld [vmem:[#allocation2 + $0x318] sm:$0xff]
    %v222 = vld [vmem:[#allocation2 + $0x320] sm:$0xff]
    %v223 = vld [vmem:[#allocation2 + $0x328] sm:$0xff]
    %v224 = vld [vmem:[#allocation2 + $0x330] sm:$0xff]
    %v225 = vld [vmem:[#allocation2 + $0x338] sm:$0xff]
    %v226 = vld [vmem:[#allocation2 + $0x340] sm:$0xff]
    %v227 = vld [vmem:[#allocation2 + $0x348] sm:$0xff]
    %v228 = vld [vmem:[#allocation2 + $0x350] sm:$0xff]
    %v229 = vld [vmem:[#allocation2 + $0x358] sm:$0xff]
    %v230 = vld [vmem:[#allocation2 + $0x360] sm:$0xff]
    %v231 = vld [vmem:[#allocation2 + $0x368] sm:$0xff]
    %v232 = vld [vmem:[#allocation2 + $0x370] sm:$0xff]
    %v233 = vld [vmem:[#allocation2 + $0x378] sm:$0xff]
    %v234 = vld [vmem:[#allocation2 + $0x380] sm:$0xff]
    %v235 = vld [vmem:[#allocation2 + $0x388] sm:$0xff]
    %v236 = vld [vmem:[#allocation2 + $0x390] sm:$0xff]
    %v237 = vld [vmem:[#allocation2 + $0x398] sm:$0xff]
    %v238 = vld [vmem:[#allocation2 + $0x3a0] sm:$0xff]
    %v239 = vld [vmem:[#allocation2 + $0x3a8] sm:$0xff]
    %v240 = vld [vmem:[#allocation2 + $0x3b0] sm:$0xff]
    %v241 = vld [vmem:[#allocation2 + $0x3b8] sm:$0xff]
    %v242 = vld [vmem:[#allocation2 + $0x3c0] sm:$0xff]
    %v243 = vld [vmem:[#allocation2 + $0x3c8] sm:$0xff]
    %v244 = vld [vmem:[#allocation2 + $0x3d0] sm:$0xff]
    %v245 = vld [vmem:[#allocation2 + $0x3d8] sm:$0xff]
    %v246 = vld [vmem:[#allocation2 + $0x3e0] sm:$0xff]
    %v247 = vld [vmem:[#allocation2 + $0x3e8] sm:$0xff]
    %v248 = vld [vmem:[#allocation2 + $0x3f0] sm:$0xff]
    %v249 = vld [vmem:[#allocation2 + $0x3f8] sm:$0xff]
    %v250 = vld [vmem:[#allocation2 + $0x400] sm:$0xff]
    %v251 = vld [vmem:[#allocation2 + $0x408] sm:$0xff]
    %v252 = vld [vmem:[#allocation2 + $0x410] sm:$0xff]
    %v253 = vld [vmem:[#allocation2 + $0x418] sm:$0xff]
    %v254 = vld [vmem:[#allocation2 + $0x420] sm:$0xff]
    %v255 = vld [vmem:[#allocation2 + $0x428] sm:$0xff]
    %v256 = vld [vmem:[#allocation2 + $0x430] sm:$0xff]
    %v257 = vld [vmem:[#allocation2 + $0x438] sm:$0xff]
    %v258 = vld [vmem:[#allocation2 + $0x440] sm:$0xff]
    %v259 = vld [vmem:[#allocation2 + $0x448] sm:$0xff]
    %v260 = vld [vmem:[#allocation2 + $0x450] sm:$0xff]
    %v261 = vld [vmem:[#allocation2 + $0x458] sm:$0xff]
    %v262 = vld [vmem:[#allocation2 + $0x460] sm:$0xff]
    %v263 = vld [vmem:[#allocation2 + $0x468] sm:$0xff]
    %v264 = vld [vmem:[#allocation2 + $0x470] sm:$0xff]
    %v265 = vld [vmem:[#allocation2 + $0x478] sm:$0xff]
    %v266 = vld [vmem:[#allocation2 + $0x480] sm:$0xff]
    %v267 = vld [vmem:[#allocation2 + $0x488] sm:$0xff]
    %v268 = vld [vmem:[#allocation2 + $0x490] sm:$0xff]
    %v269 = vld [vmem:[#allocation2 + $0x498] sm:$0xff]
    %v270 = vld [vmem:[#allocation2 + $0x4a0] sm:$0xff]
    %v271 = vld [vmem:[#allocation2 + $0x4a8] sm:$0xff]
    %v272 = vld [vmem:[#allocation2 + $0x4b0] sm:$0xff]
    %v273 = vld [vmem:[#allocation2 + $0x4b8] sm:$0xff]
    %v274 = vld [vmem:[#allocation2 + $0x4c0] sm:$0xff]
    %v275 = vld [vmem:[#allocation2 + $0x4c8] sm:$0xff]
    %v276 = vld [vmem:[#allocation2 + $0x4d0] sm:$0xff]
    %v277 = vld [vmem:[#allocation2 + $0x4d8] sm:$0xff]
    %v278 = vld [vmem:[#allocation2 + $0x4e0] sm:$0xff]
    %v279 = vld [vmem:[#allocation2 + $0x4e8] sm:$0xff]
    %v280 = vld [vmem:[#allocation2 + $0x4f0] sm:$0xff]
    %v281 = vld [vmem:[#allocation2 + $0x4f8] sm:$0xff]
    %v282 = vld [vmem:[#allocation2 + $0x500] sm:$0xff]
    %v283 = vld [vmem:[#allocation2 + $0x508] sm:$0xff]
    %v284 = vld [vmem:[#allocation2 + $0x510] sm:$0xff]
    %v285 = vld [vmem:[#allocation2 + $0x518] sm:$0xff]
    %v286 = vld [vmem:[#allocation2 + $0x520] sm:$0xff]
    %v287 = vld [vmem:[#allocation2 + $0x528] sm:$0xff]
    %v288 = vld [vmem:[#allocation2 + $0x530] sm:$0xff]
    %v289 = vld [vmem:[#allocation2 + $0x538] sm:$0xff]
    %v290 = vld [vmem:[#allocation2 + $0x540] sm:$0xff]
    %v291 = vld [vmem:[#allocation2 + $0x548] sm:$0xff]
    %v292 = vld [vmem:[#allocation2 + $0x550] sm:$0xff]
    %v293 = vld [vmem:[#allocation2 + $0x558] sm:$0xff]
    %v294 = vld [vmem:[#allocation2 + $0x560] sm:$0xff]
    %v295 = vld [vmem:[#allocation2 + $0x568] sm:$0xff]
    %v296 = vld [vmem:[#allocation2 + $0x570] sm:$0xff]
    %v297 = vld [vmem:[#allocation2 + $0x578] sm:$0xff]
    %v298 = vld [vmem:[#allocation2 + $0x580] sm:$0xff]
    %v299 = vld [vmem:[#allocation2 + $0x588] sm:$0xff]
    %v300 = vld [vmem:[#allocation2 + $0x590] sm:$0xff]
    %v301 = vld [vmem:[#allocation2 + $0x598] sm:$0xff]
    %v302 = vld [vmem:[#allocation2 + $0x5a0] sm:$0xff]
    %v303 = vld [vmem:[#allocation2 + $0x5a8] sm:$0xff]
    %v304 = vld [vmem:[#allocation2 + $0x5b0] sm:$0xff]
    %v305 = vld [vmem:[#allocation2 + $0x5b8] sm:$0xff]
    %v306 = vld [vmem:[#allocation2 + $0x5c0] sm:$0xff]
    %v307 = vld [vmem:[#allocation2 + $0x5c8] sm:$0xff]
    %v308 = vld [vmem:[#allocation2 + $0x5d0] sm:$0xff]
    %v309 = vld [vmem:[#allocation2 + $0x5d8] sm:$0xff]
    %v310 = vld [vmem:[#allocation2 + $0x5e0] sm:$0xff]
    %v311 = vld [vmem:[#allocation2 + $0x5e8] sm:$0xff]
    %v312 = vld [vmem:[#allocation2 + $0x5f0] sm:$0xff]
    %v313 = vld [vmem:[#allocation2 + $0x5f8] sm:$0xff]
    %v314 = vld [vmem:[#allocation2 + $0x600] sm:$0xff]
    %v315 = vld [vmem:[#allocation2 + $0x608] sm:$0xff]
    %v316 = vld [vmem:[#allocation2 + $0x610] sm:$0xff]
    %v317 = vld [vmem:[#allocation2 + $0x618] sm:$0xff]
    %v318 = vld [vmem:[#allocation2 + $0x620] sm:$0xff]
    %v319 = vld [vmem:[#allocation2 + $0x628] sm:$0xff]
    %v320 = vld [vmem:[#allocation2 + $0x630] sm:$0xff]
    %v321 = vld [vmem:[#allocation2 + $0x638] sm:$0xff]
    %v322 = vld [vmem:[#allocation2 + $0x640] sm:$0xff]
    %v323 = vld [vmem:[#allocation2 + $0x648] sm:$0xff]
    %v324 = vld [vmem:[#allocation2 + $0x650] sm:$0xff]
    %v325 = vld [vmem:[#allocation2 + $0x658] sm:$0xff]
    %v326 = vld [vmem:[#allocation2 + $0x660] sm:$0xff]
    %v327 = vld [vmem:[#allocation2 + $0x668] sm:$0xff]
    %v328 = vld [vmem:[#allocation2 + $0x670] sm:$0xff]
    %v329 = vld [vmem:[#allocation2 + $0x678] sm:$0xff]
    %v330 = vld [vmem:[#allocation2 + $0x680] sm:$0xff]
    %v331 = vld [vmem:[#allocation2 + $0x688] sm:$0xff]
    %v332 = vld [vmem:[#allocation2 + $0x690] sm:$0xff]
    %v333 = vld [vmem:[#allocation2 + $0x698] sm:$0xff]
    %v334 = vld [vmem:[#allocation2 + $0x6a0] sm:$0xff]
    %v335 = vld [vmem:[#allocation2 + $0x6a8] sm:$0xff]
    %v336 = vld [vmem:[#allocation2 + $0x6b0] sm:$0xff]
    %v337 = vld [vmem:[#allocation2 + $0x6b8] sm:$0xff]
    %v338 = vld [vmem:[#allocation2 + $0x6c0] sm:$0xff]
    %v339 = vld [vmem:[#allocation2 + $0x6c8] sm:$0xff]
    %v340 = vld [vmem:[#allocation2 + $0x6d0] sm:$0xff]
    %v341 = vld [vmem:[#allocation2 + $0x6d8] sm:$0xff]
    %v342 = vld [vmem:[#allocation2 + $0x6e0] sm:$0xff]
    %v343 = vld [vmem:[#allocation2 + $0x6e8] sm:$0xff]
    %v344 = vld [vmem:[#allocation2 + $0x6f0] sm:$0xff]
    %v345 = vld [vmem:[#allocation2 + $0x6f8] sm:$0xff]
    %v346 = vld [vmem:[#allocation2 + $0x700] sm:$0xff]
    %v347 = vld [vmem:[#allocation2 + $0x708] sm:$0xff]
    %v348 = vld [vmem:[#allocation2 + $0x710] sm:$0xff]
    %v349 = vld [vmem:[#allocation2 + $0x718] sm:$0xff]
    %v350 = vld [vmem:[#allocation2 + $0x720] sm:$0xff]
    %v351 = vld [vmem:[#allocation2 + $0x728] sm:$0xff]
    %v352 = vld [vmem:[#allocation2 + $0x730] sm:$0xff]
    %v353 = vld [vmem:[#allocation2 + $0x738] sm:$0xff]
    %v354 = vld [vmem:[#allocation2 + $0x740] sm:$0xff]
    %v355 = vld [vmem:[#allocation2 + $0x748] sm:$0xff]
    %v356 = vld [vmem:[#allocation2 + $0x750] sm:$0xff]
    %v357 = vld [vmem:[#allocation2 + $0x758] sm:$0xff]
    %v358 = vld [vmem:[#allocation2 + $0x760] sm:$0xff]
    %v359 = vld [vmem:[#allocation2 + $0x768] sm:$0xff]
    %v360 = vld [vmem:[#allocation2 + $0x770] sm:$0xff]
    %v361 = vld [vmem:[#allocation2 + $0x778] sm:$0xff]
    %v362 = vld [vmem:[#allocation2 + $0x780] sm:$0xff]
    %v363 = vld [vmem:[#allocation2 + $0x788] sm:$0xff]
    %v364 = vld [vmem:[#allocation2 + $0x790] sm:$0xff]
    %v365 = vld [vmem:[#allocation2 + $0x798] sm:$0xff]
    %v366 = vld [vmem:[#allocation2 + $0x7a0] sm:$0xff]
    %v367 = vld [vmem:[#allocation2 + $0x7a8] sm:$0xff]
    %v368 = vld [vmem:[#allocation2 + $0x7b0] sm:$0xff]
    %v369 = vld [vmem:[#allocation2 + $0x7b8] sm:$0xff]
    %v370 = vld [vmem:[#allocation2 + $0x7c0] sm:$0xff]
    %v371 = vld [vmem:[#allocation2 + $0x7c8] sm:$0xff]
    %v372 = vld [vmem:[#allocation2 + $0x7d0] sm:$0xff]
    %v373 = vld [vmem:[#allocation2 + $0x7d8] sm:$0xff]
    %v374 = vld [vmem:[#allocation2 + $0x7e0] sm:$0xff]
    %v375 = vld [vmem:[#allocation2 + $0x7e8] sm:$0xff]
    %v376 = vld [vmem:[#allocation2 + $0x7f0] sm:$0xff]
    %v377 = vld [vmem:[#allocation2 + $0x7f8] sm:$0xff]
    %v378 = vld [vmem:[#allocation2 + $0x800] sm:$0xff]
    %v379 = vld [vmem:[#allocation2 + $0x808] sm:$0xff]
    %v380 = vld [vmem:[#allocation2 + $0x810] sm:$0xff]
    %v381 = vld [vmem:[#allocation2 + $0x818] sm:$0xff]
    %v382 = vld [vmem:[#allocation2 + $0x820] sm:$0xff]
    %v383 = vld [vmem:[#allocation2 + $0x828] sm:$0xff]
    %v384 = vld [vmem:[#allocation2 + $0x830] sm:$0xff]
    %v385 = vld [vmem:[#allocation2 + $0x838] sm:$0xff]
    %v386 = vld [vmem:[#allocation2 + $0x840] sm:$0xff]
    %v387 = vld [vmem:[#allocation2 + $0x848] sm:$0xff]
    %v388 = vld [vmem:[#allocation2 + $0x850] sm:$0xff]
    %v389 = vld [vmem:[#allocation2 + $0x858] sm:$0xff]
    %v390 = vld [vmem:[#allocation2 + $0x860] sm:$0xff]
    %v391 = vld [vmem:[#allocation2 + $0x868] sm:$0xff]
    %v392 = vld [vmem:[#allocation2 + $0x870] sm:$0xff]
    %v393 = vld [vmem:[#allocation2 + $0x878] sm:$0xff]
    %v394 = vld [vmem:[#allocation2 + $0x880] sm:$0xff]
    %v395 = vld [vmem:[#allocation2 + $0x888] sm:$0xff]
    %v396 = vld [vmem:[#allocation2 + $0x890] sm:$0xff]
    %v397 = vld [vmem:[#allocation2 + $0x898] sm:$0xff]
    %v398 = vld [vmem:[#allocation2 + $0x8a0] sm:$0xff]
    %v399 = vld [vmem:[#allocation2 + $0x8a8] sm:$0xff]
    %v400 = vld [vmem:[#allocation2 + $0x8b0] sm:$0xff]
    %v401 = vld [vmem:[#allocation2 + $0x8b8] sm:$0xff]
    %v402 = vld [vmem:[#allocation2 + $0x8c0] sm:$0xff]
    %v403 = vld [vmem:[#allocation2 + $0x8c8] sm:$0xff]
    %v404 = vld [vmem:[#allocation2 + $0x8d0] sm:$0xff]
    %v405 = vld [vmem:[#allocation2 + $0x8d8] sm:$0xff]
    %v406 = vld [vmem:[#allocation2 + $0x8e0] sm:$0xff]
    %v407 = vld [vmem:[#allocation2 + $0x8e8] sm:$0xff]
    %v408 = vld [vmem:[#allocation2 + $0x8f0] sm:$0xff]
    %v409 = vld [vmem:[#allocation2 + $0x8f8] sm:$0xff]
    %v410 = vld [vmem:[#allocation2 + $0x900] sm:$0xff]
    %v411 = vld [vmem:[#allocation2 + $0x908] sm:$0xff]
    %v412 = vld [vmem:[#allocation2 + $0x910] sm:$0xff]
    %v413 = vld [vmem:[#allocation2 + $0x918] sm:$0xff]
    %v414 = vld [vmem:[#allocation2 + $0x920] sm:$0xff]
    %v415 = vld [vmem:[#allocation2 + $0x928] sm:$0xff]
    %v416 = vld [vmem:[#allocation2 + $0x930] sm:$0xff]
    %v417 = vld [vmem:[#allocation2 + $0x938] sm:$0xff]
    %v418 = vld [vmem:[#allocation2 + $0x940] sm:$0xff]
    %v419 = vld [vmem:[#allocation2 + $0x948] sm:$0xff]
    %v420 = vld [vmem:[#allocation2 + $0x950] sm:$0xff]
    %v421 = vld [vmem:[#allocation2 + $0x958] sm:$0xff]
    %v422 = vld [vmem:[#allocation2 + $0x960] sm:$0xff]
    %v423 = vld [vmem:[#allocation2 + $0x968] sm:$0xff]
    %v424 = vld [vmem:[#allocation2 + $0x970] sm:$0xff]
    %v425 = vld [vmem:[#allocation2 + $0x978] sm:$0xff]
    %v426 = vld [vmem:[#allocation2 + $0x980] sm:$0xff]
    %v427 = vld [vmem:[#allocation2 + $0x988] sm:$0xff]
    %v428 = vld [vmem:[#allocation2 + $0x990] sm:$0xff]
    %v429 = vld [vmem:[#allocation2 + $0x998] sm:$0xff]
    %v430 = vld [vmem:[#allocation2 + $0x9a0] sm:$0xff]
    %v431 = vld [vmem:[#allocation2 + $0x9a8] sm:$0xff]
    %v432 = vld [vmem:[#allocation2 + $0x9b0] sm:$0xff]
    %v433 = vld [vmem:[#allocation2 + $0x9b8] sm:$0xff]
    %v434 = vld [vmem:[#allocation2 + $0x9c0] sm:$0xff]
    %v435 = vld [vmem:[#allocation2 + $0x9c8] sm:$0xff]
    %v436 = vld [vmem:[#allocation2 + $0x9d0] sm:$0xff]
    %v437 = vld [vmem:[#allocation2 + $0x9d8] sm:$0xff]
    %v438 = vld [vmem:[#allocation2 + $0x9e0] sm:$0xff]
    %v439 = vld [vmem:[#allocation2 + $0x9e8] sm:$0xff]
    %v440 = vld [vmem:[#allocation2 + $0x9f0] sm:$0xff]
    %v441 = vld [vmem:[#allocation2 + $0x9f8] sm:$0xff]
    %v442 = vld [vmem:[#allocation2 + $0xa00] sm:$0xff]
    %v443 = vld [vmem:[#allocation2 + $0xa08] sm:$0xff]
    %v444 = vld [vmem:[#allocation2 + $0xa10] sm:$0xff]
    %v445 = vld [vmem:[#allocation2 + $0xa18] sm:$0xff]
    %v446 = vld [vmem:[#allocation2 + $0xa20] sm:$0xff]
    %v447 = vld [vmem:[#allocation2 + $0xa28] sm:$0xff]
    %v448 = vld [vmem:[#allocation2 + $0xa30] sm:$0xff]
    %v449 = vld [vmem:[#allocation2 + $0xa38] sm:$0xff]
    %v450 = vld [vmem:[#allocation2 + $0xa40] sm:$0xff]
    %v451 = vld [vmem:[#allocation2 + $0xa48] sm:$0xff]
    %v452 = vld [vmem:[#allocation2 + $0xa50] sm:$0xff]
    %v453 = vld [vmem:[#allocation2 + $0xa58] sm:$0xff]
    %v454 = vld [vmem:[#allocation2 + $0xa60] sm:$0xff]
    %v455 = vld [vmem:[#allocation2 + $0xa68] sm:$0xff]
    %v456 = vld [vmem:[#allocation2 + $0xa70] sm:$0xff]
    %v457 = vld [vmem:[#allocation2 + $0xa78] sm:$0xff]
    %v458 = vld [vmem:[#allocation2 + $0xa80] sm:$0xff]
    %v459 = vld [vmem:[#allocation2 + $0xa88] sm:$0xff]
    %v460 = vld [vmem:[#allocation2 + $0xa90] sm:$0xff]
    %v461 = vld [vmem:[#allocation2 + $0xa98] sm:$0xff]
    %v462 = vld [vmem:[#allocation2 + $0xaa0] sm:$0xff]
    %v463 = vld [vmem:[#allocation2 + $0xaa8] sm:$0xff]
    %v464 = vld [vmem:[#allocation2 + $0xab0] sm:$0xff]
    %v465 = vld [vmem:[#allocation2 + $0xab8] sm:$0xff]
    %v466 = vld [vmem:[#allocation2 + $0xac0] sm:$0xff]
    %v467 = vld [vmem:[#allocation2 + $0xac8] sm:$0xff]
    %v468 = vld [vmem:[#allocation2 + $0xad0] sm:$0xff]
    %v469 = vld [vmem:[#allocation2 + $0xad8] sm:$0xff]
    %v470 = vld [vmem:[#allocation2 + $0xae0] sm:$0xff]
    %v471 = vld [vmem:[#allocation2 + $0xae8] sm:$0xff]
    %v472 = vld [vmem:[#allocation2 + $0xaf0] sm:$0xff]
    %v473 = vld [vmem:[#allocation2 + $0xaf8] sm:$0xff]
    %v474 = vld [vmem:[#allocation2 + $0xb00] sm:$0xff]
    %v475 = vld [vmem:[#allocation2 + $0xb08] sm:$0xff]
    %v476 = vld [vmem:[#allocation2 + $0xb10] sm:$0xff]
    %v477 = vld [vmem:[#allocation2 + $0xb18] sm:$0xff]
    %v478 = vld [vmem:[#allocation2 + $0xb20] sm:$0xff]
    %v479 = vld [vmem:[#allocation2 + $0xb28] sm:$0xff]
    %v480 = vld [vmem:[#allocation2 + $0xb30] sm:$0xff]
    %v481 = vld [vmem:[#allocation2 + $0xb38] sm:$0xff]
    %v482 = vld [vmem:[#allocation2 + $0xb40] sm:$0xff]
    %v483 = vld [vmem:[#allocation2 + $0xb48] sm:$0xff]
    %v484 = vld [vmem:[#allocation2 + $0xb50] sm:$0xff]
    %v485 = vld [vmem:[#allocation2 + $0xb58] sm:$0xff]
    %v486 = vld [vmem:[#allocation2 + $0xb60] sm:$0xff]
    %v487 = vld [vmem:[#allocation2 + $0xb68] sm:$0xff]
    %v488 = vld [vmem:[#allocation2 + $0xb70] sm:$0xff]
    %v489 = vld [vmem:[#allocation2 + $0xb78] sm:$0xff]
    %v490 = vld [vmem:[#allocation2 + $0xb80] sm:$0xff]
    %v491 = vld [vmem:[#allocation2 + $0xb88] sm:$0xff]
    %v492 = vld [vmem:[#allocation2 + $0xb90] sm:$0xff]
    %v493 = vld [vmem:[#allocation2 + $0xb98] sm:$0xff]
    %v494 = vld [vmem:[#allocation2 + $0xba0] sm:$0xff]
    %v495 = vld [vmem:[#allocation2 + $0xba8] sm:$0xff]
    %v496 = vld [vmem:[#allocation2 + $0xbb0] sm:$0xff]
    %v497 = vld [vmem:[#allocation2 + $0xbb8] sm:$0xff]
    %v498 = vld [vmem:[#allocation2 + $0xbc0] sm:$0xff]
    %v499 = vld [vmem:[#allocation2 + $0xbc8] sm:$0xff]
    %v500 = vld [vmem:[#allocation2 + $0xbd0] sm:$0xff]
    %v501 = vld [vmem:[#allocation2 + $0xbd8] sm:$0xff]
    %v502 = vld [vmem:[#allocation2 + $0xbe0] sm:$0xff]
    %v503 = vld [vmem:[#allocation2 + $0xbe8] sm:$0xff]
    %v504 = vld [vmem:[#allocation2 + $0xbf0] sm:$0xff]
    %v505 = vld [vmem:[#allocation2 + $0xbf8] sm:$0xff]
    %v506 = vld [vmem:[#allocation2 + $0xc00] sm:$0xff]
    %v507 = vld [vmem:[#allocation2 + $0xc08] sm:$0xff]
    %v508 = vld [vmem:[#allocation2 + $0xc10] sm:$0xff]
    %v509 = vld [vmem:[#allocation2 + $0xc18] sm:$0xff]
    %v510 = vld [vmem:[#allocation2 + $0xc20] sm:$0xff]
    %v511 = vld [vmem:[#allocation2 + $0xc28] sm:$0xff]
    %v512 = vld [vmem:[#allocation2 + $0xc30] sm:$0xff]
    %v513 = vld [vmem:[#allocation2 + $0xc38] sm:$0xff]
    %v514 = vld [vmem:[#allocation2 + $0xc40] sm:$0xff]
    %v515 = vld [vmem:[#allocation2 + $0xc48] sm:$0xff]
    %v516 = vld [vmem:[#allocation2 + $0xc50] sm:$0xff]
    %v517 = vld [vmem:[#allocation2 + $0xc58] sm:$0xff]
    %v518 = vld [vmem:[#allocation2 + $0xc60] sm:$0xff]
    %v519 = vld [vmem:[#allocation2 + $0xc68] sm:$0xff]
    %v520 = vld [vmem:[#allocation2 + $0xc70] sm:$0xff]
    %v521 = vld [vmem:[#allocation2 + $0xc78] sm:$0xff]
    %v522 = vld [vmem:[#allocation2 + $0xc80] sm:$0xff]
    %v523 = vld [vmem:[#allocation2 + $0xc88] sm:$0xff]
    %v524 = vld [vmem:[#allocation2 + $0xc90] sm:$0xff]
    %v525 = vld [vmem:[#allocation2 + $0xc98] sm:$0xff]
    %v526 = vld [vmem:[#allocation2 + $0xca0] sm:$0xff]
    %v527 = vld [vmem:[#allocation2 + $0xca8] sm:$0xff]
    %v528 = vld [vmem:[#allocation2 + $0xcb0] sm:$0xff]
    %v529 = vld [vmem:[#allocation2 + $0xcb8] sm:$0xff]
    %v530 = vld [vmem:[#allocation2 + $0xcc0] sm:$0xff]
    %v531 = vld [vmem:[#allocation2 + $0xcc8] sm:$0xff]
    %v532 = vld [vmem:[#allocation2 + $0xcd0] sm:$0xff]
    %v533 = vld [vmem:[#allocation2 + $0xcd8] sm:$0xff]
    %v534 = vld [vmem:[#allocation2 + $0xce0] sm:$0xff]
    %v535 = vld [vmem:[#allocation2 + $0xce8] sm:$0xff]
    %v536 = vld [vmem:[#allocation2 + $0xcf0] sm:$0xff]
    %v537 = vld [vmem:[#allocation2 + $0xcf8] sm:$0xff]
    %v538 = vld [vmem:[#allocation2 + $0xd00] sm:$0xff]
    %v539 = vld [vmem:[#allocation2 + $0xd08] sm:$0xff]
    %v540 = vld [vmem:[#allocation2 + $0xd10] sm:$0xff]
    %v541 = vld [vmem:[#allocation2 + $0xd18] sm:$0xff]
    %v542 = vld [vmem:[#allocation2 + $0xd20] sm:$0xff]
    %v543 = vld [vmem:[#allocation2 + $0xd28] sm:$0xff]
    %v544 = vld [vmem:[#allocation2 + $0xd30] sm:$0xff]
    %v545 = vld [vmem:[#allocation2 + $0xd38] sm:$0xff]
    %v546 = vld [vmem:[#allocation2 + $0xd40] sm:$0xff]
    %v547 = vld [vmem:[#allocation2 + $0xd48] sm:$0xff]
    %v548 = vld [vmem:[#allocation2 + $0xd50] sm:$0xff]
    %v549 = vld [vmem:[#allocation2 + $0xd58] sm:$0xff]
    %v550 = vld [vmem:[#allocation2 + $0xd60] sm:$0xff]
    %v551 = vld [vmem:[#allocation2 + $0xd68] sm:$0xff]
    %v552 = vld [vmem:[#allocation2 + $0xd70] sm:$0xff]
    %v553 = vld [vmem:[#allocation2 + $0xd78] sm:$0xff]
    %v554 = vld [vmem:[#allocation2 + $0xd80] sm:$0xff]
    %v555 = vld [vmem:[#allocation2 + $0xd88] sm:$0xff]
    %v556 = vld [vmem:[#allocation2 + $0xd90] sm:$0xff]
    %v557 = vld [vmem:[#allocation2 + $0xd98] sm:$0xff]
    %v558 = vld [vmem:[#allocation2 + $0xda0] sm:$0xff]
    %v559 = vld [vmem:[#allocation2 + $0xda8] sm:$0xff]
    %v560 = vld [vmem:[#allocation2 + $0xdb0] sm:$0xff]
    %v561 = vld [vmem:[#allocation2 + $0xdb8] sm:$0xff]
    %v562 = vld [vmem:[#allocation2 + $0xdc0] sm:$0xff]
    %v563 = vld [vmem:[#allocation2 + $0xdc8] sm:$0xff]
    %v564 = vld [vmem:[#allocation2 + $0xdd0] sm:$0xff]
    %v565 = vld [vmem:[#allocation2 + $0xdd8] sm:$0xff]
    %v566 = vld [vmem:[#allocation2 + $0xde0] sm:$0xff]
    %v567 = vld [vmem:[#allocation2 + $0xde8] sm:$0xff]
    %v568 = vld [vmem:[#allocation2 + $0xdf0] sm:$0xff]
    %v569 = vld [vmem:[#allocation2 + $0xdf8] sm:$0xff]
    %v570 = vld [vmem:[#allocation2 + $0xe00] sm:$0xff]
    %v571 = vld [vmem:[#allocation2 + $0xe08] sm:$0xff]
    %v572 = vld [vmem:[#allocation2 + $0xe10] sm:$0xff]
    %v573 = vld [vmem:[#allocation2 + $0xe18] sm:$0xff]
    %v574 = vld [vmem:[#allocation2 + $0xe20] sm:$0xff]
    %v575 = vld [vmem:[#allocation2 + $0xe28] sm:$0xff]
    %v576 = vld [vmem:[#allocation2 + $0xe30] sm:$0xff]
    %v577 = vld [vmem:[#allocation2 + $0xe38] sm:$0xff]
    %v578 = vld [vmem:[#allocation2 + $0xe40] sm:$0xff]
    %v579 = vld [vmem:[#allocation2 + $0xe48] sm:$0xff]
    %v580 = vld [vmem:[#allocation2 + $0xe50] sm:$0xff]
    %v581 = vld [vmem:[#allocation2 + $0xe58] sm:$0xff]
    %v582 = vld [vmem:[#allocation2 + $0xe60] sm:$0xff]
    %v583 = vld [vmem:[#allocation2 + $0xe68] sm:$0xff]
    %v584 = vld [vmem:[#allocation2 + $0xe70] sm:$0xff]
    %v585 = vld [vmem:[#allocation2 + $0xe78] sm:$0xff]
    %v586 = vld [vmem:[#allocation2 + $0xe80] sm:$0xff]
    %v587 = vld [vmem:[#allocation2 + $0xe88] sm:$0xff]
    %v588 = vld [vmem:[#allocation2 + $0xe90] sm:$0xff]
    %v589 = vld [vmem:[#allocation2 + $0xe98] sm:$0xff]
    %v590 = vld [vmem:[#allocation2 + $0xea0] sm:$0xff]
    %v591 = vld [vmem:[#allocation2 + $0xea8] sm:$0xff]
    %v592 = vld [vmem:[#allocation2 + $0xeb0] sm:$0xff]
    %v593 = vld [vmem:[#allocation2 + $0xeb8] sm:$0xff]
    %v594 = vld [vmem:[#allocation2 + $0xec0] sm:$0xff]
    %v595 = vld [vmem:[#allocation2 + $0xec8] sm:$0xff]
    %v596 = vld [vmem:[#allocation2 + $0xed0] sm:$0xff]
    %v597 = vld [vmem:[#allocation2 + $0xed8] sm:$0xff]
    %v598 = vld [vmem:[#allocation2 + $0xee0] sm:$0xff]
    %v599 = vld [vmem:[#allocation2 + $0xee8] sm:$0xff]
    %v600 = vld [vmem:[#allocation2 + $0xef0] sm:$0xff]
    %v601 = vld [vmem:[#allocation2 + $0xef8] sm:$0xff]
    %v602 = vld [vmem:[#allocation2 + $0xf00] sm:$0xff]
    %v603 = vld [vmem:[#allocation2 + $0xf08] sm:$0xff]
    %v604 = vld [vmem:[#allocation2 + $0xf10] sm:$0xff]
    %v605 = vld [vmem:[#allocation2 + $0xf18] sm:$0xff]
    %v606 = vld [vmem:[#allocation2 + $0xf20] sm:$0xff]
    %v607 = vld [vmem:[#allocation2 + $0xf28] sm:$0xff]
    %v608 = vld [vmem:[#allocation2 + $0xf30] sm:$0xff]
    %v609 = vld [vmem:[#allocation2 + $0xf38] sm:$0xff]
    %v610 = vld [vmem:[#allocation2 + $0xf40] sm:$0xff]
    %v611 = vld [vmem:[#allocation2 + $0xf48] sm:$0xff]
    %v612 = vld [vmem:[#allocation2 + $0xf50] sm:$0xff]
    %v613 = vld [vmem:[#allocation2 + $0xf58] sm:$0xff]
    %v614 = vld [vmem:[#allocation2 + $0xf60] sm:$0xff]
    %v615 = vld [vmem:[#allocation2 + $0xf68] sm:$0xff]
    %v616 = vld [vmem:[#allocation2 + $0xf70] sm:$0xff]
    %v617 = vld [vmem:[#allocation2 + $0xf78] sm:$0xff]
    %v618 = vld [vmem:[#allocation2 + $0xf80] sm:$0xff]
    %v619 = vld [vmem:[#allocation2 + $0xf88] sm:$0xff]
    %v620 = vld [vmem:[#allocation2 + $0xf90] sm:$0xff]
    %v621 = vld [vmem:[#allocation2 + $0xf98] sm:$0xff]
    %v622 = vld [vmem:[#allocation2 + $0xfa0] sm:$0xff]
    %v623 = vld [vmem:[#allocation2 + $0xfa8] sm:$0xff]
    %v624 = vld [vmem:[#allocation2 + $0xfb0] sm:$0xff]
    %v625 = vld [vmem:[#allocation2 + $0xfb8] sm:$0xff]
    %v626 = vld [vmem:[#allocation2 + $0xfc0] sm:$0xff]
    %v627 = vld [vmem:[#allocation2 + $0xfc8] sm:$0xff]
    %v628 = vld [vmem:[#allocation2 + $0xfd0] sm:$0xff]
    %v629 = vld [vmem:[#allocation2 + $0xfd8] sm:$0xff]
    %v630 = vld [vmem:[#allocation2 + $0xfe0] sm:$0xff]
    %v631 = vld [vmem:[#allocation2 + $0xfe8] sm:$0xff]
    %v632 = vld [vmem:[#allocation2 + $0xff0] sm:$0xff]
    %v633 = vld [vmem:[#allocation2 + $0xff8] sm:$0xff]
    %v634 = vld [vmem:[#allocation4] sm:$0xff]
    %v636 = vperm.slane %v634, 0
    %v637 = vperm.slane %v634, 1
    %v638 = vperm.slane %v634, 2
    %v639 = vperm.slane %v634, 3
    %v640 = vperm.slane %v634, 4
    %v641 = vperm.slane %v634, 5
    %v642 = vperm.slane %v634, 6
    %v643 = vperm.slane %v634, 7
    %v660 = vunpack.c.l.b16 %v114
    %v661 = vunpack.c.h.b16 %v114
    %v662 = vunpack.c.l.b16 %v115
    %v663 = vunpack.c.h.b16 %v115
    %v664 = vunpack.c.l.b16 %v116
    %v665 = vunpack.c.h.b16 %v116
    %v666 = vunpack.c.l.b16 %v117
    %v667 = vunpack.c.h.b16 %v117
    %v668 = vunpack.c.l.b16 %v118
    %v669 = vunpack.c.h.b16 %v118
    %v670 = vunpack.c.l.b16 %v119
    %v671 = vunpack.c.h.b16 %v119
    %v672 = vunpack.c.l.b16 %v120
    %v673 = vunpack.c.h.b16 %v120
    %v674 = vunpack.c.l.b16 %v121
    %v675 = vunpack.c.h.b16 %v121
    %v676 = vpack.c.b16 %v668, %v660
    %v677 = vpack.c.b16 %v669, %v661
    %v678 = vpack.c.b16 %v670, %v662
    %v679 = vpack.c.b16 %v671, %v663
    %v680 = vpack.c.b16 %v672, %v664
    %v681 = vpack.c.b16 %v673, %v665
    %v682 = vpack.c.b16 %v674, %v666
    %v683 = vpack.c.b16 %v675, %v667
    %v1204 = vunpack.c.l.b16 %v122
    %v1205 = vunpack.c.h.b16 %v122
    %v1206 = vunpack.c.l.b16 %v123
    %v1207 = vunpack.c.h.b16 %v123
    %v1208 = vunpack.c.l.b16 %v124
    %v1209 = vunpack.c.h.b16 %v124
    %v1210 = vunpack.c.l.b16 %v125
    %v1211 = vunpack.c.h.b16 %v125
    %v1212 = vunpack.c.l.b16 %v126
    %v1213 = vunpack.c.h.b16 %v126
    %v1214 = vunpack.c.l.b16 %v127
    %v1215 = vunpack.c.h.b16 %v127
    %v1216 = vunpack.c.l.b16 %v128
    %v1217 = vunpack.c.h.b16 %v128
    %v1218 = vunpack.c.l.b16 %v129
    %v1219 = vunpack.c.h.b16 %v129
    %v1220 = vunpack.c.l.b16 %v130
    %v1221 = vunpack.c.h.b16 %v130
    %v1222 = vunpack.c.l.b16 %v131
    %v1223 = vunpack.c.h.b16 %v131
    %v1224 = vunpack.c.l.b16 %v132
    %v1225 = vunpack.c.h.b16 %v132
    %v1226 = vunpack.c.l.b16 %v133
    %v1227 = vunpack.c.h.b16 %v133
    %v1228 = vunpack.c.l.b16 %v134
    %v1229 = vunpack.c.h.b16 %v134
    %v1230 = vunpack.c.l.b16 %v135
    %v1231 = vunpack.c.h.b16 %v135
    %v1232 = vunpack.c.l.b16 %v136
    %v1233 = vunpack.c.h.b16 %v136
    %v1234 = vunpack.c.l.b16 %v137
    %v1235 = vunpack.c.h.b16 %v137
    %v1236 = vunpack.c.l.b16 %v138
    %v1237 = vunpack.c.h.b16 %v138
    %v1238 = vunpack.c.l.b16 %v139
    %v1239 = vunpack.c.h.b16 %v139
    %v1240 = vunpack.c.l.b16 %v140
    %v1241 = vunpack.c.h.b16 %v140
    %v1242 = vunpack.c.l.b16 %v141
    %v1243 = vunpack.c.h.b16 %v141
    %v1244 = vunpack.c.l.b16 %v142
    %v1245 = vunpack.c.h.b16 %v142
    %v1246 = vunpack.c.l.b16 %v143
    %v1247 = vunpack.c.h.b16 %v143
    %v1248 = vunpack.c.l.b16 %v144
    %v1249 = vunpack.c.h.b16 %v144
    %v1250 = vunpack.c.l.b16 %v145
    %v1251 = vunpack.c.h.b16 %v145
    %v1252 = vunpack.c.l.b16 %v146
    %v1253 = vunpack.c.h.b16 %v146
    %v1254 = vunpack.c.l.b16 %v147
    %v1255 = vunpack.c.h.b16 %v147
    %v1256 = vunpack.c.l.b16 %v148
    %v1257 = vunpack.c.h.b16 %v148
    %v1258 = vunpack.c.l.b16 %v149
    %v1259 = vunpack.c.h.b16 %v149
    %v1260 = vunpack.c.l.b16 %v150
    %v1261 = vunpack.c.h.b16 %v150
    %v1262 = vunpack.c.l.b16 %v151
    %v1263 = vunpack.c.h.b16 %v151
    %v1264 = vunpack.c.l.b16 %v152
    %v1265 = vunpack.c.h.b16 %v152
    %v1266 = vunpack.c.l.b16 %v153
    %v1267 = vunpack.c.h.b16 %v153
    %v1268 = vunpack.c.l.b16 %v154
    %v1269 = vunpack.c.h.b16 %v154
    %v1270 = vunpack.c.l.b16 %v155
    %v1271 = vunpack.c.h.b16 %v155
    %v1272 = vunpack.c.l.b16 %v156
    %v1273 = vunpack.c.h.b16 %v156
    %v1274 = vunpack.c.l.b16 %v157
    %v1275 = vunpack.c.h.b16 %v157
    %v1276 = vunpack.c.l.b16 %v158
    %v1277 = vunpack.c.h.b16 %v158
    %v1278 = vunpack.c.l.b16 %v159
    %v1279 = vunpack.c.h.b16 %v159
    %v1280 = vunpack.c.l.b16 %v160
    %v1281 = vunpack.c.h.b16 %v160
    %v1282 = vunpack.c.l.b16 %v161
    %v1283 = vunpack.c.h.b16 %v161
    %v1284 = vunpack.c.l.b16 %v162
    %v1285 = vunpack.c.h.b16 %v162
    %v1286 = vunpack.c.l.b16 %v163
    %v1287 = vunpack.c.h.b16 %v163
    %v1288 = vunpack.c.l.b16 %v164
    %v1289 = vunpack.c.h.b16 %v164
    %v1290 = vunpack.c.l.b16 %v165
    %v1291 = vunpack.c.h.b16 %v165
    %v1292 = vunpack.c.l.b16 %v166
    %v1293 = vunpack.c.h.b16 %v166
    %v1294 = vunpack.c.l.b16 %v167
    %v1295 = vunpack.c.h.b16 %v167
    %v1296 = vunpack.c.l.b16 %v168
    %v1297 = vunpack.c.h.b16 %v168
    %v1298 = vunpack.c.l.b16 %v169
    %v1299 = vunpack.c.h.b16 %v169
    %v1300 = vunpack.c.l.b16 %v170
    %v1301 = vunpack.c.h.b16 %v170
    %v1302 = vunpack.c.l.b16 %v171
    %v1303 = vunpack.c.h.b16 %v171
    %v1304 = vunpack.c.l.b16 %v172
    %v1305 = vunpack.c.h.b16 %v172
    %v1306 = vunpack.c.l.b16 %v173
    %v1307 = vunpack.c.h.b16 %v173
    %v1308 = vunpack.c.l.b16 %v174
    %v1309 = vunpack.c.h.b16 %v174
    %v1310 = vunpack.c.l.b16 %v175
    %v1311 = vunpack.c.h.b16 %v175
    %v1312 = vunpack.c.l.b16 %v176
    %v1313 = vunpack.c.h.b16 %v176
    %v1314 = vunpack.c.l.b16 %v177
    %v1315 = vunpack.c.h.b16 %v177
    %v1316 = vunpack.c.l.b16 %v178
    %v1317 = vunpack.c.h.b16 %v178
    %v1318 = vunpack.c.l.b16 %v179
    %v1319 = vunpack.c.h.b16 %v179
    %v1320 = vunpack.c.l.b16 %v180
    %v1321 = vunpack.c.h.b16 %v180
    %v1322 = vunpack.c.l.b16 %v181
    %v1323 = vunpack.c.h.b16 %v181
    %v1324 = vunpack.c.l.b16 %v182
    %v1325 = vunpack.c.h.b16 %v182
    %v1326 = vunpack.c.l.b16 %v183
    %v1327 = vunpack.c.h.b16 %v183
    %v1328 = vunpack.c.l.b16 %v184
    %v1329 = vunpack.c.h.b16 %v184
    %v1330 = vunpack.c.l.b16 %v185
    %v1331 = vunpack.c.h.b16 %v185
    %v1332 = vunpack.c.l.b16 %v186
    %v1333 = vunpack.c.h.b16 %v186
    %v1334 = vunpack.c.l.b16 %v187
    %v1335 = vunpack.c.h.b16 %v187
    %v1336 = vunpack.c.l.b16 %v188
    %v1337 = vunpack.c.h.b16 %v188
    %v1338 = vunpack.c.l.b16 %v189
    %v1339 = vunpack.c.h.b16 %v189
    %v1340 = vunpack.c.l.b16 %v190
    %v1341 = vunpack.c.h.b16 %v190
    %v1342 = vunpack.c.l.b16 %v191
    %v1343 = vunpack.c.h.b16 %v191
    %v1344 = vunpack.c.l.b16 %v192
    %v1345 = vunpack.c.h.b16 %v192
    %v1346 = vunpack.c.l.b16 %v193
    %v1347 = vunpack.c.h.b16 %v193
    %v1348 = vunpack.c.l.b16 %v194
    %v1349 = vunpack.c.h.b16 %v194
    %v1350 = vunpack.c.l.b16 %v195
    %v1351 = vunpack.c.h.b16 %v195
    %v1352 = vunpack.c.l.b16 %v196
    %v1353 = vunpack.c.h.b16 %v196
    %v1354 = vunpack.c.l.b16 %v197
    %v1355 = vunpack.c.h.b16 %v197
    %v1356 = vunpack.c.l.b16 %v198
    %v1357 = vunpack.c.h.b16 %v198
    %v1358 = vunpack.c.l.b16 %v199
    %v1359 = vunpack.c.h.b16 %v199
    %v1360 = vunpack.c.l.b16 %v200
    %v1361 = vunpack.c.h.b16 %v200
    %v1362 = vunpack.c.l.b16 %v201
    %v1363 = vunpack.c.h.b16 %v201
    %v1364 = vunpack.c.l.b16 %v202
    %v1365 = vunpack.c.h.b16 %v202
    %v1366 = vunpack.c.l.b16 %v203
    %v1367 = vunpack.c.h.b16 %v203
    %v1368 = vunpack.c.l.b16 %v204
    %v1369 = vunpack.c.h.b16 %v204
    %v1370 = vunpack.c.l.b16 %v205
    %v1371 = vunpack.c.h.b16 %v205
    %v1372 = vunpack.c.l.b16 %v206
    %v1373 = vunpack.c.h.b16 %v206
    %v1374 = vunpack.c.l.b16 %v207
    %v1375 = vunpack.c.h.b16 %v207
    %v1376 = vunpack.c.l.b16 %v208
    %v1377 = vunpack.c.h.b16 %v208
    %v1378 = vunpack.c.l.b16 %v209
    %v1379 = vunpack.c.h.b16 %v209
    %v1380 = vunpack.c.l.b16 %v210
    %v1381 = vunpack.c.h.b16 %v210
    %v1382 = vunpack.c.l.b16 %v211
    %v1383 = vunpack.c.h.b16 %v211
    %v1384 = vunpack.c.l.b16 %v212
    %v1385 = vunpack.c.h.b16 %v212
    %v1386 = vunpack.c.l.b16 %v213
    %v1387 = vunpack.c.h.b16 %v213
    %v1388 = vunpack.c.l.b16 %v214
    %v1389 = vunpack.c.h.b16 %v214
    %v1390 = vunpack.c.l.b16 %v215
    %v1391 = vunpack.c.h.b16 %v215
    %v1392 = vunpack.c.l.b16 %v216
    %v1393 = vunpack.c.h.b16 %v216
    %v1394 = vunpack.c.l.b16 %v217
    %v1395 = vunpack.c.h.b16 %v217
    %v1396 = vunpack.c.l.b16 %v218
    %v1397 = vunpack.c.h.b16 %v218
    %v1398 = vunpack.c.l.b16 %v219
    %v1399 = vunpack.c.h.b16 %v219
    %v1400 = vunpack.c.l.b16 %v220
    %v1401 = vunpack.c.h.b16 %v220
    %v1402 = vunpack.c.l.b16 %v221
    %v1403 = vunpack.c.h.b16 %v221
    %v1404 = vunpack.c.l.b16 %v222
    %v1405 = vunpack.c.h.b16 %v222
    %v1406 = vunpack.c.l.b16 %v223
    %v1407 = vunpack.c.h.b16 %v223
    %v1408 = vunpack.c.l.b16 %v224
    %v1409 = vunpack.c.h.b16 %v224
    %v1410 = vunpack.c.l.b16 %v225
    %v1411 = vunpack.c.h.b16 %v225
    %v1412 = vunpack.c.l.b16 %v226
    %v1413 = vunpack.c.h.b16 %v226
    %v1414 = vunpack.c.l.b16 %v227
    %v1415 = vunpack.c.h.b16 %v227
    %v1416 = vunpack.c.l.b16 %v228
    %v1417 = vunpack.c.h.b16 %v228
    %v1418 = vunpack.c.l.b16 %v229
    %v1419 = vunpack.c.h.b16 %v229
    %v1420 = vunpack.c.l.b16 %v230
    %v1421 = vunpack.c.h.b16 %v230
    %v1422 = vunpack.c.l.b16 %v231
    %v1423 = vunpack.c.h.b16 %v231
    %v1424 = vunpack.c.l.b16 %v232
    %v1425 = vunpack.c.h.b16 %v232
    %v1426 = vunpack.c.l.b16 %v233
    %v1427 = vunpack.c.h.b16 %v233
    %v1428 = vunpack.c.l.b16 %v234
    %v1429 = vunpack.c.h.b16 %v234
    %v1430 = vunpack.c.l.b16 %v235
    %v1431 = vunpack.c.h.b16 %v235
    %v1432 = vunpack.c.l.b16 %v236
    %v1433 = vunpack.c.h.b16 %v236
    %v1434 = vunpack.c.l.b16 %v237
    %v1435 = vunpack.c.h.b16 %v237
    %v1436 = vunpack.c.l.b16 %v238
    %v1437 = vunpack.c.h.b16 %v238
    %v1438 = vunpack.c.l.b16 %v239
    %v1439 = vunpack.c.h.b16 %v239
    %v1440 = vunpack.c.l.b16 %v240
    %v1441 = vunpack.c.h.b16 %v240
    %v1442 = vunpack.c.l.b16 %v241
    %v1443 = vunpack.c.h.b16 %v241
    %v1444 = vunpack.c.l.b16 %v242
    %v1445 = vunpack.c.h.b16 %v242
    %v1446 = vunpack.c.l.b16 %v243
    %v1447 = vunpack.c.h.b16 %v243
    %v1448 = vunpack.c.l.b16 %v244
    %v1449 = vunpack.c.h.b16 %v244
    %v1450 = vunpack.c.l.b16 %v245
    %v1451 = vunpack.c.h.b16 %v245
    %v1452 = vunpack.c.l.b16 %v246
    %v1453 = vunpack.c.h.b16 %v246
    %v1454 = vunpack.c.l.b16 %v247
    %v1455 = vunpack.c.h.b16 %v247
    %v1456 = vunpack.c.l.b16 %v248
    %v1457 = vunpack.c.h.b16 %v248
    %v1458 = vunpack.c.l.b16 %v249
    %v1459 = vunpack.c.h.b16 %v249
    %v1460 = vunpack.c.l.b16 %v250
    %v1461 = vunpack.c.h.b16 %v250
    %v1462 = vunpack.c.l.b16 %v251
    %v1463 = vunpack.c.h.b16 %v251
    %v1464 = vunpack.c.l.b16 %v252
    %v1465 = vunpack.c.h.b16 %v252
    %v1466 = vunpack.c.l.b16 %v253
    %v1467 = vunpack.c.h.b16 %v253
    %v1468 = vunpack.c.l.b16 %v254
    %v1469 = vunpack.c.h.b16 %v254
    %v1470 = vunpack.c.l.b16 %v255
    %v1471 = vunpack.c.h.b16 %v255
    %v1472 = vunpack.c.l.b16 %v256
    %v1473 = vunpack.c.h.b16 %v256
    %v1474 = vunpack.c.l.b16 %v257
    %v1475 = vunpack.c.h.b16 %v257
    %v1476 = vunpack.c.l.b16 %v258
    %v1477 = vunpack.c.h.b16 %v258
    %v1478 = vunpack.c.l.b16 %v259
    %v1479 = vunpack.c.h.b16 %v259
    %v1480 = vunpack.c.l.b16 %v260
    %v1481 = vunpack.c.h.b16 %v260
    %v1482 = vunpack.c.l.b16 %v261
    %v1483 = vunpack.c.h.b16 %v261
    %v1484 = vunpack.c.l.b16 %v262
    %v1485 = vunpack.c.h.b16 %v262
    %v1486 = vunpack.c.l.b16 %v263
    %v1487 = vunpack.c.h.b16 %v263
    %v1488 = vunpack.c.l.b16 %v264
    %v1489 = vunpack.c.h.b16 %v264
    %v1490 = vunpack.c.l.b16 %v265
    %v1491 = vunpack.c.h.b16 %v265
    %v1492 = vunpack.c.l.b16 %v266
    %v1493 = vunpack.c.h.b16 %v266
    %v1494 = vunpack.c.l.b16 %v267
    %v1495 = vunpack.c.h.b16 %v267
    %v1496 = vunpack.c.l.b16 %v268
    %v1497 = vunpack.c.h.b16 %v268
    %v1498 = vunpack.c.l.b16 %v269
    %v1499 = vunpack.c.h.b16 %v269
    %v1500 = vunpack.c.l.b16 %v270
    %v1501 = vunpack.c.h.b16 %v270
    %v1502 = vunpack.c.l.b16 %v271
    %v1503 = vunpack.c.h.b16 %v271
    %v1504 = vunpack.c.l.b16 %v272
    %v1505 = vunpack.c.h.b16 %v272
    %v1506 = vunpack.c.l.b16 %v273
    %v1507 = vunpack.c.h.b16 %v273
    %v1508 = vunpack.c.l.b16 %v274
    %v1509 = vunpack.c.h.b16 %v274
    %v1510 = vunpack.c.l.b16 %v275
    %v1511 = vunpack.c.h.b16 %v275
    %v1512 = vunpack.c.l.b16 %v276
    %v1513 = vunpack.c.h.b16 %v276
    %v1514 = vunpack.c.l.b16 %v277
    %v1515 = vunpack.c.h.b16 %v277
    %v1516 = vunpack.c.l.b16 %v278
    %v1517 = vunpack.c.h.b16 %v278
    %v1518 = vunpack.c.l.b16 %v279
    %v1519 = vunpack.c.h.b16 %v279
    %v1520 = vunpack.c.l.b16 %v280
    %v1521 = vunpack.c.h.b16 %v280
    %v1522 = vunpack.c.l.b16 %v281
    %v1523 = vunpack.c.h.b16 %v281
    %v1524 = vunpack.c.l.b16 %v282
    %v1525 = vunpack.c.h.b16 %v282
    %v1526 = vunpack.c.l.b16 %v283
    %v1527 = vunpack.c.h.b16 %v283
    %v1528 = vunpack.c.l.b16 %v284
    %v1529 = vunpack.c.h.b16 %v284
    %v1530 = vunpack.c.l.b16 %v285
    %v1531 = vunpack.c.h.b16 %v285
    %v1532 = vunpack.c.l.b16 %v286
    %v1533 = vunpack.c.h.b16 %v286
    %v1534 = vunpack.c.l.b16 %v287
    %v1535 = vunpack.c.h.b16 %v287
    %v1536 = vunpack.c.l.b16 %v288
    %v1537 = vunpack.c.h.b16 %v288
    %v1538 = vunpack.c.l.b16 %v289
    %v1539 = vunpack.c.h.b16 %v289
    %v1540 = vunpack.c.l.b16 %v290
    %v1541 = vunpack.c.h.b16 %v290
    %v1542 = vunpack.c.l.b16 %v291
    %v1543 = vunpack.c.h.b16 %v291
    %v1544 = vunpack.c.l.b16 %v292
    %v1545 = vunpack.c.h.b16 %v292
    %v1546 = vunpack.c.l.b16 %v293
    %v1547 = vunpack.c.h.b16 %v293
    %v1548 = vunpack.c.l.b16 %v294
    %v1549 = vunpack.c.h.b16 %v294
    %v1550 = vunpack.c.l.b16 %v295
    %v1551 = vunpack.c.h.b16 %v295
    %v1552 = vunpack.c.l.b16 %v296
    %v1553 = vunpack.c.h.b16 %v296
    %v1554 = vunpack.c.l.b16 %v297
    %v1555 = vunpack.c.h.b16 %v297
    %v1556 = vunpack.c.l.b16 %v298
    %v1557 = vunpack.c.h.b16 %v298
    %v1558 = vunpack.c.l.b16 %v299
    %v1559 = vunpack.c.h.b16 %v299
    %v1560 = vunpack.c.l.b16 %v300
    %v1561 = vunpack.c.h.b16 %v300
    %v1562 = vunpack.c.l.b16 %v301
    %v1563 = vunpack.c.h.b16 %v301
    %v1564 = vunpack.c.l.b16 %v302
    %v1565 = vunpack.c.h.b16 %v302
    %v1566 = vunpack.c.l.b16 %v303
    %v1567 = vunpack.c.h.b16 %v303
    %v1568 = vunpack.c.l.b16 %v304
    %v1569 = vunpack.c.h.b16 %v304
    %v1570 = vunpack.c.l.b16 %v305
    %v1571 = vunpack.c.h.b16 %v305
    %v1572 = vunpack.c.l.b16 %v306
    %v1573 = vunpack.c.h.b16 %v306
    %v1574 = vunpack.c.l.b16 %v307
    %v1575 = vunpack.c.h.b16 %v307
    %v1576 = vunpack.c.l.b16 %v308
    %v1577 = vunpack.c.h.b16 %v308
    %v1578 = vunpack.c.l.b16 %v309
    %v1579 = vunpack.c.h.b16 %v309
    %v1580 = vunpack.c.l.b16 %v310
    %v1581 = vunpack.c.h.b16 %v310
    %v1582 = vunpack.c.l.b16 %v311
    %v1583 = vunpack.c.h.b16 %v311
    %v1584 = vunpack.c.l.b16 %v312
    %v1585 = vunpack.c.h.b16 %v312
    %v1586 = vunpack.c.l.b16 %v313
    %v1587 = vunpack.c.h.b16 %v313
    %v1588 = vunpack.c.l.b16 %v314
    %v1589 = vunpack.c.h.b16 %v314
    %v1590 = vunpack.c.l.b16 %v315
    %v1591 = vunpack.c.h.b16 %v315
    %v1592 = vunpack.c.l.b16 %v316
    %v1593 = vunpack.c.h.b16 %v316
    %v1594 = vunpack.c.l.b16 %v317
    %v1595 = vunpack.c.h.b16 %v317
    %v1596 = vunpack.c.l.b16 %v318
    %v1597 = vunpack.c.h.b16 %v318
    %v1598 = vunpack.c.l.b16 %v319
    %v1599 = vunpack.c.h.b16 %v319
    %v1600 = vunpack.c.l.b16 %v320
    %v1601 = vunpack.c.h.b16 %v320
    %v1602 = vunpack.c.l.b16 %v321
    %v1603 = vunpack.c.h.b16 %v321
    %v1604 = vunpack.c.l.b16 %v322
    %v1605 = vunpack.c.h.b16 %v322
    %v1606 = vunpack.c.l.b16 %v323
    %v1607 = vunpack.c.h.b16 %v323
    %v1608 = vunpack.c.l.b16 %v324
    %v1609 = vunpack.c.h.b16 %v324
    %v1610 = vunpack.c.l.b16 %v325
    %v1611 = vunpack.c.h.b16 %v325
    %v1612 = vunpack.c.l.b16 %v326
    %v1613 = vunpack.c.h.b16 %v326
    %v1614 = vunpack.c.l.b16 %v327
    %v1615 = vunpack.c.h.b16 %v327
    %v1616 = vunpack.c.l.b16 %v328
    %v1617 = vunpack.c.h.b16 %v328
    %v1618 = vunpack.c.l.b16 %v329
    %v1619 = vunpack.c.h.b16 %v329
    %v1620 = vunpack.c.l.b16 %v330
    %v1621 = vunpack.c.h.b16 %v330
    %v1622 = vunpack.c.l.b16 %v331
    %v1623 = vunpack.c.h.b16 %v331
    %v1624 = vunpack.c.l.b16 %v332
    %v1625 = vunpack.c.h.b16 %v332
    %v1626 = vunpack.c.l.b16 %v333
    %v1627 = vunpack.c.h.b16 %v333
    %v1628 = vunpack.c.l.b16 %v334
    %v1629 = vunpack.c.h.b16 %v334
    %v1630 = vunpack.c.l.b16 %v335
    %v1631 = vunpack.c.h.b16 %v335
    %v1632 = vunpack.c.l.b16 %v336
    %v1633 = vunpack.c.h.b16 %v336
    %v1634 = vunpack.c.l.b16 %v337
    %v1635 = vunpack.c.h.b16 %v337
    %v1636 = vunpack.c.l.b16 %v338
    %v1637 = vunpack.c.h.b16 %v338
    %v1638 = vunpack.c.l.b16 %v339
    %v1639 = vunpack.c.h.b16 %v339
    %v1640 = vunpack.c.l.b16 %v340
    %v1641 = vunpack.c.h.b16 %v340
    %v1642 = vunpack.c.l.b16 %v341
    %v1643 = vunpack.c.h.b16 %v341
    %v1644 = vunpack.c.l.b16 %v342
    %v1645 = vunpack.c.h.b16 %v342
    %v1646 = vunpack.c.l.b16 %v343
    %v1647 = vunpack.c.h.b16 %v343
    %v1648 = vunpack.c.l.b16 %v344
    %v1649 = vunpack.c.h.b16 %v344
    %v1650 = vunpack.c.l.b16 %v345
    %v1651 = vunpack.c.h.b16 %v345
    %v1652 = vunpack.c.l.b16 %v346
    %v1653 = vunpack.c.h.b16 %v346
    %v1654 = vunpack.c.l.b16 %v347
    %v1655 = vunpack.c.h.b16 %v347
    %v1656 = vunpack.c.l.b16 %v348
    %v1657 = vunpack.c.h.b16 %v348
    %v1658 = vunpack.c.l.b16 %v349
    %v1659 = vunpack.c.h.b16 %v349
    %v1660 = vunpack.c.l.b16 %v350
    %v1661 = vunpack.c.h.b16 %v350
    %v1662 = vunpack.c.l.b16 %v351
    %v1663 = vunpack.c.h.b16 %v351
    %v1664 = vunpack.c.l.b16 %v352
    %v1665 = vunpack.c.h.b16 %v352
    %v1666 = vunpack.c.l.b16 %v353
    %v1667 = vunpack.c.h.b16 %v353
    %v1668 = vunpack.c.l.b16 %v354
    %v1669 = vunpack.c.h.b16 %v354
    %v1670 = vunpack.c.l.b16 %v355
    %v1671 = vunpack.c.h.b16 %v355
    %v1672 = vunpack.c.l.b16 %v356
    %v1673 = vunpack.c.h.b16 %v356
    %v1674 = vunpack.c.l.b16 %v357
    %v1675 = vunpack.c.h.b16 %v357
    %v1676 = vunpack.c.l.b16 %v358
    %v1677 = vunpack.c.h.b16 %v358
    %v1678 = vunpack.c.l.b16 %v359
    %v1679 = vunpack.c.h.b16 %v359
    %v1680 = vunpack.c.l.b16 %v360
    %v1681 = vunpack.c.h.b16 %v360
    %v1682 = vunpack.c.l.b16 %v361
    %v1683 = vunpack.c.h.b16 %v361
    %v1684 = vunpack.c.l.b16 %v362
    %v1685 = vunpack.c.h.b16 %v362
    %v1686 = vunpack.c.l.b16 %v363
    %v1687 = vunpack.c.h.b16 %v363
    %v1688 = vunpack.c.l.b16 %v364
    %v1689 = vunpack.c.h.b16 %v364
    %v1690 = vunpack.c.l.b16 %v365
    %v1691 = vunpack.c.h.b16 %v365
    %v1692 = vunpack.c.l.b16 %v366
    %v1693 = vunpack.c.h.b16 %v366
    %v1694 = vunpack.c.l.b16 %v367
    %v1695 = vunpack.c.h.b16 %v367
    %v1696 = vunpack.c.l.b16 %v368
    %v1697 = vunpack.c.h.b16 %v368
    %v1698 = vunpack.c.l.b16 %v369
    %v1699 = vunpack.c.h.b16 %v369
    %v1700 = vunpack.c.l.b16 %v370
    %v1701 = vunpack.c.h.b16 %v370
    %v1702 = vunpack.c.l.b16 %v371
    %v1703 = vunpack.c.h.b16 %v371
    %v1704 = vunpack.c.l.b16 %v372
    %v1705 = vunpack.c.h.b16 %v372
    %v1706 = vunpack.c.l.b16 %v373
    %v1707 = vunpack.c.h.b16 %v373
    %v1708 = vunpack.c.l.b16 %v374
    %v1709 = vunpack.c.h.b16 %v374
    %v1710 = vunpack.c.l.b16 %v375
    %v1711 = vunpack.c.h.b16 %v375
    %v1712 = vunpack.c.l.b16 %v376
    %v1713 = vunpack.c.h.b16 %v376
    %v1714 = vunpack.c.l.b16 %v377
    %v1715 = vunpack.c.h.b16 %v377
    %v1716 = vunpack.c.l.b16 %v378
    %v1717 = vunpack.c.h.b16 %v378
    %v1718 = vunpack.c.l.b16 %v379
    %v1719 = vunpack.c.h.b16 %v379
    %v1720 = vunpack.c.l.b16 %v380
    %v1721 = vunpack.c.h.b16 %v380
    %v1722 = vunpack.c.l.b16 %v381
    %v1723 = vunpack.c.h.b16 %v381
    %v1724 = vunpack.c.l.b16 %v382
    %v1725 = vunpack.c.h.b16 %v382
    %v1726 = vunpack.c.l.b16 %v383
    %v1727 = vunpack.c.h.b16 %v383
    %v1728 = vunpack.c.l.b16 %v384
    %v1729 = vunpack.c.h.b16 %v384
    %v1730 = vunpack.c.l.b16 %v385
    %v1731 = vunpack.c.h.b16 %v385
    %v1732 = vunpack.c.l.b16 %v386
    %v1733 = vunpack.c.h.b16 %v386
    %v1734 = vunpack.c.l.b16 %v387
    %v1735 = vunpack.c.h.b16 %v387
    %v1736 = vunpack.c.l.b16 %v388
    %v1737 = vunpack.c.h.b16 %v388
    %v1738 = vunpack.c.l.b16 %v389
    %v1739 = vunpack.c.h.b16 %v389
    %v1740 = vunpack.c.l.b16 %v390
    %v1741 = vunpack.c.h.b16 %v390
    %v1742 = vunpack.c.l.b16 %v391
    %v1743 = vunpack.c.h.b16 %v391
    %v1744 = vunpack.c.l.b16 %v392
    %v1745 = vunpack.c.h.b16 %v392
    %v1746 = vunpack.c.l.b16 %v393
    %v1747 = vunpack.c.h.b16 %v393
    %v1748 = vunpack.c.l.b16 %v394
    %v1749 = vunpack.c.h.b16 %v394
    %v1750 = vunpack.c.l.b16 %v395
    %v1751 = vunpack.c.h.b16 %v395
    %v1752 = vunpack.c.l.b16 %v396
    %v1753 = vunpack.c.h.b16 %v396
    %v1754 = vunpack.c.l.b16 %v397
    %v1755 = vunpack.c.h.b16 %v397
    %v1756 = vunpack.c.l.b16 %v398
    %v1757 = vunpack.c.h.b16 %v398
    %v1758 = vunpack.c.l.b16 %v399
    %v1759 = vunpack.c.h.b16 %v399
    %v1760 = vunpack.c.l.b16 %v400
    %v1761 = vunpack.c.h.b16 %v400
    %v1762 = vunpack.c.l.b16 %v401
    %v1763 = vunpack.c.h.b16 %v401
    %v1764 = vunpack.c.l.b16 %v402
    %v1765 = vunpack.c.h.b16 %v402
    %v1766 = vunpack.c.l.b16 %v403
    %v1767 = vunpack.c.h.b16 %v403
    %v1768 = vunpack.c.l.b16 %v404
    %v1769 = vunpack.c.h.b16 %v404
    %v1770 = vunpack.c.l.b16 %v405
    %v1771 = vunpack.c.h.b16 %v405
    %v1772 = vunpack.c.l.b16 %v406
    %v1773 = vunpack.c.h.b16 %v406
    %v1774 = vunpack.c.l.b16 %v407
    %v1775 = vunpack.c.h.b16 %v407
    %v1776 = vunpack.c.l.b16 %v408
    %v1777 = vunpack.c.h.b16 %v408
    %v1778 = vunpack.c.l.b16 %v409
    %v1779 = vunpack.c.h.b16 %v409
    %v1780 = vunpack.c.l.b16 %v410
    %v1781 = vunpack.c.h.b16 %v410
    %v1782 = vunpack.c.l.b16 %v411
    %v1783 = vunpack.c.h.b16 %v411
    %v1784 = vunpack.c.l.b16 %v412
    %v1785 = vunpack.c.h.b16 %v412
    %v1786 = vunpack.c.l.b16 %v413
    %v1787 = vunpack.c.h.b16 %v413
    %v1788 = vunpack.c.l.b16 %v414
    %v1789 = vunpack.c.h.b16 %v414
    %v1790 = vunpack.c.l.b16 %v415
    %v1791 = vunpack.c.h.b16 %v415
    %v1792 = vunpack.c.l.b16 %v416
    %v1793 = vunpack.c.h.b16 %v416
    %v1794 = vunpack.c.l.b16 %v417
    %v1795 = vunpack.c.h.b16 %v417
    %v1796 = vunpack.c.l.b16 %v418
    %v1797 = vunpack.c.h.b16 %v418
    %v1798 = vunpack.c.l.b16 %v419
    %v1799 = vunpack.c.h.b16 %v419
    %v1800 = vunpack.c.l.b16 %v420
    %v1801 = vunpack.c.h.b16 %v420
    %v1802 = vunpack.c.l.b16 %v421
    %v1803 = vunpack.c.h.b16 %v421
    %v1804 = vunpack.c.l.b16 %v422
    %v1805 = vunpack.c.h.b16 %v422
    %v1806 = vunpack.c.l.b16 %v423
    %v1807 = vunpack.c.h.b16 %v423
    %v1808 = vunpack.c.l.b16 %v424
    %v1809 = vunpack.c.h.b16 %v424
    %v1810 = vunpack.c.l.b16 %v425
    %v1811 = vunpack.c.h.b16 %v425
    %v1812 = vunpack.c.l.b16 %v426
    %v1813 = vunpack.c.h.b16 %v426
    %v1814 = vunpack.c.l.b16 %v427
    %v1815 = vunpack.c.h.b16 %v427
    %v1816 = vunpack.c.l.b16 %v428
    %v1817 = vunpack.c.h.b16 %v428
    %v1818 = vunpack.c.l.b16 %v429
    %v1819 = vunpack.c.h.b16 %v429
    %v1820 = vunpack.c.l.b16 %v430
    %v1821 = vunpack.c.h.b16 %v430
    %v1822 = vunpack.c.l.b16 %v431
    %v1823 = vunpack.c.h.b16 %v431
    %v1824 = vunpack.c.l.b16 %v432
    %v1825 = vunpack.c.h.b16 %v432
    %v1826 = vunpack.c.l.b16 %v433
    %v1827 = vunpack.c.h.b16 %v433
    %v1828 = vunpack.c.l.b16 %v434
    %v1829 = vunpack.c.h.b16 %v434
    %v1830 = vunpack.c.l.b16 %v435
    %v1831 = vunpack.c.h.b16 %v435
    %v1832 = vunpack.c.l.b16 %v436
    %v1833 = vunpack.c.h.b16 %v436
    %v1834 = vunpack.c.l.b16 %v437
    %v1835 = vunpack.c.h.b16 %v437
    %v1836 = vunpack.c.l.b16 %v438
    %v1837 = vunpack.c.h.b16 %v438
    %v1838 = vunpack.c.l.b16 %v439
    %v1839 = vunpack.c.h.b16 %v439
    %v1840 = vunpack.c.l.b16 %v440
    %v1841 = vunpack.c.h.b16 %v440
    %v1842 = vunpack.c.l.b16 %v441
    %v1843 = vunpack.c.h.b16 %v441
    %v1844 = vunpack.c.l.b16 %v442
    %v1845 = vunpack.c.h.b16 %v442
    %v1846 = vunpack.c.l.b16 %v443
    %v1847 = vunpack.c.h.b16 %v443
    %v1848 = vunpack.c.l.b16 %v444
    %v1849 = vunpack.c.h.b16 %v444
    %v1850 = vunpack.c.l.b16 %v445
    %v1851 = vunpack.c.h.b16 %v445
    %v1852 = vunpack.c.l.b16 %v446
    %v1853 = vunpack.c.h.b16 %v446
    %v1854 = vunpack.c.l.b16 %v447
    %v1855 = vunpack.c.h.b16 %v447
    %v1856 = vunpack.c.l.b16 %v448
    %v1857 = vunpack.c.h.b16 %v448
    %v1858 = vunpack.c.l.b16 %v449
    %v1859 = vunpack.c.h.b16 %v449
    %v1860 = vunpack.c.l.b16 %v450
    %v1861 = vunpack.c.h.b16 %v450
    %v1862 = vunpack.c.l.b16 %v451
    %v1863 = vunpack.c.h.b16 %v451
    %v1864 = vunpack.c.l.b16 %v452
    %v1865 = vunpack.c.h.b16 %v452
    %v1866 = vunpack.c.l.b16 %v453
    %v1867 = vunpack.c.h.b16 %v453
    %v1868 = vunpack.c.l.b16 %v454
    %v1869 = vunpack.c.h.b16 %v454
    %v1870 = vunpack.c.l.b16 %v455
    %v1871 = vunpack.c.h.b16 %v455
    %v1872 = vunpack.c.l.b16 %v456
    %v1873 = vunpack.c.h.b16 %v456
    %v1874 = vunpack.c.l.b16 %v457
    %v1875 = vunpack.c.h.b16 %v457
    %v1876 = vunpack.c.l.b16 %v458
    %v1877 = vunpack.c.h.b16 %v458
    %v1878 = vunpack.c.l.b16 %v459
    %v1879 = vunpack.c.h.b16 %v459
    %v1880 = vunpack.c.l.b16 %v460
    %v1881 = vunpack.c.h.b16 %v460
    %v1882 = vunpack.c.l.b16 %v461
    %v1883 = vunpack.c.h.b16 %v461
    %v1884 = vunpack.c.l.b16 %v462
    %v1885 = vunpack.c.h.b16 %v462
    %v1886 = vunpack.c.l.b16 %v463
    %v1887 = vunpack.c.h.b16 %v463
    %v1888 = vunpack.c.l.b16 %v464
    %v1889 = vunpack.c.h.b16 %v464
    %v1890 = vunpack.c.l.b16 %v465
    %v1891 = vunpack.c.h.b16 %v465
    %v1892 = vunpack.c.l.b16 %v466
    %v1893 = vunpack.c.h.b16 %v466
    %v1894 = vunpack.c.l.b16 %v467
    %v1895 = vunpack.c.h.b16 %v467
    %v1896 = vunpack.c.l.b16 %v468
    %v1897 = vunpack.c.h.b16 %v468
    %v1898 = vunpack.c.l.b16 %v469
    %v1899 = vunpack.c.h.b16 %v469
    %v1900 = vunpack.c.l.b16 %v470
    %v1901 = vunpack.c.h.b16 %v470
    %v1902 = vunpack.c.l.b16 %v471
    %v1903 = vunpack.c.h.b16 %v471
    %v1904 = vunpack.c.l.b16 %v472
    %v1905 = vunpack.c.h.b16 %v472
    %v1906 = vunpack.c.l.b16 %v473
    %v1907 = vunpack.c.h.b16 %v473
    %v1908 = vunpack.c.l.b16 %v474
    %v1909 = vunpack.c.h.b16 %v474
    %v1910 = vunpack.c.l.b16 %v475
    %v1911 = vunpack.c.h.b16 %v475
    %v1912 = vunpack.c.l.b16 %v476
    %v1913 = vunpack.c.h.b16 %v476
    %v1914 = vunpack.c.l.b16 %v477
    %v1915 = vunpack.c.h.b16 %v477
    %v1916 = vunpack.c.l.b16 %v478
    %v1917 = vunpack.c.h.b16 %v478
    %v1918 = vunpack.c.l.b16 %v479
    %v1919 = vunpack.c.h.b16 %v479
    %v1920 = vunpack.c.l.b16 %v480
    %v1921 = vunpack.c.h.b16 %v480
    %v1922 = vunpack.c.l.b16 %v481
    %v1923 = vunpack.c.h.b16 %v481
    %v1924 = vunpack.c.l.b16 %v482
    %v1925 = vunpack.c.h.b16 %v482
    %v1926 = vunpack.c.l.b16 %v483
    %v1927 = vunpack.c.h.b16 %v483
    %v1928 = vunpack.c.l.b16 %v484
    %v1929 = vunpack.c.h.b16 %v484
    %v1930 = vunpack.c.l.b16 %v485
    %v1931 = vunpack.c.h.b16 %v485
    %v1932 = vunpack.c.l.b16 %v486
    %v1933 = vunpack.c.h.b16 %v486
    %v1934 = vunpack.c.l.b16 %v487
    %v1935 = vunpack.c.h.b16 %v487
    %v1936 = vunpack.c.l.b16 %v488
    %v1937 = vunpack.c.h.b16 %v488
    %v1938 = vunpack.c.l.b16 %v489
    %v1939 = vunpack.c.h.b16 %v489
    %v1940 = vunpack.c.l.b16 %v490
    %v1941 = vunpack.c.h.b16 %v490
    %v1942 = vunpack.c.l.b16 %v491
    %v1943 = vunpack.c.h.b16 %v491
    %v1944 = vunpack.c.l.b16 %v492
    %v1945 = vunpack.c.h.b16 %v492
    %v1946 = vunpack.c.l.b16 %v493
    %v1947 = vunpack.c.h.b16 %v493
    %v1948 = vunpack.c.l.b16 %v494
    %v1949 = vunpack.c.h.b16 %v494
    %v1950 = vunpack.c.l.b16 %v495
    %v1951 = vunpack.c.h.b16 %v495
    %v1952 = vunpack.c.l.b16 %v496
    %v1953 = vunpack.c.h.b16 %v496
    %v1954 = vunpack.c.l.b16 %v497
    %v1955 = vunpack.c.h.b16 %v497
    %v1956 = vunpack.c.l.b16 %v498
    %v1957 = vunpack.c.h.b16 %v498
    %v1958 = vunpack.c.l.b16 %v499
    %v1959 = vunpack.c.h.b16 %v499
    %v1960 = vunpack.c.l.b16 %v500
    %v1961 = vunpack.c.h.b16 %v500
    %v1962 = vunpack.c.l.b16 %v501
    %v1963 = vunpack.c.h.b16 %v501
    %v1964 = vunpack.c.l.b16 %v502
    %v1965 = vunpack.c.h.b16 %v502
    %v1966 = vunpack.c.l.b16 %v503
    %v1967 = vunpack.c.h.b16 %v503
    %v1968 = vunpack.c.l.b16 %v504
    %v1969 = vunpack.c.h.b16 %v504
    %v1970 = vunpack.c.l.b16 %v505
    %v1971 = vunpack.c.h.b16 %v505
    %v1972 = vunpack.c.l.b16 %v506
    %v1973 = vunpack.c.h.b16 %v506
    %v1974 = vunpack.c.l.b16 %v507
    %v1975 = vunpack.c.h.b16 %v507
    %v1976 = vunpack.c.l.b16 %v508
    %v1977 = vunpack.c.h.b16 %v508
    %v1978 = vunpack.c.l.b16 %v509
    %v1979 = vunpack.c.h.b16 %v509
    %v1980 = vunpack.c.l.b16 %v510
    %v1981 = vunpack.c.h.b16 %v510
    %v1982 = vunpack.c.l.b16 %v511
    %v1983 = vunpack.c.h.b16 %v511
    %v1984 = vunpack.c.l.b16 %v512
    %v1985 = vunpack.c.h.b16 %v512
    %v1986 = vunpack.c.l.b16 %v513
    %v1987 = vunpack.c.h.b16 %v513
    %v1988 = vunpack.c.l.b16 %v514
    %v1989 = vunpack.c.h.b16 %v514
    %v1990 = vunpack.c.l.b16 %v515
    %v1991 = vunpack.c.h.b16 %v515
    %v1992 = vunpack.c.l.b16 %v516
    %v1993 = vunpack.c.h.b16 %v516
    %v1994 = vunpack.c.l.b16 %v517
    %v1995 = vunpack.c.h.b16 %v517
    %v1996 = vunpack.c.l.b16 %v518
    %v1997 = vunpack.c.h.b16 %v518
    %v1998 = vunpack.c.l.b16 %v519
    %v1999 = vunpack.c.h.b16 %v519
    %v2000 = vunpack.c.l.b16 %v520
    %v2001 = vunpack.c.h.b16 %v520
    %v2002 = vunpack.c.l.b16 %v521
    %v2003 = vunpack.c.h.b16 %v521
    %v2004 = vunpack.c.l.b16 %v522
    %v2005 = vunpack.c.h.b16 %v522
    %v2006 = vunpack.c.l.b16 %v523
    %v2007 = vunpack.c.h.b16 %v523
    %v2008 = vunpack.c.l.b16 %v524
    %v2009 = vunpack.c.h.b16 %v524
    %v2010 = vunpack.c.l.b16 %v525
    %v2011 = vunpack.c.h.b16 %v525
    %v2012 = vunpack.c.l.b16 %v526
    %v2013 = vunpack.c.h.b16 %v526
    %v2014 = vunpack.c.l.b16 %v527
    %v2015 = vunpack.c.h.b16 %v527
    %v2016 = vunpack.c.l.b16 %v528
    %v2017 = vunpack.c.h.b16 %v528
    %v2018 = vunpack.c.l.b16 %v529
    %v2019 = vunpack.c.h.b16 %v529
    %v2020 = vunpack.c.l.b16 %v530
    %v2021 = vunpack.c.h.b16 %v530
    %v2022 = vunpack.c.l.b16 %v531
    %v2023 = vunpack.c.h.b16 %v531
    %v2024 = vunpack.c.l.b16 %v532
    %v2025 = vunpack.c.h.b16 %v532
    %v2026 = vunpack.c.l.b16 %v533
    %v2027 = vunpack.c.h.b16 %v533
    %v2028 = vunpack.c.l.b16 %v534
    %v2029 = vunpack.c.h.b16 %v534
    %v2030 = vunpack.c.l.b16 %v535
    %v2031 = vunpack.c.h.b16 %v535
    %v2032 = vunpack.c.l.b16 %v536
    %v2033 = vunpack.c.h.b16 %v536
    %v2034 = vunpack.c.l.b16 %v537
    %v2035 = vunpack.c.h.b16 %v537
    %v2036 = vunpack.c.l.b16 %v538
    %v2037 = vunpack.c.h.b16 %v538
    %v2038 = vunpack.c.l.b16 %v539
    %v2039 = vunpack.c.h.b16 %v539
    %v2040 = vunpack.c.l.b16 %v540
    %v2041 = vunpack.c.h.b16 %v540
    %v2042 = vunpack.c.l.b16 %v541
    %v2043 = vunpack.c.h.b16 %v541
    %v2044 = vunpack.c.l.b16 %v542
    %v2045 = vunpack.c.h.b16 %v542
    %v2046 = vunpack.c.l.b16 %v543
    %v2047 = vunpack.c.h.b16 %v543
    %v2048 = vunpack.c.l.b16 %v544
    %v2049 = vunpack.c.h.b16 %v544
    %v2050 = vunpack.c.l.b16 %v545
    %v2051 = vunpack.c.h.b16 %v545
    %v2052 = vunpack.c.l.b16 %v546
    %v2053 = vunpack.c.h.b16 %v546
    %v2054 = vunpack.c.l.b16 %v547
    %v2055 = vunpack.c.h.b16 %v547
    %v2056 = vunpack.c.l.b16 %v548
    %v2057 = vunpack.c.h.b16 %v548
    %v2058 = vunpack.c.l.b16 %v549
    %v2059 = vunpack.c.h.b16 %v549
    %v2060 = vunpack.c.l.b16 %v550
    %v2061 = vunpack.c.h.b16 %v550
    %v2062 = vunpack.c.l.b16 %v551
    %v2063 = vunpack.c.h.b16 %v551
    %v2064 = vunpack.c.l.b16 %v552
    %v2065 = vunpack.c.h.b16 %v552
    %v2066 = vunpack.c.l.b16 %v553
    %v2067 = vunpack.c.h.b16 %v553
    %v2068 = vunpack.c.l.b16 %v554
    %v2069 = vunpack.c.h.b16 %v554
    %v2070 = vunpack.c.l.b16 %v555
    %v2071 = vunpack.c.h.b16 %v555
    %v2072 = vunpack.c.l.b16 %v556
    %v2073 = vunpack.c.h.b16 %v556
    %v2074 = vunpack.c.l.b16 %v557
    %v2075 = vunpack.c.h.b16 %v557
    %v2076 = vunpack.c.l.b16 %v558
    %v2077 = vunpack.c.h.b16 %v558
    %v2078 = vunpack.c.l.b16 %v559
    %v2079 = vunpack.c.h.b16 %v559
    %v2080 = vunpack.c.l.b16 %v560
    %v2081 = vunpack.c.h.b16 %v560
    %v2082 = vunpack.c.l.b16 %v561
    %v2083 = vunpack.c.h.b16 %v561
    %v2084 = vunpack.c.l.b16 %v562
    %v2085 = vunpack.c.h.b16 %v562
    %v2086 = vunpack.c.l.b16 %v563
    %v2087 = vunpack.c.h.b16 %v563
    %v2088 = vunpack.c.l.b16 %v564
    %v2089 = vunpack.c.h.b16 %v564
    %v2090 = vunpack.c.l.b16 %v565
    %v2091 = vunpack.c.h.b16 %v565
    %v2092 = vunpack.c.l.b16 %v566
    %v2093 = vunpack.c.h.b16 %v566
    %v2094 = vunpack.c.l.b16 %v567
    %v2095 = vunpack.c.h.b16 %v567
    %v2096 = vunpack.c.l.b16 %v568
    %v2097 = vunpack.c.h.b16 %v568
    %v2098 = vunpack.c.l.b16 %v569
    %v2099 = vunpack.c.h.b16 %v569
    %v2100 = vunpack.c.l.b16 %v570
    %v2101 = vunpack.c.h.b16 %v570
    %v2102 = vunpack.c.l.b16 %v571
    %v2103 = vunpack.c.h.b16 %v571
    %v2104 = vunpack.c.l.b16 %v572
    %v2105 = vunpack.c.h.b16 %v572
    %v2106 = vunpack.c.l.b16 %v573
    %v2107 = vunpack.c.h.b16 %v573
    %v2108 = vunpack.c.l.b16 %v574
    %v2109 = vunpack.c.h.b16 %v574
    %v2110 = vunpack.c.l.b16 %v575
    %v2111 = vunpack.c.h.b16 %v575
    %v2112 = vunpack.c.l.b16 %v576
    %v2113 = vunpack.c.h.b16 %v576
    %v2114 = vunpack.c.l.b16 %v577
    %v2115 = vunpack.c.h.b16 %v577
    %v2116 = vunpack.c.l.b16 %v578
    %v2117 = vunpack.c.h.b16 %v578
    %v2118 = vunpack.c.l.b16 %v579
    %v2119 = vunpack.c.h.b16 %v579
    %v2120 = vunpack.c.l.b16 %v580
    %v2121 = vunpack.c.h.b16 %v580
    %v2122 = vunpack.c.l.b16 %v581
    %v2123 = vunpack.c.h.b16 %v581
    %v2124 = vunpack.c.l.b16 %v582
    %v2125 = vunpack.c.h.b16 %v582
    %v2126 = vunpack.c.l.b16 %v583
    %v2127 = vunpack.c.h.b16 %v583
    %v2128 = vunpack.c.l.b16 %v584
    %v2129 = vunpack.c.h.b16 %v584
    %v2130 = vunpack.c.l.b16 %v585
    %v2131 = vunpack.c.h.b16 %v585
    %v2132 = vunpack.c.l.b16 %v586
    %v2133 = vunpack.c.h.b16 %v586
    %v2134 = vunpack.c.l.b16 %v587
    %v2135 = vunpack.c.h.b16 %v587
    %v2136 = vunpack.c.l.b16 %v588
    %v2137 = vunpack.c.h.b16 %v588
    %v2138 = vunpack.c.l.b16 %v589
    %v2139 = vunpack.c.h.b16 %v589
    %v2140 = vunpack.c.l.b16 %v590
    %v2141 = vunpack.c.h.b16 %v590
    %v2142 = vunpack.c.l.b16 %v591
    %v2143 = vunpack.c.h.b16 %v591
    %v2144 = vunpack.c.l.b16 %v592
    %v2145 = vunpack.c.h.b16 %v592
    %v2146 = vunpack.c.l.b16 %v593
    %v2147 = vunpack.c.h.b16 %v593
    %v2148 = vunpack.c.l.b16 %v594
    %v2149 = vunpack.c.h.b16 %v594
    %v2150 = vunpack.c.l.b16 %v595
    %v2151 = vunpack.c.h.b16 %v595
    %v2152 = vunpack.c.l.b16 %v596
    %v2153 = vunpack.c.h.b16 %v596
    %v2154 = vunpack.c.l.b16 %v597
    %v2155 = vunpack.c.h.b16 %v597
    %v2156 = vunpack.c.l.b16 %v598
    %v2157 = vunpack.c.h.b16 %v598
    %v2158 = vunpack.c.l.b16 %v599
    %v2159 = vunpack.c.h.b16 %v599
    %v2160 = vunpack.c.l.b16 %v600
    %v2161 = vunpack.c.h.b16 %v600
    %v2162 = vunpack.c.l.b16 %v601
    %v2163 = vunpack.c.h.b16 %v601
    %v2164 = vunpack.c.l.b16 %v602
    %v2165 = vunpack.c.h.b16 %v602
    %v2166 = vunpack.c.l.b16 %v603
    %v2167 = vunpack.c.h.b16 %v603
    %v2168 = vunpack.c.l.b16 %v604
    %v2169 = vunpack.c.h.b16 %v604
    %v2170 = vunpack.c.l.b16 %v605
    %v2171 = vunpack.c.h.b16 %v605
    %v2172 = vunpack.c.l.b16 %v606
    %v2173 = vunpack.c.h.b16 %v606
    %v2174 = vunpack.c.l.b16 %v607
    %v2175 = vunpack.c.h.b16 %v607
    %v2176 = vunpack.c.l.b16 %v608
    %v2177 = vunpack.c.h.b16 %v608
    %v2178 = vunpack.c.l.b16 %v609
    %v2179 = vunpack.c.h.b16 %v609
    %v2180 = vunpack.c.l.b16 %v610
    %v2181 = vunpack.c.h.b16 %v610
    %v2182 = vunpack.c.l.b16 %v611
    %v2183 = vunpack.c.h.b16 %v611
    %v2184 = vunpack.c.l.b16 %v612
    %v2185 = vunpack.c.h.b16 %v612
    %v2186 = vunpack.c.l.b16 %v613
    %v2187 = vunpack.c.h.b16 %v613
    %v2188 = vunpack.c.l.b16 %v614
    %v2189 = vunpack.c.h.b16 %v614
    %v2190 = vunpack.c.l.b16 %v615
    %v2191 = vunpack.c.h.b16 %v615
    %v2192 = vunpack.c.l.b16 %v616
    %v2193 = vunpack.c.h.b16 %v616
    %v2194 = vunpack.c.l.b16 %v617
    %v2195 = vunpack.c.h.b16 %v617
    %v2196 = vunpack.c.l.b16 %v618
    %v2197 = vunpack.c.h.b16 %v618
    %v2198 = vunpack.c.l.b16 %v619
    %v2199 = vunpack.c.h.b16 %v619
    %v2200 = vunpack.c.l.b16 %v620
    %v2201 = vunpack.c.h.b16 %v620
    %v2202 = vunpack.c.l.b16 %v621
    %v2203 = vunpack.c.h.b16 %v621
    %v2204 = vunpack.c.l.b16 %v622
    %v2205 = vunpack.c.h.b16 %v622
    %v2206 = vunpack.c.l.b16 %v623
    %v2207 = vunpack.c.h.b16 %v623
    %v2208 = vunpack.c.l.b16 %v624
    %v2209 = vunpack.c.h.b16 %v624
    %v2210 = vunpack.c.l.b16 %v625
    %v2211 = vunpack.c.h.b16 %v625
    %v2212 = vunpack.c.l.b16 %v626
    %v2213 = vunpack.c.h.b16 %v626
    %v2214 = vunpack.c.l.b16 %v627
    %v2215 = vunpack.c.h.b16 %v627
    %v2216 = vunpack.c.l.b16 %v628
    %v2217 = vunpack.c.h.b16 %v628
    %v2218 = vunpack.c.l.b16 %v629
    %v2219 = vunpack.c.h.b16 %v629
    %v2220 = vunpack.c.l.b16 %v630
    %v2221 = vunpack.c.h.b16 %v630
    %v2222 = vunpack.c.l.b16 %v631
    %v2223 = vunpack.c.h.b16 %v631
    %v2224 = vunpack.c.l.b16 %v632
    %v2225 = vunpack.c.h.b16 %v632
    %v2226 = vunpack.c.l.b16 %v633
    %v2227 = vunpack.c.h.b16 %v633
    %v2228 = vpack.c.b16 %v1212, %v1204
    %v2229 = vpack.c.b16 %v1213, %v1205
    %v2230 = vpack.c.b16 %v1214, %v1206
    %v2231 = vpack.c.b16 %v1215, %v1207
    %v2232 = vpack.c.b16 %v1216, %v1208
    %v2233 = vpack.c.b16 %v1217, %v1209
    %v2234 = vpack.c.b16 %v1218, %v1210
    %v2235 = vpack.c.b16 %v1219, %v1211
    %v2236 = vpack.c.b16 %v1228, %v1220
    %v2237 = vpack.c.b16 %v1229, %v1221
    %v2238 = vpack.c.b16 %v1230, %v1222
    %v2239 = vpack.c.b16 %v1231, %v1223
    %v2240 = vpack.c.b16 %v1232, %v1224
    %v2241 = vpack.c.b16 %v1233, %v1225
    %v2242 = vpack.c.b16 %v1234, %v1226
    %v2243 = vpack.c.b16 %v1235, %v1227
    %v2244 = vpack.c.b16 %v1244, %v1236
    %v2245 = vpack.c.b16 %v1245, %v1237
    %v2246 = vpack.c.b16 %v1246, %v1238
    %v2247 = vpack.c.b16 %v1247, %v1239
    %v2248 = vpack.c.b16 %v1248, %v1240
    %v2249 = vpack.c.b16 %v1249, %v1241
    %v2250 = vpack.c.b16 %v1250, %v1242
    %v2251 = vpack.c.b16 %v1251, %v1243
    %v2252 = vpack.c.b16 %v1260, %v1252
    %v2253 = vpack.c.b16 %v1261, %v1253
    %v2254 = vpack.c.b16 %v1262, %v1254
    %v2255 = vpack.c.b16 %v1263, %v1255
    %v2256 = vpack.c.b16 %v1264, %v1256
    %v2257 = vpack.c.b16 %v1265, %v1257
    %v2258 = vpack.c.b16 %v1266, %v1258
    %v2259 = vpack.c.b16 %v1267, %v1259
    %v2260 = vpack.c.b16 %v1276, %v1268
    %v2261 = vpack.c.b16 %v1277, %v1269
    %v2262 = vpack.c.b16 %v1278, %v1270
    %v2263 = vpack.c.b16 %v1279, %v1271
    %v2264 = vpack.c.b16 %v1280, %v1272
    %v2265 = vpack.c.b16 %v1281, %v1273
    %v2266 = vpack.c.b16 %v1282, %v1274
    %v2267 = vpack.c.b16 %v1283, %v1275
    %v2268 = vpack.c.b16 %v1292, %v1284
    %v2269 = vpack.c.b16 %v1293, %v1285
    %v2270 = vpack.c.b16 %v1294, %v1286
    %v2271 = vpack.c.b16 %v1295, %v1287
    %v2272 = vpack.c.b16 %v1296, %v1288
    %v2273 = vpack.c.b16 %v1297, %v1289
    %v2274 = vpack.c.b16 %v1298, %v1290
    %v2275 = vpack.c.b16 %v1299, %v1291
    %v2276 = vpack.c.b16 %v1308, %v1300
    %v2277 = vpack.c.b16 %v1309, %v1301
    %v2278 = vpack.c.b16 %v1310, %v1302
    %v2279 = vpack.c.b16 %v1311, %v1303
    %v2280 = vpack.c.b16 %v1312, %v1304
    %v2281 = vpack.c.b16 %v1313, %v1305
    %v2282 = vpack.c.b16 %v1314, %v1306
    %v2283 = vpack.c.b16 %v1315, %v1307
    %v2284 = vpack.c.b16 %v1324, %v1316
    %v2285 = vpack.c.b16 %v1325, %v1317
    %v2286 = vpack.c.b16 %v1326, %v1318
    %v2287 = vpack.c.b16 %v1327, %v1319
    %v2288 = vpack.c.b16 %v1328, %v1320
    %v2289 = vpack.c.b16 %v1329, %v1321
    %v2290 = vpack.c.b16 %v1330, %v1322
    %v2291 = vpack.c.b16 %v1331, %v1323
    %v2292 = vpack.c.b16 %v1340, %v1332
    %v2293 = vpack.c.b16 %v1341, %v1333
    %v2294 = vpack.c.b16 %v1342, %v1334
    %v2295 = vpack.c.b16 %v1343, %v1335
    %v2296 = vpack.c.b16 %v1344, %v1336
    %v2297 = vpack.c.b16 %v1345, %v1337
    %v2298 = vpack.c.b16 %v1346, %v1338
    %v2299 = vpack.c.b16 %v1347, %v1339
    %v2300 = vpack.c.b16 %v1356, %v1348
    %v2301 = vpack.c.b16 %v1357, %v1349
    %v2302 = vpack.c.b16 %v1358, %v1350
    %v2303 = vpack.c.b16 %v1359, %v1351
    %v2304 = vpack.c.b16 %v1360, %v1352
    %v2305 = vpack.c.b16 %v1361, %v1353
    %v2306 = vpack.c.b16 %v1362, %v1354
    %v2307 = vpack.c.b16 %v1363, %v1355
    %v2308 = vpack.c.b16 %v1372, %v1364
    %v2309 = vpack.c.b16 %v1373, %v1365
    %v2310 = vpack.c.b16 %v1374, %v1366
    %v2311 = vpack.c.b16 %v1375, %v1367
    %v2312 = vpack.c.b16 %v1376, %v1368
    %v2313 = vpack.c.b16 %v1377, %v1369
    %v2314 = vpack.c.b16 %v1378, %v1370
    %v2315 = vpack.c.b16 %v1379, %v1371
    %v2316 = vpack.c.b16 %v1388, %v1380
    %v2317 = vpack.c.b16 %v1389, %v1381
    %v2318 = vpack.c.b16 %v1390, %v1382
    %v2319 = vpack.c.b16 %v1391, %v1383
    %v2320 = vpack.c.b16 %v1392, %v1384
    %v2321 = vpack.c.b16 %v1393, %v1385
    %v2322 = vpack.c.b16 %v1394, %v1386
    %v2323 = vpack.c.b16 %v1395, %v1387
    %v2324 = vpack.c.b16 %v1404, %v1396
    %v2325 = vpack.c.b16 %v1405, %v1397
    %v2326 = vpack.c.b16 %v1406, %v1398
    %v2327 = vpack.c.b16 %v1407, %v1399
    %v2328 = vpack.c.b16 %v1408, %v1400
    %v2329 = vpack.c.b16 %v1409, %v1401
    %v2330 = vpack.c.b16 %v1410, %v1402
    %v2331 = vpack.c.b16 %v1411, %v1403
    %v2332 = vpack.c.b16 %v1420, %v1412
    %v2333 = vpack.c.b16 %v1421, %v1413
    %v2334 = vpack.c.b16 %v1422, %v1414
    %v2335 = vpack.c.b16 %v1423, %v1415
    %v2336 = vpack.c.b16 %v1424, %v1416
    %v2337 = vpack.c.b16 %v1425, %v1417
    %v2338 = vpack.c.b16 %v1426, %v1418
    %v2339 = vpack.c.b16 %v1427, %v1419
    %v2340 = vpack.c.b16 %v1436, %v1428
    %v2341 = vpack.c.b16 %v1437, %v1429
    %v2342 = vpack.c.b16 %v1438, %v1430
    %v2343 = vpack.c.b16 %v1439, %v1431
    %v2344 = vpack.c.b16 %v1440, %v1432
    %v2345 = vpack.c.b16 %v1441, %v1433
    %v2346 = vpack.c.b16 %v1442, %v1434
    %v2347 = vpack.c.b16 %v1443, %v1435
    %v2348 = vpack.c.b16 %v1452, %v1444
    %v2349 = vpack.c.b16 %v1453, %v1445
    %v2350 = vpack.c.b16 %v1454, %v1446
    %v2351 = vpack.c.b16 %v1455, %v1447
    %v2352 = vpack.c.b16 %v1456, %v1448
    %v2353 = vpack.c.b16 %v1457, %v1449
    %v2354 = vpack.c.b16 %v1458, %v1450
    %v2355 = vpack.c.b16 %v1459, %v1451
    %v2356 = vpack.c.b16 %v1468, %v1460
    %v2357 = vpack.c.b16 %v1469, %v1461
    %v2358 = vpack.c.b16 %v1470, %v1462
    %v2359 = vpack.c.b16 %v1471, %v1463
    %v2360 = vpack.c.b16 %v1472, %v1464
    %v2361 = vpack.c.b16 %v1473, %v1465
    %v2362 = vpack.c.b16 %v1474, %v1466
    %v2363 = vpack.c.b16 %v1475, %v1467
    %v2364 = vpack.c.b16 %v1484, %v1476
    %v2365 = vpack.c.b16 %v1485, %v1477
    %v2366 = vpack.c.b16 %v1486, %v1478
    %v2367 = vpack.c.b16 %v1487, %v1479
    %v2368 = vpack.c.b16 %v1488, %v1480
    %v2369 = vpack.c.b16 %v1489, %v1481
    %v2370 = vpack.c.b16 %v1490, %v1482
    %v2371 = vpack.c.b16 %v1491, %v1483
    %v2372 = vpack.c.b16 %v1500, %v1492
    %v2373 = vpack.c.b16 %v1501, %v1493
    %v2374 = vpack.c.b16 %v1502, %v1494
    %v2375 = vpack.c.b16 %v1503, %v1495
    %v2376 = vpack.c.b16 %v1504, %v1496
    %v2377 = vpack.c.b16 %v1505, %v1497
    %v2378 = vpack.c.b16 %v1506, %v1498
    %v2379 = vpack.c.b16 %v1507, %v1499
    %v2380 = vpack.c.b16 %v1516, %v1508
    %v2381 = vpack.c.b16 %v1517, %v1509
    %v2382 = vpack.c.b16 %v1518, %v1510
    %v2383 = vpack.c.b16 %v1519, %v1511
    %v2384 = vpack.c.b16 %v1520, %v1512
    %v2385 = vpack.c.b16 %v1521, %v1513
    %v2386 = vpack.c.b16 %v1522, %v1514
    %v2387 = vpack.c.b16 %v1523, %v1515
    %v2388 = vpack.c.b16 %v1532, %v1524
    %v2389 = vpack.c.b16 %v1533, %v1525
    %v2390 = vpack.c.b16 %v1534, %v1526
    %v2391 = vpack.c.b16 %v1535, %v1527
    %v2392 = vpack.c.b16 %v1536, %v1528
    %v2393 = vpack.c.b16 %v1537, %v1529
    %v2394 = vpack.c.b16 %v1538, %v1530
    %v2395 = vpack.c.b16 %v1539, %v1531
    %v2396 = vpack.c.b16 %v1548, %v1540
    %v2397 = vpack.c.b16 %v1549, %v1541
    %v2398 = vpack.c.b16 %v1550, %v1542
    %v2399 = vpack.c.b16 %v1551, %v1543
    %v2400 = vpack.c.b16 %v1552, %v1544
    %v2401 = vpack.c.b16 %v1553, %v1545
    %v2402 = vpack.c.b16 %v1554, %v1546
    %v2403 = vpack.c.b16 %v1555, %v1547
    %v2404 = vpack.c.b16 %v1564, %v1556
    %v2405 = vpack.c.b16 %v1565, %v1557
    %v2406 = vpack.c.b16 %v1566, %v1558
    %v2407 = vpack.c.b16 %v1567, %v1559
    %v2408 = vpack.c.b16 %v1568, %v1560
    %v2409 = vpack.c.b16 %v1569, %v1561
    %v2410 = vpack.c.b16 %v1570, %v1562
    %v2411 = vpack.c.b16 %v1571, %v1563
    %v2412 = vpack.c.b16 %v1580, %v1572
    %v2413 = vpack.c.b16 %v1581, %v1573
    %v2414 = vpack.c.b16 %v1582, %v1574
    %v2415 = vpack.c.b16 %v1583, %v1575
    %v2416 = vpack.c.b16 %v1584, %v1576
    %v2417 = vpack.c.b16 %v1585, %v1577
    %v2418 = vpack.c.b16 %v1586, %v1578
    %v2419 = vpack.c.b16 %v1587, %v1579
    %v2420 = vpack.c.b16 %v1596, %v1588
    %v2421 = vpack.c.b16 %v1597, %v1589
    %v2422 = vpack.c.b16 %v1598, %v1590
    %v2423 = vpack.c.b16 %v1599, %v1591
    %v2424 = vpack.c.b16 %v1600, %v1592
    %v2425 = vpack.c.b16 %v1601, %v1593
    %v2426 = vpack.c.b16 %v1602, %v1594
    %v2427 = vpack.c.b16 %v1603, %v1595
    %v2428 = vpack.c.b16 %v1612, %v1604
    %v2429 = vpack.c.b16 %v1613, %v1605
    %v2430 = vpack.c.b16 %v1614, %v1606
    %v2431 = vpack.c.b16 %v1615, %v1607
    %v2432 = vpack.c.b16 %v1616, %v1608
    %v2433 = vpack.c.b16 %v1617, %v1609
    %v2434 = vpack.c.b16 %v1618, %v1610
    %v2435 = vpack.c.b16 %v1619, %v1611
    %v2436 = vpack.c.b16 %v1628, %v1620
    %v2437 = vpack.c.b16 %v1629, %v1621
    %v2438 = vpack.c.b16 %v1630, %v1622
    %v2439 = vpack.c.b16 %v1631, %v1623
    %v2440 = vpack.c.b16 %v1632, %v1624
    %v2441 = vpack.c.b16 %v1633, %v1625
    %v2442 = vpack.c.b16 %v1634, %v1626
    %v2443 = vpack.c.b16 %v1635, %v1627
    %v2444 = vpack.c.b16 %v1644, %v1636
    %v2445 = vpack.c.b16 %v1645, %v1637
    %v2446 = vpack.c.b16 %v1646, %v1638
    %v2447 = vpack.c.b16 %v1647, %v1639
    %v2448 = vpack.c.b16 %v1648, %v1640
    %v2449 = vpack.c.b16 %v1649, %v1641
    %v2450 = vpack.c.b16 %v1650, %v1642
    %v2451 = vpack.c.b16 %v1651, %v1643
    %v2452 = vpack.c.b16 %v1660, %v1652
    %v2453 = vpack.c.b16 %v1661, %v1653
    %v2454 = vpack.c.b16 %v1662, %v1654
    %v2455 = vpack.c.b16 %v1663, %v1655
    %v2456 = vpack.c.b16 %v1664, %v1656
    %v2457 = vpack.c.b16 %v1665, %v1657
    %v2458 = vpack.c.b16 %v1666, %v1658
    %v2459 = vpack.c.b16 %v1667, %v1659
    %v2460 = vpack.c.b16 %v1676, %v1668
    %v2461 = vpack.c.b16 %v1677, %v1669
    %v2462 = vpack.c.b16 %v1678, %v1670
    %v2463 = vpack.c.b16 %v1679, %v1671
    %v2464 = vpack.c.b16 %v1680, %v1672
    %v2465 = vpack.c.b16 %v1681, %v1673
    %v2466 = vpack.c.b16 %v1682, %v1674
    %v2467 = vpack.c.b16 %v1683, %v1675
    %v2468 = vpack.c.b16 %v1692, %v1684
    %v2469 = vpack.c.b16 %v1693, %v1685
    %v2470 = vpack.c.b16 %v1694, %v1686
    %v2471 = vpack.c.b16 %v1695, %v1687
    %v2472 = vpack.c.b16 %v1696, %v1688
    %v2473 = vpack.c.b16 %v1697, %v1689
    %v2474 = vpack.c.b16 %v1698, %v1690
    %v2475 = vpack.c.b16 %v1699, %v1691
    %v2476 = vpack.c.b16 %v1708, %v1700
    %v2477 = vpack.c.b16 %v1709, %v1701
    %v2478 = vpack.c.b16 %v1710, %v1702
    %v2479 = vpack.c.b16 %v1711, %v1703
    %v2480 = vpack.c.b16 %v1712, %v1704
    %v2481 = vpack.c.b16 %v1713, %v1705
    %v2482 = vpack.c.b16 %v1714, %v1706
    %v2483 = vpack.c.b16 %v1715, %v1707
    %v2484 = vpack.c.b16 %v1724, %v1716
    %v2485 = vpack.c.b16 %v1725, %v1717
    %v2486 = vpack.c.b16 %v1726, %v1718
    %v2487 = vpack.c.b16 %v1727, %v1719
    %v2488 = vpack.c.b16 %v1728, %v1720
    %v2489 = vpack.c.b16 %v1729, %v1721
    %v2490 = vpack.c.b16 %v1730, %v1722
    %v2491 = vpack.c.b16 %v1731, %v1723
    %v2492 = vpack.c.b16 %v1740, %v1732
    %v2493 = vpack.c.b16 %v1741, %v1733
    %v2494 = vpack.c.b16 %v1742, %v1734
    %v2495 = vpack.c.b16 %v1743, %v1735
    %v2496 = vpack.c.b16 %v1744, %v1736
    %v2497 = vpack.c.b16 %v1745, %v1737
    %v2498 = vpack.c.b16 %v1746, %v1738
    %v2499 = vpack.c.b16 %v1747, %v1739
    %v2500 = vpack.c.b16 %v1756, %v1748
    %v2501 = vpack.c.b16 %v1757, %v1749
    %v2502 = vpack.c.b16 %v1758, %v1750
    %v2503 = vpack.c.b16 %v1759, %v1751
    %v2504 = vpack.c.b16 %v1760, %v1752
    %v2505 = vpack.c.b16 %v1761, %v1753
    %v2506 = vpack.c.b16 %v1762, %v1754
    %v2507 = vpack.c.b16 %v1763, %v1755
    %v2508 = vpack.c.b16 %v1772, %v1764
    %v2509 = vpack.c.b16 %v1773, %v1765
    %v2510 = vpack.c.b16 %v1774, %v1766
    %v2511 = vpack.c.b16 %v1775, %v1767
    %v2512 = vpack.c.b16 %v1776, %v1768
    %v2513 = vpack.c.b16 %v1777, %v1769
    %v2514 = vpack.c.b16 %v1778, %v1770
    %v2515 = vpack.c.b16 %v1779, %v1771
    %v2516 = vpack.c.b16 %v1788, %v1780
    %v2517 = vpack.c.b16 %v1789, %v1781
    %v2518 = vpack.c.b16 %v1790, %v1782
    %v2519 = vpack.c.b16 %v1791, %v1783
    %v2520 = vpack.c.b16 %v1792, %v1784
    %v2521 = vpack.c.b16 %v1793, %v1785
    %v2522 = vpack.c.b16 %v1794, %v1786
    %v2523 = vpack.c.b16 %v1795, %v1787
    %v2524 = vpack.c.b16 %v1804, %v1796
    %v2525 = vpack.c.b16 %v1805, %v1797
    %v2526 = vpack.c.b16 %v1806, %v1798
    %v2527 = vpack.c.b16 %v1807, %v1799
    %v2528 = vpack.c.b16 %v1808, %v1800
    %v2529 = vpack.c.b16 %v1809, %v1801
    %v2530 = vpack.c.b16 %v1810, %v1802
    %v2531 = vpack.c.b16 %v1811, %v1803
    %v2532 = vpack.c.b16 %v1820, %v1812
    %v2533 = vpack.c.b16 %v1821, %v1813
    %v2534 = vpack.c.b16 %v1822, %v1814
    %v2535 = vpack.c.b16 %v1823, %v1815
    %v2536 = vpack.c.b16 %v1824, %v1816
    %v2537 = vpack.c.b16 %v1825, %v1817
    %v2538 = vpack.c.b16 %v1826, %v1818
    %v2539 = vpack.c.b16 %v1827, %v1819
    %v2540 = vpack.c.b16 %v1836, %v1828
    %v2541 = vpack.c.b16 %v1837, %v1829
    %v2542 = vpack.c.b16 %v1838, %v1830
    %v2543 = vpack.c.b16 %v1839, %v1831
    %v2544 = vpack.c.b16 %v1840, %v1832
    %v2545 = vpack.c.b16 %v1841, %v1833
    %v2546 = vpack.c.b16 %v1842, %v1834
    %v2547 = vpack.c.b16 %v1843, %v1835
    %v2548 = vpack.c.b16 %v1852, %v1844
    %v2549 = vpack.c.b16 %v1853, %v1845
    %v2550 = vpack.c.b16 %v1854, %v1846
    %v2551 = vpack.c.b16 %v1855, %v1847
    %v2552 = vpack.c.b16 %v1856, %v1848
    %v2553 = vpack.c.b16 %v1857, %v1849
    %v2554 = vpack.c.b16 %v1858, %v1850
    %v2555 = vpack.c.b16 %v1859, %v1851
    %v2556 = vpack.c.b16 %v1868, %v1860
    %v2557 = vpack.c.b16 %v1869, %v1861
    %v2558 = vpack.c.b16 %v1870, %v1862
    %v2559 = vpack.c.b16 %v1871, %v1863
    %v2560 = vpack.c.b16 %v1872, %v1864
    %v2561 = vpack.c.b16 %v1873, %v1865
    %v2562 = vpack.c.b16 %v1874, %v1866
    %v2563 = vpack.c.b16 %v1875, %v1867
    %v2564 = vpack.c.b16 %v1884, %v1876
    %v2565 = vpack.c.b16 %v1885, %v1877
    %v2566 = vpack.c.b16 %v1886, %v1878
    %v2567 = vpack.c.b16 %v1887, %v1879
    %v2568 = vpack.c.b16 %v1888, %v1880
    %v2569 = vpack.c.b16 %v1889, %v1881
    %v2570 = vpack.c.b16 %v1890, %v1882
    %v2571 = vpack.c.b16 %v1891, %v1883
    %v2572 = vpack.c.b16 %v1900, %v1892
    %v2573 = vpack.c.b16 %v1901, %v1893
    %v2574 = vpack.c.b16 %v1902, %v1894
    %v2575 = vpack.c.b16 %v1903, %v1895
    %v2576 = vpack.c.b16 %v1904, %v1896
    %v2577 = vpack.c.b16 %v1905, %v1897
    %v2578 = vpack.c.b16 %v1906, %v1898
    %v2579 = vpack.c.b16 %v1907, %v1899
    %v2580 = vpack.c.b16 %v1916, %v1908
    %v2581 = vpack.c.b16 %v1917, %v1909
    %v2582 = vpack.c.b16 %v1918, %v1910
    %v2583 = vpack.c.b16 %v1919, %v1911
    %v2584 = vpack.c.b16 %v1920, %v1912
    %v2585 = vpack.c.b16 %v1921, %v1913
    %v2586 = vpack.c.b16 %v1922, %v1914
    %v2587 = vpack.c.b16 %v1923, %v1915
    %v2588 = vpack.c.b16 %v1932, %v1924
    %v2589 = vpack.c.b16 %v1933, %v1925
    %v2590 = vpack.c.b16 %v1934, %v1926
    %v2591 = vpack.c.b16 %v1935, %v1927
    %v2592 = vpack.c.b16 %v1936, %v1928
    %v2593 = vpack.c.b16 %v1937, %v1929
    %v2594 = vpack.c.b16 %v1938, %v1930
    %v2595 = vpack.c.b16 %v1939, %v1931
    %v2596 = vpack.c.b16 %v1948, %v1940
    %v2597 = vpack.c.b16 %v1949, %v1941
    %v2598 = vpack.c.b16 %v1950, %v1942
    %v2599 = vpack.c.b16 %v1951, %v1943
    %v2600 = vpack.c.b16 %v1952, %v1944
    %v2601 = vpack.c.b16 %v1953, %v1945
    %v2602 = vpack.c.b16 %v1954, %v1946
    %v2603 = vpack.c.b16 %v1955, %v1947
    %v2604 = vpack.c.b16 %v1964, %v1956
    %v2605 = vpack.c.b16 %v1965, %v1957
    %v2606 = vpack.c.b16 %v1966, %v1958
    %v2607 = vpack.c.b16 %v1967, %v1959
    %v2608 = vpack.c.b16 %v1968, %v1960
    %v2609 = vpack.c.b16 %v1969, %v1961
    %v2610 = vpack.c.b16 %v1970, %v1962
    %v2611 = vpack.c.b16 %v1971, %v1963
    %v2612 = vpack.c.b16 %v1980, %v1972
    %v2613 = vpack.c.b16 %v1981, %v1973
    %v2614 = vpack.c.b16 %v1982, %v1974
    %v2615 = vpack.c.b16 %v1983, %v1975
    %v2616 = vpack.c.b16 %v1984, %v1976
    %v2617 = vpack.c.b16 %v1985, %v1977
    %v2618 = vpack.c.b16 %v1986, %v1978
    %v2619 = vpack.c.b16 %v1987, %v1979
    %v2620 = vpack.c.b16 %v1996, %v1988
    %v2621 = vpack.c.b16 %v1997, %v1989
    %v2622 = vpack.c.b16 %v1998, %v1990
    %v2623 = vpack.c.b16 %v1999, %v1991
    %v2624 = vpack.c.b16 %v2000, %v1992
    %v2625 = vpack.c.b16 %v2001, %v1993
    %v2626 = vpack.c.b16 %v2002, %v1994
    %v2627 = vpack.c.b16 %v2003, %v1995
    %v2628 = vpack.c.b16 %v2012, %v2004
    %v2629 = vpack.c.b16 %v2013, %v2005
    %v2630 = vpack.c.b16 %v2014, %v2006
    %v2631 = vpack.c.b16 %v2015, %v2007
    %v2632 = vpack.c.b16 %v2016, %v2008
    %v2633 = vpack.c.b16 %v2017, %v2009
    %v2634 = vpack.c.b16 %v2018, %v2010
    %v2635 = vpack.c.b16 %v2019, %v2011
    %v2636 = vpack.c.b16 %v2028, %v2020
    %v2637 = vpack.c.b16 %v2029, %v2021
    %v2638 = vpack.c.b16 %v2030, %v2022
    %v2639 = vpack.c.b16 %v2031, %v2023
    %v2640 = vpack.c.b16 %v2032, %v2024
    %v2641 = vpack.c.b16 %v2033, %v2025
    %v2642 = vpack.c.b16 %v2034, %v2026
    %v2643 = vpack.c.b16 %v2035, %v2027
    %v2644 = vpack.c.b16 %v2044, %v2036
    %v2645 = vpack.c.b16 %v2045, %v2037
    %v2646 = vpack.c.b16 %v2046, %v2038
    %v2647 = vpack.c.b16 %v2047, %v2039
    %v2648 = vpack.c.b16 %v2048, %v2040
    %v2649 = vpack.c.b16 %v2049, %v2041
    %v2650 = vpack.c.b16 %v2050, %v2042
    %v2651 = vpack.c.b16 %v2051, %v2043
    %v2652 = vpack.c.b16 %v2060, %v2052
    %v2653 = vpack.c.b16 %v2061, %v2053
    %v2654 = vpack.c.b16 %v2062, %v2054
    %v2655 = vpack.c.b16 %v2063, %v2055
    %v2656 = vpack.c.b16 %v2064, %v2056
    %v2657 = vpack.c.b16 %v2065, %v2057
    %v2658 = vpack.c.b16 %v2066, %v2058
    %v2659 = vpack.c.b16 %v2067, %v2059
    %v2660 = vpack.c.b16 %v2076, %v2068
    %v2661 = vpack.c.b16 %v2077, %v2069
    %v2662 = vpack.c.b16 %v2078, %v2070
    %v2663 = vpack.c.b16 %v2079, %v2071
    %v2664 = vpack.c.b16 %v2080, %v2072
    %v2665 = vpack.c.b16 %v2081, %v2073
    %v2666 = vpack.c.b16 %v2082, %v2074
    %v2667 = vpack.c.b16 %v2083, %v2075
    %v2668 = vpack.c.b16 %v2092, %v2084
    %v2669 = vpack.c.b16 %v2093, %v2085
    %v2670 = vpack.c.b16 %v2094, %v2086
    %v2671 = vpack.c.b16 %v2095, %v2087
    %v2672 = vpack.c.b16 %v2096, %v2088
    %v2673 = vpack.c.b16 %v2097, %v2089
    %v2674 = vpack.c.b16 %v2098, %v2090
    %v2675 = vpack.c.b16 %v2099, %v2091
    %v2676 = vpack.c.b16 %v2108, %v2100
    %v2677 = vpack.c.b16 %v2109, %v2101
    %v2678 = vpack.c.b16 %v2110, %v2102
    %v2679 = vpack.c.b16 %v2111, %v2103
    %v2680 = vpack.c.b16 %v2112, %v2104
    %v2681 = vpack.c.b16 %v2113, %v2105
    %v2682 = vpack.c.b16 %v2114, %v2106
    %v2683 = vpack.c.b16 %v2115, %v2107
    %v2684 = vpack.c.b16 %v2124, %v2116
    %v2685 = vpack.c.b16 %v2125, %v2117
    %v2686 = vpack.c.b16 %v2126, %v2118
    %v2687 = vpack.c.b16 %v2127, %v2119
    %v2688 = vpack.c.b16 %v2128, %v2120
    %v2689 = vpack.c.b16 %v2129, %v2121
    %v2690 = vpack.c.b16 %v2130, %v2122
    %v2691 = vpack.c.b16 %v2131, %v2123
    %v2692 = vpack.c.b16 %v2140, %v2132
    %v2693 = vpack.c.b16 %v2141, %v2133
    %v2694 = vpack.c.b16 %v2142, %v2134
    %v2695 = vpack.c.b16 %v2143, %v2135
    %v2696 = vpack.c.b16 %v2144, %v2136
    %v2697 = vpack.c.b16 %v2145, %v2137
    %v2698 = vpack.c.b16 %v2146, %v2138
    %v2699 = vpack.c.b16 %v2147, %v2139
    %v2700 = vpack.c.b16 %v2156, %v2148
    %v2701 = vpack.c.b16 %v2157, %v2149
    %v2702 = vpack.c.b16 %v2158, %v2150
    %v2703 = vpack.c.b16 %v2159, %v2151
    %v2704 = vpack.c.b16 %v2160, %v2152
    %v2705 = vpack.c.b16 %v2161, %v2153
    %v2706 = vpack.c.b16 %v2162, %v2154
    %v2707 = vpack.c.b16 %v2163, %v2155
    %v2708 = vpack.c.b16 %v2172, %v2164
    %v2709 = vpack.c.b16 %v2173, %v2165
    %v2710 = vpack.c.b16 %v2174, %v2166
    %v2711 = vpack.c.b16 %v2175, %v2167
    %v2712 = vpack.c.b16 %v2176, %v2168
    %v2713 = vpack.c.b16 %v2177, %v2169
    %v2714 = vpack.c.b16 %v2178, %v2170
    %v2715 = vpack.c.b16 %v2179, %v2171
    %v2716 = vpack.c.b16 %v2188, %v2180
    %v2717 = vpack.c.b16 %v2189, %v2181
    %v2718 = vpack.c.b16 %v2190, %v2182
    %v2719 = vpack.c.b16 %v2191, %v2183
    %v2720 = vpack.c.b16 %v2192, %v2184
    %v2721 = vpack.c.b16 %v2193, %v2185
    %v2722 = vpack.c.b16 %v2194, %v2186
    %v2723 = vpack.c.b16 %v2195, %v2187
    %v2724 = vpack.c.b16 %v2204, %v2196
    %v2725 = vpack.c.b16 %v2205, %v2197
    %v2726 = vpack.c.b16 %v2206, %v2198
    %v2727 = vpack.c.b16 %v2207, %v2199
    %v2728 = vpack.c.b16 %v2208, %v2200
    %v2729 = vpack.c.b16 %v2209, %v2201
    %v2730 = vpack.c.b16 %v2210, %v2202
    %v2731 = vpack.c.b16 %v2211, %v2203
    %v2732 = vpack.c.b16 %v2220, %v2212
    %v2733 = vpack.c.b16 %v2221, %v2213
    %v2734 = vpack.c.b16 %v2222, %v2214
    %v2735 = vpack.c.b16 %v2223, %v2215
    %v2736 = vpack.c.b16 %v2224, %v2216
    %v2737 = vpack.c.b16 %v2225, %v2217
    %v2738 = vpack.c.b16 %v2226, %v2218
    %v2739 = vpack.c.b16 %v2227, %v2219
    %3252 = vmatpush.bf16.msra.mxu0 %v2284
    %3253 = vmatpush.bf16.msra.mxu0 %v2276
    %3254 = vmatpush.bf16.msra.mxu0 %v2268
    %3255 = vmatpush.bf16.msra.mxu0 %v2260
    %3256 = vmatpush.bf16.msra.mxu0 %v2252
    %3257 = vmatpush.bf16.msra.mxu0 %v2244
    %3258 = vmatpush.bf16.msra.mxu0 %v2236
    %3259 = vmatpush.bf16.msra.mxu0 %v2228
    %3260 = vmatmul.bf16.gmra.mxu0 %v676
    %v3261 = vpop.f32.mrf.mxu0
    %v3262 = vadd.f32 %v636, %v3261
    %v3263 = vpop.f32.mrf.mxu0
    %v3264 = vadd.f32 %v636, %v3263
    %3265 = vdwg.mxu0
    %3266 = vmatpush.bf16.msra.mxu0 %v2348
    %3267 = vmatpush.bf16.msra.mxu0 %v2340
    %3268 = vmatpush.bf16.msra.mxu0 %v2332
    %3269 = vmatpush.bf16.msra.mxu0 %v2324
    %3270 = vmatpush.bf16.msra.mxu0 %v2316
    %3271 = vmatpush.bf16.msra.mxu0 %v2308
    %3272 = vmatpush.bf16.msra.mxu0 %v2300
    %3273 = vmatpush.bf16.msra.mxu0 %v2292
    %3274 = vmatmul.bf16.gmra.mxu0 %v677
    %v3275 = vpop.f32.mrf.mxu0
    %v3276 = vadd.f32 %v3262, %v3275
    %v3277 = vpop.f32.mrf.mxu0
    %v3278 = vadd.f32 %v3264, %v3277
    %3279 = vdwg.mxu0
    %3280 = vmatpush.bf16.msra.mxu0 %v2412
    %3281 = vmatpush.bf16.msra.mxu0 %v2404
    %3282 = vmatpush.bf16.msra.mxu0 %v2396
    %3283 = vmatpush.bf16.msra.mxu0 %v2388
    %3284 = vmatpush.bf16.msra.mxu0 %v2380
    %3285 = vmatpush.bf16.msra.mxu0 %v2372
    %3286 = vmatpush.bf16.msra.mxu0 %v2364
    %3287 = vmatpush.bf16.msra.mxu0 %v2356
    %3288 = vmatmul.bf16.gmra.mxu0 %v678
    %v3289 = vpop.f32.mrf.mxu0
    %v3290 = vadd.f32 %v3276, %v3289
    %v3291 = vpop.f32.mrf.mxu0
    %v3292 = vadd.f32 %v3278, %v3291
    %3293 = vdwg.mxu0
    %3294 = vmatpush.bf16.msra.mxu0 %v2476
    %3295 = vmatpush.bf16.msra.mxu0 %v2468
    %3296 = vmatpush.bf16.msra.mxu0 %v2460
    %3297 = vmatpush.bf16.msra.mxu0 %v2452
    %3298 = vmatpush.bf16.msra.mxu0 %v2444
    %3299 = vmatpush.bf16.msra.mxu0 %v2436
    %3300 = vmatpush.bf16.msra.mxu0 %v2428
    %3301 = vmatpush.bf16.msra.mxu0 %v2420
    %3302 = vmatmul.bf16.gmra.mxu0 %v679
    %v3303 = vpop.f32.mrf.mxu0
    %v3304 = vadd.f32 %v3290, %v3303
    %v3305 = vpop.f32.mrf.mxu0
    %v3306 = vadd.f32 %v3292, %v3305
    %3307 = vdwg.mxu0
    %3308 = vmatpush.bf16.msra.mxu0 %v2540
    %3309 = vmatpush.bf16.msra.mxu0 %v2532
    %3310 = vmatpush.bf16.msra.mxu0 %v2524
    %3311 = vmatpush.bf16.msra.mxu0 %v2516
    %3312 = vmatpush.bf16.msra.mxu0 %v2508
    %3313 = vmatpush.bf16.msra.mxu0 %v2500
    %3314 = vmatpush.bf16.msra.mxu0 %v2492
    %3315 = vmatpush.bf16.msra.mxu0 %v2484
    %3316 = vmatmul.bf16.gmra.mxu0 %v680
    %v3317 = vpop.f32.mrf.mxu0
    %v3318 = vadd.f32 %v3304, %v3317
    %v3319 = vpop.f32.mrf.mxu0
    %v3320 = vadd.f32 %v3306, %v3319
    %3321 = vdwg.mxu0
    %3322 = vmatpush.bf16.msra.mxu0 %v2604
    %3323 = vmatpush.bf16.msra.mxu0 %v2596
    %3324 = vmatpush.bf16.msra.mxu0 %v2588
    %3325 = vmatpush.bf16.msra.mxu0 %v2580
    %3326 = vmatpush.bf16.msra.mxu0 %v2572
    %3327 = vmatpush.bf16.msra.mxu0 %v2564
    %3328 = vmatpush.bf16.msra.mxu0 %v2556
    %3329 = vmatpush.bf16.msra.mxu0 %v2548
    %3330 = vmatmul.bf16.gmra.mxu0 %v681
    %v3331 = vpop.f32.mrf.mxu0
    %v3332 = vadd.f32 %v3318, %v3331
    %v3333 = vpop.f32.mrf.mxu0
    %v3334 = vadd.f32 %v3320, %v3333
    %3335 = vdwg.mxu0
    %3336 = vmatpush.bf16.msra.mxu0 %v2668
    %3337 = vmatpush.bf16.msra.mxu0 %v2660
    %3338 = vmatpush.bf16.msra.mxu0 %v2652
    %3339 = vmatpush.bf16.msra.mxu0 %v2644
    %3340 = vmatpush.bf16.msra.mxu0 %v2636
    %3341 = vmatpush.bf16.msra.mxu0 %v2628
    %3342 = vmatpush.bf16.msra.mxu0 %v2620
    %3343 = vmatpush.bf16.msra.mxu0 %v2612
    %3344 = vmatmul.bf16.gmra.mxu0 %v682
    %v3345 = vpop.f32.mrf.mxu0
    %v3346 = vadd.f32 %v3332, %v3345
    %v3347 = vpop.f32.mrf.mxu0
    %v3348 = vadd.f32 %v3334, %v3347
    %3349 = vdwg.mxu0
    %3350 = vmatpush.bf16.msra.mxu0 %v2732
    %3351 = vmatpush.bf16.msra.mxu0 %v2724
    %3352 = vmatpush.bf16.msra.mxu0 %v2716
    %3353 = vmatpush.bf16.msra.mxu0 %v2708
    %3354 = vmatpush.bf16.msra.mxu0 %v2700
    %3355 = vmatpush.bf16.msra.mxu0 %v2692
    %3356 = vmatpush.bf16.msra.mxu0 %v2684
    %3357 = vmatpush.bf16.msra.mxu0 %v2676
    %3358 = vmatmul.bf16.gmra.mxu0 %v683
    %v3359 = vpop.f32.mrf.mxu0
    %v3360 = vadd.f32 %v3346, %v3359
    %v3361 = vpop.f32.mrf.mxu0
    %v3362 = vadd.f32 %v3348, %v3361
    %3363 = vdwg.mxu0
    %3364 = vmatpush.bf16.msra.mxu0 %v2285
    %3365 = vmatpush.bf16.msra.mxu0 %v2277
    %3366 = vmatpush.bf16.msra.mxu0 %v2269
    %3367 = vmatpush.bf16.msra.mxu0 %v2261
    %3368 = vmatpush.bf16.msra.mxu0 %v2253
    %3369 = vmatpush.bf16.msra.mxu0 %v2245
    %3370 = vmatpush.bf16.msra.mxu0 %v2237
    %3371 = vmatpush.bf16.msra.mxu0 %v2229
    %3372 = vmatmul.bf16.gmra.mxu0 %v676
    %v3373 = vpop.f32.mrf.mxu0
    %v3374 = vadd.f32 %v637, %v3373
    %v3375 = vpop.f32.mrf.mxu0
    %v3376 = vadd.f32 %v637, %v3375
    %3377 = vdwg.mxu0
    %3378 = vmatpush.bf16.msra.mxu0 %v2349
    %3379 = vmatpush.bf16.msra.mxu0 %v2341
    %3380 = vmatpush.bf16.msra.mxu0 %v2333
    %3381 = vmatpush.bf16.msra.mxu0 %v2325
    %3382 = vmatpush.bf16.msra.mxu0 %v2317
    %3383 = vmatpush.bf16.msra.mxu0 %v2309
    %3384 = vmatpush.bf16.msra.mxu0 %v2301
    %3385 = vmatpush.bf16.msra.mxu0 %v2293
    %3386 = vmatmul.bf16.gmra.mxu0 %v677
    %v3387 = vpop.f32.mrf.mxu0
    %v3388 = vadd.f32 %v3374, %v3387
    %v3389 = vpop.f32.mrf.mxu0
    %v3390 = vadd.f32 %v3376, %v3389
    %3391 = vdwg.mxu0
    %3392 = vmatpush.bf16.msra.mxu0 %v2413
    %3393 = vmatpush.bf16.msra.mxu0 %v2405
    %3394 = vmatpush.bf16.msra.mxu0 %v2397
    %3395 = vmatpush.bf16.msra.mxu0 %v2389
    %3396 = vmatpush.bf16.msra.mxu0 %v2381
    %3397 = vmatpush.bf16.msra.mxu0 %v2373
    %3398 = vmatpush.bf16.msra.mxu0 %v2365
    %3399 = vmatpush.bf16.msra.mxu0 %v2357
    %3400 = vmatmul.bf16.gmra.mxu0 %v678
    %v3401 = vpop.f32.mrf.mxu0
    %v3402 = vadd.f32 %v3388, %v3401
    %v3403 = vpop.f32.mrf.mxu0
    %v3404 = vadd.f32 %v3390, %v3403
    %3405 = vdwg.mxu0
    %3406 = vmatpush.bf16.msra.mxu0 %v2477
    %3407 = vmatpush.bf16.msra.mxu0 %v2469
    %3408 = vmatpush.bf16.msra.mxu0 %v2461
    %3409 = vmatpush.bf16.msra.mxu0 %v2453
    %3410 = vmatpush.bf16.msra.mxu0 %v2445
    %3411 = vmatpush.bf16.msra.mxu0 %v2437
    %3412 = vmatpush.bf16.msra.mxu0 %v2429
    %3413 = vmatpush.bf16.msra.mxu0 %v2421
    %3414 = vmatmul.bf16.gmra.mxu0 %v679
    %v3415 = vpop.f32.mrf.mxu0
    %v3416 = vadd.f32 %v3402, %v3415
    %v3417 = vpop.f32.mrf.mxu0
    %v3418 = vadd.f32 %v3404, %v3417
    %3419 = vdwg.mxu0
    %3420 = vmatpush.bf16.msra.mxu0 %v2541
    %3421 = vmatpush.bf16.msra.mxu0 %v2533
    %3422 = vmatpush.bf16.msra.mxu0 %v2525
    %3423 = vmatpush.bf16.msra.mxu0 %v2517
    %3424 = vmatpush.bf16.msra.mxu0 %v2509
    %3425 = vmatpush.bf16.msra.mxu0 %v2501
    %3426 = vmatpush.bf16.msra.mxu0 %v2493
    %3427 = vmatpush.bf16.msra.mxu0 %v2485
    %3428 = vmatmul.bf16.gmra.mxu0 %v680
    %v3429 = vpop.f32.mrf.mxu0
    %v3430 = vadd.f32 %v3416, %v3429
    %v3431 = vpop.f32.mrf.mxu0
    %v3432 = vadd.f32 %v3418, %v3431
    %3433 = vdwg.mxu0
    %3434 = vmatpush.bf16.msra.mxu0 %v2605
    %3435 = vmatpush.bf16.msra.mxu0 %v2597
    %3436 = vmatpush.bf16.msra.mxu0 %v2589
    %3437 = vmatpush.bf16.msra.mxu0 %v2581
    %3438 = vmatpush.bf16.msra.mxu0 %v2573
    %3439 = vmatpush.bf16.msra.mxu0 %v2565
    %3440 = vmatpush.bf16.msra.mxu0 %v2557
    %3441 = vmatpush.bf16.msra.mxu0 %v2549
    %3442 = vmatmul.bf16.gmra.mxu0 %v681
    %v3443 = vpop.f32.mrf.mxu0
    %v3444 = vadd.f32 %v3430, %v3443
    %v3445 = vpop.f32.mrf.mxu0
    %v3446 = vadd.f32 %v3432, %v3445
    %3447 = vdwg.mxu0
    %3448 = vmatpush.bf16.msra.mxu0 %v2669
    %3449 = vmatpush.bf16.msra.mxu0 %v2661
    %3450 = vmatpush.bf16.msra.mxu0 %v2653
    %3451 = vmatpush.bf16.msra.mxu0 %v2645
    %3452 = vmatpush.bf16.msra.mxu0 %v2637
    %3453 = vmatpush.bf16.msra.mxu0 %v2629
    %3454 = vmatpush.bf16.msra.mxu0 %v2621
    %3455 = vmatpush.bf16.msra.mxu0 %v2613
    %3456 = vmatmul.bf16.gmra.mxu0 %v682
    %v3457 = vpop.f32.mrf.mxu0
    %v3458 = vadd.f32 %v3444, %v3457
    %v3459 = vpop.f32.mrf.mxu0
    %v3460 = vadd.f32 %v3446, %v3459
    %3461 = vdwg.mxu0
    %3462 = vmatpush.bf16.msra.mxu0 %v2733
    %3463 = vmatpush.bf16.msra.mxu0 %v2725
    %3464 = vmatpush.bf16.msra.mxu0 %v2717
    %3465 = vmatpush.bf16.msra.mxu0 %v2709
    %3466 = vmatpush.bf16.msra.mxu0 %v2701
    %3467 = vmatpush.bf16.msra.mxu0 %v2693
    %3468 = vmatpush.bf16.msra.mxu0 %v2685
    %3469 = vmatpush.bf16.msra.mxu0 %v2677
    %3470 = vmatmul.bf16.gmra.mxu0 %v683
    %v3471 = vpop.f32.mrf.mxu0
    %v3472 = vadd.f32 %v3458, %v3471
    %v3473 = vpop.f32.mrf.mxu0
    %v3474 = vadd.f32 %v3460, %v3473
    %3475 = vdwg.mxu0
    %3476 = vmatpush.bf16.msra.mxu0 %v2286
    %3477 = vmatpush.bf16.msra.mxu0 %v2278
    %3478 = vmatpush.bf16.msra.mxu0 %v2270
    %3479 = vmatpush.bf16.msra.mxu0 %v2262
    %3480 = vmatpush.bf16.msra.mxu0 %v2254
    %3481 = vmatpush.bf16.msra.mxu0 %v2246
    %3482 = vmatpush.bf16.msra.mxu0 %v2238
    %3483 = vmatpush.bf16.msra.mxu0 %v2230
    %3484 = vmatmul.bf16.gmra.mxu0 %v676
    %v3485 = vpop.f32.mrf.mxu0
    %v3486 = vadd.f32 %v638, %v3485
    %v3487 = vpop.f32.mrf.mxu0
    %v3488 = vadd.f32 %v638, %v3487
    %3489 = vdwg.mxu0
    %3490 = vmatpush.bf16.msra.mxu0 %v2350
    %3491 = vmatpush.bf16.msra.mxu0 %v2342
    %3492 = vmatpush.bf16.msra.mxu0 %v2334
    %3493 = vmatpush.bf16.msra.mxu0 %v2326
    %3494 = vmatpush.bf16.msra.mxu0 %v2318
    %3495 = vmatpush.bf16.msra.mxu0 %v2310
    %3496 = vmatpush.bf16.msra.mxu0 %v2302
    %3497 = vmatpush.bf16.msra.mxu0 %v2294
    %3498 = vmatmul.bf16.gmra.mxu0 %v677
    %v3499 = vpop.f32.mrf.mxu0
    %v3500 = vadd.f32 %v3486, %v3499
    %v3501 = vpop.f32.mrf.mxu0
    %v3502 = vadd.f32 %v3488, %v3501
    %3503 = vdwg.mxu0
    %3504 = vmatpush.bf16.msra.mxu0 %v2414
    %3505 = vmatpush.bf16.msra.mxu0 %v2406
    %3506 = vmatpush.bf16.msra.mxu0 %v2398
    %3507 = vmatpush.bf16.msra.mxu0 %v2390
    %3508 = vmatpush.bf16.msra.mxu0 %v2382
    %3509 = vmatpush.bf16.msra.mxu0 %v2374
    %3510 = vmatpush.bf16.msra.mxu0 %v2366
    %3511 = vmatpush.bf16.msra.mxu0 %v2358
    %3512 = vmatmul.bf16.gmra.mxu0 %v678
    %v3513 = vpop.f32.mrf.mxu0
    %v3514 = vadd.f32 %v3500, %v3513
    %v3515 = vpop.f32.mrf.mxu0
    %v3516 = vadd.f32 %v3502, %v3515
    %3517 = vdwg.mxu0
    %3518 = vmatpush.bf16.msra.mxu0 %v2478
    %3519 = vmatpush.bf16.msra.mxu0 %v2470
    %3520 = vmatpush.bf16.msra.mxu0 %v2462
    %3521 = vmatpush.bf16.msra.mxu0 %v2454
    %3522 = vmatpush.bf16.msra.mxu0 %v2446
    %3523 = vmatpush.bf16.msra.mxu0 %v2438
    %3524 = vmatpush.bf16.msra.mxu0 %v2430
    %3525 = vmatpush.bf16.msra.mxu0 %v2422
    %3526 = vmatmul.bf16.gmra.mxu0 %v679
    %v3527 = vpop.f32.mrf.mxu0
    %v3528 = vadd.f32 %v3514, %v3527
    %v3529 = vpop.f32.mrf.mxu0
    %v3530 = vadd.f32 %v3516, %v3529
    %3531 = vdwg.mxu0
    %3532 = vmatpush.bf16.msra.mxu0 %v2542
    %3533 = vmatpush.bf16.msra.mxu0 %v2534
    %3534 = vmatpush.bf16.msra.mxu0 %v2526
    %3535 = vmatpush.bf16.msra.mxu0 %v2518
    %3536 = vmatpush.bf16.msra.mxu0 %v2510
    %3537 = vmatpush.bf16.msra.mxu0 %v2502
    %3538 = vmatpush.bf16.msra.mxu0 %v2494
    %3539 = vmatpush.bf16.msra.mxu0 %v2486
    %3540 = vmatmul.bf16.gmra.mxu0 %v680
    %v3541 = vpop.f32.mrf.mxu0
    %v3542 = vadd.f32 %v3528, %v3541
    %v3543 = vpop.f32.mrf.mxu0
    %v3544 = vadd.f32 %v3530, %v3543
    %3545 = vdwg.mxu0
    %3546 = vmatpush.bf16.msra.mxu0 %v2606
    %3547 = vmatpush.bf16.msra.mxu0 %v2598
    %3548 = vmatpush.bf16.msra.mxu0 %v2590
    %3549 = vmatpush.bf16.msra.mxu0 %v2582
    %3550 = vmatpush.bf16.msra.mxu0 %v2574
    %3551 = vmatpush.bf16.msra.mxu0 %v2566
    %3552 = vmatpush.bf16.msra.mxu0 %v2558
    %3553 = vmatpush.bf16.msra.mxu0 %v2550
    %3554 = vmatmul.bf16.gmra.mxu0 %v681
    %v3555 = vpop.f32.mrf.mxu0
    %v3556 = vadd.f32 %v3542, %v3555
    %v3557 = vpop.f32.mrf.mxu0
    %v3558 = vadd.f32 %v3544, %v3557
    %3559 = vdwg.mxu0
    %3560 = vmatpush.bf16.msra.mxu0 %v2670
    %3561 = vmatpush.bf16.msra.mxu0 %v2662
    %3562 = vmatpush.bf16.msra.mxu0 %v2654
    %3563 = vmatpush.bf16.msra.mxu0 %v2646
    %3564 = vmatpush.bf16.msra.mxu0 %v2638
    %3565 = vmatpush.bf16.msra.mxu0 %v2630
    %3566 = vmatpush.bf16.msra.mxu0 %v2622
    %3567 = vmatpush.bf16.msra.mxu0 %v2614
    %3568 = vmatmul.bf16.gmra.mxu0 %v682
    %v3569 = vpop.f32.mrf.mxu0
    %v3570 = vadd.f32 %v3556, %v3569
    %v3571 = vpop.f32.mrf.mxu0
    %v3572 = vadd.f32 %v3558, %v3571
    %3573 = vdwg.mxu0
    %3574 = vmatpush.bf16.msra.mxu0 %v2734
    %3575 = vmatpush.bf16.msra.mxu0 %v2726
    %3576 = vmatpush.bf16.msra.mxu0 %v2718
    %3577 = vmatpush.bf16.msra.mxu0 %v2710
    %3578 = vmatpush.bf16.msra.mxu0 %v2702
    %3579 = vmatpush.bf16.msra.mxu0 %v2694
    %3580 = vmatpush.bf16.msra.mxu0 %v2686
    %3581 = vmatpush.bf16.msra.mxu0 %v2678
    %3582 = vmatmul.bf16.gmra.mxu0 %v683
    %v3583 = vpop.f32.mrf.mxu0
    %v3584 = vadd.f32 %v3570, %v3583
    %v3585 = vpop.f32.mrf.mxu0
    %v3586 = vadd.f32 %v3572, %v3585
    %3587 = vdwg.mxu0
    %3588 = vmatpush.bf16.msra.mxu0 %v2287
    %3589 = vmatpush.bf16.msra.mxu0 %v2279
    %3590 = vmatpush.bf16.msra.mxu0 %v2271
    %3591 = vmatpush.bf16.msra.mxu0 %v2263
    %3592 = vmatpush.bf16.msra.mxu0 %v2255
    %3593 = vmatpush.bf16.msra.mxu0 %v2247
    %3594 = vmatpush.bf16.msra.mxu0 %v2239
    %3595 = vmatpush.bf16.msra.mxu0 %v2231
    %3596 = vmatmul.bf16.gmra.mxu0 %v676
    %v3597 = vpop.f32.mrf.mxu0
    %v3598 = vadd.f32 %v639, %v3597
    %v3599 = vpop.f32.mrf.mxu0
    %v3600 = vadd.f32 %v639, %v3599
    %3601 = vdwg.mxu0
    %3602 = vmatpush.bf16.msra.mxu0 %v2351
    %3603 = vmatpush.bf16.msra.mxu0 %v2343
    %3604 = vmatpush.bf16.msra.mxu0 %v2335
    %3605 = vmatpush.bf16.msra.mxu0 %v2327
    %3606 = vmatpush.bf16.msra.mxu0 %v2319
    %3607 = vmatpush.bf16.msra.mxu0 %v2311
    %3608 = vmatpush.bf16.msra.mxu0 %v2303
    %3609 = vmatpush.bf16.msra.mxu0 %v2295
    %3610 = vmatmul.bf16.gmra.mxu0 %v677
    %v3611 = vpop.f32.mrf.mxu0
    %v3612 = vadd.f32 %v3598, %v3611
    %v3613 = vpop.f32.mrf.mxu0
    %v3614 = vadd.f32 %v3600, %v3613
    %3615 = vdwg.mxu0
    %3616 = vmatpush.bf16.msra.mxu0 %v2415
    %3617 = vmatpush.bf16.msra.mxu0 %v2407
    %3618 = vmatpush.bf16.msra.mxu0 %v2399
    %3619 = vmatpush.bf16.msra.mxu0 %v2391
    %3620 = vmatpush.bf16.msra.mxu0 %v2383
    %3621 = vmatpush.bf16.msra.mxu0 %v2375
    %3622 = vmatpush.bf16.msra.mxu0 %v2367
    %3623 = vmatpush.bf16.msra.mxu0 %v2359
    %3624 = vmatmul.bf16.gmra.mxu0 %v678
    %v3625 = vpop.f32.mrf.mxu0
    %v3626 = vadd.f32 %v3612, %v3625
    %v3627 = vpop.f32.mrf.mxu0
    %v3628 = vadd.f32 %v3614, %v3627
    %3629 = vdwg.mxu0
    %3630 = vmatpush.bf16.msra.mxu0 %v2479
    %3631 = vmatpush.bf16.msra.mxu0 %v2471
    %3632 = vmatpush.bf16.msra.mxu0 %v2463
    %3633 = vmatpush.bf16.msra.mxu0 %v2455
    %3634 = vmatpush.bf16.msra.mxu0 %v2447
    %3635 = vmatpush.bf16.msra.mxu0 %v2439
    %3636 = vmatpush.bf16.msra.mxu0 %v2431
    %3637 = vmatpush.bf16.msra.mxu0 %v2423
    %3638 = vmatmul.bf16.gmra.mxu0 %v679
    %v3639 = vpop.f32.mrf.mxu0
    %v3640 = vadd.f32 %v3626, %v3639
    %v3641 = vpop.f32.mrf.mxu0
    %v3642 = vadd.f32 %v3628, %v3641
    %3643 = vdwg.mxu0
    %3644 = vmatpush.bf16.msra.mxu0 %v2543
    %3645 = vmatpush.bf16.msra.mxu0 %v2535
    %3646 = vmatpush.bf16.msra.mxu0 %v2527
    %3647 = vmatpush.bf16.msra.mxu0 %v2519
    %3648 = vmatpush.bf16.msra.mxu0 %v2511
    %3649 = vmatpush.bf16.msra.mxu0 %v2503
    %3650 = vmatpush.bf16.msra.mxu0 %v2495
    %3651 = vmatpush.bf16.msra.mxu0 %v2487
    %3652 = vmatmul.bf16.gmra.mxu0 %v680
    %v3653 = vpop.f32.mrf.mxu0
    %v3654 = vadd.f32 %v3640, %v3653
    %v3655 = vpop.f32.mrf.mxu0
    %v3656 = vadd.f32 %v3642, %v3655
    %3657 = vdwg.mxu0
    %3658 = vmatpush.bf16.msra.mxu0 %v2607
    %3659 = vmatpush.bf16.msra.mxu0 %v2599
    %3660 = vmatpush.bf16.msra.mxu0 %v2591
    %3661 = vmatpush.bf16.msra.mxu0 %v2583
    %3662 = vmatpush.bf16.msra.mxu0 %v2575
    %3663 = vmatpush.bf16.msra.mxu0 %v2567
    %3664 = vmatpush.bf16.msra.mxu0 %v2559
    %3665 = vmatpush.bf16.msra.mxu0 %v2551
    %3666 = vmatmul.bf16.gmra.mxu0 %v681
    %v3667 = vpop.f32.mrf.mxu0
    %v3668 = vadd.f32 %v3654, %v3667
    %v3669 = vpop.f32.mrf.mxu0
    %v3670 = vadd.f32 %v3656, %v3669
    %3671 = vdwg.mxu0
    %3672 = vmatpush.bf16.msra.mxu0 %v2671
    %3673 = vmatpush.bf16.msra.mxu0 %v2663
    %3674 = vmatpush.bf16.msra.mxu0 %v2655
    %3675 = vmatpush.bf16.msra.mxu0 %v2647
    %3676 = vmatpush.bf16.msra.mxu0 %v2639
    %3677 = vmatpush.bf16.msra.mxu0 %v2631
    %3678 = vmatpush.bf16.msra.mxu0 %v2623
    %3679 = vmatpush.bf16.msra.mxu0 %v2615
    %3680 = vmatmul.bf16.gmra.mxu0 %v682
    %v3681 = vpop.f32.mrf.mxu0
    %v3682 = vadd.f32 %v3668, %v3681
    %v3683 = vpop.f32.mrf.mxu0
    %v3684 = vadd.f32 %v3670, %v3683
    %3685 = vdwg.mxu0
    %3686 = vmatpush.bf16.msra.mxu0 %v2735
    %3687 = vmatpush.bf16.msra.mxu0 %v2727
    %3688 = vmatpush.bf16.msra.mxu0 %v2719
    %3689 = vmatpush.bf16.msra.mxu0 %v2711
    %3690 = vmatpush.bf16.msra.mxu0 %v2703
    %3691 = vmatpush.bf16.msra.mxu0 %v2695
    %3692 = vmatpush.bf16.msra.mxu0 %v2687
    %3693 = vmatpush.bf16.msra.mxu0 %v2679
    %3694 = vmatmul.bf16.gmra.mxu0 %v683
    %v3695 = vpop.f32.mrf.mxu0
    %v3696 = vadd.f32 %v3682, %v3695
    %v3697 = vpop.f32.mrf.mxu0
    %v3698 = vadd.f32 %v3684, %v3697
    %3699 = vdwg.mxu0
    %3700 = vmatpush.bf16.msra.mxu0 %v2288
    %3701 = vmatpush.bf16.msra.mxu0 %v2280
    %3702 = vmatpush.bf16.msra.mxu0 %v2272
    %3703 = vmatpush.bf16.msra.mxu0 %v2264
    %3704 = vmatpush.bf16.msra.mxu0 %v2256
    %3705 = vmatpush.bf16.msra.mxu0 %v2248
    %3706 = vmatpush.bf16.msra.mxu0 %v2240
    %3707 = vmatpush.bf16.msra.mxu0 %v2232
    %3708 = vmatmul.bf16.gmra.mxu0 %v676
    %v3709 = vpop.f32.mrf.mxu0
    %v3710 = vadd.f32 %v640, %v3709
    %v3711 = vpop.f32.mrf.mxu0
    %v3712 = vadd.f32 %v640, %v3711
    %3713 = vdwg.mxu0
    %3714 = vmatpush.bf16.msra.mxu0 %v2352
    %3715 = vmatpush.bf16.msra.mxu0 %v2344
    %3716 = vmatpush.bf16.msra.mxu0 %v2336
    %3717 = vmatpush.bf16.msra.mxu0 %v2328
    %3718 = vmatpush.bf16.msra.mxu0 %v2320
    %3719 = vmatpush.bf16.msra.mxu0 %v2312
    %3720 = vmatpush.bf16.msra.mxu0 %v2304
    %3721 = vmatpush.bf16.msra.mxu0 %v2296
    %3722 = vmatmul.bf16.gmra.mxu0 %v677
    %v3723 = vpop.f32.mrf.mxu0
    %v3724 = vadd.f32 %v3710, %v3723
    %v3725 = vpop.f32.mrf.mxu0
    %v3726 = vadd.f32 %v3712, %v3725
    %3727 = vdwg.mxu0
    %3728 = vmatpush.bf16.msra.mxu0 %v2416
    %3729 = vmatpush.bf16.msra.mxu0 %v2408
    %3730 = vmatpush.bf16.msra.mxu0 %v2400
    %3731 = vmatpush.bf16.msra.mxu0 %v2392
    %3732 = vmatpush.bf16.msra.mxu0 %v2384
    %3733 = vmatpush.bf16.msra.mxu0 %v2376
    %3734 = vmatpush.bf16.msra.mxu0 %v2368
    %3735 = vmatpush.bf16.msra.mxu0 %v2360
    %3736 = vmatmul.bf16.gmra.mxu0 %v678
    %v3737 = vpop.f32.mrf.mxu0
    %v3738 = vadd.f32 %v3724, %v3737
    %v3739 = vpop.f32.mrf.mxu0
    %v3740 = vadd.f32 %v3726, %v3739
    %3741 = vdwg.mxu0
    %3742 = vmatpush.bf16.msra.mxu0 %v2480
    %3743 = vmatpush.bf16.msra.mxu0 %v2472
    %3744 = vmatpush.bf16.msra.mxu0 %v2464
    %3745 = vmatpush.bf16.msra.mxu0 %v2456
    %3746 = vmatpush.bf16.msra.mxu0 %v2448
    %3747 = vmatpush.bf16.msra.mxu0 %v2440
    %3748 = vmatpush.bf16.msra.mxu0 %v2432
    %3749 = vmatpush.bf16.msra.mxu0 %v2424
    %3750 = vmatmul.bf16.gmra.mxu0 %v679
    %v3751 = vpop.f32.mrf.mxu0
    %v3752 = vadd.f32 %v3738, %v3751
    %v3753 = vpop.f32.mrf.mxu0
    %v3754 = vadd.f32 %v3740, %v3753
    %3755 = vdwg.mxu0
    %3756 = vmatpush.bf16.msra.mxu0 %v2544
    %3757 = vmatpush.bf16.msra.mxu0 %v2536
    %3758 = vmatpush.bf16.msra.mxu0 %v2528
    %3759 = vmatpush.bf16.msra.mxu0 %v2520
    %3760 = vmatpush.bf16.msra.mxu0 %v2512
    %3761 = vmatpush.bf16.msra.mxu0 %v2504
    %3762 = vmatpush.bf16.msra.mxu0 %v2496
    %3763 = vmatpush.bf16.msra.mxu0 %v2488
    %3764 = vmatmul.bf16.gmra.mxu0 %v680
    %v3765 = vpop.f32.mrf.mxu0
    %v3766 = vadd.f32 %v3752, %v3765
    %v3767 = vpop.f32.mrf.mxu0
    %v3768 = vadd.f32 %v3754, %v3767
    %3769 = vdwg.mxu0
    %3770 = vmatpush.bf16.msra.mxu0 %v2608
    %3771 = vmatpush.bf16.msra.mxu0 %v2600
    %3772 = vmatpush.bf16.msra.mxu0 %v2592
    %3773 = vmatpush.bf16.msra.mxu0 %v2584
    %3774 = vmatpush.bf16.msra.mxu0 %v2576
    %3775 = vmatpush.bf16.msra.mxu0 %v2568
    %3776 = vmatpush.bf16.msra.mxu0 %v2560
    %3777 = vmatpush.bf16.msra.mxu0 %v2552
    %3778 = vmatmul.bf16.gmra.mxu0 %v681
    %v3779 = vpop.f32.mrf.mxu0
    %v3780 = vadd.f32 %v3766, %v3779
    %v3781 = vpop.f32.mrf.mxu0
    %v3782 = vadd.f32 %v3768, %v3781
    %3783 = vdwg.mxu0
    %3784 = vmatpush.bf16.msra.mxu0 %v2672
    %3785 = vmatpush.bf16.msra.mxu0 %v2664
    %3786 = vmatpush.bf16.msra.mxu0 %v2656
    %3787 = vmatpush.bf16.msra.mxu0 %v2648
    %3788 = vmatpush.bf16.msra.mxu0 %v2640
    %3789 = vmatpush.bf16.msra.mxu0 %v2632
    %3790 = vmatpush.bf16.msra.mxu0 %v2624
    %3791 = vmatpush.bf16.msra.mxu0 %v2616
    %3792 = vmatmul.bf16.gmra.mxu0 %v682
    %v3793 = vpop.f32.mrf.mxu0
    %v3794 = vadd.f32 %v3780, %v3793
    %v3795 = vpop.f32.mrf.mxu0
    %v3796 = vadd.f32 %v3782, %v3795
    %3797 = vdwg.mxu0
    %3798 = vmatpush.bf16.msra.mxu0 %v2736
    %3799 = vmatpush.bf16.msra.mxu0 %v2728
    %3800 = vmatpush.bf16.msra.mxu0 %v2720
    %3801 = vmatpush.bf16.msra.mxu0 %v2712
    %3802 = vmatpush.bf16.msra.mxu0 %v2704
    %3803 = vmatpush.bf16.msra.mxu0 %v2696
    %3804 = vmatpush.bf16.msra.mxu0 %v2688
    %3805 = vmatpush.bf16.msra.mxu0 %v2680
    %3806 = vmatmul.bf16.gmra.mxu0 %v683
    %v3807 = vpop.f32.mrf.mxu0
    %v3808 = vadd.f32 %v3794, %v3807
    %v3809 = vpop.f32.mrf.mxu0
    %v3810 = vadd.f32 %v3796, %v3809
    %3811 = vdwg.mxu0
    %3812 = vmatpush.bf16.msra.mxu0 %v2289
    %3813 = vmatpush.bf16.msra.mxu0 %v2281
    %3814 = vmatpush.bf16.msra.mxu0 %v2273
    %3815 = vmatpush.bf16.msra.mxu0 %v2265
    %3816 = vmatpush.bf16.msra.mxu0 %v2257
    %3817 = vmatpush.bf16.msra.mxu0 %v2249
    %3818 = vmatpush.bf16.msra.mxu0 %v2241
    %3819 = vmatpush.bf16.msra.mxu0 %v2233
    %3820 = vmatmul.bf16.gmra.mxu0 %v676
    %v3821 = vpop.f32.mrf.mxu0
    %v3822 = vadd.f32 %v641, %v3821
    %v3823 = vpop.f32.mrf.mxu0
    %v3824 = vadd.f32 %v641, %v3823
    %3825 = vdwg.mxu0
    %3826 = vmatpush.bf16.msra.mxu0 %v2353
    %3827 = vmatpush.bf16.msra.mxu0 %v2345
    %3828 = vmatpush.bf16.msra.mxu0 %v2337
    %3829 = vmatpush.bf16.msra.mxu0 %v2329
    %3830 = vmatpush.bf16.msra.mxu0 %v2321
    %3831 = vmatpush.bf16.msra.mxu0 %v2313
    %3832 = vmatpush.bf16.msra.mxu0 %v2305
    %3833 = vmatpush.bf16.msra.mxu0 %v2297
    %3834 = vmatmul.bf16.gmra.mxu0 %v677
    %v3835 = vpop.f32.mrf.mxu0
    %v3836 = vadd.f32 %v3822, %v3835
    %v3837 = vpop.f32.mrf.mxu0
    %v3838 = vadd.f32 %v3824, %v3837
    %3839 = vdwg.mxu0
    %3840 = vmatpush.bf16.msra.mxu0 %v2417
    %3841 = vmatpush.bf16.msra.mxu0 %v2409
    %3842 = vmatpush.bf16.msra.mxu0 %v2401
    %3843 = vmatpush.bf16.msra.mxu0 %v2393
    %3844 = vmatpush.bf16.msra.mxu0 %v2385
    %3845 = vmatpush.bf16.msra.mxu0 %v2377
    %3846 = vmatpush.bf16.msra.mxu0 %v2369
    %3847 = vmatpush.bf16.msra.mxu0 %v2361
    %3848 = vmatmul.bf16.gmra.mxu0 %v678
    %v3849 = vpop.f32.mrf.mxu0
    %v3850 = vadd.f32 %v3836, %v3849
    %v3851 = vpop.f32.mrf.mxu0
    %v3852 = vadd.f32 %v3838, %v3851
    %3853 = vdwg.mxu0
    %3854 = vmatpush.bf16.msra.mxu0 %v2481
    %3855 = vmatpush.bf16.msra.mxu0 %v2473
    %3856 = vmatpush.bf16.msra.mxu0 %v2465
    %3857 = vmatpush.bf16.msra.mxu0 %v2457
    %3858 = vmatpush.bf16.msra.mxu0 %v2449
    %3859 = vmatpush.bf16.msra.mxu0 %v2441
    %3860 = vmatpush.bf16.msra.mxu0 %v2433
    %3861 = vmatpush.bf16.msra.mxu0 %v2425
    %3862 = vmatmul.bf16.gmra.mxu0 %v679
    %v3863 = vpop.f32.mrf.mxu0
    %v3864 = vadd.f32 %v3850, %v3863
    %v3865 = vpop.f32.mrf.mxu0
    %v3866 = vadd.f32 %v3852, %v3865
    %3867 = vdwg.mxu0
    %3868 = vmatpush.bf16.msra.mxu0 %v2545
    %3869 = vmatpush.bf16.msra.mxu0 %v2537
    %3870 = vmatpush.bf16.msra.mxu0 %v2529
    %3871 = vmatpush.bf16.msra.mxu0 %v2521
    %3872 = vmatpush.bf16.msra.mxu0 %v2513
    %3873 = vmatpush.bf16.msra.mxu0 %v2505
    %3874 = vmatpush.bf16.msra.mxu0 %v2497
    %3875 = vmatpush.bf16.msra.mxu0 %v2489
    %3876 = vmatmul.bf16.gmra.mxu0 %v680
    %v3877 = vpop.f32.mrf.mxu0
    %v3878 = vadd.f32 %v3864, %v3877
    %v3879 = vpop.f32.mrf.mxu0
    %v3880 = vadd.f32 %v3866, %v3879
    %3881 = vdwg.mxu0
    %3882 = vmatpush.bf16.msra.mxu0 %v2609
    %3883 = vmatpush.bf16.msra.mxu0 %v2601
    %3884 = vmatpush.bf16.msra.mxu0 %v2593
    %3885 = vmatpush.bf16.msra.mxu0 %v2585
    %3886 = vmatpush.bf16.msra.mxu0 %v2577
    %3887 = vmatpush.bf16.msra.mxu0 %v2569
    %3888 = vmatpush.bf16.msra.mxu0 %v2561
    %3889 = vmatpush.bf16.msra.mxu0 %v2553
    %3890 = vmatmul.bf16.gmra.mxu0 %v681
    %v3891 = vpop.f32.mrf.mxu0
    %v3892 = vadd.f32 %v3878, %v3891
    %v3893 = vpop.f32.mrf.mxu0
    %v3894 = vadd.f32 %v3880, %v3893
    %3895 = vdwg.mxu0
    %3896 = vmatpush.bf16.msra.mxu0 %v2673
    %3897 = vmatpush.bf16.msra.mxu0 %v2665
    %3898 = vmatpush.bf16.msra.mxu0 %v2657
    %3899 = vmatpush.bf16.msra.mxu0 %v2649
    %3900 = vmatpush.bf16.msra.mxu0 %v2641
    %3901 = vmatpush.bf16.msra.mxu0 %v2633
    %3902 = vmatpush.bf16.msra.mxu0 %v2625
    %3903 = vmatpush.bf16.msra.mxu0 %v2617
    %3904 = vmatmul.bf16.gmra.mxu0 %v682
    %v3905 = vpop.f32.mrf.mxu0
    %v3906 = vadd.f32 %v3892, %v3905
    %v3907 = vpop.f32.mrf.mxu0
    %v3908 = vadd.f32 %v3894, %v3907
    %3909 = vdwg.mxu0
    %3910 = vmatpush.bf16.msra.mxu0 %v2737
    %3911 = vmatpush.bf16.msra.mxu0 %v2729
    %3912 = vmatpush.bf16.msra.mxu0 %v2721
    %3913 = vmatpush.bf16.msra.mxu0 %v2713
    %3914 = vmatpush.bf16.msra.mxu0 %v2705
    %3915 = vmatpush.bf16.msra.mxu0 %v2697
    %3916 = vmatpush.bf16.msra.mxu0 %v2689
    %3917 = vmatpush.bf16.msra.mxu0 %v2681
    %3918 = vmatmul.bf16.gmra.mxu0 %v683
    %v3919 = vpop.f32.mrf.mxu0
    %v3920 = vadd.f32 %v3906, %v3919
    %v3921 = vpop.f32.mrf.mxu0
    %v3922 = vadd.f32 %v3908, %v3921
    %3923 = vdwg.mxu0
    %3924 = vmatpush.bf16.msra.mxu0 %v2290
    %3925 = vmatpush.bf16.msra.mxu0 %v2282
    %3926 = vmatpush.bf16.msra.mxu0 %v2274
    %3927 = vmatpush.bf16.msra.mxu0 %v2266
    %3928 = vmatpush.bf16.msra.mxu0 %v2258
    %3929 = vmatpush.bf16.msra.mxu0 %v2250
    %3930 = vmatpush.bf16.msra.mxu0 %v2242
    %3931 = vmatpush.bf16.msra.mxu0 %v2234
    %3932 = vmatmul.bf16.gmra.mxu0 %v676
    %v3933 = vpop.f32.mrf.mxu0
    %v3934 = vadd.f32 %v642, %v3933
    %v3935 = vpop.f32.mrf.mxu0
    %v3936 = vadd.f32 %v642, %v3935
    %3937 = vdwg.mxu0
    %3938 = vmatpush.bf16.msra.mxu0 %v2354
    %3939 = vmatpush.bf16.msra.mxu0 %v2346
    %3940 = vmatpush.bf16.msra.mxu0 %v2338
    %3941 = vmatpush.bf16.msra.mxu0 %v2330
    %3942 = vmatpush.bf16.msra.mxu0 %v2322
    %3943 = vmatpush.bf16.msra.mxu0 %v2314
    %3944 = vmatpush.bf16.msra.mxu0 %v2306
    %3945 = vmatpush.bf16.msra.mxu0 %v2298
    %3946 = vmatmul.bf16.gmra.mxu0 %v677
    %v3947 = vpop.f32.mrf.mxu0
    %v3948 = vadd.f32 %v3934, %v3947
    %v3949 = vpop.f32.mrf.mxu0
    %v3950 = vadd.f32 %v3936, %v3949
    %3951 = vdwg.mxu0
    %3952 = vmatpush.bf16.msra.mxu0 %v2418
    %3953 = vmatpush.bf16.msra.mxu0 %v2410
    %3954 = vmatpush.bf16.msra.mxu0 %v2402
    %3955 = vmatpush.bf16.msra.mxu0 %v2394
    %3956 = vmatpush.bf16.msra.mxu0 %v2386
    %3957 = vmatpush.bf16.msra.mxu0 %v2378
    %3958 = vmatpush.bf16.msra.mxu0 %v2370
    %3959 = vmatpush.bf16.msra.mxu0 %v2362
    %3960 = vmatmul.bf16.gmra.mxu0 %v678
    %v3961 = vpop.f32.mrf.mxu0
    %v3962 = vadd.f32 %v3948, %v3961
    %v3963 = vpop.f32.mrf.mxu0
    %v3964 = vadd.f32 %v3950, %v3963
    %3965 = vdwg.mxu0
    %3966 = vmatpush.bf16.msra.mxu0 %v2482
    %3967 = vmatpush.bf16.msra.mxu0 %v2474
    %3968 = vmatpush.bf16.msra.mxu0 %v2466
    %3969 = vmatpush.bf16.msra.mxu0 %v2458
    %3970 = vmatpush.bf16.msra.mxu0 %v2450
    %3971 = vmatpush.bf16.msra.mxu0 %v2442
    %3972 = vmatpush.bf16.msra.mxu0 %v2434
    %3973 = vmatpush.bf16.msra.mxu0 %v2426
    %3974 = vmatmul.bf16.gmra.mxu0 %v679
    %v3975 = vpop.f32.mrf.mxu0
    %v3976 = vadd.f32 %v3962, %v3975
    %v3977 = vpop.f32.mrf.mxu0
    %v3978 = vadd.f32 %v3964, %v3977
    %3979 = vdwg.mxu0
    %3980 = vmatpush.bf16.msra.mxu0 %v2546
    %3981 = vmatpush.bf16.msra.mxu0 %v2538
    %3982 = vmatpush.bf16.msra.mxu0 %v2530
    %3983 = vmatpush.bf16.msra.mxu0 %v2522
    %3984 = vmatpush.bf16.msra.mxu0 %v2514
    %3985 = vmatpush.bf16.msra.mxu0 %v2506
    %3986 = vmatpush.bf16.msra.mxu0 %v2498
    %3987 = vmatpush.bf16.msra.mxu0 %v2490
    %3988 = vmatmul.bf16.gmra.mxu0 %v680
    %v3989 = vpop.f32.mrf.mxu0
    %v3990 = vadd.f32 %v3976, %v3989
    %v3991 = vpop.f32.mrf.mxu0
    %v3992 = vadd.f32 %v3978, %v3991
    %3993 = vdwg.mxu0
    %3994 = vmatpush.bf16.msra.mxu0 %v2610
    %3995 = vmatpush.bf16.msra.mxu0 %v2602
    %3996 = vmatpush.bf16.msra.mxu0 %v2594
    %3997 = vmatpush.bf16.msra.mxu0 %v2586
    %3998 = vmatpush.bf16.msra.mxu0 %v2578
    %3999 = vmatpush.bf16.msra.mxu0 %v2570
    %4000 = vmatpush.bf16.msra.mxu0 %v2562
    %4001 = vmatpush.bf16.msra.mxu0 %v2554
    %4002 = vmatmul.bf16.gmra.mxu0 %v681
    %v4003 = vpop.f32.mrf.mxu0
    %v4004 = vadd.f32 %v3990, %v4003
    %v4005 = vpop.f32.mrf.mxu0
    %v4006 = vadd.f32 %v3992, %v4005
    %4007 = vdwg.mxu0
    %4008 = vmatpush.bf16.msra.mxu0 %v2674
    %4009 = vmatpush.bf16.msra.mxu0 %v2666
    %4010 = vmatpush.bf16.msra.mxu0 %v2658
    %4011 = vmatpush.bf16.msra.mxu0 %v2650
    %4012 = vmatpush.bf16.msra.mxu0 %v2642
    %4013 = vmatpush.bf16.msra.mxu0 %v2634
    %4014 = vmatpush.bf16.msra.mxu0 %v2626
    %4015 = vmatpush.bf16.msra.mxu0 %v2618
    %4016 = vmatmul.bf16.gmra.mxu0 %v682
    %v4017 = vpop.f32.mrf.mxu0
    %v4018 = vadd.f32 %v4004, %v4017
    %v4019 = vpop.f32.mrf.mxu0
    %v4020 = vadd.f32 %v4006, %v4019
    %4021 = vdwg.mxu0
    %4022 = vmatpush.bf16.msra.mxu0 %v2738
    %4023 = vmatpush.bf16.msra.mxu0 %v2730
    %4024 = vmatpush.bf16.msra.mxu0 %v2722
    %4025 = vmatpush.bf16.msra.mxu0 %v2714
    %4026 = vmatpush.bf16.msra.mxu0 %v2706
    %4027 = vmatpush.bf16.msra.mxu0 %v2698
    %4028 = vmatpush.bf16.msra.mxu0 %v2690
    %4029 = vmatpush.bf16.msra.mxu0 %v2682
    %4030 = vmatmul.bf16.gmra.mxu0 %v683
    %v4031 = vpop.f32.mrf.mxu0
    %v4032 = vadd.f32 %v4018, %v4031
    %v4033 = vpop.f32.mrf.mxu0
    %v4034 = vadd.f32 %v4020, %v4033
    %4035 = vdwg.mxu0
    %4036 = vmatpush.bf16.msra.mxu0 %v2291
    %4037 = vmatpush.bf16.msra.mxu0 %v2283
    %4038 = vmatpush.bf16.msra.mxu0 %v2275
    %4039 = vmatpush.bf16.msra.mxu0 %v2267
    %4040 = vmatpush.bf16.msra.mxu0 %v2259
    %4041 = vmatpush.bf16.msra.mxu0 %v2251
    %4042 = vmatpush.bf16.msra.mxu0 %v2243
    %4043 = vmatpush.bf16.msra.mxu0 %v2235
    %4044 = vmatmul.bf16.gmra.mxu0 %v676
    %v4045 = vpop.f32.mrf.mxu0
    %v4046 = vadd.f32 %v643, %v4045
    %v4047 = vpop.f32.mrf.mxu0
    %v4048 = vadd.f32 %v643, %v4047
    %4049 = vdwg.mxu0
    %4050 = vmatpush.bf16.msra.mxu0 %v2355
    %4051 = vmatpush.bf16.msra.mxu0 %v2347
    %4052 = vmatpush.bf16.msra.mxu0 %v2339
    %4053 = vmatpush.bf16.msra.mxu0 %v2331
    %4054 = vmatpush.bf16.msra.mxu0 %v2323
    %4055 = vmatpush.bf16.msra.mxu0 %v2315
    %4056 = vmatpush.bf16.msra.mxu0 %v2307
    %4057 = vmatpush.bf16.msra.mxu0 %v2299
    %4058 = vmatmul.bf16.gmra.mxu0 %v677
    %v4059 = vpop.f32.mrf.mxu0
    %v4060 = vadd.f32 %v4046, %v4059
    %v4061 = vpop.f32.mrf.mxu0
    %v4062 = vadd.f32 %v4048, %v4061
    %4063 = vdwg.mxu0
    %4064 = vmatpush.bf16.msra.mxu0 %v2419
    %4065 = vmatpush.bf16.msra.mxu0 %v2411
    %4066 = vmatpush.bf16.msra.mxu0 %v2403
    %4067 = vmatpush.bf16.msra.mxu0 %v2395
    %4068 = vmatpush.bf16.msra.mxu0 %v2387
    %4069 = vmatpush.bf16.msra.mxu0 %v2379
    %4070 = vmatpush.bf16.msra.mxu0 %v2371
    %4071 = vmatpush.bf16.msra.mxu0 %v2363
    %4072 = vmatmul.bf16.gmra.mxu0 %v678
    %v4073 = vpop.f32.mrf.mxu0
    %v4074 = vadd.f32 %v4060, %v4073
    %v4075 = vpop.f32.mrf.mxu0
    %v4076 = vadd.f32 %v4062, %v4075
    %4077 = vdwg.mxu0
    %4078 = vmatpush.bf16.msra.mxu0 %v2483
    %4079 = vmatpush.bf16.msra.mxu0 %v2475
    %4080 = vmatpush.bf16.msra.mxu0 %v2467
    %4081 = vmatpush.bf16.msra.mxu0 %v2459
    %4082 = vmatpush.bf16.msra.mxu0 %v2451
    %4083 = vmatpush.bf16.msra.mxu0 %v2443
    %4084 = vmatpush.bf16.msra.mxu0 %v2435
    %4085 = vmatpush.bf16.msra.mxu0 %v2427
    %4086 = vmatmul.bf16.gmra.mxu0 %v679
    %v4087 = vpop.f32.mrf.mxu0
    %v4088 = vadd.f32 %v4074, %v4087
    %v4089 = vpop.f32.mrf.mxu0
    %v4090 = vadd.f32 %v4076, %v4089
    %4091 = vdwg.mxu0
    %4092 = vmatpush.bf16.msra.mxu0 %v2547
    %4093 = vmatpush.bf16.msra.mxu0 %v2539
    %4094 = vmatpush.bf16.msra.mxu0 %v2531
    %4095 = vmatpush.bf16.msra.mxu0 %v2523
    %4096 = vmatpush.bf16.msra.mxu0 %v2515
    %4097 = vmatpush.bf16.msra.mxu0 %v2507
    %4098 = vmatpush.bf16.msra.mxu0 %v2499
    %4099 = vmatpush.bf16.msra.mxu0 %v2491
    %4100 = vmatmul.bf16.gmra.mxu0 %v680
    %v4101 = vpop.f32.mrf.mxu0
    %v4102 = vadd.f32 %v4088, %v4101
    %v4103 = vpop.f32.mrf.mxu0
    %v4104 = vadd.f32 %v4090, %v4103
    %4105 = vdwg.mxu0
    %4106 = vmatpush.bf16.msra.mxu0 %v2611
    %4107 = vmatpush.bf16.msra.mxu0 %v2603
    %4108 = vmatpush.bf16.msra.mxu0 %v2595
    %4109 = vmatpush.bf16.msra.mxu0 %v2587
    %4110 = vmatpush.bf16.msra.mxu0 %v2579
    %4111 = vmatpush.bf16.msra.mxu0 %v2571
    %4112 = vmatpush.bf16.msra.mxu0 %v2563
    %4113 = vmatpush.bf16.msra.mxu0 %v2555
    %4114 = vmatmul.bf16.gmra.mxu0 %v681
    %v4115 = vpop.f32.mrf.mxu0
    %v4116 = vadd.f32 %v4102, %v4115
    %v4117 = vpop.f32.mrf.mxu0
    %v4118 = vadd.f32 %v4104, %v4117
    %4119 = vdwg.mxu0
    %4120 = vmatpush.bf16.msra.mxu0 %v2675
    %4121 = vmatpush.bf16.msra.mxu0 %v2667
    %4122 = vmatpush.bf16.msra.mxu0 %v2659
    %4123 = vmatpush.bf16.msra.mxu0 %v2651
    %4124 = vmatpush.bf16.msra.mxu0 %v2643
    %4125 = vmatpush.bf16.msra.mxu0 %v2635
    %4126 = vmatpush.bf16.msra.mxu0 %v2627
    %4127 = vmatpush.bf16.msra.mxu0 %v2619
    %4128 = vmatmul.bf16.gmra.mxu0 %v682
    %v4129 = vpop.f32.mrf.mxu0
    %v4130 = vadd.f32 %v4116, %v4129
    %v4131 = vpop.f32.mrf.mxu0
    %v4132 = vadd.f32 %v4118, %v4131
    %4133 = vdwg.mxu0
    %4134 = vmatpush.bf16.msra.mxu0 %v2739
    %4135 = vmatpush.bf16.msra.mxu0 %v2731
    %4136 = vmatpush.bf16.msra.mxu0 %v2723
    %4137 = vmatpush.bf16.msra.mxu0 %v2715
    %4138 = vmatpush.bf16.msra.mxu0 %v2707
    %4139 = vmatpush.bf16.msra.mxu0 %v2699
    %4140 = vmatpush.bf16.msra.mxu0 %v2691
    %4141 = vmatpush.bf16.msra.mxu0 %v2683
    %4142 = vmatmul.bf16.gmra.mxu0 %v683
    %v4143 = vpop.f32.mrf.mxu0
    %v4144 = vadd.f32 %v4130, %v4143
    %v4145 = vpop.f32.mrf.mxu0
    %v4146 = vadd.f32 %v4132, %v4145
    %4147 = vdwg.mxu0
    %v4148 = vmul.f32 %v3360, 0.2
    %v4149 = vmul.f32 %v3472, 0.2
    %v4150 = vmul.f32 %v3584, 0.2
    %v4151 = vmul.f32 %v3696, 0.2
    %v4152 = vmul.f32 %v3808, 0.2
    %v4153 = vmul.f32 %v3920, 0.2
    %v4154 = vmul.f32 %v4032, 0.2
    %v4155 = vmul.f32 %v4144, 0.2
    %v4156 = vmul.f32 %v3362, 0.2
    %v4157 = vmul.f32 %v3474, 0.2
    %v4158 = vmul.f32 %v3586, 0.2
    %v4159 = vmul.f32 %v3698, 0.2
    %v4160 = vmul.f32 %v3810, 0.2
    %v4161 = vmul.f32 %v3922, 0.2
    %v4162 = vmul.f32 %v4034, 0.2
    %v4163 = vmul.f32 %v4146, 0.2
    %v4164 = vmax.f32 %v3360, %v4148
    %v4165 = vmax.f32 %v3472, %v4149
    %v4166 = vmax.f32 %v3584, %v4150
    %v4167 = vmax.f32 %v3696, %v4151
    %v4168 = vmax.f32 %v3808, %v4152
    %v4169 = vmax.f32 %v3920, %v4153
    %v4170 = vmax.f32 %v4032, %v4154
    %v4171 = vmax.f32 %v4144, %v4155
    %v4172 = vmax.f32 %v3362, %v4156
    %v4173 = vmax.f32 %v3474, %v4157
    %v4174 = vmax.f32 %v3586, %v4158
    %v4175 = vmax.f32 %v3698, %v4159
    %v4176 = vmax.f32 %v3810, %v4160
    %v4177 = vmax.f32 %v3922, %v4161
    %v4178 = vmax.f32 %v4034, %v4162
    %v4179 = vmax.f32 %v4146, %v4163
    %v4180 = vpack.c.bf16 %v4172, %v4164
    %v4181 = vpack.c.bf16 %v4173, %v4165
    %v4182 = vpack.c.bf16 %v4174, %v4166
    %v4183 = vpack.c.bf16 %v4175, %v4167
    %v4184 = vpack.c.bf16 %v4176, %v4168
    %v4185 = vpack.c.bf16 %v4177, %v4169
    %v4186 = vpack.c.bf16 %v4178, %v4170
    %v4187 = vpack.c.bf16 %v4179, %v4171
    %v4188 = vld [vmem:[#allocation6] sm:$0xff]
    %v4189 = vld [vmem:[#allocation6 + $0x8] sm:$0xff]
    %v4190 = vld [vmem:[#allocation6 + $0x10] sm:$0xff]
    %v4191 = vld [vmem:[#allocation6 + $0x18] sm:$0xff]
    %v4192 = vld [vmem:[#allocation6 + $0x20] sm:$0xff]
    %v4193 = vld [vmem:[#allocation6 + $0x28] sm:$0xff]
    %v4194 = vld [vmem:[#allocation6 + $0x30] sm:$0xff]
    %v4195 = vld [vmem:[#allocation6 + $0x38] sm:$0xff]
    %v4196 = vld [vmem:[#allocation6 + $0x40] sm:$0xff]
    %v4197 = vld [vmem:[#allocation6 + $0x48] sm:$0xff]
    %v4198 = vld [vmem:[#allocation6 + $0x50] sm:$0xff]
    %v4199 = vld [vmem:[#allocation6 + $0x58] sm:$0xff]
    %v4200 = vld [vmem:[#allocation6 + $0x60] sm:$0xff]
    %v4201 = vld [vmem:[#allocation6 + $0x68] sm:$0xff]
    %v4202 = vld [vmem:[#allocation6 + $0x70] sm:$0xff]
    %v4203 = vld [vmem:[#allocation6 + $0x78] sm:$0xff]
    %v4204 = vld [vmem:[#allocation6 + $0x80] sm:$0xff]
    %v4205 = vld [vmem:[#allocation6 + $0x88] sm:$0xff]
    %v4206 = vld [vmem:[#allocation6 + $0x90] sm:$0xff]
    %v4207 = vld [vmem:[#allocation6 + $0x98] sm:$0xff]
    %v4208 = vld [vmem:[#allocation6 + $0xa0] sm:$0xff]
    %v4209 = vld [vmem:[#allocation6 + $0xa8] sm:$0xff]
    %v4210 = vld [vmem:[#allocation6 + $0xb0] sm:$0xff]
    %v4211 = vld [vmem:[#allocation6 + $0xb8] sm:$0xff]
    %v4212 = vld [vmem:[#allocation6 + $0xc0] sm:$0xff]
    %v4213 = vld [vmem:[#allocation6 + $0xc8] sm:$0xff]
    %v4214 = vld [vmem:[#allocation6 + $0xd0] sm:$0xff]
    %v4215 = vld [vmem:[#allocation6 + $0xd8] sm:$0xff]
    %v4216 = vld [vmem:[#allocation6 + $0xe0] sm:$0xff]
    %v4217 = vld [vmem:[#allocation6 + $0xe8] sm:$0xff]
    %v4218 = vld [vmem:[#allocation6 + $0xf0] sm:$0xff]
    %v4219 = vld [vmem:[#allocation6 + $0xf8] sm:$0xff]
    %v4220 = vld [vmem:[#allocation6 + $0x100] sm:$0xff]
    %v4221 = vld [vmem:[#allocation6 + $0x108] sm:$0xff]
    %v4222 = vld [vmem:[#allocation6 + $0x110] sm:$0xff]
    %v4223 = vld [vmem:[#allocation6 + $0x118] sm:$0xff]
    %v4224 = vld [vmem:[#allocation6 + $0x120] sm:$0xff]
    %v4225 = vld [vmem:[#allocation6 + $0x128] sm:$0xff]
    %v4226 = vld [vmem:[#allocation6 + $0x130] sm:$0xff]
    %v4227 = vld [vmem:[#allocation6 + $0x138] sm:$0xff]
    %v4228 = vld [vmem:[#allocation6 + $0x140] sm:$0xff]
    %v4229 = vld [vmem:[#allocation6 + $0x148] sm:$0xff]
    %v4230 = vld [vmem:[#allocation6 + $0x150] sm:$0xff]
    %v4231 = vld [vmem:[#allocation6 + $0x158] sm:$0xff]
    %v4232 = vld [vmem:[#allocation6 + $0x160] sm:$0xff]
    %v4233 = vld [vmem:[#allocation6 + $0x168] sm:$0xff]
    %v4234 = vld [vmem:[#allocation6 + $0x170] sm:$0xff]
    %v4235 = vld [vmem:[#allocation6 + $0x178] sm:$0xff]
    %v4236 = vld [vmem:[#allocation6 + $0x180] sm:$0xff]
    %v4237 = vld [vmem:[#allocation6 + $0x188] sm:$0xff]
    %v4238 = vld [vmem:[#allocation6 + $0x190] sm:$0xff]
    %v4239 = vld [vmem:[#allocation6 + $0x198] sm:$0xff]
    %v4240 = vld [vmem:[#allocation6 + $0x1a0] sm:$0xff]
    %v4241 = vld [vmem:[#allocation6 + $0x1a8] sm:$0xff]
    %v4242 = vld [vmem:[#allocation6 + $0x1b0] sm:$0xff]
    %v4243 = vld [vmem:[#allocation6 + $0x1b8] sm:$0xff]
    %v4244 = vld [vmem:[#allocation6 + $0x1c0] sm:$0xff]
    %v4245 = vld [vmem:[#allocation6 + $0x1c8] sm:$0xff]
    %v4246 = vld [vmem:[#allocation6 + $0x1d0] sm:$0xff]
    %v4247 = vld [vmem:[#allocation6 + $0x1d8] sm:$0xff]
    %v4248 = vld [vmem:[#allocation6 + $0x1e0] sm:$0xff]
    %v4249 = vld [vmem:[#allocation6 + $0x1e8] sm:$0xff]
    %v4250 = vld [vmem:[#allocation6 + $0x1f0] sm:$0xff]
    %v4251 = vld [vmem:[#allocation6 + $0x1f8] sm:$0xff]
    %v4252 = vld [vmem:[#allocation6 + $0x200] sm:$0xff]
    %v4253 = vld [vmem:[#allocation6 + $0x208] sm:$0xff]
    %v4254 = vld [vmem:[#allocation6 + $0x210] sm:$0xff]
    %v4255 = vld [vmem:[#allocation6 + $0x218] sm:$0xff]
    %v4256 = vld [vmem:[#allocation6 + $0x220] sm:$0xff]
    %v4257 = vld [vmem:[#allocation6 + $0x228] sm:$0xff]
    %v4258 = vld [vmem:[#allocation6 + $0x230] sm:$0xff]
    %v4259 = vld [vmem:[#allocation6 + $0x238] sm:$0xff]
    %v4260 = vld [vmem:[#allocation6 + $0x240] sm:$0xff]
    %v4261 = vld [vmem:[#allocation6 + $0x248] sm:$0xff]
    %v4262 = vld [vmem:[#allocation6 + $0x250] sm:$0xff]
    %v4263 = vld [vmem:[#allocation6 + $0x258] sm:$0xff]
    %v4264 = vld [vmem:[#allocation6 + $0x260] sm:$0xff]
    %v4265 = vld [vmem:[#allocation6 + $0x268] sm:$0xff]
    %v4266 = vld [vmem:[#allocation6 + $0x270] sm:$0xff]
    %v4267 = vld [vmem:[#allocation6 + $0x278] sm:$0xff]
    %v4268 = vld [vmem:[#allocation6 + $0x280] sm:$0xff]
    %v4269 = vld [vmem:[#allocation6 + $0x288] sm:$0xff]
    %v4270 = vld [vmem:[#allocation6 + $0x290] sm:$0xff]
    %v4271 = vld [vmem:[#allocation6 + $0x298] sm:$0xff]
    %v4272 = vld [vmem:[#allocation6 + $0x2a0] sm:$0xff]
    %v4273 = vld [vmem:[#allocation6 + $0x2a8] sm:$0xff]
    %v4274 = vld [vmem:[#allocation6 + $0x2b0] sm:$0xff]
    %v4275 = vld [vmem:[#allocation6 + $0x2b8] sm:$0xff]
    %v4276 = vld [vmem:[#allocation6 + $0x2c0] sm:$0xff]
    %v4277 = vld [vmem:[#allocation6 + $0x2c8] sm:$0xff]
    %v4278 = vld [vmem:[#allocation6 + $0x2d0] sm:$0xff]
    %v4279 = vld [vmem:[#allocation6 + $0x2d8] sm:$0xff]
    %v4280 = vld [vmem:[#allocation6 + $0x2e0] sm:$0xff]
    %v4281 = vld [vmem:[#allocation6 + $0x2e8] sm:$0xff]
    %v4282 = vld [vmem:[#allocation6 + $0x2f0] sm:$0xff]
    %v4283 = vld [vmem:[#allocation6 + $0x2f8] sm:$0xff]
    %v4284 = vld [vmem:[#allocation6 + $0x300] sm:$0xff]
    %v4285 = vld [vmem:[#allocation6 + $0x308] sm:$0xff]
    %v4286 = vld [vmem:[#allocation6 + $0x310] sm:$0xff]
    %v4287 = vld [vmem:[#allocation6 + $0x318] sm:$0xff]
    %v4288 = vld [vmem:[#allocation6 + $0x320] sm:$0xff]
    %v4289 = vld [vmem:[#allocation6 + $0x328] sm:$0xff]
    %v4290 = vld [vmem:[#allocation6 + $0x330] sm:$0xff]
    %v4291 = vld [vmem:[#allocation6 + $0x338] sm:$0xff]
    %v4292 = vld [vmem:[#allocation6 + $0x340] sm:$0xff]
    %v4293 = vld [vmem:[#allocation6 + $0x348] sm:$0xff]
    %v4294 = vld [vmem:[#allocation6 + $0x350] sm:$0xff]
    %v4295 = vld [vmem:[#allocation6 + $0x358] sm:$0xff]
    %v4296 = vld [vmem:[#allocation6 + $0x360] sm:$0xff]
    %v4297 = vld [vmem:[#allocation6 + $0x368] sm:$0xff]
    %v4298 = vld [vmem:[#allocation6 + $0x370] sm:$0xff]
    %v4299 = vld [vmem:[#allocation6 + $0x378] sm:$0xff]
    %v4300 = vld [vmem:[#allocation6 + $0x380] sm:$0xff]
    %v4301 = vld [vmem:[#allocation6 + $0x388] sm:$0xff]
    %v4302 = vld [vmem:[#allocation6 + $0x390] sm:$0xff]
    %v4303 = vld [vmem:[#allocation6 + $0x398] sm:$0xff]
    %v4304 = vld [vmem:[#allocation6 + $0x3a0] sm:$0xff]
    %v4305 = vld [vmem:[#allocation6 + $0x3a8] sm:$0xff]
    %v4306 = vld [vmem:[#allocation6 + $0x3b0] sm:$0xff]
    %v4307 = vld [vmem:[#allocation6 + $0x3b8] sm:$0xff]
    %v4308 = vld [vmem:[#allocation6 + $0x3c0] sm:$0xff]
    %v4309 = vld [vmem:[#allocation6 + $0x3c8] sm:$0xff]
    %v4310 = vld [vmem:[#allocation6 + $0x3d0] sm:$0xff]
    %v4311 = vld [vmem:[#allocation6 + $0x3d8] sm:$0xff]
    %v4312 = vld [vmem:[#allocation6 + $0x3e0] sm:$0xff]
    %v4313 = vld [vmem:[#allocation6 + $0x3e8] sm:$0xff]
    %v4314 = vld [vmem:[#allocation6 + $0x3f0] sm:$0xff]
    %v4315 = vld [vmem:[#allocation6 + $0x3f8] sm:$0xff]
    %v4316 = vld [vmem:[#allocation6 + $0x400] sm:$0xff]
    %v4317 = vld [vmem:[#allocation6 + $0x408] sm:$0xff]
    %v4318 = vld [vmem:[#allocation6 + $0x410] sm:$0xff]
    %v4319 = vld [vmem:[#allocation6 + $0x418] sm:$0xff]
    %v4320 = vld [vmem:[#allocation6 + $0x420] sm:$0xff]
    %v4321 = vld [vmem:[#allocation6 + $0x428] sm:$0xff]
    %v4322 = vld [vmem:[#allocation6 + $0x430] sm:$0xff]
    %v4323 = vld [vmem:[#allocation6 + $0x438] sm:$0xff]
    %v4324 = vld [vmem:[#allocation6 + $0x440] sm:$0xff]
    %v4325 = vld [vmem:[#allocation6 + $0x448] sm:$0xff]
    %v4326 = vld [vmem:[#allocation6 + $0x450] sm:$0xff]
    %v4327 = vld [vmem:[#allocation6 + $0x458] sm:$0xff]
    %v4328 = vld [vmem:[#allocation6 + $0x460] sm:$0xff]
    %v4329 = vld [vmem:[#allocation6 + $0x468] sm:$0xff]
    %v4330 = vld [vmem:[#allocation6 + $0x470] sm:$0xff]
    %v4331 = vld [vmem:[#allocation6 + $0x478] sm:$0xff]
    %v4332 = vld [vmem:[#allocation6 + $0x480] sm:$0xff]
    %v4333 = vld [vmem:[#allocation6 + $0x488] sm:$0xff]
    %v4334 = vld [vmem:[#allocation6 + $0x490] sm:$0xff]
    %v4335 = vld [vmem:[#allocation6 + $0x498] sm:$0xff]
    %v4336 = vld [vmem:[#allocation6 + $0x4a0] sm:$0xff]
    %v4337 = vld [vmem:[#allocation6 + $0x4a8] sm:$0xff]
    %v4338 = vld [vmem:[#allocation6 + $0x4b0] sm:$0xff]
    %v4339 = vld [vmem:[#allocation6 + $0x4b8] sm:$0xff]
    %v4340 = vld [vmem:[#allocation6 + $0x4c0] sm:$0xff]
    %v4341 = vld [vmem:[#allocation6 + $0x4c8] sm:$0xff]
    %v4342 = vld [vmem:[#allocation6 + $0x4d0] sm:$0xff]
    %v4343 = vld [vmem:[#allocation6 + $0x4d8] sm:$0xff]
    %v4344 = vld [vmem:[#allocation6 + $0x4e0] sm:$0xff]
    %v4345 = vld [vmem:[#allocation6 + $0x4e8] sm:$0xff]
    %v4346 = vld [vmem:[#allocation6 + $0x4f0] sm:$0xff]
    %v4347 = vld [vmem:[#allocation6 + $0x4f8] sm:$0xff]
    %v4348 = vld [vmem:[#allocation6 + $0x500] sm:$0xff]
    %v4349 = vld [vmem:[#allocation6 + $0x508] sm:$0xff]
    %v4350 = vld [vmem:[#allocation6 + $0x510] sm:$0xff]
    %v4351 = vld [vmem:[#allocation6 + $0x518] sm:$0xff]
    %v4352 = vld [vmem:[#allocation6 + $0x520] sm:$0xff]
    %v4353 = vld [vmem:[#allocation6 + $0x528] sm:$0xff]
    %v4354 = vld [vmem:[#allocation6 + $0x530] sm:$0xff]
    %v4355 = vld [vmem:[#allocation6 + $0x538] sm:$0xff]
    %v4356 = vld [vmem:[#allocation6 + $0x540] sm:$0xff]
    %v4357 = vld [vmem:[#allocation6 + $0x548] sm:$0xff]
    %v4358 = vld [vmem:[#allocation6 + $0x550] sm:$0xff]
    %v4359 = vld [vmem:[#allocation6 + $0x558] sm:$0xff]
    %v4360 = vld [vmem:[#allocation6 + $0x560] sm:$0xff]
    %v4361 = vld [vmem:[#allocation6 + $0x568] sm:$0xff]
    %v4362 = vld [vmem:[#allocation6 + $0x570] sm:$0xff]
    %v4363 = vld [vmem:[#allocation6 + $0x578] sm:$0xff]
    %v4364 = vld [vmem:[#allocation6 + $0x580] sm:$0xff]
    %v4365 = vld [vmem:[#allocation6 + $0x588] sm:$0xff]
    %v4366 = vld [vmem:[#allocation6 + $0x590] sm:$0xff]
    %v4367 = vld [vmem:[#allocation6 + $0x598] sm:$0xff]
    %v4368 = vld [vmem:[#allocation6 + $0x5a0] sm:$0xff]
    %v4369 = vld [vmem:[#allocation6 + $0x5a8] sm:$0xff]
    %v4370 = vld [vmem:[#allocation6 + $0x5b0] sm:$0xff]
    %v4371 = vld [vmem:[#allocation6 + $0x5b8] sm:$0xff]
    %v4372 = vld [vmem:[#allocation6 + $0x5c0] sm:$0xff]
    %v4373 = vld [vmem:[#allocation6 + $0x5c8] sm:$0xff]
    %v4374 = vld [vmem:[#allocation6 + $0x5d0] sm:$0xff]
    %v4375 = vld [vmem:[#allocation6 + $0x5d8] sm:$0xff]
    %v4376 = vld [vmem:[#allocation6 + $0x5e0] sm:$0xff]
    %v4377 = vld [vmem:[#allocation6 + $0x5e8] sm:$0xff]
    %v4378 = vld [vmem:[#allocation6 + $0x5f0] sm:$0xff]
    %v4379 = vld [vmem:[#allocation6 + $0x5f8] sm:$0xff]
    %v4380 = vld [vmem:[#allocation6 + $0x600] sm:$0xff]
    %v4381 = vld [vmem:[#allocation6 + $0x608] sm:$0xff]
    %v4382 = vld [vmem:[#allocation6 + $0x610] sm:$0xff]
    %v4383 = vld [vmem:[#allocation6 + $0x618] sm:$0xff]
    %v4384 = vld [vmem:[#allocation6 + $0x620] sm:$0xff]
    %v4385 = vld [vmem:[#allocation6 + $0x628] sm:$0xff]
    %v4386 = vld [vmem:[#allocation6 + $0x630] sm:$0xff]
    %v4387 = vld [vmem:[#allocation6 + $0x638] sm:$0xff]
    %v4388 = vld [vmem:[#allocation6 + $0x640] sm:$0xff]
    %v4389 = vld [vmem:[#allocation6 + $0x648] sm:$0xff]
    %v4390 = vld [vmem:[#allocation6 + $0x650] sm:$0xff]
    %v4391 = vld [vmem:[#allocation6 + $0x658] sm:$0xff]
    %v4392 = vld [vmem:[#allocation6 + $0x660] sm:$0xff]
    %v4393 = vld [vmem:[#allocation6 + $0x668] sm:$0xff]
    %v4394 = vld [vmem:[#allocation6 + $0x670] sm:$0xff]
    %v4395 = vld [vmem:[#allocation6 + $0x678] sm:$0xff]
    %v4396 = vld [vmem:[#allocation6 + $0x680] sm:$0xff]
    %v4397 = vld [vmem:[#allocation6 + $0x688] sm:$0xff]
    %v4398 = vld [vmem:[#allocation6 + $0x690] sm:$0xff]
    %v4399 = vld [vmem:[#allocation6 + $0x698] sm:$0xff]
    %v4400 = vld [vmem:[#allocation6 + $0x6a0] sm:$0xff]
    %v4401 = vld [vmem:[#allocation6 + $0x6a8] sm:$0xff]
    %v4402 = vld [vmem:[#allocation6 + $0x6b0] sm:$0xff]
    %v4403 = vld [vmem:[#allocation6 + $0x6b8] sm:$0xff]
    %v4404 = vld [vmem:[#allocation6 + $0x6c0] sm:$0xff]
    %v4405 = vld [vmem:[#allocation6 + $0x6c8] sm:$0xff]
    %v4406 = vld [vmem:[#allocation6 + $0x6d0] sm:$0xff]
    %v4407 = vld [vmem:[#allocation6 + $0x6d8] sm:$0xff]
    %v4408 = vld [vmem:[#allocation6 + $0x6e0] sm:$0xff]
    %v4409 = vld [vmem:[#allocation6 + $0x6e8] sm:$0xff]
    %v4410 = vld [vmem:[#allocation6 + $0x6f0] sm:$0xff]
    %v4411 = vld [vmem:[#allocation6 + $0x6f8] sm:$0xff]
    %v4412 = vld [vmem:[#allocation6 + $0x700] sm:$0xff]
    %v4413 = vld [vmem:[#allocation6 + $0x708] sm:$0xff]
    %v4414 = vld [vmem:[#allocation6 + $0x710] sm:$0xff]
    %v4415 = vld [vmem:[#allocation6 + $0x718] sm:$0xff]
    %v4416 = vld [vmem:[#allocation6 + $0x720] sm:$0xff]
    %v4417 = vld [vmem:[#allocation6 + $0x728] sm:$0xff]
    %v4418 = vld [vmem:[#allocation6 + $0x730] sm:$0xff]
    %v4419 = vld [vmem:[#allocation6 + $0x738] sm:$0xff]
    %v4420 = vld [vmem:[#allocation6 + $0x740] sm:$0xff]
    %v4421 = vld [vmem:[#allocation6 + $0x748] sm:$0xff]
    %v4422 = vld [vmem:[#allocation6 + $0x750] sm:$0xff]
    %v4423 = vld [vmem:[#allocation6 + $0x758] sm:$0xff]
    %v4424 = vld [vmem:[#allocation6 + $0x760] sm:$0xff]
    %v4425 = vld [vmem:[#allocation6 + $0x768] sm:$0xff]
    %v4426 = vld [vmem:[#allocation6 + $0x770] sm:$0xff]
    %v4427 = vld [vmem:[#allocation6 + $0x778] sm:$0xff]
    %v4428 = vld [vmem:[#allocation6 + $0x780] sm:$0xff]
    %v4429 = vld [vmem:[#allocation6 + $0x788] sm:$0xff]
    %v4430 = vld [vmem:[#allocation6 + $0x790] sm:$0xff]
    %v4431 = vld [vmem:[#allocation6 + $0x798] sm:$0xff]
    %v4432 = vld [vmem:[#allocation6 + $0x7a0] sm:$0xff]
    %v4433 = vld [vmem:[#allocation6 + $0x7a8] sm:$0xff]
    %v4434 = vld [vmem:[#allocation6 + $0x7b0] sm:$0xff]
    %v4435 = vld [vmem:[#allocation6 + $0x7b8] sm:$0xff]
    %v4436 = vld [vmem:[#allocation6 + $0x7c0] sm:$0xff]
    %v4437 = vld [vmem:[#allocation6 + $0x7c8] sm:$0xff]
    %v4438 = vld [vmem:[#allocation6 + $0x7d0] sm:$0xff]
    %v4439 = vld [vmem:[#allocation6 + $0x7d8] sm:$0xff]
    %v4440 = vld [vmem:[#allocation6 + $0x7e0] sm:$0xff]
    %v4441 = vld [vmem:[#allocation6 + $0x7e8] sm:$0xff]
    %v4442 = vld [vmem:[#allocation6 + $0x7f0] sm:$0xff]
    %v4443 = vld [vmem:[#allocation6 + $0x7f8] sm:$0xff]
    %v4444 = vld [vmem:[#allocation6 + $0x800] sm:$0xff]
    %v4445 = vld [vmem:[#allocation6 + $0x808] sm:$0xff]
    %v4446 = vld [vmem:[#allocation6 + $0x810] sm:$0xff]
    %v4447 = vld [vmem:[#allocation6 + $0x818] sm:$0xff]
    %v4448 = vld [vmem:[#allocation6 + $0x820] sm:$0xff]
    %v4449 = vld [vmem:[#allocation6 + $0x828] sm:$0xff]
    %v4450 = vld [vmem:[#allocation6 + $0x830] sm:$0xff]
    %v4451 = vld [vmem:[#allocation6 + $0x838] sm:$0xff]
    %v4452 = vld [vmem:[#allocation6 + $0x840] sm:$0xff]
    %v4453 = vld [vmem:[#allocation6 + $0x848] sm:$0xff]
    %v4454 = vld [vmem:[#allocation6 + $0x850] sm:$0xff]
    %v4455 = vld [vmem:[#allocation6 + $0x858] sm:$0xff]
    %v4456 = vld [vmem:[#allocation6 + $0x860] sm:$0xff]
    %v4457 = vld [vmem:[#allocation6 + $0x868] sm:$0xff]
    %v4458 = vld [vmem:[#allocation6 + $0x870] sm:$0xff]
    %v4459 = vld [vmem:[#allocation6 + $0x878] sm:$0xff]
    %v4460 = vld [vmem:[#allocation6 + $0x880] sm:$0xff]
    %v4461 = vld [vmem:[#allocation6 + $0x888] sm:$0xff]
    %v4462 = vld [vmem:[#allocation6 + $0x890] sm:$0xff]
    %v4463 = vld [vmem:[#allocation6 + $0x898] sm:$0xff]
    %v4464 = vld [vmem:[#allocation6 + $0x8a0] sm:$0xff]
    %v4465 = vld [vmem:[#allocation6 + $0x8a8] sm:$0xff]
    %v4466 = vld [vmem:[#allocation6 + $0x8b0] sm:$0xff]
    %v4467 = vld [vmem:[#allocation6 + $0x8b8] sm:$0xff]
    %v4468 = vld [vmem:[#allocation6 + $0x8c0] sm:$0xff]
    %v4469 = vld [vmem:[#allocation6 + $0x8c8] sm:$0xff]
    %v4470 = vld [vmem:[#allocation6 + $0x8d0] sm:$0xff]
    %v4471 = vld [vmem:[#allocation6 + $0x8d8] sm:$0xff]
    %v4472 = vld [vmem:[#allocation6 + $0x8e0] sm:$0xff]
    %v4473 = vld [vmem:[#allocation6 + $0x8e8] sm:$0xff]
    %v4474 = vld [vmem:[#allocation6 + $0x8f0] sm:$0xff]
    %v4475 = vld [vmem:[#allocation6 + $0x8f8] sm:$0xff]
    %v4476 = vld [vmem:[#allocation6 + $0x900] sm:$0xff]
    %v4477 = vld [vmem:[#allocation6 + $0x908] sm:$0xff]
    %v4478 = vld [vmem:[#allocation6 + $0x910] sm:$0xff]
    %v4479 = vld [vmem:[#allocation6 + $0x918] sm:$0xff]
    %v4480 = vld [vmem:[#allocation6 + $0x920] sm:$0xff]
    %v4481 = vld [vmem:[#allocation6 + $0x928] sm:$0xff]
    %v4482 = vld [vmem:[#allocation6 + $0x930] sm:$0xff]
    %v4483 = vld [vmem:[#allocation6 + $0x938] sm:$0xff]
    %v4484 = vld [vmem:[#allocation6 + $0x940] sm:$0xff]
    %v4485 = vld [vmem:[#allocation6 + $0x948] sm:$0xff]
    %v4486 = vld [vmem:[#allocation6 + $0x950] sm:$0xff]
    %v4487 = vld [vmem:[#allocation6 + $0x958] sm:$0xff]
    %v4488 = vld [vmem:[#allocation6 + $0x960] sm:$0xff]
    %v4489 = vld [vmem:[#allocation6 + $0x968] sm:$0xff]
    %v4490 = vld [vmem:[#allocation6 + $0x970] sm:$0xff]
    %v4491 = vld [vmem:[#allocation6 + $0x978] sm:$0xff]
    %v4492 = vld [vmem:[#allocation6 + $0x980] sm:$0xff]
    %v4493 = vld [vmem:[#allocation6 + $0x988] sm:$0xff]
    %v4494 = vld [vmem:[#allocation6 + $0x990] sm:$0xff]
    %v4495 = vld [vmem:[#allocation6 + $0x998] sm:$0xff]
    %v4496 = vld [vmem:[#allocation6 + $0x9a0] sm:$0xff]
    %v4497 = vld [vmem:[#allocation6 + $0x9a8] sm:$0xff]
    %v4498 = vld [vmem:[#allocation6 + $0x9b0] sm:$0xff]
    %v4499 = vld [vmem:[#allocation6 + $0x9b8] sm:$0xff]
    %v4500 = vld [vmem:[#allocation6 + $0x9c0] sm:$0xff]
    %v4501 = vld [vmem:[#allocation6 + $0x9c8] sm:$0xff]
    %v4502 = vld [vmem:[#allocation6 + $0x9d0] sm:$0xff]
    %v4503 = vld [vmem:[#allocation6 + $0x9d8] sm:$0xff]
    %v4504 = vld [vmem:[#allocation6 + $0x9e0] sm:$0xff]
    %v4505 = vld [vmem:[#allocation6 + $0x9e8] sm:$0xff]
    %v4506 = vld [vmem:[#allocation6 + $0x9f0] sm:$0xff]
    %v4507 = vld [vmem:[#allocation6 + $0x9f8] sm:$0xff]
    %v4508 = vld [vmem:[#allocation6 + $0xa00] sm:$0xff]
    %v4509 = vld [vmem:[#allocation6 + $0xa08] sm:$0xff]
    %v4510 = vld [vmem:[#allocation6 + $0xa10] sm:$0xff]
    %v4511 = vld [vmem:[#allocation6 + $0xa18] sm:$0xff]
    %v4512 = vld [vmem:[#allocation6 + $0xa20] sm:$0xff]
    %v4513 = vld [vmem:[#allocation6 + $0xa28] sm:$0xff]
    %v4514 = vld [vmem:[#allocation6 + $0xa30] sm:$0xff]
    %v4515 = vld [vmem:[#allocation6 + $0xa38] sm:$0xff]
    %v4516 = vld [vmem:[#allocation6 + $0xa40] sm:$0xff]
    %v4517 = vld [vmem:[#allocation6 + $0xa48] sm:$0xff]
    %v4518 = vld [vmem:[#allocation6 + $0xa50] sm:$0xff]
    %v4519 = vld [vmem:[#allocation6 + $0xa58] sm:$0xff]
    %v4520 = vld [vmem:[#allocation6 + $0xa60] sm:$0xff]
    %v4521 = vld [vmem:[#allocation6 + $0xa68] sm:$0xff]
    %v4522 = vld [vmem:[#allocation6 + $0xa70] sm:$0xff]
    %v4523 = vld [vmem:[#allocation6 + $0xa78] sm:$0xff]
    %v4524 = vld [vmem:[#allocation6 + $0xa80] sm:$0xff]
    %v4525 = vld [vmem:[#allocation6 + $0xa88] sm:$0xff]
    %v4526 = vld [vmem:[#allocation6 + $0xa90] sm:$0xff]
    %v4527 = vld [vmem:[#allocation6 + $0xa98] sm:$0xff]
    %v4528 = vld [vmem:[#allocation6 + $0xaa0] sm:$0xff]
    %v4529 = vld [vmem:[#allocation6 + $0xaa8] sm:$0xff]
    %v4530 = vld [vmem:[#allocation6 + $0xab0] sm:$0xff]
    %v4531 = vld [vmem:[#allocation6 + $0xab8] sm:$0xff]
    %v4532 = vld [vmem:[#allocation6 + $0xac0] sm:$0xff]
    %v4533 = vld [vmem:[#allocation6 + $0xac8] sm:$0xff]
    %v4534 = vld [vmem:[#allocation6 + $0xad0] sm:$0xff]
    %v4535 = vld [vmem:[#allocation6 + $0xad8] sm:$0xff]
    %v4536 = vld [vmem:[#allocation6 + $0xae0] sm:$0xff]
    %v4537 = vld [vmem:[#allocation6 + $0xae8] sm:$0xff]
    %v4538 = vld [vmem:[#allocation6 + $0xaf0] sm:$0xff]
    %v4539 = vld [vmem:[#allocation6 + $0xaf8] sm:$0xff]
    %v4540 = vld [vmem:[#allocation6 + $0xb00] sm:$0xff]
    %v4541 = vld [vmem:[#allocation6 + $0xb08] sm:$0xff]
    %v4542 = vld [vmem:[#allocation6 + $0xb10] sm:$0xff]
    %v4543 = vld [vmem:[#allocation6 + $0xb18] sm:$0xff]
    %v4544 = vld [vmem:[#allocation6 + $0xb20] sm:$0xff]
    %v4545 = vld [vmem:[#allocation6 + $0xb28] sm:$0xff]
    %v4546 = vld [vmem:[#allocation6 + $0xb30] sm:$0xff]
    %v4547 = vld [vmem:[#allocation6 + $0xb38] sm:$0xff]
    %v4548 = vld [vmem:[#allocation6 + $0xb40] sm:$0xff]
    %v4549 = vld [vmem:[#allocation6 + $0xb48] sm:$0xff]
    %v4550 = vld [vmem:[#allocation6 + $0xb50] sm:$0xff]
    %v4551 = vld [vmem:[#allocation6 + $0xb58] sm:$0xff]
    %v4552 = vld [vmem:[#allocation6 + $0xb60] sm:$0xff]
    %v4553 = vld [vmem:[#allocation6 + $0xb68] sm:$0xff]
    %v4554 = vld [vmem:[#allocation6 + $0xb70] sm:$0xff]
    %v4555 = vld [vmem:[#allocation6 + $0xb78] sm:$0xff]
    %v4556 = vld [vmem:[#allocation6 + $0xb80] sm:$0xff]
    %v4557 = vld [vmem:[#allocation6 + $0xb88] sm:$0xff]
    %v4558 = vld [vmem:[#allocation6 + $0xb90] sm:$0xff]
    %v4559 = vld [vmem:[#allocation6 + $0xb98] sm:$0xff]
    %v4560 = vld [vmem:[#allocation6 + $0xba0] sm:$0xff]
    %v4561 = vld [vmem:[#allocation6 + $0xba8] sm:$0xff]
    %v4562 = vld [vmem:[#allocation6 + $0xbb0] sm:$0xff]
    %v4563 = vld [vmem:[#allocation6 + $0xbb8] sm:$0xff]
    %v4564 = vld [vmem:[#allocation6 + $0xbc0] sm:$0xff]
    %v4565 = vld [vmem:[#allocation6 + $0xbc8] sm:$0xff]
    %v4566 = vld [vmem:[#allocation6 + $0xbd0] sm:$0xff]
    %v4567 = vld [vmem:[#allocation6 + $0xbd8] sm:$0xff]
    %v4568 = vld [vmem:[#allocation6 + $0xbe0] sm:$0xff]
    %v4569 = vld [vmem:[#allocation6 + $0xbe8] sm:$0xff]
    %v4570 = vld [vmem:[#allocation6 + $0xbf0] sm:$0xff]
    %v4571 = vld [vmem:[#allocation6 + $0xbf8] sm:$0xff]
    %v4572 = vld [vmem:[#allocation6 + $0xc00] sm:$0xff]
    %v4573 = vld [vmem:[#allocation6 + $0xc08] sm:$0xff]
    %v4574 = vld [vmem:[#allocation6 + $0xc10] sm:$0xff]
    %v4575 = vld [vmem:[#allocation6 + $0xc18] sm:$0xff]
    %v4576 = vld [vmem:[#allocation6 + $0xc20] sm:$0xff]
    %v4577 = vld [vmem:[#allocation6 + $0xc28] sm:$0xff]
    %v4578 = vld [vmem:[#allocation6 + $0xc30] sm:$0xff]
    %v4579 = vld [vmem:[#allocation6 + $0xc38] sm:$0xff]
    %v4580 = vld [vmem:[#allocation6 + $0xc40] sm:$0xff]
    %v4581 = vld [vmem:[#allocation6 + $0xc48] sm:$0xff]
    %v4582 = vld [vmem:[#allocation6 + $0xc50] sm:$0xff]
    %v4583 = vld [vmem:[#allocation6 + $0xc58] sm:$0xff]
    %v4584 = vld [vmem:[#allocation6 + $0xc60] sm:$0xff]
    %v4585 = vld [vmem:[#allocation6 + $0xc68] sm:$0xff]
    %v4586 = vld [vmem:[#allocation6 + $0xc70] sm:$0xff]
    %v4587 = vld [vmem:[#allocation6 + $0xc78] sm:$0xff]
    %v4588 = vld [vmem:[#allocation6 + $0xc80] sm:$0xff]
    %v4589 = vld [vmem:[#allocation6 + $0xc88] sm:$0xff]
    %v4590 = vld [vmem:[#allocation6 + $0xc90] sm:$0xff]
    %v4591 = vld [vmem:[#allocation6 + $0xc98] sm:$0xff]
    %v4592 = vld [vmem:[#allocation6 + $0xca0] sm:$0xff]
    %v4593 = vld [vmem:[#allocation6 + $0xca8] sm:$0xff]
    %v4594 = vld [vmem:[#allocation6 + $0xcb0] sm:$0xff]
    %v4595 = vld [vmem:[#allocation6 + $0xcb8] sm:$0xff]
    %v4596 = vld [vmem:[#allocation6 + $0xcc0] sm:$0xff]
    %v4597 = vld [vmem:[#allocation6 + $0xcc8] sm:$0xff]
    %v4598 = vld [vmem:[#allocation6 + $0xcd0] sm:$0xff]
    %v4599 = vld [vmem:[#allocation6 + $0xcd8] sm:$0xff]
    %v4600 = vld [vmem:[#allocation6 + $0xce0] sm:$0xff]
    %v4601 = vld [vmem:[#allocation6 + $0xce8] sm:$0xff]
    %v4602 = vld [vmem:[#allocation6 + $0xcf0] sm:$0xff]
    %v4603 = vld [vmem:[#allocation6 + $0xcf8] sm:$0xff]
    %v4604 = vld [vmem:[#allocation6 + $0xd00] sm:$0xff]
    %v4605 = vld [vmem:[#allocation6 + $0xd08] sm:$0xff]
    %v4606 = vld [vmem:[#allocation6 + $0xd10] sm:$0xff]
    %v4607 = vld [vmem:[#allocation6 + $0xd18] sm:$0xff]
    %v4608 = vld [vmem:[#allocation6 + $0xd20] sm:$0xff]
    %v4609 = vld [vmem:[#allocation6 + $0xd28] sm:$0xff]
    %v4610 = vld [vmem:[#allocation6 + $0xd30] sm:$0xff]
    %v4611 = vld [vmem:[#allocation6 + $0xd38] sm:$0xff]
    %v4612 = vld [vmem:[#allocation6 + $0xd40] sm:$0xff]
    %v4613 = vld [vmem:[#allocation6 + $0xd48] sm:$0xff]
    %v4614 = vld [vmem:[#allocation6 + $0xd50] sm:$0xff]
    %v4615 = vld [vmem:[#allocation6 + $0xd58] sm:$0xff]
    %v4616 = vld [vmem:[#allocation6 + $0xd60] sm:$0xff]
    %v4617 = vld [vmem:[#allocation6 + $0xd68] sm:$0xff]
    %v4618 = vld [vmem:[#allocation6 + $0xd70] sm:$0xff]
    %v4619 = vld [vmem:[#allocation6 + $0xd78] sm:$0xff]
    %v4620 = vld [vmem:[#allocation6 + $0xd80] sm:$0xff]
    %v4621 = vld [vmem:[#allocation6 + $0xd88] sm:$0xff]
    %v4622 = vld [vmem:[#allocation6 + $0xd90] sm:$0xff]
    %v4623 = vld [vmem:[#allocation6 + $0xd98] sm:$0xff]
    %v4624 = vld [vmem:[#allocation6 + $0xda0] sm:$0xff]
    %v4625 = vld [vmem:[#allocation6 + $0xda8] sm:$0xff]
    %v4626 = vld [vmem:[#allocation6 + $0xdb0] sm:$0xff]
    %v4627 = vld [vmem:[#allocation6 + $0xdb8] sm:$0xff]
    %v4628 = vld [vmem:[#allocation6 + $0xdc0] sm:$0xff]
    %v4629 = vld [vmem:[#allocation6 + $0xdc8] sm:$0xff]
    %v4630 = vld [vmem:[#allocation6 + $0xdd0] sm:$0xff]
    %v4631 = vld [vmem:[#allocation6 + $0xdd8] sm:$0xff]
    %v4632 = vld [vmem:[#allocation6 + $0xde0] sm:$0xff]
    %v4633 = vld [vmem:[#allocation6 + $0xde8] sm:$0xff]
    %v4634 = vld [vmem:[#allocation6 + $0xdf0] sm:$0xff]
    %v4635 = vld [vmem:[#allocation6 + $0xdf8] sm:$0xff]
    %v4636 = vld [vmem:[#allocation6 + $0xe00] sm:$0xff]
    %v4637 = vld [vmem:[#allocation6 + $0xe08] sm:$0xff]
    %v4638 = vld [vmem:[#allocation6 + $0xe10] sm:$0xff]
    %v4639 = vld [vmem:[#allocation6 + $0xe18] sm:$0xff]
    %v4640 = vld [vmem:[#allocation6 + $0xe20] sm:$0xff]
    %v4641 = vld [vmem:[#allocation6 + $0xe28] sm:$0xff]
    %v4642 = vld [vmem:[#allocation6 + $0xe30] sm:$0xff]
    %v4643 = vld [vmem:[#allocation6 + $0xe38] sm:$0xff]
    %v4644 = vld [vmem:[#allocation6 + $0xe40] sm:$0xff]
    %v4645 = vld [vmem:[#allocation6 + $0xe48] sm:$0xff]
    %v4646 = vld [vmem:[#allocation6 + $0xe50] sm:$0xff]
    %v4647 = vld [vmem:[#allocation6 + $0xe58] sm:$0xff]
    %v4648 = vld [vmem:[#allocation6 + $0xe60] sm:$0xff]
    %v4649 = vld [vmem:[#allocation6 + $0xe68] sm:$0xff]
    %v4650 = vld [vmem:[#allocation6 + $0xe70] sm:$0xff]
    %v4651 = vld [vmem:[#allocation6 + $0xe78] sm:$0xff]
    %v4652 = vld [vmem:[#allocation6 + $0xe80] sm:$0xff]
    %v4653 = vld [vmem:[#allocation6 + $0xe88] sm:$0xff]
    %v4654 = vld [vmem:[#allocation6 + $0xe90] sm:$0xff]
    %v4655 = vld [vmem:[#allocation6 + $0xe98] sm:$0xff]
    %v4656 = vld [vmem:[#allocation6 + $0xea0] sm:$0xff]
    %v4657 = vld [vmem:[#allocation6 + $0xea8] sm:$0xff]
    %v4658 = vld [vmem:[#allocation6 + $0xeb0] sm:$0xff]
    %v4659 = vld [vmem:[#allocation6 + $0xeb8] sm:$0xff]
    %v4660 = vld [vmem:[#allocation6 + $0xec0] sm:$0xff]
    %v4661 = vld [vmem:[#allocation6 + $0xec8] sm:$0xff]
    %v4662 = vld [vmem:[#allocation6 + $0xed0] sm:$0xff]
    %v4663 = vld [vmem:[#allocation6 + $0xed8] sm:$0xff]
    %v4664 = vld [vmem:[#allocation6 + $0xee0] sm:$0xff]
    %v4665 = vld [vmem:[#allocation6 + $0xee8] sm:$0xff]
    %v4666 = vld [vmem:[#allocation6 + $0xef0] sm:$0xff]
    %v4667 = vld [vmem:[#allocation6 + $0xef8] sm:$0xff]
    %v4668 = vld [vmem:[#allocation6 + $0xf00] sm:$0xff]
    %v4669 = vld [vmem:[#allocation6 + $0xf08] sm:$0xff]
    %v4670 = vld [vmem:[#allocation6 + $0xf10] sm:$0xff]
    %v4671 = vld [vmem:[#allocation6 + $0xf18] sm:$0xff]
    %v4672 = vld [vmem:[#allocation6 + $0xf20] sm:$0xff]
    %v4673 = vld [vmem:[#allocation6 + $0xf28] sm:$0xff]
    %v4674 = vld [vmem:[#allocation6 + $0xf30] sm:$0xff]
    %v4675 = vld [vmem:[#allocation6 + $0xf38] sm:$0xff]
    %v4676 = vld [vmem:[#allocation6 + $0xf40] sm:$0xff]
    %v4677 = vld [vmem:[#allocation6 + $0xf48] sm:$0xff]
    %v4678 = vld [vmem:[#allocation6 + $0xf50] sm:$0xff]
    %v4679 = vld [vmem:[#allocation6 + $0xf58] sm:$0xff]
    %v4680 = vld [vmem:[#allocation6 + $0xf60] sm:$0xff]
    %v4681 = vld [vmem:[#allocation6 + $0xf68] sm:$0xff]
    %v4682 = vld [vmem:[#allocation6 + $0xf70] sm:$0xff]
    %v4683 = vld [vmem:[#allocation6 + $0xf78] sm:$0xff]
    %v4684 = vld [vmem:[#allocation6 + $0xf80] sm:$0xff]
    %v4685 = vld [vmem:[#allocation6 + $0xf88] sm:$0xff]
    %v4686 = vld [vmem:[#allocation6 + $0xf90] sm:$0xff]
    %v4687 = vld [vmem:[#allocation6 + $0xf98] sm:$0xff]
    %v4688 = vld [vmem:[#allocation6 + $0xfa0] sm:$0xff]
    %v4689 = vld [vmem:[#allocation6 + $0xfa8] sm:$0xff]
    %v4690 = vld [vmem:[#allocation6 + $0xfb0] sm:$0xff]
    %v4691 = vld [vmem:[#allocation6 + $0xfb8] sm:$0xff]
    %v4692 = vld [vmem:[#allocation6 + $0xfc0] sm:$0xff]
    %v4693 = vld [vmem:[#allocation6 + $0xfc8] sm:$0xff]
    %v4694 = vld [vmem:[#allocation6 + $0xfd0] sm:$0xff]
    %v4695 = vld [vmem:[#allocation6 + $0xfd8] sm:$0xff]
    %v4696 = vld [vmem:[#allocation6 + $0xfe0] sm:$0xff]
    %v4697 = vld [vmem:[#allocation6 + $0xfe8] sm:$0xff]
    %v4698 = vld [vmem:[#allocation6 + $0xff0] sm:$0xff]
    %v4699 = vld [vmem:[#allocation6 + $0xff8] sm:$0xff]
    %v4700 = vld [vmem:[#allocation7] sm:$0xff]
    %v4702 = vperm.slane %v4700, 0
    %v4703 = vperm.slane %v4700, 1
    %v4704 = vperm.slane %v4700, 2
    %v4705 = vperm.slane %v4700, 3
    %v4706 = vperm.slane %v4700, 4
    %v4707 = vperm.slane %v4700, 5
    %v4708 = vperm.slane %v4700, 6
    %v4709 = vperm.slane %v4700, 7
    %v5230 = vunpack.c.l.b16 %v4188
    %v5231 = vunpack.c.h.b16 %v4188
    %v5232 = vunpack.c.l.b16 %v4189
    %v5233 = vunpack.c.h.b16 %v4189
    %v5234 = vunpack.c.l.b16 %v4190
    %v5235 = vunpack.c.h.b16 %v4190
    %v5236 = vunpack.c.l.b16 %v4191
    %v5237 = vunpack.c.h.b16 %v4191
    %v5238 = vunpack.c.l.b16 %v4192
    %v5239 = vunpack.c.h.b16 %v4192
    %v5240 = vunpack.c.l.b16 %v4193
    %v5241 = vunpack.c.h.b16 %v4193
    %v5242 = vunpack.c.l.b16 %v4194
    %v5243 = vunpack.c.h.b16 %v4194
    %v5244 = vunpack.c.l.b16 %v4195
    %v5245 = vunpack.c.h.b16 %v4195
    %v5246 = vunpack.c.l.b16 %v4196
    %v5247 = vunpack.c.h.b16 %v4196
    %v5248 = vunpack.c.l.b16 %v4197
    %v5249 = vunpack.c.h.b16 %v4197
    %v5250 = vunpack.c.l.b16 %v4198
    %v5251 = vunpack.c.h.b16 %v4198
    %v5252 = vunpack.c.l.b16 %v4199
    %v5253 = vunpack.c.h.b16 %v4199
    %v5254 = vunpack.c.l.b16 %v4200
    %v5255 = vunpack.c.h.b16 %v4200
    %v5256 = vunpack.c.l.b16 %v4201
    %v5257 = vunpack.c.h.b16 %v4201
    %v5258 = vunpack.c.l.b16 %v4202
    %v5259 = vunpack.c.h.b16 %v4202
    %v5260 = vunpack.c.l.b16 %v4203
    %v5261 = vunpack.c.h.b16 %v4203
    %v5262 = vunpack.c.l.b16 %v4204
    %v5263 = vunpack.c.h.b16 %v4204
    %v5264 = vunpack.c.l.b16 %v4205
    %v5265 = vunpack.c.h.b16 %v4205
    %v5266 = vunpack.c.l.b16 %v4206
    %v5267 = vunpack.c.h.b16 %v4206
    %v5268 = vunpack.c.l.b16 %v4207
    %v5269 = vunpack.c.h.b16 %v4207
    %v5270 = vunpack.c.l.b16 %v4208
    %v5271 = vunpack.c.h.b16 %v4208
    %v5272 = vunpack.c.l.b16 %v4209
    %v5273 = vunpack.c.h.b16 %v4209
    %v5274 = vunpack.c.l.b16 %v4210
    %v5275 = vunpack.c.h.b16 %v4210
    %v5276 = vunpack.c.l.b16 %v4211
    %v5277 = vunpack.c.h.b16 %v4211
    %v5278 = vunpack.c.l.b16 %v4212
    %v5279 = vunpack.c.h.b16 %v4212
    %v5280 = vunpack.c.l.b16 %v4213
    %v5281 = vunpack.c.h.b16 %v4213
    %v5282 = vunpack.c.l.b16 %v4214
    %v5283 = vunpack.c.h.b16 %v4214
    %v5284 = vunpack.c.l.b16 %v4215
    %v5285 = vunpack.c.h.b16 %v4215
    %v5286 = vunpack.c.l.b16 %v4216
    %v5287 = vunpack.c.h.b16 %v4216
    %v5288 = vunpack.c.l.b16 %v4217
    %v5289 = vunpack.c.h.b16 %v4217
    %v5290 = vunpack.c.l.b16 %v4218
    %v5291 = vunpack.c.h.b16 %v4218
    %v5292 = vunpack.c.l.b16 %v4219
    %v5293 = vunpack.c.h.b16 %v4219
    %v5294 = vunpack.c.l.b16 %v4220
    %v5295 = vunpack.c.h.b16 %v4220
    %v5296 = vunpack.c.l.b16 %v4221
    %v5297 = vunpack.c.h.b16 %v4221
    %v5298 = vunpack.c.l.b16 %v4222
    %v5299 = vunpack.c.h.b16 %v4222
    %v5300 = vunpack.c.l.b16 %v4223
    %v5301 = vunpack.c.h.b16 %v4223
    %v5302 = vunpack.c.l.b16 %v4224
    %v5303 = vunpack.c.h.b16 %v4224
    %v5304 = vunpack.c.l.b16 %v4225
    %v5305 = vunpack.c.h.b16 %v4225
    %v5306 = vunpack.c.l.b16 %v4226
    %v5307 = vunpack.c.h.b16 %v4226
    %v5308 = vunpack.c.l.b16 %v4227
    %v5309 = vunpack.c.h.b16 %v4227
    %v5310 = vunpack.c.l.b16 %v4228
    %v5311 = vunpack.c.h.b16 %v4228
    %v5312 = vunpack.c.l.b16 %v4229
    %v5313 = vunpack.c.h.b16 %v4229
    %v5314 = vunpack.c.l.b16 %v4230
    %v5315 = vunpack.c.h.b16 %v4230
    %v5316 = vunpack.c.l.b16 %v4231
    %v5317 = vunpack.c.h.b16 %v4231
    %v5318 = vunpack.c.l.b16 %v4232
    %v5319 = vunpack.c.h.b16 %v4232
    %v5320 = vunpack.c.l.b16 %v4233
    %v5321 = vunpack.c.h.b16 %v4233
    %v5322 = vunpack.c.l.b16 %v4234
    %v5323 = vunpack.c.h.b16 %v4234
    %v5324 = vunpack.c.l.b16 %v4235
    %v5325 = vunpack.c.h.b16 %v4235
    %v5326 = vunpack.c.l.b16 %v4236
    %v5327 = vunpack.c.h.b16 %v4236
    %v5328 = vunpack.c.l.b16 %v4237
    %v5329 = vunpack.c.h.b16 %v4237
    %v5330 = vunpack.c.l.b16 %v4238
    %v5331 = vunpack.c.h.b16 %v4238
    %v5332 = vunpack.c.l.b16 %v4239
    %v5333 = vunpack.c.h.b16 %v4239
    %v5334 = vunpack.c.l.b16 %v4240
    %v5335 = vunpack.c.h.b16 %v4240
    %v5336 = vunpack.c.l.b16 %v4241
    %v5337 = vunpack.c.h.b16 %v4241
    %v5338 = vunpack.c.l.b16 %v4242
    %v5339 = vunpack.c.h.b16 %v4242
    %v5340 = vunpack.c.l.b16 %v4243
    %v5341 = vunpack.c.h.b16 %v4243
    %v5342 = vunpack.c.l.b16 %v4244
    %v5343 = vunpack.c.h.b16 %v4244
    %v5344 = vunpack.c.l.b16 %v4245
    %v5345 = vunpack.c.h.b16 %v4245
    %v5346 = vunpack.c.l.b16 %v4246
    %v5347 = vunpack.c.h.b16 %v4246
    %v5348 = vunpack.c.l.b16 %v4247
    %v5349 = vunpack.c.h.b16 %v4247
    %v5350 = vunpack.c.l.b16 %v4248
    %v5351 = vunpack.c.h.b16 %v4248
    %v5352 = vunpack.c.l.b16 %v4249
    %v5353 = vunpack.c.h.b16 %v4249
    %v5354 = vunpack.c.l.b16 %v4250
    %v5355 = vunpack.c.h.b16 %v4250
    %v5356 = vunpack.c.l.b16 %v4251
    %v5357 = vunpack.c.h.b16 %v4251
    %v5358 = vunpack.c.l.b16 %v4252
    %v5359 = vunpack.c.h.b16 %v4252
    %v5360 = vunpack.c.l.b16 %v4253
    %v5361 = vunpack.c.h.b16 %v4253
    %v5362 = vunpack.c.l.b16 %v4254
    %v5363 = vunpack.c.h.b16 %v4254
    %v5364 = vunpack.c.l.b16 %v4255
    %v5365 = vunpack.c.h.b16 %v4255
    %v5366 = vunpack.c.l.b16 %v4256
    %v5367 = vunpack.c.h.b16 %v4256
    %v5368 = vunpack.c.l.b16 %v4257
    %v5369 = vunpack.c.h.b16 %v4257
    %v5370 = vunpack.c.l.b16 %v4258
    %v5371 = vunpack.c.h.b16 %v4258
    %v5372 = vunpack.c.l.b16 %v4259
    %v5373 = vunpack.c.h.b16 %v4259
    %v5374 = vunpack.c.l.b16 %v4260
    %v5375 = vunpack.c.h.b16 %v4260
    %v5376 = vunpack.c.l.b16 %v4261
    %v5377 = vunpack.c.h.b16 %v4261
    %v5378 = vunpack.c.l.b16 %v4262
    %v5379 = vunpack.c.h.b16 %v4262
    %v5380 = vunpack.c.l.b16 %v4263
    %v5381 = vunpack.c.h.b16 %v4263
    %v5382 = vunpack.c.l.b16 %v4264
    %v5383 = vunpack.c.h.b16 %v4264
    %v5384 = vunpack.c.l.b16 %v4265
    %v5385 = vunpack.c.h.b16 %v4265
    %v5386 = vunpack.c.l.b16 %v4266
    %v5387 = vunpack.c.h.b16 %v4266
    %v5388 = vunpack.c.l.b16 %v4267
    %v5389 = vunpack.c.h.b16 %v4267
    %v5390 = vunpack.c.l.b16 %v4268
    %v5391 = vunpack.c.h.b16 %v4268
    %v5392 = vunpack.c.l.b16 %v4269
    %v5393 = vunpack.c.h.b16 %v4269
    %v5394 = vunpack.c.l.b16 %v4270
    %v5395 = vunpack.c.h.b16 %v4270
    %v5396 = vunpack.c.l.b16 %v4271
    %v5397 = vunpack.c.h.b16 %v4271
    %v5398 = vunpack.c.l.b16 %v4272
    %v5399 = vunpack.c.h.b16 %v4272
    %v5400 = vunpack.c.l.b16 %v4273
    %v5401 = vunpack.c.h.b16 %v4273
    %v5402 = vunpack.c.l.b16 %v4274
    %v5403 = vunpack.c.h.b16 %v4274
    %v5404 = vunpack.c.l.b16 %v4275
    %v5405 = vunpack.c.h.b16 %v4275
    %v5406 = vunpack.c.l.b16 %v4276
    %v5407 = vunpack.c.h.b16 %v4276
    %v5408 = vunpack.c.l.b16 %v4277
    %v5409 = vunpack.c.h.b16 %v4277
    %v5410 = vunpack.c.l.b16 %v4278
    %v5411 = vunpack.c.h.b16 %v4278
    %v5412 = vunpack.c.l.b16 %v4279
    %v5413 = vunpack.c.h.b16 %v4279
    %v5414 = vunpack.c.l.b16 %v4280
    %v5415 = vunpack.c.h.b16 %v4280
    %v5416 = vunpack.c.l.b16 %v4281
    %v5417 = vunpack.c.h.b16 %v4281
    %v5418 = vunpack.c.l.b16 %v4282
    %v5419 = vunpack.c.h.b16 %v4282
    %v5420 = vunpack.c.l.b16 %v4283
    %v5421 = vunpack.c.h.b16 %v4283
    %v5422 = vunpack.c.l.b16 %v4284
    %v5423 = vunpack.c.h.b16 %v4284
    %v5424 = vunpack.c.l.b16 %v4285
    %v5425 = vunpack.c.h.b16 %v4285
    %v5426 = vunpack.c.l.b16 %v4286
    %v5427 = vunpack.c.h.b16 %v4286
    %v5428 = vunpack.c.l.b16 %v4287
    %v5429 = vunpack.c.h.b16 %v4287
    %v5430 = vunpack.c.l.b16 %v4288
    %v5431 = vunpack.c.h.b16 %v4288
    %v5432 = vunpack.c.l.b16 %v4289
    %v5433 = vunpack.c.h.b16 %v4289
    %v5434 = vunpack.c.l.b16 %v4290
    %v5435 = vunpack.c.h.b16 %v4290
    %v5436 = vunpack.c.l.b16 %v4291
    %v5437 = vunpack.c.h.b16 %v4291
    %v5438 = vunpack.c.l.b16 %v4292
    %v5439 = vunpack.c.h.b16 %v4292
    %v5440 = vunpack.c.l.b16 %v4293
    %v5441 = vunpack.c.h.b16 %v4293
    %v5442 = vunpack.c.l.b16 %v4294
    %v5443 = vunpack.c.h.b16 %v4294
    %v5444 = vunpack.c.l.b16 %v4295
    %v5445 = vunpack.c.h.b16 %v4295
    %v5446 = vunpack.c.l.b16 %v4296
    %v5447 = vunpack.c.h.b16 %v4296
    %v5448 = vunpack.c.l.b16 %v4297
    %v5449 = vunpack.c.h.b16 %v4297
    %v5450 = vunpack.c.l.b16 %v4298
    %v5451 = vunpack.c.h.b16 %v4298
    %v5452 = vunpack.c.l.b16 %v4299
    %v5453 = vunpack.c.h.b16 %v4299
    %v5454 = vunpack.c.l.b16 %v4300
    %v5455 = vunpack.c.h.b16 %v4300
    %v5456 = vunpack.c.l.b16 %v4301
    %v5457 = vunpack.c.h.b16 %v4301
    %v5458 = vunpack.c.l.b16 %v4302
    %v5459 = vunpack.c.h.b16 %v4302
    %v5460 = vunpack.c.l.b16 %v4303
    %v5461 = vunpack.c.h.b16 %v4303
    %v5462 = vunpack.c.l.b16 %v4304
    %v5463 = vunpack.c.h.b16 %v4304
    %v5464 = vunpack.c.l.b16 %v4305
    %v5465 = vunpack.c.h.b16 %v4305
    %v5466 = vunpack.c.l.b16 %v4306
    %v5467 = vunpack.c.h.b16 %v4306
    %v5468 = vunpack.c.l.b16 %v4307
    %v5469 = vunpack.c.h.b16 %v4307
    %v5470 = vunpack.c.l.b16 %v4308
    %v5471 = vunpack.c.h.b16 %v4308
    %v5472 = vunpack.c.l.b16 %v4309
    %v5473 = vunpack.c.h.b16 %v4309
    %v5474 = vunpack.c.l.b16 %v4310
    %v5475 = vunpack.c.h.b16 %v4310
    %v5476 = vunpack.c.l.b16 %v4311
    %v5477 = vunpack.c.h.b16 %v4311
    %v5478 = vunpack.c.l.b16 %v4312
    %v5479 = vunpack.c.h.b16 %v4312
    %v5480 = vunpack.c.l.b16 %v4313
    %v5481 = vunpack.c.h.b16 %v4313
    %v5482 = vunpack.c.l.b16 %v4314
    %v5483 = vunpack.c.h.b16 %v4314
    %v5484 = vunpack.c.l.b16 %v4315
    %v5485 = vunpack.c.h.b16 %v4315
    %v5486 = vunpack.c.l.b16 %v4316
    %v5487 = vunpack.c.h.b16 %v4316
    %v5488 = vunpack.c.l.b16 %v4317
    %v5489 = vunpack.c.h.b16 %v4317
    %v5490 = vunpack.c.l.b16 %v4318
    %v5491 = vunpack.c.h.b16 %v4318
    %v5492 = vunpack.c.l.b16 %v4319
    %v5493 = vunpack.c.h.b16 %v4319
    %v5494 = vunpack.c.l.b16 %v4320
    %v5495 = vunpack.c.h.b16 %v4320
    %v5496 = vunpack.c.l.b16 %v4321
    %v5497 = vunpack.c.h.b16 %v4321
    %v5498 = vunpack.c.l.b16 %v4322
    %v5499 = vunpack.c.h.b16 %v4322
    %v5500 = vunpack.c.l.b16 %v4323
    %v5501 = vunpack.c.h.b16 %v4323
    %v5502 = vunpack.c.l.b16 %v4324
    %v5503 = vunpack.c.h.b16 %v4324
    %v5504 = vunpack.c.l.b16 %v4325
    %v5505 = vunpack.c.h.b16 %v4325
    %v5506 = vunpack.c.l.b16 %v4326
    %v5507 = vunpack.c.h.b16 %v4326
    %v5508 = vunpack.c.l.b16 %v4327
    %v5509 = vunpack.c.h.b16 %v4327
    %v5510 = vunpack.c.l.b16 %v4328
    %v5511 = vunpack.c.h.b16 %v4328
    %v5512 = vunpack.c.l.b16 %v4329
    %v5513 = vunpack.c.h.b16 %v4329
    %v5514 = vunpack.c.l.b16 %v4330
    %v5515 = vunpack.c.h.b16 %v4330
    %v5516 = vunpack.c.l.b16 %v4331
    %v5517 = vunpack.c.h.b16 %v4331
    %v5518 = vunpack.c.l.b16 %v4332
    %v5519 = vunpack.c.h.b16 %v4332
    %v5520 = vunpack.c.l.b16 %v4333
    %v5521 = vunpack.c.h.b16 %v4333
    %v5522 = vunpack.c.l.b16 %v4334
    %v5523 = vunpack.c.h.b16 %v4334
    %v5524 = vunpack.c.l.b16 %v4335
    %v5525 = vunpack.c.h.b16 %v4335
    %v5526 = vunpack.c.l.b16 %v4336
    %v5527 = vunpack.c.h.b16 %v4336
    %v5528 = vunpack.c.l.b16 %v4337
    %v5529 = vunpack.c.h.b16 %v4337
    %v5530 = vunpack.c.l.b16 %v4338
    %v5531 = vunpack.c.h.b16 %v4338
    %v5532 = vunpack.c.l.b16 %v4339
    %v5533 = vunpack.c.h.b16 %v4339
    %v5534 = vunpack.c.l.b16 %v4340
    %v5535 = vunpack.c.h.b16 %v4340
    %v5536 = vunpack.c.l.b16 %v4341
    %v5537 = vunpack.c.h.b16 %v4341
    %v5538 = vunpack.c.l.b16 %v4342
    %v5539 = vunpack.c.h.b16 %v4342
    %v5540 = vunpack.c.l.b16 %v4343
    %v5541 = vunpack.c.h.b16 %v4343
    %v5542 = vunpack.c.l.b16 %v4344
    %v5543 = vunpack.c.h.b16 %v4344
    %v5544 = vunpack.c.l.b16 %v4345
    %v5545 = vunpack.c.h.b16 %v4345
    %v5546 = vunpack.c.l.b16 %v4346
    %v5547 = vunpack.c.h.b16 %v4346
    %v5548 = vunpack.c.l.b16 %v4347
    %v5549 = vunpack.c.h.b16 %v4347
    %v5550 = vunpack.c.l.b16 %v4348
    %v5551 = vunpack.c.h.b16 %v4348
    %v5552 = vunpack.c.l.b16 %v4349
    %v5553 = vunpack.c.h.b16 %v4349
    %v5554 = vunpack.c.l.b16 %v4350
    %v5555 = vunpack.c.h.b16 %v4350
    %v5556 = vunpack.c.l.b16 %v4351
    %v5557 = vunpack.c.h.b16 %v4351
    %v5558 = vunpack.c.l.b16 %v4352
    %v5559 = vunpack.c.h.b16 %v4352
    %v5560 = vunpack.c.l.b16 %v4353
    %v5561 = vunpack.c.h.b16 %v4353
    %v5562 = vunpack.c.l.b16 %v4354
    %v5563 = vunpack.c.h.b16 %v4354
    %v5564 = vunpack.c.l.b16 %v4355
    %v5565 = vunpack.c.h.b16 %v4355
    %v5566 = vunpack.c.l.b16 %v4356
    %v5567 = vunpack.c.h.b16 %v4356
    %v5568 = vunpack.c.l.b16 %v4357
    %v5569 = vunpack.c.h.b16 %v4357
    %v5570 = vunpack.c.l.b16 %v4358
    %v5571 = vunpack.c.h.b16 %v4358
    %v5572 = vunpack.c.l.b16 %v4359
    %v5573 = vunpack.c.h.b16 %v4359
    %v5574 = vunpack.c.l.b16 %v4360
    %v5575 = vunpack.c.h.b16 %v4360
    %v5576 = vunpack.c.l.b16 %v4361
    %v5577 = vunpack.c.h.b16 %v4361
    %v5578 = vunpack.c.l.b16 %v4362
    %v5579 = vunpack.c.h.b16 %v4362
    %v5580 = vunpack.c.l.b16 %v4363
    %v5581 = vunpack.c.h.b16 %v4363
    %v5582 = vunpack.c.l.b16 %v4364
    %v5583 = vunpack.c.h.b16 %v4364
    %v5584 = vunpack.c.l.b16 %v4365
    %v5585 = vunpack.c.h.b16 %v4365
    %v5586 = vunpack.c.l.b16 %v4366
    %v5587 = vunpack.c.h.b16 %v4366
    %v5588 = vunpack.c.l.b16 %v4367
    %v5589 = vunpack.c.h.b16 %v4367
    %v5590 = vunpack.c.l.b16 %v4368
    %v5591 = vunpack.c.h.b16 %v4368
    %v5592 = vunpack.c.l.b16 %v4369
    %v5593 = vunpack.c.h.b16 %v4369
    %v5594 = vunpack.c.l.b16 %v4370
    %v5595 = vunpack.c.h.b16 %v4370
    %v5596 = vunpack.c.l.b16 %v4371
    %v5597 = vunpack.c.h.b16 %v4371
    %v5598 = vunpack.c.l.b16 %v4372
    %v5599 = vunpack.c.h.b16 %v4372
    %v5600 = vunpack.c.l.b16 %v4373
    %v5601 = vunpack.c.h.b16 %v4373
    %v5602 = vunpack.c.l.b16 %v4374
    %v5603 = vunpack.c.h.b16 %v4374
    %v5604 = vunpack.c.l.b16 %v4375
    %v5605 = vunpack.c.h.b16 %v4375
    %v5606 = vunpack.c.l.b16 %v4376
    %v5607 = vunpack.c.h.b16 %v4376
    %v5608 = vunpack.c.l.b16 %v4377
    %v5609 = vunpack.c.h.b16 %v4377
    %v5610 = vunpack.c.l.b16 %v4378
    %v5611 = vunpack.c.h.b16 %v4378
    %v5612 = vunpack.c.l.b16 %v4379
    %v5613 = vunpack.c.h.b16 %v4379
    %v5614 = vunpack.c.l.b16 %v4380
    %v5615 = vunpack.c.h.b16 %v4380
    %v5616 = vunpack.c.l.b16 %v4381
    %v5617 = vunpack.c.h.b16 %v4381
    %v5618 = vunpack.c.l.b16 %v4382
    %v5619 = vunpack.c.h.b16 %v4382
    %v5620 = vunpack.c.l.b16 %v4383
    %v5621 = vunpack.c.h.b16 %v4383
    %v5622 = vunpack.c.l.b16 %v4384
    %v5623 = vunpack.c.h.b16 %v4384
    %v5624 = vunpack.c.l.b16 %v4385
    %v5625 = vunpack.c.h.b16 %v4385
    %v5626 = vunpack.c.l.b16 %v4386
    %v5627 = vunpack.c.h.b16 %v4386
    %v5628 = vunpack.c.l.b16 %v4387
    %v5629 = vunpack.c.h.b16 %v4387
    %v5630 = vunpack.c.l.b16 %v4388
    %v5631 = vunpack.c.h.b16 %v4388
    %v5632 = vunpack.c.l.b16 %v4389
    %v5633 = vunpack.c.h.b16 %v4389
    %v5634 = vunpack.c.l.b16 %v4390
    %v5635 = vunpack.c.h.b16 %v4390
    %v5636 = vunpack.c.l.b16 %v4391
    %v5637 = vunpack.c.h.b16 %v4391
    %v5638 = vunpack.c.l.b16 %v4392
    %v5639 = vunpack.c.h.b16 %v4392
    %v5640 = vunpack.c.l.b16 %v4393
    %v5641 = vunpack.c.h.b16 %v4393
    %v5642 = vunpack.c.l.b16 %v4394
    %v5643 = vunpack.c.h.b16 %v4394
    %v5644 = vunpack.c.l.b16 %v4395
    %v5645 = vunpack.c.h.b16 %v4395
    %v5646 = vunpack.c.l.b16 %v4396
    %v5647 = vunpack.c.h.b16 %v4396
    %v5648 = vunpack.c.l.b16 %v4397
    %v5649 = vunpack.c.h.b16 %v4397
    %v5650 = vunpack.c.l.b16 %v4398
    %v5651 = vunpack.c.h.b16 %v4398
    %v5652 = vunpack.c.l.b16 %v4399
    %v5653 = vunpack.c.h.b16 %v4399
    %v5654 = vunpack.c.l.b16 %v4400
    %v5655 = vunpack.c.h.b16 %v4400
    %v5656 = vunpack.c.l.b16 %v4401
    %v5657 = vunpack.c.h.b16 %v4401
    %v5658 = vunpack.c.l.b16 %v4402
    %v5659 = vunpack.c.h.b16 %v4402
    %v5660 = vunpack.c.l.b16 %v4403
    %v5661 = vunpack.c.h.b16 %v4403
    %v5662 = vunpack.c.l.b16 %v4404
    %v5663 = vunpack.c.h.b16 %v4404
    %v5664 = vunpack.c.l.b16 %v4405
    %v5665 = vunpack.c.h.b16 %v4405
    %v5666 = vunpack.c.l.b16 %v4406
    %v5667 = vunpack.c.h.b16 %v4406
    %v5668 = vunpack.c.l.b16 %v4407
    %v5669 = vunpack.c.h.b16 %v4407
    %v5670 = vunpack.c.l.b16 %v4408
    %v5671 = vunpack.c.h.b16 %v4408
    %v5672 = vunpack.c.l.b16 %v4409
    %v5673 = vunpack.c.h.b16 %v4409
    %v5674 = vunpack.c.l.b16 %v4410
    %v5675 = vunpack.c.h.b16 %v4410
    %v5676 = vunpack.c.l.b16 %v4411
    %v5677 = vunpack.c.h.b16 %v4411
    %v5678 = vunpack.c.l.b16 %v4412
    %v5679 = vunpack.c.h.b16 %v4412
    %v5680 = vunpack.c.l.b16 %v4413
    %v5681 = vunpack.c.h.b16 %v4413
    %v5682 = vunpack.c.l.b16 %v4414
    %v5683 = vunpack.c.h.b16 %v4414
    %v5684 = vunpack.c.l.b16 %v4415
    %v5685 = vunpack.c.h.b16 %v4415
    %v5686 = vunpack.c.l.b16 %v4416
    %v5687 = vunpack.c.h.b16 %v4416
    %v5688 = vunpack.c.l.b16 %v4417
    %v5689 = vunpack.c.h.b16 %v4417
    %v5690 = vunpack.c.l.b16 %v4418
    %v5691 = vunpack.c.h.b16 %v4418
    %v5692 = vunpack.c.l.b16 %v4419
    %v5693 = vunpack.c.h.b16 %v4419
    %v5694 = vunpack.c.l.b16 %v4420
    %v5695 = vunpack.c.h.b16 %v4420
    %v5696 = vunpack.c.l.b16 %v4421
    %v5697 = vunpack.c.h.b16 %v4421
    %v5698 = vunpack.c.l.b16 %v4422
    %v5699 = vunpack.c.h.b16 %v4422
    %v5700 = vunpack.c.l.b16 %v4423
    %v5701 = vunpack.c.h.b16 %v4423
    %v5702 = vunpack.c.l.b16 %v4424
    %v5703 = vunpack.c.h.b16 %v4424
    %v5704 = vunpack.c.l.b16 %v4425
    %v5705 = vunpack.c.h.b16 %v4425
    %v5706 = vunpack.c.l.b16 %v4426
    %v5707 = vunpack.c.h.b16 %v4426
    %v5708 = vunpack.c.l.b16 %v4427
    %v5709 = vunpack.c.h.b16 %v4427
    %v5710 = vunpack.c.l.b16 %v4428
    %v5711 = vunpack.c.h.b16 %v4428
    %v5712 = vunpack.c.l.b16 %v4429
    %v5713 = vunpack.c.h.b16 %v4429
    %v5714 = vunpack.c.l.b16 %v4430
    %v5715 = vunpack.c.h.b16 %v4430
    %v5716 = vunpack.c.l.b16 %v4431
    %v5717 = vunpack.c.h.b16 %v4431
    %v5718 = vunpack.c.l.b16 %v4432
    %v5719 = vunpack.c.h.b16 %v4432
    %v5720 = vunpack.c.l.b16 %v4433
    %v5721 = vunpack.c.h.b16 %v4433
    %v5722 = vunpack.c.l.b16 %v4434
    %v5723 = vunpack.c.h.b16 %v4434
    %v5724 = vunpack.c.l.b16 %v4435
    %v5725 = vunpack.c.h.b16 %v4435
    %v5726 = vunpack.c.l.b16 %v4436
    %v5727 = vunpack.c.h.b16 %v4436
    %v5728 = vunpack.c.l.b16 %v4437
    %v5729 = vunpack.c.h.b16 %v4437
    %v5730 = vunpack.c.l.b16 %v4438
    %v5731 = vunpack.c.h.b16 %v4438
    %v5732 = vunpack.c.l.b16 %v4439
    %v5733 = vunpack.c.h.b16 %v4439
    %v5734 = vunpack.c.l.b16 %v4440
    %v5735 = vunpack.c.h.b16 %v4440
    %v5736 = vunpack.c.l.b16 %v4441
    %v5737 = vunpack.c.h.b16 %v4441
    %v5738 = vunpack.c.l.b16 %v4442
    %v5739 = vunpack.c.h.b16 %v4442
    %v5740 = vunpack.c.l.b16 %v4443
    %v5741 = vunpack.c.h.b16 %v4443
    %v5742 = vunpack.c.l.b16 %v4444
    %v5743 = vunpack.c.h.b16 %v4444
    %v5744 = vunpack.c.l.b16 %v4445
    %v5745 = vunpack.c.h.b16 %v4445
    %v5746 = vunpack.c.l.b16 %v4446
    %v5747 = vunpack.c.h.b16 %v4446
    %v5748 = vunpack.c.l.b16 %v4447
    %v5749 = vunpack.c.h.b16 %v4447
    %v5750 = vunpack.c.l.b16 %v4448
    %v5751 = vunpack.c.h.b16 %v4448
    %v5752 = vunpack.c.l.b16 %v4449
    %v5753 = vunpack.c.h.b16 %v4449
    %v5754 = vunpack.c.l.b16 %v4450
    %v5755 = vunpack.c.h.b16 %v4450
    %v5756 = vunpack.c.l.b16 %v4451
    %v5757 = vunpack.c.h.b16 %v4451
    %v5758 = vunpack.c.l.b16 %v4452
    %v5759 = vunpack.c.h.b16 %v4452
    %v5760 = vunpack.c.l.b16 %v4453
    %v5761 = vunpack.c.h.b16 %v4453
    %v5762 = vunpack.c.l.b16 %v4454
    %v5763 = vunpack.c.h.b16 %v4454
    %v5764 = vunpack.c.l.b16 %v4455
    %v5765 = vunpack.c.h.b16 %v4455
    %v5766 = vunpack.c.l.b16 %v4456
    %v5767 = vunpack.c.h.b16 %v4456
    %v5768 = vunpack.c.l.b16 %v4457
    %v5769 = vunpack.c.h.b16 %v4457
    %v5770 = vunpack.c.l.b16 %v4458
    %v5771 = vunpack.c.h.b16 %v4458
    %v5772 = vunpack.c.l.b16 %v4459
    %v5773 = vunpack.c.h.b16 %v4459
    %v5774 = vunpack.c.l.b16 %v4460
    %v5775 = vunpack.c.h.b16 %v4460
    %v5776 = vunpack.c.l.b16 %v4461
    %v5777 = vunpack.c.h.b16 %v4461
    %v5778 = vunpack.c.l.b16 %v4462
    %v5779 = vunpack.c.h.b16 %v4462
    %v5780 = vunpack.c.l.b16 %v4463
    %v5781 = vunpack.c.h.b16 %v4463
    %v5782 = vunpack.c.l.b16 %v4464
    %v5783 = vunpack.c.h.b16 %v4464
    %v5784 = vunpack.c.l.b16 %v4465
    %v5785 = vunpack.c.h.b16 %v4465
    %v5786 = vunpack.c.l.b16 %v4466
    %v5787 = vunpack.c.h.b16 %v4466
    %v5788 = vunpack.c.l.b16 %v4467
    %v5789 = vunpack.c.h.b16 %v4467
    %v5790 = vunpack.c.l.b16 %v4468
    %v5791 = vunpack.c.h.b16 %v4468
    %v5792 = vunpack.c.l.b16 %v4469
    %v5793 = vunpack.c.h.b16 %v4469
    %v5794 = vunpack.c.l.b16 %v4470
    %v5795 = vunpack.c.h.b16 %v4470
    %v5796 = vunpack.c.l.b16 %v4471
    %v5797 = vunpack.c.h.b16 %v4471
    %v5798 = vunpack.c.l.b16 %v4472
    %v5799 = vunpack.c.h.b16 %v4472
    %v5800 = vunpack.c.l.b16 %v4473
    %v5801 = vunpack.c.h.b16 %v4473
    %v5802 = vunpack.c.l.b16 %v4474
    %v5803 = vunpack.c.h.b16 %v4474
    %v5804 = vunpack.c.l.b16 %v4475
    %v5805 = vunpack.c.h.b16 %v4475
    %v5806 = vunpack.c.l.b16 %v4476
    %v5807 = vunpack.c.h.b16 %v4476
    %v5808 = vunpack.c.l.b16 %v4477
    %v5809 = vunpack.c.h.b16 %v4477
    %v5810 = vunpack.c.l.b16 %v4478
    %v5811 = vunpack.c.h.b16 %v4478
    %v5812 = vunpack.c.l.b16 %v4479
    %v5813 = vunpack.c.h.b16 %v4479
    %v5814 = vunpack.c.l.b16 %v4480
    %v5815 = vunpack.c.h.b16 %v4480
    %v5816 = vunpack.c.l.b16 %v4481
    %v5817 = vunpack.c.h.b16 %v4481
    %v5818 = vunpack.c.l.b16 %v4482
    %v5819 = vunpack.c.h.b16 %v4482
    %v5820 = vunpack.c.l.b16 %v4483
    %v5821 = vunpack.c.h.b16 %v4483
    %v5822 = vunpack.c.l.b16 %v4484
    %v5823 = vunpack.c.h.b16 %v4484
    %v5824 = vunpack.c.l.b16 %v4485
    %v5825 = vunpack.c.h.b16 %v4485
    %v5826 = vunpack.c.l.b16 %v4486
    %v5827 = vunpack.c.h.b16 %v4486
    %v5828 = vunpack.c.l.b16 %v4487
    %v5829 = vunpack.c.h.b16 %v4487
    %v5830 = vunpack.c.l.b16 %v4488
    %v5831 = vunpack.c.h.b16 %v4488
    %v5832 = vunpack.c.l.b16 %v4489
    %v5833 = vunpack.c.h.b16 %v4489
    %v5834 = vunpack.c.l.b16 %v4490
    %v5835 = vunpack.c.h.b16 %v4490
    %v5836 = vunpack.c.l.b16 %v4491
    %v5837 = vunpack.c.h.b16 %v4491
    %v5838 = vunpack.c.l.b16 %v4492
    %v5839 = vunpack.c.h.b16 %v4492
    %v5840 = vunpack.c.l.b16 %v4493
    %v5841 = vunpack.c.h.b16 %v4493
    %v5842 = vunpack.c.l.b16 %v4494
    %v5843 = vunpack.c.h.b16 %v4494
    %v5844 = vunpack.c.l.b16 %v4495
    %v5845 = vunpack.c.h.b16 %v4495
    %v5846 = vunpack.c.l.b16 %v4496
    %v5847 = vunpack.c.h.b16 %v4496
    %v5848 = vunpack.c.l.b16 %v4497
    %v5849 = vunpack.c.h.b16 %v4497
    %v5850 = vunpack.c.l.b16 %v4498
    %v5851 = vunpack.c.h.b16 %v4498
    %v5852 = vunpack.c.l.b16 %v4499
    %v5853 = vunpack.c.h.b16 %v4499
    %v5854 = vunpack.c.l.b16 %v4500
    %v5855 = vunpack.c.h.b16 %v4500
    %v5856 = vunpack.c.l.b16 %v4501
    %v5857 = vunpack.c.h.b16 %v4501
    %v5858 = vunpack.c.l.b16 %v4502
    %v5859 = vunpack.c.h.b16 %v4502
    %v5860 = vunpack.c.l.b16 %v4503
    %v5861 = vunpack.c.h.b16 %v4503
    %v5862 = vunpack.c.l.b16 %v4504
    %v5863 = vunpack.c.h.b16 %v4504
    %v5864 = vunpack.c.l.b16 %v4505
    %v5865 = vunpack.c.h.b16 %v4505
    %v5866 = vunpack.c.l.b16 %v4506
    %v5867 = vunpack.c.h.b16 %v4506
    %v5868 = vunpack.c.l.b16 %v4507
    %v5869 = vunpack.c.h.b16 %v4507
    %v5870 = vunpack.c.l.b16 %v4508
    %v5871 = vunpack.c.h.b16 %v4508
    %v5872 = vunpack.c.l.b16 %v4509
    %v5873 = vunpack.c.h.b16 %v4509
    %v5874 = vunpack.c.l.b16 %v4510
    %v5875 = vunpack.c.h.b16 %v4510
    %v5876 = vunpack.c.l.b16 %v4511
    %v5877 = vunpack.c.h.b16 %v4511
    %v5878 = vunpack.c.l.b16 %v4512
    %v5879 = vunpack.c.h.b16 %v4512
    %v5880 = vunpack.c.l.b16 %v4513
    %v5881 = vunpack.c.h.b16 %v4513
    %v5882 = vunpack.c.l.b16 %v4514
    %v5883 = vunpack.c.h.b16 %v4514
    %v5884 = vunpack.c.l.b16 %v4515
    %v5885 = vunpack.c.h.b16 %v4515
    %v5886 = vunpack.c.l.b16 %v4516
    %v5887 = vunpack.c.h.b16 %v4516
    %v5888 = vunpack.c.l.b16 %v4517
    %v5889 = vunpack.c.h.b16 %v4517
    %v5890 = vunpack.c.l.b16 %v4518
    %v5891 = vunpack.c.h.b16 %v4518
    %v5892 = vunpack.c.l.b16 %v4519
    %v5893 = vunpack.c.h.b16 %v4519
    %v5894 = vunpack.c.l.b16 %v4520
    %v5895 = vunpack.c.h.b16 %v4520
    %v5896 = vunpack.c.l.b16 %v4521
    %v5897 = vunpack.c.h.b16 %v4521
    %v5898 = vunpack.c.l.b16 %v4522
    %v5899 = vunpack.c.h.b16 %v4522
    %v5900 = vunpack.c.l.b16 %v4523
    %v5901 = vunpack.c.h.b16 %v4523
    %v5902 = vunpack.c.l.b16 %v4524
    %v5903 = vunpack.c.h.b16 %v4524
    %v5904 = vunpack.c.l.b16 %v4525
    %v5905 = vunpack.c.h.b16 %v4525
    %v5906 = vunpack.c.l.b16 %v4526
    %v5907 = vunpack.c.h.b16 %v4526
    %v5908 = vunpack.c.l.b16 %v4527
    %v5909 = vunpack.c.h.b16 %v4527
    %v5910 = vunpack.c.l.b16 %v4528
    %v5911 = vunpack.c.h.b16 %v4528
    %v5912 = vunpack.c.l.b16 %v4529
    %v5913 = vunpack.c.h.b16 %v4529
    %v5914 = vunpack.c.l.b16 %v4530
    %v5915 = vunpack.c.h.b16 %v4530
    %v5916 = vunpack.c.l.b16 %v4531
    %v5917 = vunpack.c.h.b16 %v4531
    %v5918 = vunpack.c.l.b16 %v4532
    %v5919 = vunpack.c.h.b16 %v4532
    %v5920 = vunpack.c.l.b16 %v4533
    %v5921 = vunpack.c.h.b16 %v4533
    %v5922 = vunpack.c.l.b16 %v4534
    %v5923 = vunpack.c.h.b16 %v4534
    %v5924 = vunpack.c.l.b16 %v4535
    %v5925 = vunpack.c.h.b16 %v4535
    %v5926 = vunpack.c.l.b16 %v4536
    %v5927 = vunpack.c.h.b16 %v4536
    %v5928 = vunpack.c.l.b16 %v4537
    %v5929 = vunpack.c.h.b16 %v4537
    %v5930 = vunpack.c.l.b16 %v4538
    %v5931 = vunpack.c.h.b16 %v4538
    %v5932 = vunpack.c.l.b16 %v4539
    %v5933 = vunpack.c.h.b16 %v4539
    %v5934 = vunpack.c.l.b16 %v4540
    %v5935 = vunpack.c.h.b16 %v4540
    %v5936 = vunpack.c.l.b16 %v4541
    %v5937 = vunpack.c.h.b16 %v4541
    %v5938 = vunpack.c.l.b16 %v4542
    %v5939 = vunpack.c.h.b16 %v4542
    %v5940 = vunpack.c.l.b16 %v4543
    %v5941 = vunpack.c.h.b16 %v4543
    %v5942 = vunpack.c.l.b16 %v4544
    %v5943 = vunpack.c.h.b16 %v4544
    %v5944 = vunpack.c.l.b16 %v4545
    %v5945 = vunpack.c.h.b16 %v4545
    %v5946 = vunpack.c.l.b16 %v4546
    %v5947 = vunpack.c.h.b16 %v4546
    %v5948 = vunpack.c.l.b16 %v4547
    %v5949 = vunpack.c.h.b16 %v4547
    %v5950 = vunpack.c.l.b16 %v4548
    %v5951 = vunpack.c.h.b16 %v4548
    %v5952 = vunpack.c.l.b16 %v4549
    %v5953 = vunpack.c.h.b16 %v4549
    %v5954 = vunpack.c.l.b16 %v4550
    %v5955 = vunpack.c.h.b16 %v4550
    %v5956 = vunpack.c.l.b16 %v4551
    %v5957 = vunpack.c.h.b16 %v4551
    %v5958 = vunpack.c.l.b16 %v4552
    %v5959 = vunpack.c.h.b16 %v4552
    %v5960 = vunpack.c.l.b16 %v4553
    %v5961 = vunpack.c.h.b16 %v4553
    %v5962 = vunpack.c.l.b16 %v4554
    %v5963 = vunpack.c.h.b16 %v4554
    %v5964 = vunpack.c.l.b16 %v4555
    %v5965 = vunpack.c.h.b16 %v4555
    %v5966 = vunpack.c.l.b16 %v4556
    %v5967 = vunpack.c.h.b16 %v4556
    %v5968 = vunpack.c.l.b16 %v4557
    %v5969 = vunpack.c.h.b16 %v4557
    %v5970 = vunpack.c.l.b16 %v4558
    %v5971 = vunpack.c.h.b16 %v4558
    %v5972 = vunpack.c.l.b16 %v4559
    %v5973 = vunpack.c.h.b16 %v4559
    %v5974 = vunpack.c.l.b16 %v4560
    %v5975 = vunpack.c.h.b16 %v4560
    %v5976 = vunpack.c.l.b16 %v4561
    %v5977 = vunpack.c.h.b16 %v4561
    %v5978 = vunpack.c.l.b16 %v4562
    %v5979 = vunpack.c.h.b16 %v4562
    %v5980 = vunpack.c.l.b16 %v4563
    %v5981 = vunpack.c.h.b16 %v4563
    %v5982 = vunpack.c.l.b16 %v4564
    %v5983 = vunpack.c.h.b16 %v4564
    %v5984 = vunpack.c.l.b16 %v4565
    %v5985 = vunpack.c.h.b16 %v4565
    %v5986 = vunpack.c.l.b16 %v4566
    %v5987 = vunpack.c.h.b16 %v4566
    %v5988 = vunpack.c.l.b16 %v4567
    %v5989 = vunpack.c.h.b16 %v4567
    %v5990 = vunpack.c.l.b16 %v4568
    %v5991 = vunpack.c.h.b16 %v4568
    %v5992 = vunpack.c.l.b16 %v4569
    %v5993 = vunpack.c.h.b16 %v4569
    %v5994 = vunpack.c.l.b16 %v4570
    %v5995 = vunpack.c.h.b16 %v4570
    %v5996 = vunpack.c.l.b16 %v4571
    %v5997 = vunpack.c.h.b16 %v4571
    %v5998 = vunpack.c.l.b16 %v4572
    %v5999 = vunpack.c.h.b16 %v4572
    %v6000 = vunpack.c.l.b16 %v4573
    %v6001 = vunpack.c.h.b16 %v4573
    %v6002 = vunpack.c.l.b16 %v4574
    %v6003 = vunpack.c.h.b16 %v4574
    %v6004 = vunpack.c.l.b16 %v4575
    %v6005 = vunpack.c.h.b16 %v4575
    %v6006 = vunpack.c.l.b16 %v4576
    %v6007 = vunpack.c.h.b16 %v4576
    %v6008 = vunpack.c.l.b16 %v4577
    %v6009 = vunpack.c.h.b16 %v4577
    %v6010 = vunpack.c.l.b16 %v4578
    %v6011 = vunpack.c.h.b16 %v4578
    %v6012 = vunpack.c.l.b16 %v4579
    %v6013 = vunpack.c.h.b16 %v4579
    %v6014 = vunpack.c.l.b16 %v4580
    %v6015 = vunpack.c.h.b16 %v4580
    %v6016 = vunpack.c.l.b16 %v4581
    %v6017 = vunpack.c.h.b16 %v4581
    %v6018 = vunpack.c.l.b16 %v4582
    %v6019 = vunpack.c.h.b16 %v4582
    %v6020 = vunpack.c.l.b16 %v4583
    %v6021 = vunpack.c.h.b16 %v4583
    %v6022 = vunpack.c.l.b16 %v4584
    %v6023 = vunpack.c.h.b16 %v4584
    %v6024 = vunpack.c.l.b16 %v4585
    %v6025 = vunpack.c.h.b16 %v4585
    %v6026 = vunpack.c.l.b16 %v4586
    %v6027 = vunpack.c.h.b16 %v4586
    %v6028 = vunpack.c.l.b16 %v4587
    %v6029 = vunpack.c.h.b16 %v4587
    %v6030 = vunpack.c.l.b16 %v4588
    %v6031 = vunpack.c.h.b16 %v4588
    %v6032 = vunpack.c.l.b16 %v4589
    %v6033 = vunpack.c.h.b16 %v4589
    %v6034 = vunpack.c.l.b16 %v4590
    %v6035 = vunpack.c.h.b16 %v4590
    %v6036 = vunpack.c.l.b16 %v4591
    %v6037 = vunpack.c.h.b16 %v4591
    %v6038 = vunpack.c.l.b16 %v4592
    %v6039 = vunpack.c.h.b16 %v4592
    %v6040 = vunpack.c.l.b16 %v4593
    %v6041 = vunpack.c.h.b16 %v4593
    %v6042 = vunpack.c.l.b16 %v4594
    %v6043 = vunpack.c.h.b16 %v4594
    %v6044 = vunpack.c.l.b16 %v4595
    %v6045 = vunpack.c.h.b16 %v4595
    %v6046 = vunpack.c.l.b16 %v4596
    %v6047 = vunpack.c.h.b16 %v4596
    %v6048 = vunpack.c.l.b16 %v4597
    %v6049 = vunpack.c.h.b16 %v4597
    %v6050 = vunpack.c.l.b16 %v4598
    %v6051 = vunpack.c.h.b16 %v4598
    %v6052 = vunpack.c.l.b16 %v4599
    %v6053 = vunpack.c.h.b16 %v4599
    %v6054 = vunpack.c.l.b16 %v4600
    %v6055 = vunpack.c.h.b16 %v4600
    %v6056 = vunpack.c.l.b16 %v4601
    %v6057 = vunpack.c.h.b16 %v4601
    %v6058 = vunpack.c.l.b16 %v4602
    %v6059 = vunpack.c.h.b16 %v4602
    %v6060 = vunpack.c.l.b16 %v4603
    %v6061 = vunpack.c.h.b16 %v4603
    %v6062 = vunpack.c.l.b16 %v4604
    %v6063 = vunpack.c.h.b16 %v4604
    %v6064 = vunpack.c.l.b16 %v4605
    %v6065 = vunpack.c.h.b16 %v4605
    %v6066 = vunpack.c.l.b16 %v4606
    %v6067 = vunpack.c.h.b16 %v4606
    %v6068 = vunpack.c.l.b16 %v4607
    %v6069 = vunpack.c.h.b16 %v4607
    %v6070 = vunpack.c.l.b16 %v4608
    %v6071 = vunpack.c.h.b16 %v4608
    %v6072 = vunpack.c.l.b16 %v4609
    %v6073 = vunpack.c.h.b16 %v4609
    %v6074 = vunpack.c.l.b16 %v4610
    %v6075 = vunpack.c.h.b16 %v4610
    %v6076 = vunpack.c.l.b16 %v4611
    %v6077 = vunpack.c.h.b16 %v4611
    %v6078 = vunpack.c.l.b16 %v4612
    %v6079 = vunpack.c.h.b16 %v4612
    %v6080 = vunpack.c.l.b16 %v4613
    %v6081 = vunpack.c.h.b16 %v4613
    %v6082 = vunpack.c.l.b16 %v4614
    %v6083 = vunpack.c.h.b16 %v4614
    %v6084 = vunpack.c.l.b16 %v4615
    %v6085 = vunpack.c.h.b16 %v4615
    %v6086 = vunpack.c.l.b16 %v4616
    %v6087 = vunpack.c.h.b16 %v4616
    %v6088 = vunpack.c.l.b16 %v4617
    %v6089 = vunpack.c.h.b16 %v4617
    %v6090 = vunpack.c.l.b16 %v4618
    %v6091 = vunpack.c.h.b16 %v4618
    %v6092 = vunpack.c.l.b16 %v4619
    %v6093 = vunpack.c.h.b16 %v4619
    %v6094 = vunpack.c.l.b16 %v4620
    %v6095 = vunpack.c.h.b16 %v4620
    %v6096 = vunpack.c.l.b16 %v4621
    %v6097 = vunpack.c.h.b16 %v4621
    %v6098 = vunpack.c.l.b16 %v4622
    %v6099 = vunpack.c.h.b16 %v4622
    %v6100 = vunpack.c.l.b16 %v4623
    %v6101 = vunpack.c.h.b16 %v4623
    %v6102 = vunpack.c.l.b16 %v4624
    %v6103 = vunpack.c.h.b16 %v4624
    %v6104 = vunpack.c.l.b16 %v4625
    %v6105 = vunpack.c.h.b16 %v4625
    %v6106 = vunpack.c.l.b16 %v4626
    %v6107 = vunpack.c.h.b16 %v4626
    %v6108 = vunpack.c.l.b16 %v4627
    %v6109 = vunpack.c.h.b16 %v4627
    %v6110 = vunpack.c.l.b16 %v4628
    %v6111 = vunpack.c.h.b16 %v4628
    %v6112 = vunpack.c.l.b16 %v4629
    %v6113 = vunpack.c.h.b16 %v4629
    %v6114 = vunpack.c.l.b16 %v4630
    %v6115 = vunpack.c.h.b16 %v4630
    %v6116 = vunpack.c.l.b16 %v4631
    %v6117 = vunpack.c.h.b16 %v4631
    %v6118 = vunpack.c.l.b16 %v4632
    %v6119 = vunpack.c.h.b16 %v4632
    %v6120 = vunpack.c.l.b16 %v4633
    %v6121 = vunpack.c.h.b16 %v4633
    %v6122 = vunpack.c.l.b16 %v4634
    %v6123 = vunpack.c.h.b16 %v4634
    %v6124 = vunpack.c.l.b16 %v4635
    %v6125 = vunpack.c.h.b16 %v4635
    %v6126 = vunpack.c.l.b16 %v4636
    %v6127 = vunpack.c.h.b16 %v4636
    %v6128 = vunpack.c.l.b16 %v4637
    %v6129 = vunpack.c.h.b16 %v4637
    %v6130 = vunpack.c.l.b16 %v4638
    %v6131 = vunpack.c.h.b16 %v4638
    %v6132 = vunpack.c.l.b16 %v4639
    %v6133 = vunpack.c.h.b16 %v4639
    %v6134 = vunpack.c.l.b16 %v4640
    %v6135 = vunpack.c.h.b16 %v4640
    %v6136 = vunpack.c.l.b16 %v4641
    %v6137 = vunpack.c.h.b16 %v4641
    %v6138 = vunpack.c.l.b16 %v4642
    %v6139 = vunpack.c.h.b16 %v4642
    %v6140 = vunpack.c.l.b16 %v4643
    %v6141 = vunpack.c.h.b16 %v4643
    %v6142 = vunpack.c.l.b16 %v4644
    %v6143 = vunpack.c.h.b16 %v4644
    %v6144 = vunpack.c.l.b16 %v4645
    %v6145 = vunpack.c.h.b16 %v4645
    %v6146 = vunpack.c.l.b16 %v4646
    %v6147 = vunpack.c.h.b16 %v4646
    %v6148 = vunpack.c.l.b16 %v4647
    %v6149 = vunpack.c.h.b16 %v4647
    %v6150 = vunpack.c.l.b16 %v4648
    %v6151 = vunpack.c.h.b16 %v4648
    %v6152 = vunpack.c.l.b16 %v4649
    %v6153 = vunpack.c.h.b16 %v4649
    %v6154 = vunpack.c.l.b16 %v4650
    %v6155 = vunpack.c.h.b16 %v4650
    %v6156 = vunpack.c.l.b16 %v4651
    %v6157 = vunpack.c.h.b16 %v4651
    %v6158 = vunpack.c.l.b16 %v4652
    %v6159 = vunpack.c.h.b16 %v4652
    %v6160 = vunpack.c.l.b16 %v4653
    %v6161 = vunpack.c.h.b16 %v4653
    %v6162 = vunpack.c.l.b16 %v4654
    %v6163 = vunpack.c.h.b16 %v4654
    %v6164 = vunpack.c.l.b16 %v4655
    %v6165 = vunpack.c.h.b16 %v4655
    %v6166 = vunpack.c.l.b16 %v4656
    %v6167 = vunpack.c.h.b16 %v4656
    %v6168 = vunpack.c.l.b16 %v4657
    %v6169 = vunpack.c.h.b16 %v4657
    %v6170 = vunpack.c.l.b16 %v4658
    %v6171 = vunpack.c.h.b16 %v4658
    %v6172 = vunpack.c.l.b16 %v4659
    %v6173 = vunpack.c.h.b16 %v4659
    %v6174 = vunpack.c.l.b16 %v4660
    %v6175 = vunpack.c.h.b16 %v4660
    %v6176 = vunpack.c.l.b16 %v4661
    %v6177 = vunpack.c.h.b16 %v4661
    %v6178 = vunpack.c.l.b16 %v4662
    %v6179 = vunpack.c.h.b16 %v4662
    %v6180 = vunpack.c.l.b16 %v4663
    %v6181 = vunpack.c.h.b16 %v4663
    %v6182 = vunpack.c.l.b16 %v4664
    %v6183 = vunpack.c.h.b16 %v4664
    %v6184 = vunpack.c.l.b16 %v4665
    %v6185 = vunpack.c.h.b16 %v4665
    %v6186 = vunpack.c.l.b16 %v4666
    %v6187 = vunpack.c.h.b16 %v4666
    %v6188 = vunpack.c.l.b16 %v4667
    %v6189 = vunpack.c.h.b16 %v4667
    %v6190 = vunpack.c.l.b16 %v4668
    %v6191 = vunpack.c.h.b16 %v4668
    %v6192 = vunpack.c.l.b16 %v4669
    %v6193 = vunpack.c.h.b16 %v4669
    %v6194 = vunpack.c.l.b16 %v4670
    %v6195 = vunpack.c.h.b16 %v4670
    %v6196 = vunpack.c.l.b16 %v4671
    %v6197 = vunpack.c.h.b16 %v4671
    %v6198 = vunpack.c.l.b16 %v4672
    %v6199 = vunpack.c.h.b16 %v4672
    %v6200 = vunpack.c.l.b16 %v4673
    %v6201 = vunpack.c.h.b16 %v4673
    %v6202 = vunpack.c.l.b16 %v4674
    %v6203 = vunpack.c.h.b16 %v4674
    %v6204 = vunpack.c.l.b16 %v4675
    %v6205 = vunpack.c.h.b16 %v4675
    %v6206 = vunpack.c.l.b16 %v4676
    %v6207 = vunpack.c.h.b16 %v4676
    %v6208 = vunpack.c.l.b16 %v4677
    %v6209 = vunpack.c.h.b16 %v4677
    %v6210 = vunpack.c.l.b16 %v4678
    %v6211 = vunpack.c.h.b16 %v4678
    %v6212 = vunpack.c.l.b16 %v4679
    %v6213 = vunpack.c.h.b16 %v4679
    %v6214 = vunpack.c.l.b16 %v4680
    %v6215 = vunpack.c.h.b16 %v4680
    %v6216 = vunpack.c.l.b16 %v4681
    %v6217 = vunpack.c.h.b16 %v4681
    %v6218 = vunpack.c.l.b16 %v4682
    %v6219 = vunpack.c.h.b16 %v4682
    %v6220 = vunpack.c.l.b16 %v4683
    %v6221 = vunpack.c.h.b16 %v4683
    %v6222 = vunpack.c.l.b16 %v4684
    %v6223 = vunpack.c.h.b16 %v4684
    %v6224 = vunpack.c.l.b16 %v4685
    %v6225 = vunpack.c.h.b16 %v4685
    %v6226 = vunpack.c.l.b16 %v4686
    %v6227 = vunpack.c.h.b16 %v4686
    %v6228 = vunpack.c.l.b16 %v4687
    %v6229 = vunpack.c.h.b16 %v4687
    %v6230 = vunpack.c.l.b16 %v4688
    %v6231 = vunpack.c.h.b16 %v4688
    %v6232 = vunpack.c.l.b16 %v4689
    %v6233 = vunpack.c.h.b16 %v4689
    %v6234 = vunpack.c.l.b16 %v4690
    %v6235 = vunpack.c.h.b16 %v4690
    %v6236 = vunpack.c.l.b16 %v4691
    %v6237 = vunpack.c.h.b16 %v4691
    %v6238 = vunpack.c.l.b16 %v4692
    %v6239 = vunpack.c.h.b16 %v4692
    %v6240 = vunpack.c.l.b16 %v4693
    %v6241 = vunpack.c.h.b16 %v4693
    %v6242 = vunpack.c.l.b16 %v4694
    %v6243 = vunpack.c.h.b16 %v4694
    %v6244 = vunpack.c.l.b16 %v4695
    %v6245 = vunpack.c.h.b16 %v4695
    %v6246 = vunpack.c.l.b16 %v4696
    %v6247 = vunpack.c.h.b16 %v4696
    %v6248 = vunpack.c.l.b16 %v4697
    %v6249 = vunpack.c.h.b16 %v4697
    %v6250 = vunpack.c.l.b16 %v4698
    %v6251 = vunpack.c.h.b16 %v4698
    %v6252 = vunpack.c.l.b16 %v4699
    %v6253 = vunpack.c.h.b16 %v4699
    %v6254 = vpack.c.b16 %v5238, %v5230
    %v6255 = vpack.c.b16 %v5239, %v5231
    %v6256 = vpack.c.b16 %v5240, %v5232
    %v6257 = vpack.c.b16 %v5241, %v5233
    %v6258 = vpack.c.b16 %v5242, %v5234
    %v6259 = vpack.c.b16 %v5243, %v5235
    %v6260 = vpack.c.b16 %v5244, %v5236
    %v6261 = vpack.c.b16 %v5245, %v5237
    %v6262 = vpack.c.b16 %v5254, %v5246
    %v6263 = vpack.c.b16 %v5255, %v5247
    %v6264 = vpack.c.b16 %v5256, %v5248
    %v6265 = vpack.c.b16 %v5257, %v5249
    %v6266 = vpack.c.b16 %v5258, %v5250
    %v6267 = vpack.c.b16 %v5259, %v5251
    %v6268 = vpack.c.b16 %v5260, %v5252
    %v6269 = vpack.c.b16 %v5261, %v5253
    %v6270 = vpack.c.b16 %v5270, %v5262
    %v6271 = vpack.c.b16 %v5271, %v5263
    %v6272 = vpack.c.b16 %v5272, %v5264
    %v6273 = vpack.c.b16 %v5273, %v5265
    %v6274 = vpack.c.b16 %v5274, %v5266
    %v6275 = vpack.c.b16 %v5275, %v5267
    %v6276 = vpack.c.b16 %v5276, %v5268
    %v6277 = vpack.c.b16 %v5277, %v5269
    %v6278 = vpack.c.b16 %v5286, %v5278
    %v6279 = vpack.c.b16 %v5287, %v5279
    %v6280 = vpack.c.b16 %v5288, %v5280
    %v6281 = vpack.c.b16 %v5289, %v5281
    %v6282 = vpack.c.b16 %v5290, %v5282
    %v6283 = vpack.c.b16 %v5291, %v5283
    %v6284 = vpack.c.b16 %v5292, %v5284
    %v6285 = vpack.c.b16 %v5293, %v5285
    %v6286 = vpack.c.b16 %v5302, %v5294
    %v6287 = vpack.c.b16 %v5303, %v5295
    %v6288 = vpack.c.b16 %v5304, %v5296
    %v6289 = vpack.c.b16 %v5305, %v5297
    %v6290 = vpack.c.b16 %v5306, %v5298
    %v6291 = vpack.c.b16 %v5307, %v5299
    %v6292 = vpack.c.b16 %v5308, %v5300
    %v6293 = vpack.c.b16 %v5309, %v5301
    %v6294 = vpack.c.b16 %v5318, %v5310
    %v6295 = vpack.c.b16 %v5319, %v5311
    %v6296 = vpack.c.b16 %v5320, %v5312
    %v6297 = vpack.c.b16 %v5321, %v5313
    %v6298 = vpack.c.b16 %v5322, %v5314
    %v6299 = vpack.c.b16 %v5323, %v5315
    %v6300 = vpack.c.b16 %v5324, %v5316
    %v6301 = vpack.c.b16 %v5325, %v5317
    %v6302 = vpack.c.b16 %v5334, %v5326
    %v6303 = vpack.c.b16 %v5335, %v5327
    %v6304 = vpack.c.b16 %v5336, %v5328
    %v6305 = vpack.c.b16 %v5337, %v5329
    %v6306 = vpack.c.b16 %v5338, %v5330
    %v6307 = vpack.c.b16 %v5339, %v5331
    %v6308 = vpack.c.b16 %v5340, %v5332
    %v6309 = vpack.c.b16 %v5341, %v5333
    %v6310 = vpack.c.b16 %v5350, %v5342
    %v6311 = vpack.c.b16 %v5351, %v5343
    %v6312 = vpack.c.b16 %v5352, %v5344
    %v6313 = vpack.c.b16 %v5353, %v5345
    %v6314 = vpack.c.b16 %v5354, %v5346
    %v6315 = vpack.c.b16 %v5355, %v5347
    %v6316 = vpack.c.b16 %v5356, %v5348
    %v6317 = vpack.c.b16 %v5357, %v5349
    %v6318 = vpack.c.b16 %v5366, %v5358
    %v6319 = vpack.c.b16 %v5367, %v5359
    %v6320 = vpack.c.b16 %v5368, %v5360
    %v6321 = vpack.c.b16 %v5369, %v5361
    %v6322 = vpack.c.b16 %v5370, %v5362
    %v6323 = vpack.c.b16 %v5371, %v5363
    %v6324 = vpack.c.b16 %v5372, %v5364
    %v6325 = vpack.c.b16 %v5373, %v5365
    %v6326 = vpack.c.b16 %v5382, %v5374
    %v6327 = vpack.c.b16 %v5383, %v5375
    %v6328 = vpack.c.b16 %v5384, %v5376
    %v6329 = vpack.c.b16 %v5385, %v5377
    %v6330 = vpack.c.b16 %v5386, %v5378
    %v6331 = vpack.c.b16 %v5387, %v5379
    %v6332 = vpack.c.b16 %v5388, %v5380
    %v6333 = vpack.c.b16 %v5389, %v5381
    %v6334 = vpack.c.b16 %v5398, %v5390
    %v6335 = vpack.c.b16 %v5399, %v5391
    %v6336 = vpack.c.b16 %v5400, %v5392
    %v6337 = vpack.c.b16 %v5401, %v5393
    %v6338 = vpack.c.b16 %v5402, %v5394
    %v6339 = vpack.c.b16 %v5403, %v5395
    %v6340 = vpack.c.b16 %v5404, %v5396
    %v6341 = vpack.c.b16 %v5405, %v5397
    %v6342 = vpack.c.b16 %v5414, %v5406
    %v6343 = vpack.c.b16 %v5415, %v5407
    %v6344 = vpack.c.b16 %v5416, %v5408
    %v6345 = vpack.c.b16 %v5417, %v5409
    %v6346 = vpack.c.b16 %v5418, %v5410
    %v6347 = vpack.c.b16 %v5419, %v5411
    %v6348 = vpack.c.b16 %v5420, %v5412
    %v6349 = vpack.c.b16 %v5421, %v5413
    %v6350 = vpack.c.b16 %v5430, %v5422
    %v6351 = vpack.c.b16 %v5431, %v5423
    %v6352 = vpack.c.b16 %v5432, %v5424
    %v6353 = vpack.c.b16 %v5433, %v5425
    %v6354 = vpack.c.b16 %v5434, %v5426
    %v6355 = vpack.c.b16 %v5435, %v5427
    %v6356 = vpack.c.b16 %v5436, %v5428
    %v6357 = vpack.c.b16 %v5437, %v5429
    %v6358 = vpack.c.b16 %v5446, %v5438
    %v6359 = vpack.c.b16 %v5447, %v5439
    %v6360 = vpack.c.b16 %v5448, %v5440
    %v6361 = vpack.c.b16 %v5449, %v5441
    %v6362 = vpack.c.b16 %v5450, %v5442
    %v6363 = vpack.c.b16 %v5451, %v5443
    %v6364 = vpack.c.b16 %v5452, %v5444
    %v6365 = vpack.c.b16 %v5453, %v5445
    %v6366 = vpack.c.b16 %v5462, %v5454
    %v6367 = vpack.c.b16 %v5463, %v5455
    %v6368 = vpack.c.b16 %v5464, %v5456
    %v6369 = vpack.c.b16 %v5465, %v5457
    %v6370 = vpack.c.b16 %v5466, %v5458
    %v6371 = vpack.c.b16 %v5467, %v5459
    %v6372 = vpack.c.b16 %v5468, %v5460
    %v6373 = vpack.c.b16 %v5469, %v5461
    %v6374 = vpack.c.b16 %v5478, %v5470
    %v6375 = vpack.c.b16 %v5479, %v5471
    %v6376 = vpack.c.b16 %v5480, %v5472
    %v6377 = vpack.c.b16 %v5481, %v5473
    %v6378 = vpack.c.b16 %v5482, %v5474
    %v6379 = vpack.c.b16 %v5483, %v5475
    %v6380 = vpack.c.b16 %v5484, %v5476
    %v6381 = vpack.c.b16 %v5485, %v5477
    %v6382 = vpack.c.b16 %v5494, %v5486
    %v6383 = vpack.c.b16 %v5495, %v5487
    %v6384 = vpack.c.b16 %v5496, %v5488
    %v6385 = vpack.c.b16 %v5497, %v5489
    %v6386 = vpack.c.b16 %v5498, %v5490
    %v6387 = vpack.c.b16 %v5499, %v5491
    %v6388 = vpack.c.b16 %v5500, %v5492
    %v6389 = vpack.c.b16 %v5501, %v5493
    %v6390 = vpack.c.b16 %v5510, %v5502
    %v6391 = vpack.c.b16 %v5511, %v5503
    %v6392 = vpack.c.b16 %v5512, %v5504
    %v6393 = vpack.c.b16 %v5513, %v5505
    %v6394 = vpack.c.b16 %v5514, %v5506
    %v6395 = vpack.c.b16 %v5515, %v5507
    %v6396 = vpack.c.b16 %v5516, %v5508
    %v6397 = vpack.c.b16 %v5517, %v5509
    %v6398 = vpack.c.b16 %v5526, %v5518
    %v6399 = vpack.c.b16 %v5527, %v5519
    %v6400 = vpack.c.b16 %v5528, %v5520
    %v6401 = vpack.c.b16 %v5529, %v5521
    %v6402 = vpack.c.b16 %v5530, %v5522
    %v6403 = vpack.c.b16 %v5531, %v5523
    %v6404 = vpack.c.b16 %v5532, %v5524
    %v6405 = vpack.c.b16 %v5533, %v5525
    %v6406 = vpack.c.b16 %v5542, %v5534
    %v6407 = vpack.c.b16 %v5543, %v5535
    %v6408 = vpack.c.b16 %v5544, %v5536
    %v6409 = vpack.c.b16 %v5545, %v5537
    %v6410 = vpack.c.b16 %v5546, %v5538
    %v6411 = vpack.c.b16 %v5547, %v5539
    %v6412 = vpack.c.b16 %v5548, %v5540
    %v6413 = vpack.c.b16 %v5549, %v5541
    %v6414 = vpack.c.b16 %v5558, %v5550
    %v6415 = vpack.c.b16 %v5559, %v5551
    %v6416 = vpack.c.b16 %v5560, %v5552
    %v6417 = vpack.c.b16 %v5561, %v5553
    %v6418 = vpack.c.b16 %v5562, %v5554
    %v6419 = vpack.c.b16 %v5563, %v5555
    %v6420 = vpack.c.b16 %v5564, %v5556
    %v6421 = vpack.c.b16 %v5565, %v5557
    %v6422 = vpack.c.b16 %v5574, %v5566
    %v6423 = vpack.c.b16 %v5575, %v5567
    %v6424 = vpack.c.b16 %v5576, %v5568
    %v6425 = vpack.c.b16 %v5577, %v5569
    %v6426 = vpack.c.b16 %v5578, %v5570
    %v6427 = vpack.c.b16 %v5579, %v5571
    %v6428 = vpack.c.b16 %v5580, %v5572
    %v6429 = vpack.c.b16 %v5581, %v5573
    %v6430 = vpack.c.b16 %v5590, %v5582
    %v6431 = vpack.c.b16 %v5591, %v5583
    %v6432 = vpack.c.b16 %v5592, %v5584
    %v6433 = vpack.c.b16 %v5593, %v5585
    %v6434 = vpack.c.b16 %v5594, %v5586
    %v6435 = vpack.c.b16 %v5595, %v5587
    %v6436 = vpack.c.b16 %v5596, %v5588
    %v6437 = vpack.c.b16 %v5597, %v5589
    %v6438 = vpack.c.b16 %v5606, %v5598
    %v6439 = vpack.c.b16 %v5607, %v5599
    %v6440 = vpack.c.b16 %v5608, %v5600
    %v6441 = vpack.c.b16 %v5609, %v5601
    %v6442 = vpack.c.b16 %v5610, %v5602
    %v6443 = vpack.c.b16 %v5611, %v5603
    %v6444 = vpack.c.b16 %v5612, %v5604
    %v6445 = vpack.c.b16 %v5613, %v5605
    %v6446 = vpack.c.b16 %v5622, %v5614
    %v6447 = vpack.c.b16 %v5623, %v5615
    %v6448 = vpack.c.b16 %v5624, %v5616
    %v6449 = vpack.c.b16 %v5625, %v5617
    %v6450 = vpack.c.b16 %v5626, %v5618
    %v6451 = vpack.c.b16 %v5627, %v5619
    %v6452 = vpack.c.b16 %v5628, %v5620
    %v6453 = vpack.c.b16 %v5629, %v5621
    %v6454 = vpack.c.b16 %v5638, %v5630
    %v6455 = vpack.c.b16 %v5639, %v5631
    %v6456 = vpack.c.b16 %v5640, %v5632
    %v6457 = vpack.c.b16 %v5641, %v5633
    %v6458 = vpack.c.b16 %v5642, %v5634
    %v6459 = vpack.c.b16 %v5643, %v5635
    %v6460 = vpack.c.b16 %v5644, %v5636
    %v6461 = vpack.c.b16 %v5645, %v5637
    %v6462 = vpack.c.b16 %v5654, %v5646
    %v6463 = vpack.c.b16 %v5655, %v5647
    %v6464 = vpack.c.b16 %v5656, %v5648
    %v6465 = vpack.c.b16 %v5657, %v5649
    %v6466 = vpack.c.b16 %v5658, %v5650
    %v6467 = vpack.c.b16 %v5659, %v5651
    %v6468 = vpack.c.b16 %v5660, %v5652
    %v6469 = vpack.c.b16 %v5661, %v5653
    %v6470 = vpack.c.b16 %v5670, %v5662
    %v6471 = vpack.c.b16 %v5671, %v5663
    %v6472 = vpack.c.b16 %v5672, %v5664
    %v6473 = vpack.c.b16 %v5673, %v5665
    %v6474 = vpack.c.b16 %v5674, %v5666
    %v6475 = vpack.c.b16 %v5675, %v5667
    %v6476 = vpack.c.b16 %v5676, %v5668
    %v6477 = vpack.c.b16 %v5677, %v5669
    %v6478 = vpack.c.b16 %v5686, %v5678
    %v6479 = vpack.c.b16 %v5687, %v5679
    %v6480 = vpack.c.b16 %v5688, %v5680
    %v6481 = vpack.c.b16 %v5689, %v5681
    %v6482 = vpack.c.b16 %v5690, %v5682
    %v6483 = vpack.c.b16 %v5691, %v5683
    %v6484 = vpack.c.b16 %v5692, %v5684
    %v6485 = vpack.c.b16 %v5693, %v5685
    %v6486 = vpack.c.b16 %v5702, %v5694
    %v6487 = vpack.c.b16 %v5703, %v5695
    %v6488 = vpack.c.b16 %v5704, %v5696
    %v6489 = vpack.c.b16 %v5705, %v5697
    %v6490 = vpack.c.b16 %v5706, %v5698
    %v6491 = vpack.c.b16 %v5707, %v5699
    %v6492 = vpack.c.b16 %v5708, %v5700
    %v6493 = vpack.c.b16 %v5709, %v5701
    %v6494 = vpack.c.b16 %v5718, %v5710
    %v6495 = vpack.c.b16 %v5719, %v5711
    %v6496 = vpack.c.b16 %v5720, %v5712
    %v6497 = vpack.c.b16 %v5721, %v5713
    %v6498 = vpack.c.b16 %v5722, %v5714
    %v6499 = vpack.c.b16 %v5723, %v5715
    %v6500 = vpack.c.b16 %v5724, %v5716
    %v6501 = vpack.c.b16 %v5725, %v5717
    %v6502 = vpack.c.b16 %v5734, %v5726
    %v6503 = vpack.c.b16 %v5735, %v5727
    %v6504 = vpack.c.b16 %v5736, %v5728
    %v6505 = vpack.c.b16 %v5737, %v5729
    %v6506 = vpack.c.b16 %v5738, %v5730
    %v6507 = vpack.c.b16 %v5739, %v5731
    %v6508 = vpack.c.b16 %v5740, %v5732
    %v6509 = vpack.c.b16 %v5741, %v5733
    %v6510 = vpack.c.b16 %v5750, %v5742
    %v6511 = vpack.c.b16 %v5751, %v5743
    %v6512 = vpack.c.b16 %v5752, %v5744
    %v6513 = vpack.c.b16 %v5753, %v5745
    %v6514 = vpack.c.b16 %v5754, %v5746
    %v6515 = vpack.c.b16 %v5755, %v5747
    %v6516 = vpack.c.b16 %v5756, %v5748
    %v6517 = vpack.c.b16 %v5757, %v5749
    %v6518 = vpack.c.b16 %v5766, %v5758
    %v6519 = vpack.c.b16 %v5767, %v5759
    %v6520 = vpack.c.b16 %v5768, %v5760
    %v6521 = vpack.c.b16 %v5769, %v5761
    %v6522 = vpack.c.b16 %v5770, %v5762
    %v6523 = vpack.c.b16 %v5771, %v5763
    %v6524 = vpack.c.b16 %v5772, %v5764
    %v6525 = vpack.c.b16 %v5773, %v5765
    %v6526 = vpack.c.b16 %v5782, %v5774
    %v6527 = vpack.c.b16 %v5783, %v5775
    %v6528 = vpack.c.b16 %v5784, %v5776
    %v6529 = vpack.c.b16 %v5785, %v5777
    %v6530 = vpack.c.b16 %v5786, %v5778
    %v6531 = vpack.c.b16 %v5787, %v5779
    %v6532 = vpack.c.b16 %v5788, %v5780
    %v6533 = vpack.c.b16 %v5789, %v5781
    %v6534 = vpack.c.b16 %v5798, %v5790
    %v6535 = vpack.c.b16 %v5799, %v5791
    %v6536 = vpack.c.b16 %v5800, %v5792
    %v6537 = vpack.c.b16 %v5801, %v5793
    %v6538 = vpack.c.b16 %v5802, %v5794
    %v6539 = vpack.c.b16 %v5803, %v5795
    %v6540 = vpack.c.b16 %v5804, %v5796
    %v6541 = vpack.c.b16 %v5805, %v5797
    %v6542 = vpack.c.b16 %v5814, %v5806
    %v6543 = vpack.c.b16 %v5815, %v5807
    %v6544 = vpack.c.b16 %v5816, %v5808
    %v6545 = vpack.c.b16 %v5817, %v5809
    %v6546 = vpack.c.b16 %v5818, %v5810
    %v6547 = vpack.c.b16 %v5819, %v5811
    %v6548 = vpack.c.b16 %v5820, %v5812
    %v6549 = vpack.c.b16 %v5821, %v5813
    %v6550 = vpack.c.b16 %v5830, %v5822
    %v6551 = vpack.c.b16 %v5831, %v5823
    %v6552 = vpack.c.b16 %v5832, %v5824
    %v6553 = vpack.c.b16 %v5833, %v5825
    %v6554 = vpack.c.b16 %v5834, %v5826
    %v6555 = vpack.c.b16 %v5835, %v5827
    %v6556 = vpack.c.b16 %v5836, %v5828
    %v6557 = vpack.c.b16 %v5837, %v5829
    %v6558 = vpack.c.b16 %v5846, %v5838
    %v6559 = vpack.c.b16 %v5847, %v5839
    %v6560 = vpack.c.b16 %v5848, %v5840
    %v6561 = vpack.c.b16 %v5849, %v5841
    %v6562 = vpack.c.b16 %v5850, %v5842
    %v6563 = vpack.c.b16 %v5851, %v5843
    %v6564 = vpack.c.b16 %v5852, %v5844
    %v6565 = vpack.c.b16 %v5853, %v5845
    %v6566 = vpack.c.b16 %v5862, %v5854
    %v6567 = vpack.c.b16 %v5863, %v5855
    %v6568 = vpack.c.b16 %v5864, %v5856
    %v6569 = vpack.c.b16 %v5865, %v5857
    %v6570 = vpack.c.b16 %v5866, %v5858
    %v6571 = vpack.c.b16 %v5867, %v5859
    %v6572 = vpack.c.b16 %v5868, %v5860
    %v6573 = vpack.c.b16 %v5869, %v5861
    %v6574 = vpack.c.b16 %v5878, %v5870
    %v6575 = vpack.c.b16 %v5879, %v5871
    %v6576 = vpack.c.b16 %v5880, %v5872
    %v6577 = vpack.c.b16 %v5881, %v5873
    %v6578 = vpack.c.b16 %v5882, %v5874
    %v6579 = vpack.c.b16 %v5883, %v5875
    %v6580 = vpack.c.b16 %v5884, %v5876
    %v6581 = vpack.c.b16 %v5885, %v5877
    %v6582 = vpack.c.b16 %v5894, %v5886
    %v6583 = vpack.c.b16 %v5895, %v5887
    %v6584 = vpack.c.b16 %v5896, %v5888
    %v6585 = vpack.c.b16 %v5897, %v5889
    %v6586 = vpack.c.b16 %v5898, %v5890
    %v6587 = vpack.c.b16 %v5899, %v5891
    %v6588 = vpack.c.b16 %v5900, %v5892
    %v6589 = vpack.c.b16 %v5901, %v5893
    %v6590 = vpack.c.b16 %v5910, %v5902
    %v6591 = vpack.c.b16 %v5911, %v5903
    %v6592 = vpack.c.b16 %v5912, %v5904
    %v6593 = vpack.c.b16 %v5913, %v5905
    %v6594 = vpack.c.b16 %v5914, %v5906
    %v6595 = vpack.c.b16 %v5915, %v5907
    %v6596 = vpack.c.b16 %v5916, %v5908
    %v6597 = vpack.c.b16 %v5917, %v5909
    %v6598 = vpack.c.b16 %v5926, %v5918
    %v6599 = vpack.c.b16 %v5927, %v5919
    %v6600 = vpack.c.b16 %v5928, %v5920
    %v6601 = vpack.c.b16 %v5929, %v5921
    %v6602 = vpack.c.b16 %v5930, %v5922
    %v6603 = vpack.c.b16 %v5931, %v5923
    %v6604 = vpack.c.b16 %v5932, %v5924
    %v6605 = vpack.c.b16 %v5933, %v5925
    %v6606 = vpack.c.b16 %v5942, %v5934
    %v6607 = vpack.c.b16 %v5943, %v5935
    %v6608 = vpack.c.b16 %v5944, %v5936
    %v6609 = vpack.c.b16 %v5945, %v5937
    %v6610 = vpack.c.b16 %v5946, %v5938
    %v6611 = vpack.c.b16 %v5947, %v5939
    %v6612 = vpack.c.b16 %v5948, %v5940
    %v6613 = vpack.c.b16 %v5949, %v5941
    %v6614 = vpack.c.b16 %v5958, %v5950
    %v6615 = vpack.c.b16 %v5959, %v5951
    %v6616 = vpack.c.b16 %v5960, %v5952
    %v6617 = vpack.c.b16 %v5961, %v5953
    %v6618 = vpack.c.b16 %v5962, %v5954
    %v6619 = vpack.c.b16 %v5963, %v5955
    %v6620 = vpack.c.b16 %v5964, %v5956
    %v6621 = vpack.c.b16 %v5965, %v5957
    %v6622 = vpack.c.b16 %v5974, %v5966
    %v6623 = vpack.c.b16 %v5975, %v5967
    %v6624 = vpack.c.b16 %v5976, %v5968
    %v6625 = vpack.c.b16 %v5977, %v5969
    %v6626 = vpack.c.b16 %v5978, %v5970
    %v6627 = vpack.c.b16 %v5979, %v5971
    %v6628 = vpack.c.b16 %v5980, %v5972
    %v6629 = vpack.c.b16 %v5981, %v5973
    %v6630 = vpack.c.b16 %v5990, %v5982
    %v6631 = vpack.c.b16 %v5991, %v5983
    %v6632 = vpack.c.b16 %v5992, %v5984
    %v6633 = vpack.c.b16 %v5993, %v5985
    %v6634 = vpack.c.b16 %v5994, %v5986
    %v6635 = vpack.c.b16 %v5995, %v5987
    %v6636 = vpack.c.b16 %v5996, %v5988
    %v6637 = vpack.c.b16 %v5997, %v5989
    %v6638 = vpack.c.b16 %v6006, %v5998
    %v6639 = vpack.c.b16 %v6007, %v5999
    %v6640 = vpack.c.b16 %v6008, %v6000
    %v6641 = vpack.c.b16 %v6009, %v6001
    %v6642 = vpack.c.b16 %v6010, %v6002
    %v6643 = vpack.c.b16 %v6011, %v6003
    %v6644 = vpack.c.b16 %v6012, %v6004
    %v6645 = vpack.c.b16 %v6013, %v6005
    %v6646 = vpack.c.b16 %v6022, %v6014
    %v6647 = vpack.c.b16 %v6023, %v6015
    %v6648 = vpack.c.b16 %v6024, %v6016
    %v6649 = vpack.c.b16 %v6025, %v6017
    %v6650 = vpack.c.b16 %v6026, %v6018
    %v6651 = vpack.c.b16 %v6027, %v6019
    %v6652 = vpack.c.b16 %v6028, %v6020
    %v6653 = vpack.c.b16 %v6029, %v6021
    %v6654 = vpack.c.b16 %v6038, %v6030
    %v6655 = vpack.c.b16 %v6039, %v6031
    %v6656 = vpack.c.b16 %v6040, %v6032
    %v6657 = vpack.c.b16 %v6041, %v6033
    %v6658 = vpack.c.b16 %v6042, %v6034
    %v6659 = vpack.c.b16 %v6043, %v6035
    %v6660 = vpack.c.b16 %v6044, %v6036
    %v6661 = vpack.c.b16 %v6045, %v6037
    %v6662 = vpack.c.b16 %v6054, %v6046
    %v6663 = vpack.c.b16 %v6055, %v6047
    %v6664 = vpack.c.b16 %v6056, %v6048
    %v6665 = vpack.c.b16 %v6057, %v6049
    %v6666 = vpack.c.b16 %v6058, %v6050
    %v6667 = vpack.c.b16 %v6059, %v6051
    %v6668 = vpack.c.b16 %v6060, %v6052
    %v6669 = vpack.c.b16 %v6061, %v6053
    %v6670 = vpack.c.b16 %v6070, %v6062
    %v6671 = vpack.c.b16 %v6071, %v6063
    %v6672 = vpack.c.b16 %v6072, %v6064
    %v6673 = vpack.c.b16 %v6073, %v6065
    %v6674 = vpack.c.b16 %v6074, %v6066
    %v6675 = vpack.c.b16 %v6075, %v6067
    %v6676 = vpack.c.b16 %v6076, %v6068
    %v6677 = vpack.c.b16 %v6077, %v6069
    %v6678 = vpack.c.b16 %v6086, %v6078
    %v6679 = vpack.c.b16 %v6087, %v6079
    %v6680 = vpack.c.b16 %v6088, %v6080
    %v6681 = vpack.c.b16 %v6089, %v6081
    %v6682 = vpack.c.b16 %v6090, %v6082
    %v6683 = vpack.c.b16 %v6091, %v6083
    %v6684 = vpack.c.b16 %v6092, %v6084
    %v6685 = vpack.c.b16 %v6093, %v6085
    %v6686 = vpack.c.b16 %v6102, %v6094
    %v6687 = vpack.c.b16 %v6103, %v6095
    %v6688 = vpack.c.b16 %v6104, %v6096
    %v6689 = vpack.c.b16 %v6105, %v6097
    %v6690 = vpack.c.b16 %v6106, %v6098
    %v6691 = vpack.c.b16 %v6107, %v6099
    %v6692 = vpack.c.b16 %v6108, %v6100
    %v6693 = vpack.c.b16 %v6109, %v6101
    %v6694 = vpack.c.b16 %v6118, %v6110
    %v6695 = vpack.c.b16 %v6119, %v6111
    %v6696 = vpack.c.b16 %v6120, %v6112
    %v6697 = vpack.c.b16 %v6121, %v6113
    %v6698 = vpack.c.b16 %v6122, %v6114
    %v6699 = vpack.c.b16 %v6123, %v6115
    %v6700 = vpack.c.b16 %v6124, %v6116
    %v6701 = vpack.c.b16 %v6125, %v6117
    %v6702 = vpack.c.b16 %v6134, %v6126
    %v6703 = vpack.c.b16 %v6135, %v6127
    %v6704 = vpack.c.b16 %v6136, %v6128
    %v6705 = vpack.c.b16 %v6137, %v6129
    %v6706 = vpack.c.b16 %v6138, %v6130
    %v6707 = vpack.c.b16 %v6139, %v6131
    %v6708 = vpack.c.b16 %v6140, %v6132
    %v6709 = vpack.c.b16 %v6141, %v6133
    %v6710 = vpack.c.b16 %v6150, %v6142
    %v6711 = vpack.c.b16 %v6151, %v6143
    %v6712 = vpack.c.b16 %v6152, %v6144
    %v6713 = vpack.c.b16 %v6153, %v6145
    %v6714 = vpack.c.b16 %v6154, %v6146
    %v6715 = vpack.c.b16 %v6155, %v6147
    %v6716 = vpack.c.b16 %v6156, %v6148
    %v6717 = vpack.c.b16 %v6157, %v6149
    %v6718 = vpack.c.b16 %v6166, %v6158
    %v6719 = vpack.c.b16 %v6167, %v6159
    %v6720 = vpack.c.b16 %v6168, %v6160
    %v6721 = vpack.c.b16 %v6169, %v6161
    %v6722 = vpack.c.b16 %v6170, %v6162
    %v6723 = vpack.c.b16 %v6171, %v6163
    %v6724 = vpack.c.b16 %v6172, %v6164
    %v6725 = vpack.c.b16 %v6173, %v6165
    %v6726 = vpack.c.b16 %v6182, %v6174
    %v6727 = vpack.c.b16 %v6183, %v6175
    %v6728 = vpack.c.b16 %v6184, %v6176
    %v6729 = vpack.c.b16 %v6185, %v6177
    %v6730 = vpack.c.b16 %v6186, %v6178
    %v6731 = vpack.c.b16 %v6187, %v6179
    %v6732 = vpack.c.b16 %v6188, %v6180
    %v6733 = vpack.c.b16 %v6189, %v6181
    %v6734 = vpack.c.b16 %v6198, %v6190
    %v6735 = vpack.c.b16 %v6199, %v6191
    %v6736 = vpack.c.b16 %v6200, %v6192
    %v6737 = vpack.c.b16 %v6201, %v6193
    %v6738 = vpack.c.b16 %v6202, %v6194
    %v6739 = vpack.c.b16 %v6203, %v6195
    %v6740 = vpack.c.b16 %v6204, %v6196
    %v6741 = vpack.c.b16 %v6205, %v6197
    %v6742 = vpack.c.b16 %v6214, %v6206
    %v6743 = vpack.c.b16 %v6215, %v6207
    %v6744 = vpack.c.b16 %v6216, %v6208
    %v6745 = vpack.c.b16 %v6217, %v6209
    %v6746 = vpack.c.b16 %v6218, %v6210
    %v6747 = vpack.c.b16 %v6219, %v6211
    %v6748 = vpack.c.b16 %v6220, %v6212
    %v6749 = vpack.c.b16 %v6221, %v6213
    %v6750 = vpack.c.b16 %v6230, %v6222
    %v6751 = vpack.c.b16 %v6231, %v6223
    %v6752 = vpack.c.b16 %v6232, %v6224
    %v6753 = vpack.c.b16 %v6233, %v6225
    %v6754 = vpack.c.b16 %v6234, %v6226
    %v6755 = vpack.c.b16 %v6235, %v6227
    %v6756 = vpack.c.b16 %v6236, %v6228
    %v6757 = vpack.c.b16 %v6237, %v6229
    %v6758 = vpack.c.b16 %v6246, %v6238
    %v6759 = vpack.c.b16 %v6247, %v6239
    %v6760 = vpack.c.b16 %v6248, %v6240
    %v6761 = vpack.c.b16 %v6249, %v6241
    %v6762 = vpack.c.b16 %v6250, %v6242
    %v6763 = vpack.c.b16 %v6251, %v6243
    %v6764 = vpack.c.b16 %v6252, %v6244
    %v6765 = vpack.c.b16 %v6253, %v6245
    %7278 = vmatpush.bf16.msra.mxu0 %v6310
    %7279 = vmatpush.bf16.msra.mxu0 %v6302
    %7280 = vmatpush.bf16.msra.mxu0 %v6294
    %7281 = vmatpush.bf16.msra.mxu0 %v6286
    %7282 = vmatpush.bf16.msra.mxu0 %v6278
    %7283 = vmatpush.bf16.msra.mxu0 %v6270
    %7284 = vmatpush.bf16.msra.mxu0 %v6262
    %7285 = vmatpush.bf16.msra.mxu0 %v6254
    %7286 = vmatmul.bf16.gmra.mxu0 %v4180
    %v7287 = vpop.f32.mrf.mxu0
    %v7288 = vadd.f32 %v4702, %v7287
    %v7289 = vpop.f32.mrf.mxu0
    %v7290 = vadd.f32 %v4702, %v7289
    %7291 = vdwg.mxu0
    %7292 = vmatpush.bf16.msra.mxu0 %v6374
    %7293 = vmatpush.bf16.msra.mxu0 %v6366
    %7294 = vmatpush.bf16.msra.mxu0 %v6358
    %7295 = vmatpush.bf16.msra.mxu0 %v6350
    %7296 = vmatpush.bf16.msra.mxu0 %v6342
    %7297 = vmatpush.bf16.msra.mxu0 %v6334
    %7298 = vmatpush.bf16.msra.mxu0 %v6326
    %7299 = vmatpush.bf16.msra.mxu0 %v6318
    %7300 = vmatmul.bf16.gmra.mxu0 %v4181
    %v7301 = vpop.f32.mrf.mxu0
    %v7302 = vadd.f32 %v7288, %v7301
    %v7303 = vpop.f32.mrf.mxu0
    %v7304 = vadd.f32 %v7290, %v7303
    %7305 = vdwg.mxu0
    %7306 = vmatpush.bf16.msra.mxu0 %v6438
    %7307 = vmatpush.bf16.msra.mxu0 %v6430
    %7308 = vmatpush.bf16.msra.mxu0 %v6422
    %7309 = vmatpush.bf16.msra.mxu0 %v6414
    %7310 = vmatpush.bf16.msra.mxu0 %v6406
    %7311 = vmatpush.bf16.msra.mxu0 %v6398
    %7312 = vmatpush.bf16.msra.mxu0 %v6390
    %7313 = vmatpush.bf16.msra.mxu0 %v6382
    %7314 = vmatmul.bf16.gmra.mxu0 %v4182
    %v7315 = vpop.f32.mrf.mxu0
    %v7316 = vadd.f32 %v7302, %v7315
    %v7317 = vpop.f32.mrf.mxu0
    %v7318 = vadd.f32 %v7304, %v7317
    %7319 = vdwg.mxu0
    %7320 = vmatpush.bf16.msra.mxu0 %v6502
    %7321 = vmatpush.bf16.msra.mxu0 %v6494
    %7322 = vmatpush.bf16.msra.mxu0 %v6486
    %7323 = vmatpush.bf16.msra.mxu0 %v6478
    %7324 = vmatpush.bf16.msra.mxu0 %v6470
    %7325 = vmatpush.bf16.msra.mxu0 %v6462
    %7326 = vmatpush.bf16.msra.mxu0 %v6454
    %7327 = vmatpush.bf16.msra.mxu0 %v6446
    %7328 = vmatmul.bf16.gmra.mxu0 %v4183
    %v7329 = vpop.f32.mrf.mxu0
    %v7330 = vadd.f32 %v7316, %v7329
    %v7331 = vpop.f32.mrf.mxu0
    %v7332 = vadd.f32 %v7318, %v7331
    %7333 = vdwg.mxu0
    %7334 = vmatpush.bf16.msra.mxu0 %v6566
    %7335 = vmatpush.bf16.msra.mxu0 %v6558
    %7336 = vmatpush.bf16.msra.mxu0 %v6550
    %7337 = vmatpush.bf16.msra.mxu0 %v6542
    %7338 = vmatpush.bf16.msra.mxu0 %v6534
    %7339 = vmatpush.bf16.msra.mxu0 %v6526
    %7340 = vmatpush.bf16.msra.mxu0 %v6518
    %7341 = vmatpush.bf16.msra.mxu0 %v6510
    %7342 = vmatmul.bf16.gmra.mxu0 %v4184
    %v7343 = vpop.f32.mrf.mxu0
    %v7344 = vadd.f32 %v7330, %v7343
    %v7345 = vpop.f32.mrf.mxu0
    %v7346 = vadd.f32 %v7332, %v7345
    %7347 = vdwg.mxu0
    %7348 = vmatpush.bf16.msra.mxu0 %v6630
    %7349 = vmatpush.bf16.msra.mxu0 %v6622
    %7350 = vmatpush.bf16.msra.mxu0 %v6614
    %7351 = vmatpush.bf16.msra.mxu0 %v6606
    %7352 = vmatpush.bf16.msra.mxu0 %v6598
    %7353 = vmatpush.bf16.msra.mxu0 %v6590
    %7354 = vmatpush.bf16.msra.mxu0 %v6582
    %7355 = vmatpush.bf16.msra.mxu0 %v6574
    %7356 = vmatmul.bf16.gmra.mxu0 %v4185
    %v7357 = vpop.f32.mrf.mxu0
    %v7358 = vadd.f32 %v7344, %v7357
    %v7359 = vpop.f32.mrf.mxu0
    %v7360 = vadd.f32 %v7346, %v7359
    %7361 = vdwg.mxu0
    %7362 = vmatpush.bf16.msra.mxu0 %v6694
    %7363 = vmatpush.bf16.msra.mxu0 %v6686
    %7364 = vmatpush.bf16.msra.mxu0 %v6678
    %7365 = vmatpush.bf16.msra.mxu0 %v6670
    %7366 = vmatpush.bf16.msra.mxu0 %v6662
    %7367 = vmatpush.bf16.msra.mxu0 %v6654
    %7368 = vmatpush.bf16.msra.mxu0 %v6646
    %7369 = vmatpush.bf16.msra.mxu0 %v6638
    %7370 = vmatmul.bf16.gmra.mxu0 %v4186
    %v7371 = vpop.f32.mrf.mxu0
    %v7372 = vadd.f32 %v7358, %v7371
    %v7373 = vpop.f32.mrf.mxu0
    %v7374 = vadd.f32 %v7360, %v7373
    %7375 = vdwg.mxu0
    %7376 = vmatpush.bf16.msra.mxu0 %v6758
    %7377 = vmatpush.bf16.msra.mxu0 %v6750
    %7378 = vmatpush.bf16.msra.mxu0 %v6742
    %7379 = vmatpush.bf16.msra.mxu0 %v6734
    %7380 = vmatpush.bf16.msra.mxu0 %v6726
    %7381 = vmatpush.bf16.msra.mxu0 %v6718
    %7382 = vmatpush.bf16.msra.mxu0 %v6710
    %7383 = vmatpush.bf16.msra.mxu0 %v6702
    %7384 = vmatmul.bf16.gmra.mxu0 %v4187
    %v7385 = vpop.f32.mrf.mxu0
    %v7386 = vadd.f32 %v7372, %v7385
    %v7387 = vpop.f32.mrf.mxu0
    %v7388 = vadd.f32 %v7374, %v7387
    %7389 = vdwg.mxu0
    %7390 = vmatpush.bf16.msra.mxu0 %v6311
    %7391 = vmatpush.bf16.msra.mxu0 %v6303
    %7392 = vmatpush.bf16.msra.mxu0 %v6295
    %7393 = vmatpush.bf16.msra.mxu0 %v6287
    %7394 = vmatpush.bf16.msra.mxu0 %v6279
    %7395 = vmatpush.bf16.msra.mxu0 %v6271
    %7396 = vmatpush.bf16.msra.mxu0 %v6263
    %7397 = vmatpush.bf16.msra.mxu0 %v6255
    %7398 = vmatmul.bf16.gmra.mxu0 %v4180
    %v7399 = vpop.f32.mrf.mxu0
    %v7400 = vadd.f32 %v4703, %v7399
    %v7401 = vpop.f32.mrf.mxu0
    %v7402 = vadd.f32 %v4703, %v7401
    %7403 = vdwg.mxu0
    %7404 = vmatpush.bf16.msra.mxu0 %v6375
    %7405 = vmatpush.bf16.msra.mxu0 %v6367
    %7406 = vmatpush.bf16.msra.mxu0 %v6359
    %7407 = vmatpush.bf16.msra.mxu0 %v6351
    %7408 = vmatpush.bf16.msra.mxu0 %v6343
    %7409 = vmatpush.bf16.msra.mxu0 %v6335
    %7410 = vmatpush.bf16.msra.mxu0 %v6327
    %7411 = vmatpush.bf16.msra.mxu0 %v6319
    %7412 = vmatmul.bf16.gmra.mxu0 %v4181
    %v7413 = vpop.f32.mrf.mxu0
    %v7414 = vadd.f32 %v7400, %v7413
    %v7415 = vpop.f32.mrf.mxu0
    %v7416 = vadd.f32 %v7402, %v7415
    %7417 = vdwg.mxu0
    %7418 = vmatpush.bf16.msra.mxu0 %v6439
    %7419 = vmatpush.bf16.msra.mxu0 %v6431
    %7420 = vmatpush.bf16.msra.mxu0 %v6423
    %7421 = vmatpush.bf16.msra.mxu0 %v6415
    %7422 = vmatpush.bf16.msra.mxu0 %v6407
    %7423 = vmatpush.bf16.msra.mxu0 %v6399
    %7424 = vmatpush.bf16.msra.mxu0 %v6391
    %7425 = vmatpush.bf16.msra.mxu0 %v6383
    %7426 = vmatmul.bf16.gmra.mxu0 %v4182
    %v7427 = vpop.f32.mrf.mxu0
    %v7428 = vadd.f32 %v7414, %v7427
    %v7429 = vpop.f32.mrf.mxu0
    %v7430 = vadd.f32 %v7416, %v7429
    %7431 = vdwg.mxu0
    %7432 = vmatpush.bf16.msra.mxu0 %v6503
    %7433 = vmatpush.bf16.msra.mxu0 %v6495
    %7434 = vmatpush.bf16.msra.mxu0 %v6487
    %7435 = vmatpush.bf16.msra.mxu0 %v6479
    %7436 = vmatpush.bf16.msra.mxu0 %v6471
    %7437 = vmatpush.bf16.msra.mxu0 %v6463
    %7438 = vmatpush.bf16.msra.mxu0 %v6455
    %7439 = vmatpush.bf16.msra.mxu0 %v6447
    %7440 = vmatmul.bf16.gmra.mxu0 %v4183
    %v7441 = vpop.f32.mrf.mxu0
    %v7442 = vadd.f32 %v7428, %v7441
    %v7443 = vpop.f32.mrf.mxu0
    %v7444 = vadd.f32 %v7430, %v7443
    %7445 = vdwg.mxu0
    %7446 = vmatpush.bf16.msra.mxu0 %v6567
    %7447 = vmatpush.bf16.msra.mxu0 %v6559
    %7448 = vmatpush.bf16.msra.mxu0 %v6551
    %7449 = vmatpush.bf16.msra.mxu0 %v6543
    %7450 = vmatpush.bf16.msra.mxu0 %v6535
    %7451 = vmatpush.bf16.msra.mxu0 %v6527
    %7452 = vmatpush.bf16.msra.mxu0 %v6519
    %7453 = vmatpush.bf16.msra.mxu0 %v6511
    %7454 = vmatmul.bf16.gmra.mxu0 %v4184
    %v7455 = vpop.f32.mrf.mxu0
    %v7456 = vadd.f32 %v7442, %v7455
    %v7457 = vpop.f32.mrf.mxu0
    %v7458 = vadd.f32 %v7444, %v7457
    %7459 = vdwg.mxu0
    %7460 = vmatpush.bf16.msra.mxu0 %v6631
    %7461 = vmatpush.bf16.msra.mxu0 %v6623
    %7462 = vmatpush.bf16.msra.mxu0 %v6615
    %7463 = vmatpush.bf16.msra.mxu0 %v6607
    %7464 = vmatpush.bf16.msra.mxu0 %v6599
    %7465 = vmatpush.bf16.msra.mxu0 %v6591
    %7466 = vmatpush.bf16.msra.mxu0 %v6583
    %7467 = vmatpush.bf16.msra.mxu0 %v6575
    %7468 = vmatmul.bf16.gmra.mxu0 %v4185
    %v7469 = vpop.f32.mrf.mxu0
    %v7470 = vadd.f32 %v7456, %v7469
    %v7471 = vpop.f32.mrf.mxu0
    %v7472 = vadd.f32 %v7458, %v7471
    %7473 = vdwg.mxu0
    %7474 = vmatpush.bf16.msra.mxu0 %v6695
    %7475 = vmatpush.bf16.msra.mxu0 %v6687
    %7476 = vmatpush.bf16.msra.mxu0 %v6679
    %7477 = vmatpush.bf16.msra.mxu0 %v6671
    %7478 = vmatpush.bf16.msra.mxu0 %v6663
    %7479 = vmatpush.bf16.msra.mxu0 %v6655
    %7480 = vmatpush.bf16.msra.mxu0 %v6647
    %7481 = vmatpush.bf16.msra.mxu0 %v6639
    %7482 = vmatmul.bf16.gmra.mxu0 %v4186
    %v7483 = vpop.f32.mrf.mxu0
    %v7484 = vadd.f32 %v7470, %v7483
    %v7485 = vpop.f32.mrf.mxu0
    %v7486 = vadd.f32 %v7472, %v7485
    %7487 = vdwg.mxu0
    %7488 = vmatpush.bf16.msra.mxu0 %v6759
    %7489 = vmatpush.bf16.msra.mxu0 %v6751
    %7490 = vmatpush.bf16.msra.mxu0 %v6743
    %7491 = vmatpush.bf16.msra.mxu0 %v6735
    %7492 = vmatpush.bf16.msra.mxu0 %v6727
    %7493 = vmatpush.bf16.msra.mxu0 %v6719
    %7494 = vmatpush.bf16.msra.mxu0 %v6711
    %7495 = vmatpush.bf16.msra.mxu0 %v6703
    %7496 = vmatmul.bf16.gmra.mxu0 %v4187
    %v7497 = vpop.f32.mrf.mxu0
    %v7498 = vadd.f32 %v7484, %v7497
    %v7499 = vpop.f32.mrf.mxu0
    %v7500 = vadd.f32 %v7486, %v7499
    %7501 = vdwg.mxu0
    %7502 = vmatpush.bf16.msra.mxu0 %v6312
    %7503 = vmatpush.bf16.msra.mxu0 %v6304
    %7504 = vmatpush.bf16.msra.mxu0 %v6296
    %7505 = vmatpush.bf16.msra.mxu0 %v6288
    %7506 = vmatpush.bf16.msra.mxu0 %v6280
    %7507 = vmatpush.bf16.msra.mxu0 %v6272
    %7508 = vmatpush.bf16.msra.mxu0 %v6264
    %7509 = vmatpush.bf16.msra.mxu0 %v6256
    %7510 = vmatmul.bf16.gmra.mxu0 %v4180
    %v7511 = vpop.f32.mrf.mxu0
    %v7512 = vadd.f32 %v4704, %v7511
    %v7513 = vpop.f32.mrf.mxu0
    %v7514 = vadd.f32 %v4704, %v7513
    %7515 = vdwg.mxu0
    %7516 = vmatpush.bf16.msra.mxu0 %v6376
    %7517 = vmatpush.bf16.msra.mxu0 %v6368
    %7518 = vmatpush.bf16.msra.mxu0 %v6360
    %7519 = vmatpush.bf16.msra.mxu0 %v6352
    %7520 = vmatpush.bf16.msra.mxu0 %v6344
    %7521 = vmatpush.bf16.msra.mxu0 %v6336
    %7522 = vmatpush.bf16.msra.mxu0 %v6328
    %7523 = vmatpush.bf16.msra.mxu0 %v6320
    %7524 = vmatmul.bf16.gmra.mxu0 %v4181
    %v7525 = vpop.f32.mrf.mxu0
    %v7526 = vadd.f32 %v7512, %v7525
    %v7527 = vpop.f32.mrf.mxu0
    %v7528 = vadd.f32 %v7514, %v7527
    %7529 = vdwg.mxu0
    %7530 = vmatpush.bf16.msra.mxu0 %v6440
    %7531 = vmatpush.bf16.msra.mxu0 %v6432
    %7532 = vmatpush.bf16.msra.mxu0 %v6424
    %7533 = vmatpush.bf16.msra.mxu0 %v6416
    %7534 = vmatpush.bf16.msra.mxu0 %v6408
    %7535 = vmatpush.bf16.msra.mxu0 %v6400
    %7536 = vmatpush.bf16.msra.mxu0 %v6392
    %7537 = vmatpush.bf16.msra.mxu0 %v6384
    %7538 = vmatmul.bf16.gmra.mxu0 %v4182
    %v7539 = vpop.f32.mrf.mxu0
    %v7540 = vadd.f32 %v7526, %v7539
    %v7541 = vpop.f32.mrf.mxu0
    %v7542 = vadd.f32 %v7528, %v7541
    %7543 = vdwg.mxu0
    %7544 = vmatpush.bf16.msra.mxu0 %v6504
    %7545 = vmatpush.bf16.msra.mxu0 %v6496
    %7546 = vmatpush.bf16.msra.mxu0 %v6488
    %7547 = vmatpush.bf16.msra.mxu0 %v6480
    %7548 = vmatpush.bf16.msra.mxu0 %v6472
    %7549 = vmatpush.bf16.msra.mxu0 %v6464
    %7550 = vmatpush.bf16.msra.mxu0 %v6456
    %7551 = vmatpush.bf16.msra.mxu0 %v6448
    %7552 = vmatmul.bf16.gmra.mxu0 %v4183
    %v7553 = vpop.f32.mrf.mxu0
    %v7554 = vadd.f32 %v7540, %v7553
    %v7555 = vpop.f32.mrf.mxu0
    %v7556 = vadd.f32 %v7542, %v7555
    %7557 = vdwg.mxu0
    %7558 = vmatpush.bf16.msra.mxu0 %v6568
    %7559 = vmatpush.bf16.msra.mxu0 %v6560
    %7560 = vmatpush.bf16.msra.mxu0 %v6552
    %7561 = vmatpush.bf16.msra.mxu0 %v6544
    %7562 = vmatpush.bf16.msra.mxu0 %v6536
    %7563 = vmatpush.bf16.msra.mxu0 %v6528
    %7564 = vmatpush.bf16.msra.mxu0 %v6520
    %7565 = vmatpush.bf16.msra.mxu0 %v6512
    %7566 = vmatmul.bf16.gmra.mxu0 %v4184
    %v7567 = vpop.f32.mrf.mxu0
    %v7568 = vadd.f32 %v7554, %v7567
    %v7569 = vpop.f32.mrf.mxu0
    %v7570 = vadd.f32 %v7556, %v7569
    %7571 = vdwg.mxu0
    %7572 = vmatpush.bf16.msra.mxu0 %v6632
    %7573 = vmatpush.bf16.msra.mxu0 %v6624
    %7574 = vmatpush.bf16.msra.mxu0 %v6616
    %7575 = vmatpush.bf16.msra.mxu0 %v6608
    %7576 = vmatpush.bf16.msra.mxu0 %v6600
    %7577 = vmatpush.bf16.msra.mxu0 %v6592
    %7578 = vmatpush.bf16.msra.mxu0 %v6584
    %7579 = vmatpush.bf16.msra.mxu0 %v6576
    %7580 = vmatmul.bf16.gmra.mxu0 %v4185
    %v7581 = vpop.f32.mrf.mxu0
    %v7582 = vadd.f32 %v7568, %v7581
    %v7583 = vpop.f32.mrf.mxu0
    %v7584 = vadd.f32 %v7570, %v7583
    %7585 = vdwg.mxu0
    %7586 = vmatpush.bf16.msra.mxu0 %v6696
    %7587 = vmatpush.bf16.msra.mxu0 %v6688
    %7588 = vmatpush.bf16.msra.mxu0 %v6680
    %7589 = vmatpush.bf16.msra.mxu0 %v6672
    %7590 = vmatpush.bf16.msra.mxu0 %v6664
    %7591 = vmatpush.bf16.msra.mxu0 %v6656
    %7592 = vmatpush.bf16.msra.mxu0 %v6648
    %7593 = vmatpush.bf16.msra.mxu0 %v6640
    %7594 = vmatmul.bf16.gmra.mxu0 %v4186
    %v7595 = vpop.f32.mrf.mxu0
    %v7596 = vadd.f32 %v7582, %v7595
    %v7597 = vpop.f32.mrf.mxu0
    %v7598 = vadd.f32 %v7584, %v7597
    %7599 = vdwg.mxu0
    %7600 = vmatpush.bf16.msra.mxu0 %v6760
    %7601 = vmatpush.bf16.msra.mxu0 %v6752
    %7602 = vmatpush.bf16.msra.mxu0 %v6744
    %7603 = vmatpush.bf16.msra.mxu0 %v6736
    %7604 = vmatpush.bf16.msra.mxu0 %v6728
    %7605 = vmatpush.bf16.msra.mxu0 %v6720
    %7606 = vmatpush.bf16.msra.mxu0 %v6712
    %7607 = vmatpush.bf16.msra.mxu0 %v6704
    %7608 = vmatmul.bf16.gmra.mxu0 %v4187
    %v7609 = vpop.f32.mrf.mxu0
    %v7610 = vadd.f32 %v7596, %v7609
    %v7611 = vpop.f32.mrf.mxu0
    %v7612 = vadd.f32 %v7598, %v7611
    %7613 = vdwg.mxu0
    %7614 = vmatpush.bf16.msra.mxu0 %v6313
    %7615 = vmatpush.bf16.msra.mxu0 %v6305
    %7616 = vmatpush.bf16.msra.mxu0 %v6297
    %7617 = vmatpush.bf16.msra.mxu0 %v6289
    %7618 = vmatpush.bf16.msra.mxu0 %v6281
    %7619 = vmatpush.bf16.msra.mxu0 %v6273
    %7620 = vmatpush.bf16.msra.mxu0 %v6265
    %7621 = vmatpush.bf16.msra.mxu0 %v6257
    %7622 = vmatmul.bf16.gmra.mxu0 %v4180
    %v7623 = vpop.f32.mrf.mxu0
    %v7624 = vadd.f32 %v4705, %v7623
    %v7625 = vpop.f32.mrf.mxu0
    %v7626 = vadd.f32 %v4705, %v7625
    %7627 = vdwg.mxu0
    %7628 = vmatpush.bf16.msra.mxu0 %v6377
    %7629 = vmatpush.bf16.msra.mxu0 %v6369
    %7630 = vmatpush.bf16.msra.mxu0 %v6361
    %7631 = vmatpush.bf16.msra.mxu0 %v6353
    %7632 = vmatpush.bf16.msra.mxu0 %v6345
    %7633 = vmatpush.bf16.msra.mxu0 %v6337
    %7634 = vmatpush.bf16.msra.mxu0 %v6329
    %7635 = vmatpush.bf16.msra.mxu0 %v6321
    %7636 = vmatmul.bf16.gmra.mxu0 %v4181
    %v7637 = vpop.f32.mrf.mxu0
    %v7638 = vadd.f32 %v7624, %v7637
    %v7639 = vpop.f32.mrf.mxu0
    %v7640 = vadd.f32 %v7626, %v7639
    %7641 = vdwg.mxu0
    %7642 = vmatpush.bf16.msra.mxu0 %v6441
    %7643 = vmatpush.bf16.msra.mxu0 %v6433
    %7644 = vmatpush.bf16.msra.mxu0 %v6425
    %7645 = vmatpush.bf16.msra.mxu0 %v6417
    %7646 = vmatpush.bf16.msra.mxu0 %v6409
    %7647 = vmatpush.bf16.msra.mxu0 %v6401
    %7648 = vmatpush.bf16.msra.mxu0 %v6393
    %7649 = vmatpush.bf16.msra.mxu0 %v6385
    %7650 = vmatmul.bf16.gmra.mxu0 %v4182
    %v7651 = vpop.f32.mrf.mxu0
    %v7652 = vadd.f32 %v7638, %v7651
    %v7653 = vpop.f32.mrf.mxu0
    %v7654 = vadd.f32 %v7640, %v7653
    %7655 = vdwg.mxu0
    %7656 = vmatpush.bf16.msra.mxu0 %v6505
    %7657 = vmatpush.bf16.msra.mxu0 %v6497
    %7658 = vmatpush.bf16.msra.mxu0 %v6489
    %7659 = vmatpush.bf16.msra.mxu0 %v6481
    %7660 = vmatpush.bf16.msra.mxu0 %v6473
    %7661 = vmatpush.bf16.msra.mxu0 %v6465
    %7662 = vmatpush.bf16.msra.mxu0 %v6457
    %7663 = vmatpush.bf16.msra.mxu0 %v6449
    %7664 = vmatmul.bf16.gmra.mxu0 %v4183
    %v7665 = vpop.f32.mrf.mxu0
    %v7666 = vadd.f32 %v7652, %v7665
    %v7667 = vpop.f32.mrf.mxu0
    %v7668 = vadd.f32 %v7654, %v7667
    %7669 = vdwg.mxu0
    %7670 = vmatpush.bf16.msra.mxu0 %v6569
    %7671 = vmatpush.bf16.msra.mxu0 %v6561
    %7672 = vmatpush.bf16.msra.mxu0 %v6553
    %7673 = vmatpush.bf16.msra.mxu0 %v6545
    %7674 = vmatpush.bf16.msra.mxu0 %v6537
    %7675 = vmatpush.bf16.msra.mxu0 %v6529
    %7676 = vmatpush.bf16.msra.mxu0 %v6521
    %7677 = vmatpush.bf16.msra.mxu0 %v6513
    %7678 = vmatmul.bf16.gmra.mxu0 %v4184
    %v7679 = vpop.f32.mrf.mxu0
    %v7680 = vadd.f32 %v7666, %v7679
    %v7681 = vpop.f32.mrf.mxu0
    %v7682 = vadd.f32 %v7668, %v7681
    %7683 = vdwg.mxu0
    %7684 = vmatpush.bf16.msra.mxu0 %v6633
    %7685 = vmatpush.bf16.msra.mxu0 %v6625
    %7686 = vmatpush.bf16.msra.mxu0 %v6617
    %7687 = vmatpush.bf16.msra.mxu0 %v6609
    %7688 = vmatpush.bf16.msra.mxu0 %v6601
    %7689 = vmatpush.bf16.msra.mxu0 %v6593
    %7690 = vmatpush.bf16.msra.mxu0 %v6585
    %7691 = vmatpush.bf16.msra.mxu0 %v6577
    %7692 = vmatmul.bf16.gmra.mxu0 %v4185
    %v7693 = vpop.f32.mrf.mxu0
    %v7694 = vadd.f32 %v7680, %v7693
    %v7695 = vpop.f32.mrf.mxu0
    %v7696 = vadd.f32 %v7682, %v7695
    %7697 = vdwg.mxu0
    %7698 = vmatpush.bf16.msra.mxu0 %v6697
    %7699 = vmatpush.bf16.msra.mxu0 %v6689
    %7700 = vmatpush.bf16.msra.mxu0 %v6681
    %7701 = vmatpush.bf16.msra.mxu0 %v6673
    %7702 = vmatpush.bf16.msra.mxu0 %v6665
    %7703 = vmatpush.bf16.msra.mxu0 %v6657
    %7704 = vmatpush.bf16.msra.mxu0 %v6649
    %7705 = vmatpush.bf16.msra.mxu0 %v6641
    %7706 = vmatmul.bf16.gmra.mxu0 %v4186
    %v7707 = vpop.f32.mrf.mxu0
    %v7708 = vadd.f32 %v7694, %v7707
    %v7709 = vpop.f32.mrf.mxu0
    %v7710 = vadd.f32 %v7696, %v7709
    %7711 = vdwg.mxu0
    %7712 = vmatpush.bf16.msra.mxu0 %v6761
    %7713 = vmatpush.bf16.msra.mxu0 %v6753
    %7714 = vmatpush.bf16.msra.mxu0 %v6745
    %7715 = vmatpush.bf16.msra.mxu0 %v6737
    %7716 = vmatpush.bf16.msra.mxu0 %v6729
    %7717 = vmatpush.bf16.msra.mxu0 %v6721
    %7718 = vmatpush.bf16.msra.mxu0 %v6713
    %7719 = vmatpush.bf16.msra.mxu0 %v6705
    %7720 = vmatmul.bf16.gmra.mxu0 %v4187
    %v7721 = vpop.f32.mrf.mxu0
    %v7722 = vadd.f32 %v7708, %v7721
    %v7723 = vpop.f32.mrf.mxu0
    %v7724 = vadd.f32 %v7710, %v7723
    %7725 = vdwg.mxu0
    %7726 = vmatpush.bf16.msra.mxu0 %v6314
    %7727 = vmatpush.bf16.msra.mxu0 %v6306
    %7728 = vmatpush.bf16.msra.mxu0 %v6298
    %7729 = vmatpush.bf16.msra.mxu0 %v6290
    %7730 = vmatpush.bf16.msra.mxu0 %v6282
    %7731 = vmatpush.bf16.msra.mxu0 %v6274
    %7732 = vmatpush.bf16.msra.mxu0 %v6266
    %7733 = vmatpush.bf16.msra.mxu0 %v6258
    %7734 = vmatmul.bf16.gmra.mxu0 %v4180
    %v7735 = vpop.f32.mrf.mxu0
    %v7736 = vadd.f32 %v4706, %v7735
    %v7737 = vpop.f32.mrf.mxu0
    %v7738 = vadd.f32 %v4706, %v7737
    %7739 = vdwg.mxu0
    %7740 = vmatpush.bf16.msra.mxu0 %v6378
    %7741 = vmatpush.bf16.msra.mxu0 %v6370
    %7742 = vmatpush.bf16.msra.mxu0 %v6362
    %7743 = vmatpush.bf16.msra.mxu0 %v6354
    %7744 = vmatpush.bf16.msra.mxu0 %v6346
    %7745 = vmatpush.bf16.msra.mxu0 %v6338
    %7746 = vmatpush.bf16.msra.mxu0 %v6330
    %7747 = vmatpush.bf16.msra.mxu0 %v6322
    %7748 = vmatmul.bf16.gmra.mxu0 %v4181
    %v7749 = vpop.f32.mrf.mxu0
    %v7750 = vadd.f32 %v7736, %v7749
    %v7751 = vpop.f32.mrf.mxu0
    %v7752 = vadd.f32 %v7738, %v7751
    %7753 = vdwg.mxu0
    %7754 = vmatpush.bf16.msra.mxu0 %v6442
    %7755 = vmatpush.bf16.msra.mxu0 %v6434
    %7756 = vmatpush.bf16.msra.mxu0 %v6426
    %7757 = vmatpush.bf16.msra.mxu0 %v6418
    %7758 = vmatpush.bf16.msra.mxu0 %v6410
    %7759 = vmatpush.bf16.msra.mxu0 %v6402
    %7760 = vmatpush.bf16.msra.mxu0 %v6394
    %7761 = vmatpush.bf16.msra.mxu0 %v6386
    %7762 = vmatmul.bf16.gmra.mxu0 %v4182
    %v7763 = vpop.f32.mrf.mxu0
    %v7764 = vadd.f32 %v7750, %v7763
    %v7765 = vpop.f32.mrf.mxu0
    %v7766 = vadd.f32 %v7752, %v7765
    %7767 = vdwg.mxu0
    %7768 = vmatpush.bf16.msra.mxu0 %v6506
    %7769 = vmatpush.bf16.msra.mxu0 %v6498
    %7770 = vmatpush.bf16.msra.mxu0 %v6490
    %7771 = vmatpush.bf16.msra.mxu0 %v6482
    %7772 = vmatpush.bf16.msra.mxu0 %v6474
    %7773 = vmatpush.bf16.msra.mxu0 %v6466
    %7774 = vmatpush.bf16.msra.mxu0 %v6458
    %7775 = vmatpush.bf16.msra.mxu0 %v6450
    %7776 = vmatmul.bf16.gmra.mxu0 %v4183
    %v7777 = vpop.f32.mrf.mxu0
    %v7778 = vadd.f32 %v7764, %v7777
    %v7779 = vpop.f32.mrf.mxu0
    %v7780 = vadd.f32 %v7766, %v7779
    %7781 = vdwg.mxu0
    %7782 = vmatpush.bf16.msra.mxu0 %v6570
    %7783 = vmatpush.bf16.msra.mxu0 %v6562
    %7784 = vmatpush.bf16.msra.mxu0 %v6554
    %7785 = vmatpush.bf16.msra.mxu0 %v6546
    %7786 = vmatpush.bf16.msra.mxu0 %v6538
    %7787 = vmatpush.bf16.msra.mxu0 %v6530
    %7788 = vmatpush.bf16.msra.mxu0 %v6522
    %7789 = vmatpush.bf16.msra.mxu0 %v6514
    %7790 = vmatmul.bf16.gmra.mxu0 %v4184
    %v7791 = vpop.f32.mrf.mxu0
    %v7792 = vadd.f32 %v7778, %v7791
    %v7793 = vpop.f32.mrf.mxu0
    %v7794 = vadd.f32 %v7780, %v7793
    %7795 = vdwg.mxu0
    %7796 = vmatpush.bf16.msra.mxu0 %v6634
    %7797 = vmatpush.bf16.msra.mxu0 %v6626
    %7798 = vmatpush.bf16.msra.mxu0 %v6618
    %7799 = vmatpush.bf16.msra.mxu0 %v6610
    %7800 = vmatpush.bf16.msra.mxu0 %v6602
    %7801 = vmatpush.bf16.msra.mxu0 %v6594
    %7802 = vmatpush.bf16.msra.mxu0 %v6586
    %7803 = vmatpush.bf16.msra.mxu0 %v6578
    %7804 = vmatmul.bf16.gmra.mxu0 %v4185
    %v7805 = vpop.f32.mrf.mxu0
    %v7806 = vadd.f32 %v7792, %v7805
    %v7807 = vpop.f32.mrf.mxu0
    %v7808 = vadd.f32 %v7794, %v7807
    %7809 = vdwg.mxu0
    %7810 = vmatpush.bf16.msra.mxu0 %v6698
    %7811 = vmatpush.bf16.msra.mxu0 %v6690
    %7812 = vmatpush.bf16.msra.mxu0 %v6682
    %7813 = vmatpush.bf16.msra.mxu0 %v6674
    %7814 = vmatpush.bf16.msra.mxu0 %v6666
    %7815 = vmatpush.bf16.msra.mxu0 %v6658
    %7816 = vmatpush.bf16.msra.mxu0 %v6650
    %7817 = vmatpush.bf16.msra.mxu0 %v6642
    %7818 = vmatmul.bf16.gmra.mxu0 %v4186
    %v7819 = vpop.f32.mrf.mxu0
    %v7820 = vadd.f32 %v7806, %v7819
    %v7821 = vpop.f32.mrf.mxu0
    %v7822 = vadd.f32 %v7808, %v7821
    %7823 = vdwg.mxu0
    %7824 = vmatpush.bf16.msra.mxu0 %v6762
    %7825 = vmatpush.bf16.msra.mxu0 %v6754
    %7826 = vmatpush.bf16.msra.mxu0 %v6746
    %7827 = vmatpush.bf16.msra.mxu0 %v6738
    %7828 = vmatpush.bf16.msra.mxu0 %v6730
    %7829 = vmatpush.bf16.msra.mxu0 %v6722
    %7830 = vmatpush.bf16.msra.mxu0 %v6714
    %7831 = vmatpush.bf16.msra.mxu0 %v6706
    %7832 = vmatmul.bf16.gmra.mxu0 %v4187
    %v7833 = vpop.f32.mrf.mxu0
    %v7834 = vadd.f32 %v7820, %v7833
    %v7835 = vpop.f32.mrf.mxu0
    %v7836 = vadd.f32 %v7822, %v7835
    %7837 = vdwg.mxu0
    %7838 = vmatpush.bf16.msra.mxu0 %v6315
    %7839 = vmatpush.bf16.msra.mxu0 %v6307
    %7840 = vmatpush.bf16.msra.mxu0 %v6299
    %7841 = vmatpush.bf16.msra.mxu0 %v6291
    %7842 = vmatpush.bf16.msra.mxu0 %v6283
    %7843 = vmatpush.bf16.msra.mxu0 %v6275
    %7844 = vmatpush.bf16.msra.mxu0 %v6267
    %7845 = vmatpush.bf16.msra.mxu0 %v6259
    %7846 = vmatmul.bf16.gmra.mxu0 %v4180
    %v7847 = vpop.f32.mrf.mxu0
    %v7848 = vadd.f32 %v4707, %v7847
    %v7849 = vpop.f32.mrf.mxu0
    %v7850 = vadd.f32 %v4707, %v7849
    %7851 = vdwg.mxu0
    %7852 = vmatpush.bf16.msra.mxu0 %v6379
    %7853 = vmatpush.bf16.msra.mxu0 %v6371
    %7854 = vmatpush.bf16.msra.mxu0 %v6363
    %7855 = vmatpush.bf16.msra.mxu0 %v6355
    %7856 = vmatpush.bf16.msra.mxu0 %v6347
    %7857 = vmatpush.bf16.msra.mxu0 %v6339
    %7858 = vmatpush.bf16.msra.mxu0 %v6331
    %7859 = vmatpush.bf16.msra.mxu0 %v6323
    %7860 = vmatmul.bf16.gmra.mxu0 %v4181
    %v7861 = vpop.f32.mrf.mxu0
    %v7862 = vadd.f32 %v7848, %v7861
    %v7863 = vpop.f32.mrf.mxu0
    %v7864 = vadd.f32 %v7850, %v7863
    %7865 = vdwg.mxu0
    %7866 = vmatpush.bf16.msra.mxu0 %v6443
    %7867 = vmatpush.bf16.msra.mxu0 %v6435
    %7868 = vmatpush.bf16.msra.mxu0 %v6427
    %7869 = vmatpush.bf16.msra.mxu0 %v6419
    %7870 = vmatpush.bf16.msra.mxu0 %v6411
    %7871 = vmatpush.bf16.msra.mxu0 %v6403
    %7872 = vmatpush.bf16.msra.mxu0 %v6395
    %7873 = vmatpush.bf16.msra.mxu0 %v6387
    %7874 = vmatmul.bf16.gmra.mxu0 %v4182
    %v7875 = vpop.f32.mrf.mxu0
    %v7876 = vadd.f32 %v7862, %v7875
    %v7877 = vpop.f32.mrf.mxu0
    %v7878 = vadd.f32 %v7864, %v7877
    %7879 = vdwg.mxu0
    %7880 = vmatpush.bf16.msra.mxu0 %v6507
    %7881 = vmatpush.bf16.msra.mxu0 %v6499
    %7882 = vmatpush.bf16.msra.mxu0 %v6491
    %7883 = vmatpush.bf16.msra.mxu0 %v6483
    %7884 = vmatpush.bf16.msra.mxu0 %v6475
    %7885 = vmatpush.bf16.msra.mxu0 %v6467
    %7886 = vmatpush.bf16.msra.mxu0 %v6459
    %7887 = vmatpush.bf16.msra.mxu0 %v6451
    %7888 = vmatmul.bf16.gmra.mxu0 %v4183
    %v7889 = vpop.f32.mrf.mxu0
    %v7890 = vadd.f32 %v7876, %v7889
    %v7891 = vpop.f32.mrf.mxu0
    %v7892 = vadd.f32 %v7878, %v7891
    %7893 = vdwg.mxu0
    %7894 = vmatpush.bf16.msra.mxu0 %v6571
    %7895 = vmatpush.bf16.msra.mxu0 %v6563
    %7896 = vmatpush.bf16.msra.mxu0 %v6555
    %7897 = vmatpush.bf16.msra.mxu0 %v6547
    %7898 = vmatpush.bf16.msra.mxu0 %v6539
    %7899 = vmatpush.bf16.msra.mxu0 %v6531
    %7900 = vmatpush.bf16.msra.mxu0 %v6523
    %7901 = vmatpush.bf16.msra.mxu0 %v6515
    %7902 = vmatmul.bf16.gmra.mxu0 %v4184
    %v7903 = vpop.f32.mrf.mxu0
    %v7904 = vadd.f32 %v7890, %v7903
    %v7905 = vpop.f32.mrf.mxu0
    %v7906 = vadd.f32 %v7892, %v7905
    %7907 = vdwg.mxu0
    %7908 = vmatpush.bf16.msra.mxu0 %v6635
    %7909 = vmatpush.bf16.msra.mxu0 %v6627
    %7910 = vmatpush.bf16.msra.mxu0 %v6619
    %7911 = vmatpush.bf16.msra.mxu0 %v6611
    %7912 = vmatpush.bf16.msra.mxu0 %v6603
    %7913 = vmatpush.bf16.msra.mxu0 %v6595
    %7914 = vmatpush.bf16.msra.mxu0 %v6587
    %7915 = vmatpush.bf16.msra.mxu0 %v6579
    %7916 = vmatmul.bf16.gmra.mxu0 %v4185
    %v7917 = vpop.f32.mrf.mxu0
    %v7918 = vadd.f32 %v7904, %v7917
    %v7919 = vpop.f32.mrf.mxu0
    %v7920 = vadd.f32 %v7906, %v7919
    %7921 = vdwg.mxu0
    %7922 = vmatpush.bf16.msra.mxu0 %v6699
    %7923 = vmatpush.bf16.msra.mxu0 %v6691
    %7924 = vmatpush.bf16.msra.mxu0 %v6683
    %7925 = vmatpush.bf16.msra.mxu0 %v6675
    %7926 = vmatpush.bf16.msra.mxu0 %v6667
    %7927 = vmatpush.bf16.msra.mxu0 %v6659
    %7928 = vmatpush.bf16.msra.mxu0 %v6651
    %7929 = vmatpush.bf16.msra.mxu0 %v6643
    %7930 = vmatmul.bf16.gmra.mxu0 %v4186
    %v7931 = vpop.f32.mrf.mxu0
    %v7932 = vadd.f32 %v7918, %v7931
    %v7933 = vpop.f32.mrf.mxu0
    %v7934 = vadd.f32 %v7920, %v7933
    %7935 = vdwg.mxu0
    %7936 = vmatpush.bf16.msra.mxu0 %v6763
    %7937 = vmatpush.bf16.msra.mxu0 %v6755
    %7938 = vmatpush.bf16.msra.mxu0 %v6747
    %7939 = vmatpush.bf16.msra.mxu0 %v6739
    %7940 = vmatpush.bf16.msra.mxu0 %v6731
    %7941 = vmatpush.bf16.msra.mxu0 %v6723
    %7942 = vmatpush.bf16.msra.mxu0 %v6715
    %7943 = vmatpush.bf16.msra.mxu0 %v6707
    %7944 = vmatmul.bf16.gmra.mxu0 %v4187
    %v7945 = vpop.f32.mrf.mxu0
    %v7946 = vadd.f32 %v7932, %v7945
    %v7947 = vpop.f32.mrf.mxu0
    %v7948 = vadd.f32 %v7934, %v7947
    %7949 = vdwg.mxu0
    %7950 = vmatpush.bf16.msra.mxu0 %v6316
    %7951 = vmatpush.bf16.msra.mxu0 %v6308
    %7952 = vmatpush.bf16.msra.mxu0 %v6300
    %7953 = vmatpush.bf16.msra.mxu0 %v6292
    %7954 = vmatpush.bf16.msra.mxu0 %v6284
    %7955 = vmatpush.bf16.msra.mxu0 %v6276
    %7956 = vmatpush.bf16.msra.mxu0 %v6268
    %7957 = vmatpush.bf16.msra.mxu0 %v6260
    %7958 = vmatmul.bf16.gmra.mxu0 %v4180
    %v7959 = vpop.f32.mrf.mxu0
    %v7960 = vadd.f32 %v4708, %v7959
    %v7961 = vpop.f32.mrf.mxu0
    %v7962 = vadd.f32 %v4708, %v7961
    %7963 = vdwg.mxu0
    %7964 = vmatpush.bf16.msra.mxu0 %v6380
    %7965 = vmatpush.bf16.msra.mxu0 %v6372
    %7966 = vmatpush.bf16.msra.mxu0 %v6364
    %7967 = vmatpush.bf16.msra.mxu0 %v6356
    %7968 = vmatpush.bf16.msra.mxu0 %v6348
    %7969 = vmatpush.bf16.msra.mxu0 %v6340
    %7970 = vmatpush.bf16.msra.mxu0 %v6332
    %7971 = vmatpush.bf16.msra.mxu0 %v6324
    %7972 = vmatmul.bf16.gmra.mxu0 %v4181
    %v7973 = vpop.f32.mrf.mxu0
    %v7974 = vadd.f32 %v7960, %v7973
    %v7975 = vpop.f32.mrf.mxu0
    %v7976 = vadd.f32 %v7962, %v7975
    %7977 = vdwg.mxu0
    %7978 = vmatpush.bf16.msra.mxu0 %v6444
    %7979 = vmatpush.bf16.msra.mxu0 %v6436
    %7980 = vmatpush.bf16.msra.mxu0 %v6428
    %7981 = vmatpush.bf16.msra.mxu0 %v6420
    %7982 = vmatpush.bf16.msra.mxu0 %v6412
    %7983 = vmatpush.bf16.msra.mxu0 %v6404
    %7984 = vmatpush.bf16.msra.mxu0 %v6396
    %7985 = vmatpush.bf16.msra.mxu0 %v6388
    %7986 = vmatmul.bf16.gmra.mxu0 %v4182
    %v7987 = vpop.f32.mrf.mxu0
    %v7988 = vadd.f32 %v7974, %v7987
    %v7989 = vpop.f32.mrf.mxu0
    %v7990 = vadd.f32 %v7976, %v7989
    %7991 = vdwg.mxu0
    %7992 = vmatpush.bf16.msra.mxu0 %v6508
    %7993 = vmatpush.bf16.msra.mxu0 %v6500
    %7994 = vmatpush.bf16.msra.mxu0 %v6492
    %7995 = vmatpush.bf16.msra.mxu0 %v6484
    %7996 = vmatpush.bf16.msra.mxu0 %v6476
    %7997 = vmatpush.bf16.msra.mxu0 %v6468
    %7998 = vmatpush.bf16.msra.mxu0 %v6460
    %7999 = vmatpush.bf16.msra.mxu0 %v6452
    %8000 = vmatmul.bf16.gmra.mxu0 %v4183
    %v8001 = vpop.f32.mrf.mxu0
    %v8002 = vadd.f32 %v7988, %v8001
    %v8003 = vpop.f32.mrf.mxu0
    %v8004 = vadd.f32 %v7990, %v8003
    %8005 = vdwg.mxu0
    %8006 = vmatpush.bf16.msra.mxu0 %v6572
    %8007 = vmatpush.bf16.msra.mxu0 %v6564
    %8008 = vmatpush.bf16.msra.mxu0 %v6556
    %8009 = vmatpush.bf16.msra.mxu0 %v6548
    %8010 = vmatpush.bf16.msra.mxu0 %v6540
    %8011 = vmatpush.bf16.msra.mxu0 %v6532
    %8012 = vmatpush.bf16.msra.mxu0 %v6524
    %8013 = vmatpush.bf16.msra.mxu0 %v6516
    %8014 = vmatmul.bf16.gmra.mxu0 %v4184
    %v8015 = vpop.f32.mrf.mxu0
    %v8016 = vadd.f32 %v8002, %v8015
    %v8017 = vpop.f32.mrf.mxu0
    %v8018 = vadd.f32 %v8004, %v8017
    %8019 = vdwg.mxu0
    %8020 = vmatpush.bf16.msra.mxu0 %v6636
    %8021 = vmatpush.bf16.msra.mxu0 %v6628
    %8022 = vmatpush.bf16.msra.mxu0 %v6620
    %8023 = vmatpush.bf16.msra.mxu0 %v6612
    %8024 = vmatpush.bf16.msra.mxu0 %v6604
    %8025 = vmatpush.bf16.msra.mxu0 %v6596
    %8026 = vmatpush.bf16.msra.mxu0 %v6588
    %8027 = vmatpush.bf16.msra.mxu0 %v6580
    %8028 = vmatmul.bf16.gmra.mxu0 %v4185
    %v8029 = vpop.f32.mrf.mxu0
    %v8030 = vadd.f32 %v8016, %v8029
    %v8031 = vpop.f32.mrf.mxu0
    %v8032 = vadd.f32 %v8018, %v8031
    %8033 = vdwg.mxu0
    %8034 = vmatpush.bf16.msra.mxu0 %v6700
    %8035 = vmatpush.bf16.msra.mxu0 %v6692
    %8036 = vmatpush.bf16.msra.mxu0 %v6684
    %8037 = vmatpush.bf16.msra.mxu0 %v6676
    %8038 = vmatpush.bf16.msra.mxu0 %v6668
    %8039 = vmatpush.bf16.msra.mxu0 %v6660
    %8040 = vmatpush.bf16.msra.mxu0 %v6652
    %8041 = vmatpush.bf16.msra.mxu0 %v6644
    %8042 = vmatmul.bf16.gmra.mxu0 %v4186
    %v8043 = vpop.f32.mrf.mxu0
    %v8044 = vadd.f32 %v8030, %v8043
    %v8045 = vpop.f32.mrf.mxu0
    %v8046 = vadd.f32 %v8032, %v8045
    %8047 = vdwg.mxu0
    %8048 = vmatpush.bf16.msra.mxu0 %v6764
    %8049 = vmatpush.bf16.msra.mxu0 %v6756
    %8050 = vmatpush.bf16.msra.mxu0 %v6748
    %8051 = vmatpush.bf16.msra.mxu0 %v6740
    %8052 = vmatpush.bf16.msra.mxu0 %v6732
    %8053 = vmatpush.bf16.msra.mxu0 %v6724
    %8054 = vmatpush.bf16.msra.mxu0 %v6716
    %8055 = vmatpush.bf16.msra.mxu0 %v6708
    %8056 = vmatmul.bf16.gmra.mxu0 %v4187
    %v8057 = vpop.f32.mrf.mxu0
    %v8058 = vadd.f32 %v8044, %v8057
    %v8059 = vpop.f32.mrf.mxu0
    %v8060 = vadd.f32 %v8046, %v8059
    %8061 = vdwg.mxu0
    %8062 = vmatpush.bf16.msra.mxu0 %v6317
    %8063 = vmatpush.bf16.msra.mxu0 %v6309
    %8064 = vmatpush.bf16.msra.mxu0 %v6301
    %8065 = vmatpush.bf16.msra.mxu0 %v6293
    %8066 = vmatpush.bf16.msra.mxu0 %v6285
    %8067 = vmatpush.bf16.msra.mxu0 %v6277
    %8068 = vmatpush.bf16.msra.mxu0 %v6269
    %8069 = vmatpush.bf16.msra.mxu0 %v6261
    %8070 = vmatmul.bf16.gmra.mxu0 %v4180
    %v8071 = vpop.f32.mrf.mxu0
    %v8072 = vadd.f32 %v4709, %v8071
    %v8073 = vpop.f32.mrf.mxu0
    %v8074 = vadd.f32 %v4709, %v8073
    %8075 = vdwg.mxu0
    %8076 = vmatpush.bf16.msra.mxu0 %v6381
    %8077 = vmatpush.bf16.msra.mxu0 %v6373
    %8078 = vmatpush.bf16.msra.mxu0 %v6365
    %8079 = vmatpush.bf16.msra.mxu0 %v6357
    %8080 = vmatpush.bf16.msra.mxu0 %v6349
    %8081 = vmatpush.bf16.msra.mxu0 %v6341
    %8082 = vmatpush.bf16.msra.mxu0 %v6333
    %8083 = vmatpush.bf16.msra.mxu0 %v6325
    %8084 = vmatmul.bf16.gmra.mxu0 %v4181
    %v8085 = vpop.f32.mrf.mxu0
    %v8086 = vadd.f32 %v8072, %v8085
    %v8087 = vpop.f32.mrf.mxu0
    %v8088 = vadd.f32 %v8074, %v8087
    %8089 = vdwg.mxu0
    %8090 = vmatpush.bf16.msra.mxu0 %v6445
    %8091 = vmatpush.bf16.msra.mxu0 %v6437
    %8092 = vmatpush.bf16.msra.mxu0 %v6429
    %8093 = vmatpush.bf16.msra.mxu0 %v6421
    %8094 = vmatpush.bf16.msra.mxu0 %v6413
    %8095 = vmatpush.bf16.msra.mxu0 %v6405
    %8096 = vmatpush.bf16.msra.mxu0 %v6397
    %8097 = vmatpush.bf16.msra.mxu0 %v6389
    %8098 = vmatmul.bf16.gmra.mxu0 %v4182
    %v8099 = vpop.f32.mrf.mxu0
    %v8100 = vadd.f32 %v8086, %v8099
    %v8101 = vpop.f32.mrf.mxu0
    %v8102 = vadd.f32 %v8088, %v8101
    %8103 = vdwg.mxu0
    %8104 = vmatpush.bf16.msra.mxu0 %v6509
    %8105 = vmatpush.bf16.msra.mxu0 %v6501
    %8106 = vmatpush.bf16.msra.mxu0 %v6493
    %8107 = vmatpush.bf16.msra.mxu0 %v6485
    %8108 = vmatpush.bf16.msra.mxu0 %v6477
    %8109 = vmatpush.bf16.msra.mxu0 %v6469
    %8110 = vmatpush.bf16.msra.mxu0 %v6461
    %8111 = vmatpush.bf16.msra.mxu0 %v6453
    %8112 = vmatmul.bf16.gmra.mxu0 %v4183
    %v8113 = vpop.f32.mrf.mxu0
    %v8114 = vadd.f32 %v8100, %v8113
    %v8115 = vpop.f32.mrf.mxu0
    %v8116 = vadd.f32 %v8102, %v8115
    %8117 = vdwg.mxu0
    %8118 = vmatpush.bf16.msra.mxu0 %v6573
    %8119 = vmatpush.bf16.msra.mxu0 %v6565
    %8120 = vmatpush.bf16.msra.mxu0 %v6557
    %8121 = vmatpush.bf16.msra.mxu0 %v6549
    %8122 = vmatpush.bf16.msra.mxu0 %v6541
    %8123 = vmatpush.bf16.msra.mxu0 %v6533
    %8124 = vmatpush.bf16.msra.mxu0 %v6525
    %8125 = vmatpush.bf16.msra.mxu0 %v6517
    %8126 = vmatmul.bf16.gmra.mxu0 %v4184
    %v8127 = vpop.f32.mrf.mxu0
    %v8128 = vadd.f32 %v8114, %v8127
    %v8129 = vpop.f32.mrf.mxu0
    %v8130 = vadd.f32 %v8116, %v8129
    %8131 = vdwg.mxu0
    %8132 = vmatpush.bf16.msra.mxu0 %v6637
    %8133 = vmatpush.bf16.msra.mxu0 %v6629
    %8134 = vmatpush.bf16.msra.mxu0 %v6621
    %8135 = vmatpush.bf16.msra.mxu0 %v6613
    %8136 = vmatpush.bf16.msra.mxu0 %v6605
    %8137 = vmatpush.bf16.msra.mxu0 %v6597
    %8138 = vmatpush.bf16.msra.mxu0 %v6589
    %8139 = vmatpush.bf16.msra.mxu0 %v6581
    %8140 = vmatmul.bf16.gmra.mxu0 %v4185
    %v8141 = vpop.f32.mrf.mxu0
    %v8142 = vadd.f32 %v8128, %v8141
    %v8143 = vpop.f32.mrf.mxu0
    %v8144 = vadd.f32 %v8130, %v8143
    %8145 = vdwg.mxu0
    %8146 = vmatpush.bf16.msra.mxu0 %v6701
    %8147 = vmatpush.bf16.msra.mxu0 %v6693
    %8148 = vmatpush.bf16.msra.mxu0 %v6685
    %8149 = vmatpush.bf16.msra.mxu0 %v6677
    %8150 = vmatpush.bf16.msra.mxu0 %v6669
    %8151 = vmatpush.bf16.msra.mxu0 %v6661
    %8152 = vmatpush.bf16.msra.mxu0 %v6653
    %8153 = vmatpush.bf16.msra.mxu0 %v6645
    %8154 = vmatmul.bf16.gmra.mxu0 %v4186
    %v8155 = vpop.f32.mrf.mxu0
    %v8156 = vadd.f32 %v8142, %v8155
    %v8157 = vpop.f32.mrf.mxu0
    %v8158 = vadd.f32 %v8144, %v8157
    %8159 = vdwg.mxu0
    %8160 = vmatpush.bf16.msra.mxu0 %v6765
    %8161 = vmatpush.bf16.msra.mxu0 %v6757
    %8162 = vmatpush.bf16.msra.mxu0 %v6749
    %8163 = vmatpush.bf16.msra.mxu0 %v6741
    %8164 = vmatpush.bf16.msra.mxu0 %v6733
    %8165 = vmatpush.bf16.msra.mxu0 %v6725
    %8166 = vmatpush.bf16.msra.mxu0 %v6717
    %8167 = vmatpush.bf16.msra.mxu0 %v6709
    %8168 = vmatmul.bf16.gmra.mxu0 %v4187
    %v8169 = vpop.f32.mrf.mxu0
    %v8170 = vadd.f32 %v8156, %v8169
    %v8171 = vpop.f32.mrf.mxu0
    %v8172 = vadd.f32 %v8158, %v8171
    %8173 = vdwg.mxu0
    %v8174 = vmul.f32 %v7386, 0.2
    %v8175 = vmul.f32 %v7498, 0.2
    %v8176 = vmul.f32 %v7610, 0.2
    %v8177 = vmul.f32 %v7722, 0.2
    %v8178 = vmul.f32 %v7834, 0.2
    %v8179 = vmul.f32 %v7946, 0.2
    %v8180 = vmul.f32 %v8058, 0.2
    %v8181 = vmul.f32 %v8170, 0.2
    %v8182 = vmul.f32 %v7388, 0.2
    %v8183 = vmul.f32 %v7500, 0.2
    %v8184 = vmul.f32 %v7612, 0.2
    %v8185 = vmul.f32 %v7724, 0.2
    %v8186 = vmul.f32 %v7836, 0.2
    %v8187 = vmul.f32 %v7948, 0.2
    %v8188 = vmul.f32 %v8060, 0.2
    %v8189 = vmul.f32 %v8172, 0.2
    %v8190 = vmax.f32 %v7386, %v8174
    %v8191 = vmax.f32 %v7498, %v8175
    %v8192 = vmax.f32 %v7610, %v8176
    %v8193 = vmax.f32 %v7722, %v8177
    %v8194 = vmax.f32 %v7834, %v8178
    %v8195 = vmax.f32 %v7946, %v8179
    %v8196 = vmax.f32 %v8058, %v8180
    %v8197 = vmax.f32 %v8170, %v8181
    %v8198 = vmax.f32 %v7388, %v8182
    %v8199 = vmax.f32 %v7500, %v8183
    %v8200 = vmax.f32 %v7612, %v8184
    %v8201 = vmax.f32 %v7724, %v8185
    %v8202 = vmax.f32 %v7836, %v8186
    %v8203 = vmax.f32 %v7948, %v8187
    %v8204 = vmax.f32 %v8060, %v8188
    %v8205 = vmax.f32 %v8172, %v8189
    %v8206 = vld [vmem:[#allocation9] sm:$0xff]
    %v8207 = vld [vmem:[#allocation9 + $0x8] sm:$0xff]
    %v8208 = vld [vmem:[#allocation9 + $0x10] sm:$0xff]
    %v8209 = vld [vmem:[#allocation9 + $0x18] sm:$0xff]
    %v8210 = vld [vmem:[#allocation9 + $0x20] sm:$0xff]
    %v8211 = vld [vmem:[#allocation9 + $0x28] sm:$0xff]
    %v8212 = vld [vmem:[#allocation9 + $0x30] sm:$0xff]
    %v8213 = vld [vmem:[#allocation9 + $0x38] sm:$0xff]
    %v8214 = vld [vmem:[#allocation9 + $0x40] sm:$0xff]
    %v8215 = vld [vmem:[#allocation9 + $0x48] sm:$0xff]
    %v8216 = vld [vmem:[#allocation9 + $0x50] sm:$0xff]
    %v8217 = vld [vmem:[#allocation9 + $0x58] sm:$0xff]
    %v8218 = vld [vmem:[#allocation9 + $0x60] sm:$0xff]
    %v8219 = vld [vmem:[#allocation9 + $0x68] sm:$0xff]
    %v8220 = vld [vmem:[#allocation9 + $0x70] sm:$0xff]
    %v8221 = vld [vmem:[#allocation9 + $0x78] sm:$0xff]
    %v8222 = vld [vmem:[#allocation9 + $0x80] sm:$0xff]
    %v8223 = vld [vmem:[#allocation9 + $0x88] sm:$0xff]
    %v8224 = vld [vmem:[#allocation9 + $0x90] sm:$0xff]
    %v8225 = vld [vmem:[#allocation9 + $0x98] sm:$0xff]
    %v8226 = vld [vmem:[#allocation9 + $0xa0] sm:$0xff]
    %v8227 = vld [vmem:[#allocation9 + $0xa8] sm:$0xff]
    %v8228 = vld [vmem:[#allocation9 + $0xb0] sm:$0xff]
    %v8229 = vld [vmem:[#allocation9 + $0xb8] sm:$0xff]
    %v8230 = vld [vmem:[#allocation9 + $0xc0] sm:$0xff]
    %v8231 = vld [vmem:[#allocation9 + $0xc8] sm:$0xff]
    %v8232 = vld [vmem:[#allocation9 + $0xd0] sm:$0xff]
    %v8233 = vld [vmem:[#allocation9 + $0xd8] sm:$0xff]
    %v8234 = vld [vmem:[#allocation9 + $0xe0] sm:$0xff]
    %v8235 = vld [vmem:[#allocation9 + $0xe8] sm:$0xff]
    %v8236 = vld [vmem:[#allocation9 + $0xf0] sm:$0xff]
    %v8237 = vld [vmem:[#allocation9 + $0xf8] sm:$0xff]
    %v8238 = vld [vmem:[#allocation9 + $0x100] sm:$0xff]
    %v8239 = vld [vmem:[#allocation9 + $0x108] sm:$0xff]
    %v8240 = vld [vmem:[#allocation9 + $0x110] sm:$0xff]
    %v8241 = vld [vmem:[#allocation9 + $0x118] sm:$0xff]
    %v8242 = vld [vmem:[#allocation9 + $0x120] sm:$0xff]
    %v8243 = vld [vmem:[#allocation9 + $0x128] sm:$0xff]
    %v8244 = vld [vmem:[#allocation9 + $0x130] sm:$0xff]
    %v8245 = vld [vmem:[#allocation9 + $0x138] sm:$0xff]
    %v8246 = vld [vmem:[#allocation9 + $0x140] sm:$0xff]
    %v8247 = vld [vmem:[#allocation9 + $0x148] sm:$0xff]
    %v8248 = vld [vmem:[#allocation9 + $0x150] sm:$0xff]
    %v8249 = vld [vmem:[#allocation9 + $0x158] sm:$0xff]
    %v8250 = vld [vmem:[#allocation9 + $0x160] sm:$0xff]
    %v8251 = vld [vmem:[#allocation9 + $0x168] sm:$0xff]
    %v8252 = vld [vmem:[#allocation9 + $0x170] sm:$0xff]
    %v8253 = vld [vmem:[#allocation9 + $0x178] sm:$0xff]
    %v8254 = vld [vmem:[#allocation9 + $0x180] sm:$0xff]
    %v8255 = vld [vmem:[#allocation9 + $0x188] sm:$0xff]
    %v8256 = vld [vmem:[#allocation9 + $0x190] sm:$0xff]
    %v8257 = vld [vmem:[#allocation9 + $0x198] sm:$0xff]
    %v8258 = vld [vmem:[#allocation9 + $0x1a0] sm:$0xff]
    %v8259 = vld [vmem:[#allocation9 + $0x1a8] sm:$0xff]
    %v8260 = vld [vmem:[#allocation9 + $0x1b0] sm:$0xff]
    %v8261 = vld [vmem:[#allocation9 + $0x1b8] sm:$0xff]
    %v8262 = vld [vmem:[#allocation9 + $0x1c0] sm:$0xff]
    %v8263 = vld [vmem:[#allocation9 + $0x1c8] sm:$0xff]
    %v8264 = vld [vmem:[#allocation9 + $0x1d0] sm:$0xff]
    %v8265 = vld [vmem:[#allocation9 + $0x1d8] sm:$0xff]
    %v8266 = vld [vmem:[#allocation9 + $0x1e0] sm:$0xff]
    %v8267 = vld [vmem:[#allocation9 + $0x1e8] sm:$0xff]
    %v8268 = vld [vmem:[#allocation9 + $0x1f0] sm:$0xff]
    %v8269 = vld [vmem:[#allocation9 + $0x1f8] sm:$0xff]
    %v8270 = vld [vmem:[#allocation9 + $0x200] sm:$0xff]
    %v8271 = vld [vmem:[#allocation9 + $0x208] sm:$0xff]
    %v8272 = vld [vmem:[#allocation9 + $0x210] sm:$0xff]
    %v8273 = vld [vmem:[#allocation9 + $0x218] sm:$0xff]
    %v8274 = vld [vmem:[#allocation9 + $0x220] sm:$0xff]
    %v8275 = vld [vmem:[#allocation9 + $0x228] sm:$0xff]
    %v8276 = vld [vmem:[#allocation9 + $0x230] sm:$0xff]
    %v8277 = vld [vmem:[#allocation9 + $0x238] sm:$0xff]
    %v8278 = vld [vmem:[#allocation9 + $0x240] sm:$0xff]
    %v8279 = vld [vmem:[#allocation9 + $0x248] sm:$0xff]
    %v8280 = vld [vmem:[#allocation9 + $0x250] sm:$0xff]
    %v8281 = vld [vmem:[#allocation9 + $0x258] sm:$0xff]
    %v8282 = vld [vmem:[#allocation9 + $0x260] sm:$0xff]
    %v8283 = vld [vmem:[#allocation9 + $0x268] sm:$0xff]
    %v8284 = vld [vmem:[#allocation9 + $0x270] sm:$0xff]
    %v8285 = vld [vmem:[#allocation9 + $0x278] sm:$0xff]
    %v8286 = vld [vmem:[#allocation9 + $0x280] sm:$0xff]
    %v8287 = vld [vmem:[#allocation9 + $0x288] sm:$0xff]
    %v8288 = vld [vmem:[#allocation9 + $0x290] sm:$0xff]
    %v8289 = vld [vmem:[#allocation9 + $0x298] sm:$0xff]
    %v8290 = vld [vmem:[#allocation9 + $0x2a0] sm:$0xff]
    %v8291 = vld [vmem:[#allocation9 + $0x2a8] sm:$0xff]
    %v8292 = vld [vmem:[#allocation9 + $0x2b0] sm:$0xff]
    %v8293 = vld [vmem:[#allocation9 + $0x2b8] sm:$0xff]
    %v8294 = vld [vmem:[#allocation9 + $0x2c0] sm:$0xff]
    %v8295 = vld [vmem:[#allocation9 + $0x2c8] sm:$0xff]
    %v8296 = vld [vmem:[#allocation9 + $0x2d0] sm:$0xff]
    %v8297 = vld [vmem:[#allocation9 + $0x2d8] sm:$0xff]
    %v8298 = vld [vmem:[#allocation9 + $0x2e0] sm:$0xff]
    %v8299 = vld [vmem:[#allocation9 + $0x2e8] sm:$0xff]
    %v8300 = vld [vmem:[#allocation9 + $0x2f0] sm:$0xff]
    %v8301 = vld [vmem:[#allocation9 + $0x2f8] sm:$0xff]
    %v8302 = vld [vmem:[#allocation9 + $0x300] sm:$0xff]
    %v8303 = vld [vmem:[#allocation9 + $0x308] sm:$0xff]
    %v8304 = vld [vmem:[#allocation9 + $0x310] sm:$0xff]
    %v8305 = vld [vmem:[#allocation9 + $0x318] sm:$0xff]
    %v8306 = vld [vmem:[#allocation9 + $0x320] sm:$0xff]
    %v8307 = vld [vmem:[#allocation9 + $0x328] sm:$0xff]
    %v8308 = vld [vmem:[#allocation9 + $0x330] sm:$0xff]
    %v8309 = vld [vmem:[#allocation9 + $0x338] sm:$0xff]
    %v8310 = vld [vmem:[#allocation9 + $0x340] sm:$0xff]
    %v8311 = vld [vmem:[#allocation9 + $0x348] sm:$0xff]
    %v8312 = vld [vmem:[#allocation9 + $0x350] sm:$0xff]
    %v8313 = vld [vmem:[#allocation9 + $0x358] sm:$0xff]
    %v8314 = vld [vmem:[#allocation9 + $0x360] sm:$0xff]
    %v8315 = vld [vmem:[#allocation9 + $0x368] sm:$0xff]
    %v8316 = vld [vmem:[#allocation9 + $0x370] sm:$0xff]
    %v8317 = vld [vmem:[#allocation9 + $0x378] sm:$0xff]
    %v8318 = vld [vmem:[#allocation9 + $0x380] sm:$0xff]
    %v8319 = vld [vmem:[#allocation9 + $0x388] sm:$0xff]
    %v8320 = vld [vmem:[#allocation9 + $0x390] sm:$0xff]
    %v8321 = vld [vmem:[#allocation9 + $0x398] sm:$0xff]
    %v8322 = vld [vmem:[#allocation9 + $0x3a0] sm:$0xff]
    %v8323 = vld [vmem:[#allocation9 + $0x3a8] sm:$0xff]
    %v8324 = vld [vmem:[#allocation9 + $0x3b0] sm:$0xff]
    %v8325 = vld [vmem:[#allocation9 + $0x3b8] sm:$0xff]
    %v8326 = vld [vmem:[#allocation9 + $0x3c0] sm:$0xff]
    %v8327 = vld [vmem:[#allocation9 + $0x3c8] sm:$0xff]
    %v8328 = vld [vmem:[#allocation9 + $0x3d0] sm:$0xff]
    %v8329 = vld [vmem:[#allocation9 + $0x3d8] sm:$0xff]
    %v8330 = vld [vmem:[#allocation9 + $0x3e0] sm:$0xff]
    %v8331 = vld [vmem:[#allocation9 + $0x3e8] sm:$0xff]
    %v8332 = vld [vmem:[#allocation9 + $0x3f0] sm:$0xff]
    %v8333 = vld [vmem:[#allocation9 + $0x3f8] sm:$0xff]
    %v8334 = vld [vmem:[#allocation10] sm:$0x1]
    %v8336 = vperm.slane %v8334, 0
    %8338 = vmatpush.msra.mxu0 %v8221
    %8339 = vmatpush.msra.mxu0 %v8220
    %8340 = vmatpush.msra.mxu0 %v8219
    %8341 = vmatpush.msra.mxu0 %v8218
    %8342 = vmatpush.msra.mxu0 %v8217
    %8343 = vmatpush.msra.mxu0 %v8216
    %8344 = vmatpush.msra.mxu0 %v8215
    %8345 = vmatpush.msra.mxu0 %v8214
    %8346 = vmatpush.msra.mxu0 %v8213
    %8347 = vmatpush.msra.mxu0 %v8212
    %8348 = vmatpush.msra.mxu0 %v8211
    %8349 = vmatpush.msra.mxu0 %v8210
    %8350 = vmatpush.msra.mxu0 %v8209
    %8351 = vmatpush.msra.mxu0 %v8208
    %8352 = vmatpush.msra.mxu0 %v8207
    %8353 = vmatpush.msra.mxu0 %v8206
    %8354 = vmatmul.f32.gmra.mxu0 %v8190
    %v8355 = vpop.f32.mrf.mxu0
    %v8356 = vadd.f32 %v8336, %v8355
    %8357 = vmatmul.f32.gmra.mxu0 %v8198
    %v8358 = vpop.f32.mrf.mxu0
    %v8359 = vadd.f32 %v8336, %v8358
    %8360 = vdwg.mxu0
    %8361 = vmatpush.msra.mxu0 %v8237
    %8362 = vmatpush.msra.mxu0 %v8236
    %8363 = vmatpush.msra.mxu0 %v8235
    %8364 = vmatpush.msra.mxu0 %v8234
    %8365 = vmatpush.msra.mxu0 %v8233
    %8366 = vmatpush.msra.mxu0 %v8232
    %8367 = vmatpush.msra.mxu0 %v8231
    %8368 = vmatpush.msra.mxu0 %v8230
    %8369 = vmatpush.msra.mxu0 %v8229
    %8370 = vmatpush.msra.mxu0 %v8228
    %8371 = vmatpush.msra.mxu0 %v8227
    %8372 = vmatpush.msra.mxu0 %v8226
    %8373 = vmatpush.msra.mxu0 %v8225
    %8374 = vmatpush.msra.mxu0 %v8224
    %8375 = vmatpush.msra.mxu0 %v8223
    %8376 = vmatpush.msra.mxu0 %v8222
    %8377 = vmatmul.f32.gmra.mxu0 %v8191
    %v8378 = vpop.f32.mrf.mxu0
    %v8379 = vadd.f32 %v8356, %v8378
    %8380 = vmatmul.f32.gmra.mxu0 %v8199
    %v8381 = vpop.f32.mrf.mxu0
    %v8382 = vadd.f32 %v8359, %v8381
    %8383 = vdwg.mxu0
    %8384 = vmatpush.msra.mxu0 %v8253
    %8385 = vmatpush.msra.mxu0 %v8252
    %8386 = vmatpush.msra.mxu0 %v8251
    %8387 = vmatpush.msra.mxu0 %v8250
    %8388 = vmatpush.msra.mxu0 %v8249
    %8389 = vmatpush.msra.mxu0 %v8248
    %8390 = vmatpush.msra.mxu0 %v8247
    %8391 = vmatpush.msra.mxu0 %v8246
    %8392 = vmatpush.msra.mxu0 %v8245
    %8393 = vmatpush.msra.mxu0 %v8244
    %8394 = vmatpush.msra.mxu0 %v8243
    %8395 = vmatpush.msra.mxu0 %v8242
    %8396 = vmatpush.msra.mxu0 %v8241
    %8397 = vmatpush.msra.mxu0 %v8240
    %8398 = vmatpush.msra.mxu0 %v8239
    %8399 = vmatpush.msra.mxu0 %v8238
    %8400 = vmatmul.f32.gmra.mxu0 %v8192
    %v8401 = vpop.f32.mrf.mxu0
    %v8402 = vadd.f32 %v8379, %v8401
    %8403 = vmatmul.f32.gmra.mxu0 %v8200
    %v8404 = vpop.f32.mrf.mxu0
    %v8405 = vadd.f32 %v8382, %v8404
    %8406 = vdwg.mxu0
    %8407 = vmatpush.msra.mxu0 %v8269
    %8408 = vmatpush.msra.mxu0 %v8268
    %8409 = vmatpush.msra.mxu0 %v8267
    %8410 = vmatpush.msra.mxu0 %v8266
    %8411 = vmatpush.msra.mxu0 %v8265
    %8412 = vmatpush.msra.mxu0 %v8264
    %8413 = vmatpush.msra.mxu0 %v8263
    %8414 = vmatpush.msra.mxu0 %v8262
    %8415 = vmatpush.msra.mxu0 %v8261
    %8416 = vmatpush.msra.mxu0 %v8260
    %8417 = vmatpush.msra.mxu0 %v8259
    %8418 = vmatpush.msra.mxu0 %v8258
    %8419 = vmatpush.msra.mxu0 %v8257
    %8420 = vmatpush.msra.mxu0 %v8256
    %8421 = vmatpush.msra.mxu0 %v8255
    %8422 = vmatpush.msra.mxu0 %v8254
    %8423 = vmatmul.f32.gmra.mxu0 %v8193
    %v8424 = vpop.f32.mrf.mxu0
    %v8425 = vadd.f32 %v8402, %v8424
    %8426 = vmatmul.f32.gmra.mxu0 %v8201
    %v8427 = vpop.f32.mrf.mxu0
    %v8428 = vadd.f32 %v8405, %v8427
    %8429 = vdwg.mxu0
    %8430 = vmatpush.msra.mxu0 %v8285
    %8431 = vmatpush.msra.mxu0 %v8284
    %8432 = vmatpush.msra.mxu0 %v8283
    %8433 = vmatpush.msra.mxu0 %v8282
    %8434 = vmatpush.msra.mxu0 %v8281
    %8435 = vmatpush.msra.mxu0 %v8280
    %8436 = vmatpush.msra.mxu0 %v8279
    %8437 = vmatpush.msra.mxu0 %v8278
    %8438 = vmatpush.msra.mxu0 %v8277
    %8439 = vmatpush.msra.mxu0 %v8276
    %8440 = vmatpush.msra.mxu0 %v8275
    %8441 = vmatpush.msra.mxu0 %v8274
    %8442 = vmatpush.msra.mxu0 %v8273
    %8443 = vmatpush.msra.mxu0 %v8272
    %8444 = vmatpush.msra.mxu0 %v8271
    %8445 = vmatpush.msra.mxu0 %v8270
    %8446 = vmatmul.f32.gmra.mxu0 %v8194
    %v8447 = vpop.f32.mrf.mxu0
    %v8448 = vadd.f32 %v8425, %v8447
    %8449 = vmatmul.f32.gmra.mxu0 %v8202
    %v8450 = vpop.f32.mrf.mxu0
    %v8451 = vadd.f32 %v8428, %v8450
    %8452 = vdwg.mxu0
    %8453 = vmatpush.msra.mxu0 %v8301
    %8454 = vmatpush.msra.mxu0 %v8300
    %8455 = vmatpush.msra.mxu0 %v8299
    %8456 = vmatpush.msra.mxu0 %v8298
    %8457 = vmatpush.msra.mxu0 %v8297
    %8458 = vmatpush.msra.mxu0 %v8296
    %8459 = vmatpush.msra.mxu0 %v8295
    %8460 = vmatpush.msra.mxu0 %v8294
    %8461 = vmatpush.msra.mxu0 %v8293
    %8462 = vmatpush.msra.mxu0 %v8292
    %8463 = vmatpush.msra.mxu0 %v8291
    %8464 = vmatpush.msra.mxu0 %v8290
    %8465 = vmatpush.msra.mxu0 %v8289
    %8466 = vmatpush.msra.mxu0 %v8288
    %8467 = vmatpush.msra.mxu0 %v8287
    %8468 = vmatpush.msra.mxu0 %v8286
    %8469 = vmatmul.f32.gmra.mxu0 %v8195
    %v8470 = vpop.f32.mrf.mxu0
    %v8471 = vadd.f32 %v8448, %v8470
    %8472 = vmatmul.f32.gmra.mxu0 %v8203
    %v8473 = vpop.f32.mrf.mxu0
    %v8474 = vadd.f32 %v8451, %v8473
    %8475 = vdwg.mxu0
    %8476 = vmatpush.msra.mxu0 %v8317
    %8477 = vmatpush.msra.mxu0 %v8316
    %8478 = vmatpush.msra.mxu0 %v8315
    %8479 = vmatpush.msra.mxu0 %v8314
    %8480 = vmatpush.msra.mxu0 %v8313
    %8481 = vmatpush.msra.mxu0 %v8312
    %8482 = vmatpush.msra.mxu0 %v8311
    %8483 = vmatpush.msra.mxu0 %v8310
    %8484 = vmatpush.msra.mxu0 %v8309
    %8485 = vmatpush.msra.mxu0 %v8308
    %8486 = vmatpush.msra.mxu0 %v8307
    %8487 = vmatpush.msra.mxu0 %v8306
    %8488 = vmatpush.msra.mxu0 %v8305
    %8489 = vmatpush.msra.mxu0 %v8304
    %8490 = vmatpush.msra.mxu0 %v8303
    %8491 = vmatpush.msra.mxu0 %v8302
    %8492 = vmatmul.f32.gmra.mxu0 %v8196
    %v8493 = vpop.f32.mrf.mxu0
    %v8494 = vadd.f32 %v8471, %v8493
    %8495 = vmatmul.f32.gmra.mxu0 %v8204
    %v8496 = vpop.f32.mrf.mxu0
    %v8497 = vadd.f32 %v8474, %v8496
    %8498 = vdwg.mxu0
    %8499 = vmatpush.msra.mxu0 %v8333
    %8500 = vmatpush.msra.mxu0 %v8332
    %8501 = vmatpush.msra.mxu0 %v8331
    %8502 = vmatpush.msra.mxu0 %v8330
    %8503 = vmatpush.msra.mxu0 %v8329
    %8504 = vmatpush.msra.mxu0 %v8328
    %8505 = vmatpush.msra.mxu0 %v8327
    %8506 = vmatpush.msra.mxu0 %v8326
    %8507 = vmatpush.msra.mxu0 %v8325
    %8508 = vmatpush.msra.mxu0 %v8324
    %8509 = vmatpush.msra.mxu0 %v8323
    %8510 = vmatpush.msra.mxu0 %v8322
    %8511 = vmatpush.msra.mxu0 %v8321
    %8512 = vmatpush.msra.mxu0 %v8320
    %8513 = vmatpush.msra.mxu0 %v8319
    %8514 = vmatpush.msra.mxu0 %v8318
    %8515 = vmatmul.f32.gmra.mxu0 %v8197
    %v8516 = vpop.f32.mrf.mxu0
    %v8517 = vadd.f32 %v8494, %v8516
    %8518 = vmatmul.f32.gmra.mxu0 %v8205
    %v8519 = vpop.f32.mrf.mxu0
    %v8520 = vadd.f32 %v8497, %v8519
    %8521 = vdwg.mxu0
    %8522 = vst [vmem:[%s7] sm:$0xff] %v8517
    %8523 = vst [vmem:[%s7 + $0x8] sm:$0xff] %v8520
    // Predicated region
    $region54: #{discriminator_forward.1} parent=1 // pred_check
      _
    $region55: #{discriminator_forward.1} parent=1 // pred_check_branch
      %8525 = sbr.rel (0) target = $region57
    $region56: #{discriminator_forward.1} parent=1 // pred_region
      _
    $region57: #{discriminator_forward.1} parent=1 // pred_fallthru
      _
    // Predicated region
    $region58: #{discriminator_forward.1} parent=1 // pred_check
      _
    $region59: #{discriminator_forward.1} parent=1 // pred_check_branch
      %8527 = sbr.rel (0) target = $region61
    $region60: #{discriminator_forward.1} parent=1 // pred_region
      _
    $region61: #{discriminator_forward.1} parent=1 // pred_fallthru
      _
    %8528 = vsyncpa [#allocation3], 1
    %8529 = vsyncpa [#allocation5], 1
    %8530 = vsyncpa [#allocation8], 1
    %8531 = vsyncpa [#allocation11], 1

</llo_original>
